<compile_context>
chip_gen: v5e
topology: v5e:2x2
jax: 0.10.0
libtpu: 0.0.40
codegen_flags: <defaults>
</compile_context>

<pallas_src>
import numpy as np

import jax
import jax.numpy as jnp
from jax.experimental import pallas as pl
from jax.experimental.pallas import tpu as pltpu

# ------------------------------- geometry -----------------------------------
B = 2                    # batch size
H = W = 30               # spatial (30 ->(k3,s3) 10 ->(k5,s2,p2) 5 ->(k3,s2,p1) 3)
C_IN = 6                 # channel-concat of two RGB frames
P1, P2, P3 = 10 * 10, 5 * 5, 3 * 3   # spatial positions after conv1/2/3
R1 = B * P1              # 200 conv1 rows, ordered (b, h, w)
R2T = 64                 # h2 rows / rows per S2 tap block (50 real + pad to 4*16)
R3T = 80                 # h3 rows / rows per S3 tap block (9 blocks of 8 + pad to 5*16)
TAPS2, TAPS3 = 25, 9     # conv2 / conv3 kernel taps
FEAT = 256               # task embedding dim
HID = 64                 # control MLP hidden dim
ACT = 6                  # action dim


def _multi_acc(n, n_acc, fn):
    """Sum fn(0..n-1) with n_acc independent partial accumulators (breaks the
    serial VPU add chain gated on sequential MXU result pops)."""
    n_acc = min(n_acc, n)
    parts = [fn(t) for t in range(n_acc)]
    for t in range(n_acc, n):
        parts[t % n_acc] = parts[t % n_acc] + fn(t)
    out = parts[0]
    for p in parts[1:]:
        out = out + p
    return out


# ------------------------------ fused kernel --------------------------------

def _fused_forward_kernel(cols1_ref, s2_ref, s3_ref,
                          w1_ref, b1_ref, w2_ref, b2_ref, w3_ref, b3_ref,
                          wft_ref, wfo_ref, bft_ref, bfo_ref,
                          wm1a_ref, wm1b_ref, bm1_ref,
                          wm2_ref, bm2_ref, wm3_ref, bm3_ref,
                          act_ref, sent_ref):
    f32 = jnp.float32

    # conv1 + ReLU, both branches fused along lanes (block-diag 108 -> 32).
    h1 = jnp.dot(cols1_ref[...], w1_ref[...], preferred_element_type=f32)
    h1 = jnp.maximum(h1 + b1_ref[...], 0.0)                          # (200, 32)

    # conv2 + ReLU: per tap, {gather matmul, block-diag tap matmul}; the big
    # cols2 intermediate is never materialized.  bf16 S2 slices are 16-aligned.
    def tap2(t):
        g = jnp.dot(s2_ref[t * R2T:(t + 1) * R2T, :].astype(f32), h1,
                    preferred_element_type=f32)                      # (64, 32)
        return jnp.dot(g, w2_ref[t], preferred_element_type=f32)     # (64, 64)
    h2 = jnp.maximum(_multi_acc(TAPS2, 4, tap2) + b2_ref[...], 0.0)  # (64, 64)

    # conv3 + ReLU (rows >= 50 of h2 are pad and never gathered by S3)
    def tap3(t):
        g = jnp.dot(s3_ref[t * R3T:(t + 1) * R3T, :].astype(f32), h2,
                    preferred_element_type=f32)                      # (80, 64)
        return jnp.dot(g, w3_ref[t], preferred_element_type=f32)     # (80, 128)
    h3 = jnp.maximum(_multi_acc(TAPS3, 3, tap3) + b3_ref[...], 0.0)  # (80, 128)

    # fc_1 per branch: split the fused lane axis once (cols 0..63 task branch,
    # 64..127 obs branch), then 9 per-spatial-position 8-row matmul blocks.
    h3_task = h3[:, 0:64]
    h3_obs = h3[:, 64:128]
    sent_raw = _multi_acc(
        P3, 2, lambda p: jnp.dot(h3_task[p * 8:(p + 1) * 8, :], wft_ref[p],
                                 preferred_element_type=f32))[0:B, :] + bft_ref[...]
    obs_feat = _multi_acc(
        P3, 2, lambda p: jnp.dot(h3_obs[p * 8:(p + 1) * 8, :], wfo_ref[p],
                                 preferred_element_type=f32))[0:B, :] + bfo_ref[...]

    # L2 normalize the task sentence (matches torch.norm(p=2) divide; no eps,
    # same as the PyTorch module).
    ssq = jnp.sum(sent_raw * sent_raw, axis=1, keepdims=True)
    sentence = sent_raw * jax.lax.rsqrt(ssq)

    # control MLP on cat((obs_feat, sentence), dim=1); the concat is folded
    # into the split fc_1 weight (wm1a / wm1b).  fc_3 / fc_4 unused by forward.
    h = jnp.maximum(jnp.dot(obs_feat, wm1a_ref[...], preferred_element_type=f32)
                    + jnp.dot(sentence, wm1b_ref[...], preferred_element_type=f32)
                    + bm1_ref[...], 0.0)
    h = jnp.maximum(jnp.dot(h, wm2_ref[...], preferred_element_type=f32)
                    + bm2_ref[...], 0.0)
    act_ref[...] = jnp.dot(h, wm3_ref[...], preferred_element_type=f32) + bm3_ref[...]
    sent_ref[...] = sentence


# ------------------------ constant gather matrices ---------------------------

def _build_conv2_gather():
    """0/1 matrix S2 (25*64, 200): for each conv2 tap (kh,kw), row
    t*64 + b*25 + (ho*5+wo) selects the conv1 activation row b*100 + h*10 + w
    feeding that output position; zero rows implement the spatial zero padding
    and the 50->64 alignment pad."""
    s = np.zeros((TAPS2 * R2T, R1), np.float32)
    for kh in range(5):
        for kw in range(5):
            t = kh * 5 + kw
            for b in range(B):
                for ho in range(5):
                    for wo in range(5):
                        h_in = 2 * ho + kh - 2
                        w_in = 2 * wo + kw - 2
                        if 0 <= h_in < 10 and 0 <= w_in < 10:
                            row = t * R2T + b * P2 + ho * 5 + wo
                            col = b * P1 + h_in * 10 + w_in
                            s[row, col] = 1.0
    return s


def _build_conv3_gather():
    """0/1 matrix S3 (9*80, 64): gathers conv2 rows (b*25 + h*5 + w) for each
    conv3 tap.  Row layout t*80 + (ho*3+wo)*8 + b; rows 2..7 of each 8-row
    spatial block and rows 72..79 of each tap block are zero (alignment)."""
    s = np.zeros((TAPS3 * R3T, R2T), np.float32)
    for kh in range(3):
        for kw in range(3):
            t = kh * 3 + kw
            for ho in range(3):
                for wo in range(3):
                    for b in range(B):
                        h_in = 2 * ho + kh - 1
                        w_in = 2 * wo + kw - 1
                        if 0 <= h_in < 5 and 0 <= w_in < 5:
                            row = t * R3T + (ho * 3 + wo) * 8 + b
                            col = b * P2 + h_in * 5 + w_in
                            s[row, col] = 1.0
    return s


# --------------------------- one-time weight repack --------------------------

def _block_diag(a, b):
    za = jnp.zeros((a.shape[0], b.shape[1]), jnp.float32)
    zb = jnp.zeros((b.shape[0], a.shape[1]), jnp.float32)
    return jnp.concatenate([jnp.concatenate([a, za], axis=1),
                            jnp.concatenate([zb, b], axis=1)], axis=0)


def prepare_params(params):
    """Repack PyTorch-layout parameters into fused kernel operands (run once)."""
    f32 = jnp.float32
    tp, ob, ct = params["task_embedding"], params["img_cnn"], params["control"]

    def conv1_mat(p):
        # (16, 6, 3, 3) -> (54, 16), rows ordered (cin, kh, kw)
        return jnp.asarray(p["conv1_w"], f32).reshape(16, C_IN * 9).T

    def conv_taps(w):
        # (cout, cin, k, k) -> (k*k, cin, cout), tap index = kh*k + kw
        cout, cin, k, _ = w.shape
        return jnp.asarray(w, f32).transpose(2, 3, 1, 0).reshape(k * k, cin, cout)

    def fc1_blocks(w):
        # torch fc_1 weight (256, 576), flat input index = c*9 + (h*3+w)
        # -> (9, 64, 256): per-spatial-position (cin, cout) block
        return jnp.asarray(w, f32).reshape(FEAT, 64, P3).transpose(2, 1, 0)

    w2t, w2o = conv_taps(tp["conv2_w"]), conv_taps(ob["conv2_w"])
    w3t, w3o = conv_taps(tp["conv3_w"]), conv_taps(ob["conv3_w"])

    prep = {
        # 0/1 gather matrices stored in bf16 (exact) -> half the DMA
        "s2": jnp.asarray(_build_conv2_gather(), jnp.bfloat16),      # (1600, 200)
        "s3": jnp.asarray(_build_conv3_gather(), jnp.bfloat16),      # (720, 64)
        # branch-fused (block-diagonal) conv weights: task cols first, obs second
        "w1": _block_diag(conv1_mat(tp), conv1_mat(ob)),             # (108, 32)
        "b1": jnp.concatenate([jnp.asarray(tp["conv1_b"], f32),
                               jnp.asarray(ob["conv1_b"], f32)]).reshape(1, 32),
        "w2": jnp.stack([_block_diag(w2t[t], w2o[t]) for t in range(TAPS2)]),  # (25,32,64)
        "b2": jnp.concatenate([jnp.asarray(tp["conv2_b"], f32),
                               jnp.asarray(ob["conv2_b"], f32)]).reshape(1, 64),
        "w3": jnp.stack([_block_diag(w3t[t], w3o[t]) for t in range(TAPS3)]),  # (9,64,128)
        "b3": jnp.concatenate([jnp.asarray(tp["conv3_b"], f32),
                               jnp.asarray(ob["conv3_b"], f32)]).reshape(1, 128),
        # fc_1 kept per-branch (avoids doubling the 1.18 MB weight)
        "wft": fc1_blocks(tp["fc1_w"]), "wfo": fc1_blocks(ob["fc1_w"]),        # (9,64,256)
        "bft": jnp.asarray(tp["fc1_b"], f32).reshape(1, FEAT),
        "bfo": jnp.asarray(ob["fc1_b"], f32).reshape(1, FEAT),
    }
    wm1 = jnp.asarray(ct["fc1_w"], f32).T                            # (512, 64)
    prep["wm1a"], prep["wm1b"] = wm1[:FEAT], wm1[FEAT:]              # obs / sentence split
    prep["bm1"] = jnp.asarray(ct["fc1_b"], f32).reshape(1, HID)
    prep["wm2"] = jnp.asarray(ct["fc2_w"], f32).T
    prep["bm2"] = jnp.asarray(ct["fc2_b"], f32).reshape(1, HID)
    prep["wm3"] = jnp.asarray(ct["out_w"], f32).T
    prep["bm3"] = jnp.asarray(ct["out_b"], f32).reshape(1, ACT)
    return prep


# ------------------------------ host-side glue -------------------------------

def _patches3(x):
    """(B, 3, 30, 30) -> (B*100, 27).  conv1 has k=3, s=3, p=0, so its im2col
    is a pure regrouping: row = b*100 + ho*10 + wo, col = c*9 + kh*3 + kw."""
    b = x.shape[0]
    x = x.reshape(b, 3, 10, 3, 10, 3).transpose(0, 2, 4, 1, 3, 5)
    return x.reshape(b * P1, 3 * 9)


def _full_spec(a):
    zeros = (0,) * a.ndim
    return pl.BlockSpec(a.shape, lambda i, _z=zeros: _z)


_COST = pl.CostEstimate(flops=51_000_000, transcendentals=8,
                        bytes_accessed=2_700_000)


def image_task_embedding_forward(prep, init_observation, observation,
                                 ref_init_state, ref_final_state):
    """ImageTaskEmbeddingModel.forward (goal_feat=None path)."""
    f32 = jnp.float32
    # Channel concats of the torch code are folded into the column layout:
    # task branch cols 0..53 = (ref_init | ref_final), obs branch cols 54..107
    # = (observation | init_observation).
    cols1 = jnp.concatenate(
        [_patches3(ref_init_state.astype(f32)), _patches3(ref_final_state.astype(f32)),
         _patches3(observation.astype(f32)), _patches3(init_observation.astype(f32))],
        axis=1)                                                      # (200, 108)

    args = (cols1, prep["s2"], prep["s3"],
            prep["w1"], prep["b1"], prep["w2"], prep["b2"], prep["w3"], prep["b3"],
            prep["wft"], prep["wfo"], prep["bft"], prep["bfo"],
            prep["wm1a"], prep["wm1b"], prep["bm1"],
            prep["wm2"], prep["bm2"], prep["wm3"], prep["bm3"])

    actions, sentence = pl.pallas_call(
        _fused_forward_kernel,
        out_shape=(jax.ShapeDtypeStruct((B, ACT), jnp.float32),
                   jax.ShapeDtypeStruct((B, FEAT), jnp.float32)),
        grid=(1,),
        in_specs=[_full_spec(a) for a in args],
        out_specs=(pl.BlockSpec((B, ACT), lambda i: (0, 0)),
                   pl.BlockSpec((B, FEAT), lambda i: (0, 0))),
        compiler_params=pltpu.CompilerParams(dimension_semantics=("arbitrary",)),
        cost_estimate=_COST,
    )(*args)
    return actions, sentence


# ------------------------- plain-JAX reference (check) ------------------------

def _ref_conv(x, w, b, stride, pad):
    y = jax.lax.conv_general_dilated(
        x, w, window_strides=(stride, stride),
        padding=[(pad, pad), (pad, pad)],
        dimension_numbers=("NCHW", "OIHW", "NCHW"),
        precision=jax.lax.Precision.HIGHEST)
    return y + b[None, :, None, None]


def _ref_cnn2(p, x):
    y = jnp.maximum(_ref_conv(x, p["conv1_w"], p["conv1_b"], 3, 0), 0.0)
    y = jnp.maximum(_ref_conv(y, p["conv2_w"], p["conv2_b"], 2, 2), 0.0)
    y = _ref_conv(y, p["conv3_w"], p["conv3_b"], 2, 1)
    y = jnp.maximum(y.reshape(y.shape[0], -1), 0.0)
    return jnp.dot(y, p["fc1_w"].T, precision=jax.lax.Precision.HIGHEST) + p["fc1_b"]


def _ref_mlp2(p, x):
    hp = jax.lax.Precision.HIGHEST
    h = jnp.maximum(jnp.dot(x, p["fc1_w"].T, precision=hp) + p["fc1_b"], 0.0)
    h = jnp.maximum(jnp.dot(h, p["fc2_w"].T, precision=hp) + p["fc2_b"], 0.0)
    return jnp.dot(h, p["out_w"].T, precision=hp) + p["out_b"]


def reference_forward(params, init_observation, observation,
                      ref_init_state, ref_final_state):
    task = jnp.concatenate([ref_init_state, ref_final_state], axis=1)
    s = _ref_cnn2(params["task_embedding"], task)
    s = s / jnp.sqrt(jnp.sum(s * s, axis=1, keepdims=True))
    obs = jnp.concatenate([observation, init_observation], axis=1)
    of = _ref_cnn2(params["img_cnn"], obs)
    a = _ref_mlp2(params["control"], jnp.concatenate([of, s], axis=1))
    return a, s


# ------------------------------ parameter init -------------------------------

def init_cnn2_params(key, in_channels, out_channels=64, feature_dim=256, scale=0.05):
    ks = jax.random.split(key, 8)
    fc_out = out_channels * 3 * 3
    return {
        "conv1_w": scale * jax.random.normal(ks[0], (16, in_channels, 3, 3), jnp.float32),
        "conv1_b": scale * jax.random.normal(ks[1], (16,), jnp.float32),
        "conv2_w": scale * jax.random.normal(ks[2], (32, 16, 5, 5), jnp.float32),
        "conv2_b": scale * jax.random.normal(ks[3], (32,), jnp.float32),
        "conv3_w": scale * jax.random.normal(ks[4], (out_channels, 32, 3, 3), jnp.float32),
        "conv3_b": scale * jax.random.normal(ks[5], (out_channels,), jnp.float32),
        "fc1_w": scale * jax.random.normal(ks[6], (feature_dim, fc_out), jnp.float32),
        "fc1_b": scale * jax.random.normal(ks[7], (feature_dim,), jnp.float32),
    }


def init_mlp2_params(key, input_dim, hidden_dim=64, feature_dim=6, scale=0.05):
    ks = jax.random.split(key, 6)
    return {
        "fc1_w": scale * jax.random.normal(ks[0], (hidden_dim, input_dim), jnp.float32),
        "fc1_b": scale * jax.random.normal(ks[1], (hidden_dim,), jnp.float32),
        "fc2_w": scale * jax.random.normal(ks[2], (hidden_dim, hidden_dim), jnp.float32),
        "fc2_b": scale * jax.random.normal(ks[3], (hidden_dim,), jnp.float32),
        "out_w": scale * jax.random.normal(ks[4], (feature_dim, hidden_dim), jnp.float32),
        "out_b": scale * jax.random.normal(ks[5], (feature_dim,), jnp.float32),
    }


# ---------------------------------- main --------------------------------------

if __name__ == "__main__":
    key = jax.random.PRNGKey(0)
    k_params, k_inputs = jax.random.split(key)

    TASK_EMBEDDING_DIM, ACTION_DIM, HIDDEN_DIM = FEAT, ACT, HID
    kp = jax.random.split(k_params, 3)
    params = {
        "task_embedding": init_cnn2_params(kp[0], in_channels=6, out_channels=64,
                                           feature_dim=TASK_EMBEDDING_DIM),
        "img_cnn": init_cnn2_params(kp[1], in_channels=6, out_channels=64,
                                    feature_dim=TASK_EMBEDDING_DIM),
        "control": init_mlp2_params(kp[2], input_dim=TASK_EMBEDDING_DIM * 2,
                                    hidden_dim=HIDDEN_DIM, feature_dim=ACTION_DIM),
    }
    prep = prepare_params(params)          # one-time weight repack (outside jit)

    ki = jax.random.split(k_inputs, 4)
    init_observation = jax.random.normal(ki[0], (B, 3, H, W), jnp.float32)
    observation = jax.random.normal(ki[1], (B, 3, H, W), jnp.float32)
    ref_init_state = jax.random.normal(ki[2], (B, 3, H, W), jnp.float32)
    ref_final_state = jax.random.normal(ki[3], (B, 3, H, W), jnp.float32)

    fwd = jax.jit(image_task_embedding_forward)
    actions, sentence = fwd(prep, init_observation, observation,
                            ref_init_state, ref_final_state)
    jax.block_until_ready((actions, sentence))

    assert actions.shape == (B, ACTION_DIM), actions.shape
    assert sentence.shape == (B, TASK_EMBEDDING_DIM), sentence.shape
    assert bool(jnp.all(jnp.isfinite(actions))) and bool(jnp.all(jnp.isfinite(sentence)))

    # semantic check against a plain-JAX (lax.conv) reference of the PyTorch model
    ref_actions, ref_sentence = jax.jit(reference_forward)(
        params, init_observation, observation, ref_init_state, ref_final_state)
    np.testing.assert_allclose(np.asarray(actions), np.asarray(ref_actions),
                               rtol=3e-2, atol=2e-2)
    np.testing.assert_allclose(np.asarray(sentence), np.asarray(ref_sentence),
                               rtol=3e-2, atol=2e-2)

    print("KERNEL_OK")
</pallas_src>

<mosaic_0001>
module attributes {stable_mosaic.version = 11 : i64} {
  func.func @_fused_forward_kernel(%arg0: i32, %arg1: memref<200x108xf32, #tpu.memory_space<vmem>>, %arg2: memref<1600x200xbf16, #tpu.memory_space<vmem>>, %arg3: memref<720x64xbf16, #tpu.memory_space<vmem>>, %arg4: memref<108x32xf32, #tpu.memory_space<vmem>>, %arg5: memref<1x32xf32, #tpu.memory_space<vmem>>, %arg6: memref<25x32x64xf32, #tpu.memory_space<vmem>>, %arg7: memref<1x64xf32, #tpu.memory_space<vmem>>, %arg8: memref<9x64x128xf32, #tpu.memory_space<vmem>>, %arg9: memref<1x128xf32, #tpu.memory_space<vmem>>, %arg10: memref<9x64x256xf32, #tpu.memory_space<vmem>>, %arg11: memref<9x64x256xf32, #tpu.memory_space<vmem>>, %arg12: memref<1x256xf32, #tpu.memory_space<vmem>>, %arg13: memref<1x256xf32, #tpu.memory_space<vmem>>, %arg14: memref<256x64xf32, #tpu.memory_space<vmem>>, %arg15: memref<256x64xf32, #tpu.memory_space<vmem>>, %arg16: memref<1x64xf32, #tpu.memory_space<vmem>>, %arg17: memref<64x64xf32, #tpu.memory_space<vmem>>, %arg18: memref<1x64xf32, #tpu.memory_space<vmem>>, %arg19: memref<64x6xf32, #tpu.memory_space<vmem>>, %arg20: memref<1x6xf32, #tpu.memory_space<vmem>>, %arg21: memref<2x6xf32, #tpu.memory_space<vmem>>, %arg22: memref<2x256xf32, #tpu.memory_space<vmem>>) attributes {dimension_semantics = [#tpu.dimension_semantics<arbitrary>], iteration_bounds = array<i64: 1>, scalar_prefetch = 0 : i64, scratch_operands = 0 : i64, tpu.core_type = #tpu.core_type<tc>, window_params = [{pipeline_mode = #tpu.pipeline_mode<synchronous>, transform_indices = @transform_0, window_bounds = array<i64: 200, 108>}, {pipeline_mode = #tpu.pipeline_mode<synchronous>, transform_indices = @transform_1, window_bounds = array<i64: 1600, 200>}, {pipeline_mode = #tpu.pipeline_mode<synchronous>, transform_indices = @transform_2, window_bounds = array<i64: 720, 64>}, {pipeline_mode = #tpu.pipeline_mode<synchronous>, transform_indices = @transform_3, window_bounds = array<i64: 108, 32>}, {pipeline_mode = #tpu.pipeline_mode<synchronous>, transform_indices = @transform_4, window_bounds = array<i64: 1, 32>}, {pipeline_mode = #tpu.pipeline_mode<synchronous>, transform_indices = @transform_5, window_bounds = array<i64: 25, 32, 64>}, {pipeline_mode = #tpu.pipeline_mode<synchronous>, transform_indices = @transform_6, window_bounds = array<i64: 1, 64>}, {pipeline_mode = #tpu.pipeline_mode<synchronous>, transform_indices = @transform_7, window_bounds = array<i64: 9, 64, 128>}, {pipeline_mode = #tpu.pipeline_mode<synchronous>, transform_indices = @transform_8, window_bounds = array<i64: 1, 128>}, {pipeline_mode = #tpu.pipeline_mode<synchronous>, transform_indices = @transform_9, window_bounds = array<i64: 9, 64, 256>}, {pipeline_mode = #tpu.pipeline_mode<synchronous>, transform_indices = @transform_10, window_bounds = array<i64: 9, 64, 256>}, {pipeline_mode = #tpu.pipeline_mode<synchronous>, transform_indices = @transform_11, window_bounds = array<i64: 1, 256>}, {pipeline_mode = #tpu.pipeline_mode<synchronous>, transform_indices = @transform_12, window_bounds = array<i64: 1, 256>}, {pipeline_mode = #tpu.pipeline_mode<synchronous>, transform_indices = @transform_13, window_bounds = array<i64: 256, 64>}, {pipeline_mode = #tpu.pipeline_mode<synchronous>, transform_indices = @transform_14, window_bounds = array<i64: 256, 64>}, {pipeline_mode = #tpu.pipeline_mode<synchronous>, transform_indices = @transform_15, window_bounds = array<i64: 1, 64>}, {pipeline_mode = #tpu.pipeline_mode<synchronous>, transform_indices = @transform_16, window_bounds = array<i64: 64, 64>}, {pipeline_mode = #tpu.pipeline_mode<synchronous>, transform_indices = @transform_17, window_bounds = array<i64: 1, 64>}, {pipeline_mode = #tpu.pipeline_mode<synchronous>, transform_indices = @transform_18, window_bounds = array<i64: 64, 6>}, {pipeline_mode = #tpu.pipeline_mode<synchronous>, transform_indices = @transform_19, window_bounds = array<i64: 1, 6>}, {pipeline_mode = #tpu.pipeline_mode<synchronous>, transform_indices = @transform_20, window_bounds = array<i64: 2, 6>}, {pipeline_mode = #tpu.pipeline_mode<synchronous>, transform_indices = @transform_21, window_bounds = array<i64: 2, 256>}]} {
    %c0 = arith.constant 0 : index
    %c0_0 = arith.constant 0 : index
    %0 = vector.load %arg1[%c0, %c0_0] : memref<200x108xf32, #tpu.memory_space<vmem>>, vector<200x108xf32>
    %c0_1 = arith.constant 0 : index
    %c0_2 = arith.constant 0 : index
    %1 = vector.load %arg4[%c0_1, %c0_2] : memref<108x32xf32, #tpu.memory_space<vmem>>, vector<108x32xf32>
    %cst = arith.constant dense<0.000000e+00> : vector<200x32xf32>
    %2 = tpu.matmul %0, %1, %cst {dimension_numbers = #tpu.dot_dimension_numbers<[1], [0], [0], [1], [0, 0, 1, 1], [], []>} : vector<200x108xf32>, vector<108x32xf32>, vector<200x32xf32> -> vector<200x32xf32>
    %c0_3 = arith.constant 0 : index
    %c0_4 = arith.constant 0 : index
    %3 = vector.load %arg5[%c0_3, %c0_4] : memref<1x32xf32, #tpu.memory_space<vmem>>, vector<1x32xf32>
    %4 = vector.broadcast %3 : vector<1x32xf32> to vector<200x32xf32>
    %5 = arith.addf %2, %4 : vector<200x32xf32>
    %cst_5 = arith.constant 0.000000e+00 : f32
    %6 = vector.broadcast %cst_5 : f32 to vector<200x32xf32>
    %7 = arith.maximumf %5, %6 : vector<200x32xf32>
    %c0_6 = arith.constant 0 : index
    %c0_7 = arith.constant 0 : index
    %8 = vector.load %arg2[%c0_6, %c0_7] : memref<1600x200xbf16, #tpu.memory_space<vmem>>, vector<64x200xbf16>
    %9 = arith.extf %8 : vector<64x200xbf16> to vector<64x200xf32>
    %cst_8 = arith.constant dense<0.000000e+00> : vector<64x32xf32>
    %10 = tpu.matmul %9, %7, %cst_8 {dimension_numbers = #tpu.dot_dimension_numbers<[1], [0], [0], [1], [0, 0, 1, 1], [], []>} : vector<64x200xf32>, vector<200x32xf32>, vector<64x32xf32> -> vector<64x32xf32>
    %c0_9 = arith.constant 0 : index
    %c0_10 = arith.constant 0 : index
    %c0_11 = arith.constant 0 : index
    %11 = vector.load %arg6[%c0_9, %c0_10, %c0_11] : memref<25x32x64xf32, #tpu.memory_space<vmem>>, vector<1x32x64xf32>
    %12 = vector.shape_cast %11 : vector<1x32x64xf32> to vector<32x64xf32>
    %cst_12 = arith.constant dense<0.000000e+00> : vector<64x64xf32>
    %13 = tpu.matmul %10, %12, %cst_12 {dimension_numbers = #tpu.dot_dimension_numbers<[1], [0], [0], [1], [0, 0, 1, 1], [], []>} : vector<64x32xf32>, vector<32x64xf32>, vector<64x64xf32> -> vector<64x64xf32>
    %c64 = arith.constant 64 : index
    %c0_13 = arith.constant 0 : index
    %14 = vector.load %arg2[%c64, %c0_13] : memref<1600x200xbf16, #tpu.memory_space<vmem>>, vector<64x200xbf16>
    %15 = arith.extf %14 : vector<64x200xbf16> to vector<64x200xf32>
    %cst_14 = arith.constant dense<0.000000e+00> : vector<64x32xf32>
    %16 = tpu.matmul %15, %7, %cst_14 {dimension_numbers = #tpu.dot_dimension_numbers<[1], [0], [0], [1], [0, 0, 1, 1], [], []>} : vector<64x200xf32>, vector<200x32xf32>, vector<64x32xf32> -> vector<64x32xf32>
    %c1 = arith.constant 1 : index
    %c0_15 = arith.constant 0 : index
    %c0_16 = arith.constant 0 : index
    %17 = vector.load %arg6[%c1, %c0_15, %c0_16] : memref<25x32x64xf32, #tpu.memory_space<vmem>>, vector<1x32x64xf32>
    %18 = vector.shape_cast %17 : vector<1x32x64xf32> to vector<32x64xf32>
    %cst_17 = arith.constant dense<0.000000e+00> : vector<64x64xf32>
    %19 = tpu.matmul %16, %18, %cst_17 {dimension_numbers = #tpu.dot_dimension_numbers<[1], [0], [0], [1], [0, 0, 1, 1], [], []>} : vector<64x32xf32>, vector<32x64xf32>, vector<64x64xf32> -> vector<64x64xf32>
    %c128 = arith.constant 128 : index
    %c0_18 = arith.constant 0 : index
    %20 = vector.load %arg2[%c128, %c0_18] : memref<1600x200xbf16, #tpu.memory_space<vmem>>, vector<64x200xbf16>
    %21 = arith.extf %20 : vector<64x200xbf16> to vector<64x200xf32>
    %cst_19 = arith.constant dense<0.000000e+00> : vector<64x32xf32>
    %22 = tpu.matmul %21, %7, %cst_19 {dimension_numbers = #tpu.dot_dimension_numbers<[1], [0], [0], [1], [0, 0, 1, 1], [], []>} : vector<64x200xf32>, vector<200x32xf32>, vector<64x32xf32> -> vector<64x32xf32>
    %c2 = arith.constant 2 : index
    %c0_20 = arith.constant 0 : index
    %c0_21 = arith.constant 0 : index
    %23 = vector.load %arg6[%c2, %c0_20, %c0_21] : memref<25x32x64xf32, #tpu.memory_space<vmem>>, vector<1x32x64xf32>
    %24 = vector.shape_cast %23 : vector<1x32x64xf32> to vector<32x64xf32>
    %cst_22 = arith.constant dense<0.000000e+00> : vector<64x64xf32>
    %25 = tpu.matmul %22, %24, %cst_22 {dimension_numbers = #tpu.dot_dimension_numbers<[1], [0], [0], [1], [0, 0, 1, 1], [], []>} : vector<64x32xf32>, vector<32x64xf32>, vector<64x64xf32> -> vector<64x64xf32>
    %c192 = arith.constant 192 : index
    %c0_23 = arith.constant 0 : index
    %26 = vector.load %arg2[%c192, %c0_23] : memref<1600x200xbf16, #tpu.memory_space<vmem>>, vector<64x200xbf16>
    %27 = arith.extf %26 : vector<64x200xbf16> to vector<64x200xf32>
    %cst_24 = arith.constant dense<0.000000e+00> : vector<64x32xf32>
    %28 = tpu.matmul %27, %7, %cst_24 {dimension_numbers = #tpu.dot_dimension_numbers<[1], [0], [0], [1], [0, 0, 1, 1], [], []>} : vector<64x200xf32>, vector<200x32xf32>, vector<64x32xf32> -> vector<64x32xf32>
    %c3 = arith.constant 3 : index
    %c0_25 = arith.constant 0 : index
    %c0_26 = arith.constant 0 : index
    %29 = vector.load %arg6[%c3, %c0_25, %c0_26] : memref<25x32x64xf32, #tpu.memory_space<vmem>>, vector<1x32x64xf32>
    %30 = vector.shape_cast %29 : vector<1x32x64xf32> to vector<32x64xf32>
    %cst_27 = arith.constant dense<0.000000e+00> : vector<64x64xf32>
    %31 = tpu.matmul %28, %30, %cst_27 {dimension_numbers = #tpu.dot_dimension_numbers<[1], [0], [0], [1], [0, 0, 1, 1], [], []>} : vector<64x32xf32>, vector<32x64xf32>, vector<64x64xf32> -> vector<64x64xf32>
    %c256 = arith.constant 256 : index
    %c0_28 = arith.constant 0 : index
    %32 = vector.load %arg2[%c256, %c0_28] : memref<1600x200xbf16, #tpu.memory_space<vmem>>, vector<64x200xbf16>
    %33 = arith.extf %32 : vector<64x200xbf16> to vector<64x200xf32>
    %cst_29 = arith.constant dense<0.000000e+00> : vector<64x32xf32>
    %34 = tpu.matmul %33, %7, %cst_29 {dimension_numbers = #tpu.dot_dimension_numbers<[1], [0], [0], [1], [0, 0, 1, 1], [], []>} : vector<64x200xf32>, vector<200x32xf32>, vector<64x32xf32> -> vector<64x32xf32>
    %c4 = arith.constant 4 : index
    %c0_30 = arith.constant 0 : index
    %c0_31 = arith.constant 0 : index
    %35 = vector.load %arg6[%c4, %c0_30, %c0_31] : memref<25x32x64xf32, #tpu.memory_space<vmem>>, vector<1x32x64xf32>
    %36 = vector.shape_cast %35 : vector<1x32x64xf32> to vector<32x64xf32>
    %cst_32 = arith.constant dense<0.000000e+00> : vector<64x64xf32>
    %37 = tpu.matmul %34, %36, %cst_32 {dimension_numbers = #tpu.dot_dimension_numbers<[1], [0], [0], [1], [0, 0, 1, 1], [], []>} : vector<64x32xf32>, vector<32x64xf32>, vector<64x64xf32> -> vector<64x64xf32>
    %38 = arith.addf %13, %37 : vector<64x64xf32>
    %c320 = arith.constant 320 : index
    %c0_33 = arith.constant 0 : index
    %39 = vector.load %arg2[%c320, %c0_33] : memref<1600x200xbf16, #tpu.memory_space<vmem>>, vector<64x200xbf16>
    %40 = arith.extf %39 : vector<64x200xbf16> to vector<64x200xf32>
    %cst_34 = arith.constant dense<0.000000e+00> : vector<64x32xf32>
    %41 = tpu.matmul %40, %7, %cst_34 {dimension_numbers = #tpu.dot_dimension_numbers<[1], [0], [0], [1], [0, 0, 1, 1], [], []>} : vector<64x200xf32>, vector<200x32xf32>, vector<64x32xf32> -> vector<64x32xf32>
    %c5 = arith.constant 5 : index
    %c0_35 = arith.constant 0 : index
    %c0_36 = arith.constant 0 : index
    %42 = vector.load %arg6[%c5, %c0_35, %c0_36] : memref<25x32x64xf32, #tpu.memory_space<vmem>>, vector<1x32x64xf32>
    %43 = vector.shape_cast %42 : vector<1x32x64xf32> to vector<32x64xf32>
    %cst_37 = arith.constant dense<0.000000e+00> : vector<64x64xf32>
    %44 = tpu.matmul %41, %43, %cst_37 {dimension_numbers = #tpu.dot_dimension_numbers<[1], [0], [0], [1], [0, 0, 1, 1], [], []>} : vector<64x32xf32>, vector<32x64xf32>, vector<64x64xf32> -> vector<64x64xf32>
    %45 = arith.addf %19, %44 : vector<64x64xf32>
    %c384 = arith.constant 384 : index
    %c0_38 = arith.constant 0 : index
    %46 = vector.load %arg2[%c384, %c0_38] : memref<1600x200xbf16, #tpu.memory_space<vmem>>, vector<64x200xbf16>
    %47 = arith.extf %46 : vector<64x200xbf16> to vector<64x200xf32>
    %cst_39 = arith.constant dense<0.000000e+00> : vector<64x32xf32>
    %48 = tpu.matmul %47, %7, %cst_39 {dimension_numbers = #tpu.dot_dimension_numbers<[1], [0], [0], [1], [0, 0, 1, 1], [], []>} : vector<64x200xf32>, vector<200x32xf32>, vector<64x32xf32> -> vector<64x32xf32>
    %c6 = arith.constant 6 : index
    %c0_40 = arith.constant 0 : index
    %c0_41 = arith.constant 0 : index
    %49 = vector.load %arg6[%c6, %c0_40, %c0_41] : memref<25x32x64xf32, #tpu.memory_space<vmem>>, vector<1x32x64xf32>
    %50 = vector.shape_cast %49 : vector<1x32x64xf32> to vector<32x64xf32>
    %cst_42 = arith.constant dense<0.000000e+00> : vector<64x64xf32>
    %51 = tpu.matmul %48, %50, %cst_42 {dimension_numbers = #tpu.dot_dimension_numbers<[1], [0], [0], [1], [0, 0, 1, 1], [], []>} : vector<64x32xf32>, vector<32x64xf32>, vector<64x64xf32> -> vector<64x64xf32>
    %52 = arith.addf %25, %51 : vector<64x64xf32>
    %c448 = arith.constant 448 : index
    %c0_43 = arith.constant 0 : index
    %53 = vector.load %arg2[%c448, %c0_43] : memref<1600x200xbf16, #tpu.memory_space<vmem>>, vector<64x200xbf16>
    %54 = arith.extf %53 : vector<64x200xbf16> to vector<64x200xf32>
    %cst_44 = arith.constant dense<0.000000e+00> : vector<64x32xf32>
    %55 = tpu.matmul %54, %7, %cst_44 {dimension_numbers = #tpu.dot_dimension_numbers<[1], [0], [0], [1], [0, 0, 1, 1], [], []>} : vector<64x200xf32>, vector<200x32xf32>, vector<64x32xf32> -> vector<64x32xf32>
    %c7 = arith.constant 7 : index
    %c0_45 = arith.constant 0 : index
    %c0_46 = arith.constant 0 : index
    %56 = vector.load %arg6[%c7, %c0_45, %c0_46] : memref<25x32x64xf32, #tpu.memory_space<vmem>>, vector<1x32x64xf32>
    %57 = vector.shape_cast %56 : vector<1x32x64xf32> to vector<32x64xf32>
    %cst_47 = arith.constant dense<0.000000e+00> : vector<64x64xf32>
    %58 = tpu.matmul %55, %57, %cst_47 {dimension_numbers = #tpu.dot_dimension_numbers<[1], [0], [0], [1], [0, 0, 1, 1], [], []>} : vector<64x32xf32>, vector<32x64xf32>, vector<64x64xf32> -> vector<64x64xf32>
    %59 = arith.addf %31, %58 : vector<64x64xf32>
    %c512 = arith.constant 512 : index
    %c0_48 = arith.constant 0 : index
    %60 = vector.load %arg2[%c512, %c0_48] : memref<1600x200xbf16, #tpu.memory_space<vmem>>, vector<64x200xbf16>
    %61 = arith.extf %60 : vector<64x200xbf16> to vector<64x200xf32>
    %cst_49 = arith.constant dense<0.000000e+00> : vector<64x32xf32>
    %62 = tpu.matmul %61, %7, %cst_49 {dimension_numbers = #tpu.dot_dimension_numbers<[1], [0], [0], [1], [0, 0, 1, 1], [], []>} : vector<64x200xf32>, vector<200x32xf32>, vector<64x32xf32> -> vector<64x32xf32>
    %c8 = arith.constant 8 : index
    %c0_50 = arith.constant 0 : index
    %c0_51 = arith.constant 0 : index
    %63 = vector.load %arg6[%c8, %c0_50, %c0_51] : memref<25x32x64xf32, #tpu.memory_space<vmem>>, vector<1x32x64xf32>
    %64 = vector.shape_cast %63 : vector<1x32x64xf32> to vector<32x64xf32>
    %cst_52 = arith.constant dense<0.000000e+00> : vector<64x64xf32>
    %65 = tpu.matmul %62, %64, %cst_52 {dimension_numbers = #tpu.dot_dimension_numbers<[1], [0], [0], [1], [0, 0, 1, 1], [], []>} : vector<64x32xf32>, vector<32x64xf32>, vector<64x64xf32> -> vector<64x64xf32>
    %66 = arith.addf %38, %65 : vector<64x64xf32>
    %c576 = arith.constant 576 : index
    %c0_53 = arith.constant 0 : index
    %67 = vector.load %arg2[%c576, %c0_53] : memref<1600x200xbf16, #tpu.memory_space<vmem>>, vector<64x200xbf16>
    %68 = arith.extf %67 : vector<64x200xbf16> to vector<64x200xf32>
    %cst_54 = arith.constant dense<0.000000e+00> : vector<64x32xf32>
    %69 = tpu.matmul %68, %7, %cst_54 {dimension_numbers = #tpu.dot_dimension_numbers<[1], [0], [0], [1], [0, 0, 1, 1], [], []>} : vector<64x200xf32>, vector<200x32xf32>, vector<64x32xf32> -> vector<64x32xf32>
    %c9 = arith.constant 9 : index
    %c0_55 = arith.constant 0 : index
    %c0_56 = arith.constant 0 : index
    %70 = vector.load %arg6[%c9, %c0_55, %c0_56] : memref<25x32x64xf32, #tpu.memory_space<vmem>>, vector<1x32x64xf32>
    %71 = vector.shape_cast %70 : vector<1x32x64xf32> to vector<32x64xf32>
    %cst_57 = arith.constant dense<0.000000e+00> : vector<64x64xf32>
    %72 = tpu.matmul %69, %71, %cst_57 {dimension_numbers = #tpu.dot_dimension_numbers<[1], [0], [0], [1], [0, 0, 1, 1], [], []>} : vector<64x32xf32>, vector<32x64xf32>, vector<64x64xf32> -> vector<64x64xf32>
    %73 = arith.addf %45, %72 : vector<64x64xf32>
    %c640 = arith.constant 640 : index
    %c0_58 = arith.constant 0 : index
    %74 = vector.load %arg2[%c640, %c0_58] : memref<1600x200xbf16, #tpu.memory_space<vmem>>, vector<64x200xbf16>
    %75 = arith.extf %74 : vector<64x200xbf16> to vector<64x200xf32>
    %cst_59 = arith.constant dense<0.000000e+00> : vector<64x32xf32>
    %76 = tpu.matmul %75, %7, %cst_59 {dimension_numbers = #tpu.dot_dimension_numbers<[1], [0], [0], [1], [0, 0, 1, 1], [], []>} : vector<64x200xf32>, vector<200x32xf32>, vector<64x32xf32> -> vector<64x32xf32>
    %c10 = arith.constant 10 : index
    %c0_60 = arith.constant 0 : index
    %c0_61 = arith.constant 0 : index
    %77 = vector.load %arg6[%c10, %c0_60, %c0_61] : memref<25x32x64xf32, #tpu.memory_space<vmem>>, vector<1x32x64xf32>
    %78 = vector.shape_cast %77 : vector<1x32x64xf32> to vector<32x64xf32>
    %cst_62 = arith.constant dense<0.000000e+00> : vector<64x64xf32>
    %79 = tpu.matmul %76, %78, %cst_62 {dimension_numbers = #tpu.dot_dimension_numbers<[1], [0], [0], [1], [0, 0, 1, 1], [], []>} : vector<64x32xf32>, vector<32x64xf32>, vector<64x64xf32> -> vector<64x64xf32>
    %80 = arith.addf %52, %79 : vector<64x64xf32>
    %c704 = arith.constant 704 : index
    %c0_63 = arith.constant 0 : index
    %81 = vector.load %arg2[%c704, %c0_63] : memref<1600x200xbf16, #tpu.memory_space<vmem>>, vector<64x200xbf16>
    %82 = arith.extf %81 : vector<64x200xbf16> to vector<64x200xf32>
    %cst_64 = arith.constant dense<0.000000e+00> : vector<64x32xf32>
    %83 = tpu.matmul %82, %7, %cst_64 {dimension_numbers = #tpu.dot_dimension_numbers<[1], [0], [0], [1], [0, 0, 1, 1], [], []>} : vector<64x200xf32>, vector<200x32xf32>, vector<64x32xf32> -> vector<64x32xf32>
    %c11 = arith.constant 11 : index
    %c0_65 = arith.constant 0 : index
    %c0_66 = arith.constant 0 : index
    %84 = vector.load %arg6[%c11, %c0_65, %c0_66] : memref<25x32x64xf32, #tpu.memory_space<vmem>>, vector<1x32x64xf32>
    %85 = vector.shape_cast %84 : vector<1x32x64xf32> to vector<32x64xf32>
    %cst_67 = arith.constant dense<0.000000e+00> : vector<64x64xf32>
    %86 = tpu.matmul %83, %85, %cst_67 {dimension_numbers = #tpu.dot_dimension_numbers<[1], [0], [0], [1], [0, 0, 1, 1], [], []>} : vector<64x32xf32>, vector<32x64xf32>, vector<64x64xf32> -> vector<64x64xf32>
    %87 = arith.addf %59, %86 : vector<64x64xf32>
    %c768 = arith.constant 768 : index
    %c0_68 = arith.constant 0 : index
    %88 = vector.load %arg2[%c768, %c0_68] : memref<1600x200xbf16, #tpu.memory_space<vmem>>, vector<64x200xbf16>
    %89 = arith.extf %88 : vector<64x200xbf16> to vector<64x200xf32>
    %cst_69 = arith.constant dense<0.000000e+00> : vector<64x32xf32>
    %90 = tpu.matmul %89, %7, %cst_69 {dimension_numbers = #tpu.dot_dimension_numbers<[1], [0], [0], [1], [0, 0, 1, 1], [], []>} : vector<64x200xf32>, vector<200x32xf32>, vector<64x32xf32> -> vector<64x32xf32>
    %c12 = arith.constant 12 : index
    %c0_70 = arith.constant 0 : index
    %c0_71 = arith.constant 0 : index
    %91 = vector.load %arg6[%c12, %c0_70, %c0_71] : memref<25x32x64xf32, #tpu.memory_space<vmem>>, vector<1x32x64xf32>
    %92 = vector.shape_cast %91 : vector<1x32x64xf32> to vector<32x64xf32>
    %cst_72 = arith.constant dense<0.000000e+00> : vector<64x64xf32>
    %93 = tpu.matmul %90, %92, %cst_72 {dimension_numbers = #tpu.dot_dimension_numbers<[1], [0], [0], [1], [0, 0, 1, 1], [], []>} : vector<64x32xf32>, vector<32x64xf32>, vector<64x64xf32> -> vector<64x64xf32>
    %94 = arith.addf %66, %93 : vector<64x64xf32>
    %c832 = arith.constant 832 : index
    %c0_73 = arith.constant 0 : index
    %95 = vector.load %arg2[%c832, %c0_73] : memref<1600x200xbf16, #tpu.memory_space<vmem>>, vector<64x200xbf16>
    %96 = arith.extf %95 : vector<64x200xbf16> to vector<64x200xf32>
    %cst_74 = arith.constant dense<0.000000e+00> : vector<64x32xf32>
    %97 = tpu.matmul %96, %7, %cst_74 {dimension_numbers = #tpu.dot_dimension_numbers<[1], [0], [0], [1], [0, 0, 1, 1], [], []>} : vector<64x200xf32>, vector<200x32xf32>, vector<64x32xf32> -> vector<64x32xf32>
    %c13 = arith.constant 13 : index
    %c0_75 = arith.constant 0 : index
    %c0_76 = arith.constant 0 : index
    %98 = vector.load %arg6[%c13, %c0_75, %c0_76] : memref<25x32x64xf32, #tpu.memory_space<vmem>>, vector<1x32x64xf32>
    %99 = vector.shape_cast %98 : vector<1x32x64xf32> to vector<32x64xf32>
    %cst_77 = arith.constant dense<0.000000e+00> : vector<64x64xf32>
    %100 = tpu.matmul %97, %99, %cst_77 {dimension_numbers = #tpu.dot_dimension_numbers<[1], [0], [0], [1], [0, 0, 1, 1], [], []>} : vector<64x32xf32>, vector<32x64xf32>, vector<64x64xf32> -> vector<64x64xf32>
    %101 = arith.addf %73, %100 : vector<64x64xf32>
    %c896 = arith.constant 896 : index
    %c0_78 = arith.constant 0 : index
    %102 = vector.load %arg2[%c896, %c0_78] : memref<1600x200xbf16, #tpu.memory_space<vmem>>, vector<64x200xbf16>
    %103 = arith.extf %102 : vector<64x200xbf16> to vector<64x200xf32>
    %cst_79 = arith.constant dense<0.000000e+00> : vector<64x32xf32>
    %104 = tpu.matmul %103, %7, %cst_79 {dimension_numbers = #tpu.dot_dimension_numbers<[1], [0], [0], [1], [0, 0, 1, 1], [], []>} : vector<64x200xf32>, vector<200x32xf32>, vector<64x32xf32> -> vector<64x32xf32>
    %c14 = arith.constant 14 : index
    %c0_80 = arith.constant 0 : index
    %c0_81 = arith.constant 0 : index
    %105 = vector.load %arg6[%c14, %c0_80, %c0_81] : memref<25x32x64xf32, #tpu.memory_space<vmem>>, vector<1x32x64xf32>
    %106 = vector.shape_cast %105 : vector<1x32x64xf32> to vector<32x64xf32>
    %cst_82 = arith.constant dense<0.000000e+00> : vector<64x64xf32>
    %107 = tpu.matmul %104, %106, %cst_82 {dimension_numbers = #tpu.dot_dimension_numbers<[1], [0], [0], [1], [0, 0, 1, 1], [], []>} : vector<64x32xf32>, vector<32x64xf32>, vector<64x64xf32> -> vector<64x64xf32>
    %108 = arith.addf %80, %107 : vector<64x64xf32>
    %c960 = arith.constant 960 : index
    %c0_83 = arith.constant 0 : index
    %109 = vector.load %arg2[%c960, %c0_83] : memref<1600x200xbf16, #tpu.memory_space<vmem>>, vector<64x200xbf16>
    %110 = arith.extf %109 : vector<64x200xbf16> to vector<64x200xf32>
    %cst_84 = arith.constant dense<0.000000e+00> : vector<64x32xf32>
    %111 = tpu.matmul %110, %7, %cst_84 {dimension_numbers = #tpu.dot_dimension_numbers<[1], [0], [0], [1], [0, 0, 1, 1], [], []>} : vector<64x200xf32>, vector<200x32xf32>, vector<64x32xf32> -> vector<64x32xf32>
    %c15 = arith.constant 15 : index
    %c0_85 = arith.constant 0 : index
    %c0_86 = arith.constant 0 : index
    %112 = vector.load %arg6[%c15, %c0_85, %c0_86] : memref<25x32x64xf32, #tpu.memory_space<vmem>>, vector<1x32x64xf32>
    %113 = vector.shape_cast %112 : vector<1x32x64xf32> to vector<32x64xf32>
    %cst_87 = arith.constant dense<0.000000e+00> : vector<64x64xf32>
    %114 = tpu.matmul %111, %113, %cst_87 {dimension_numbers = #tpu.dot_dimension_numbers<[1], [0], [0], [1], [0, 0, 1, 1], [], []>} : vector<64x32xf32>, vector<32x64xf32>, vector<64x64xf32> -> vector<64x64xf32>
    %115 = arith.addf %87, %114 : vector<64x64xf32>
    %c1024 = arith.constant 1024 : index
    %c0_88 = arith.constant 0 : index
    %116 = vector.load %arg2[%c1024, %c0_88] : memref<1600x200xbf16, #tpu.memory_space<vmem>>, vector<64x200xbf16>
    %117 = arith.extf %116 : vector<64x200xbf16> to vector<64x200xf32>
    %cst_89 = arith.constant dense<0.000000e+00> : vector<64x32xf32>
    %118 = tpu.matmul %117, %7, %cst_89 {dimension_numbers = #tpu.dot_dimension_numbers<[1], [0], [0], [1], [0, 0, 1, 1], [], []>} : vector<64x200xf32>, vector<200x32xf32>, vector<64x32xf32> -> vector<64x32xf32>
    %c16 = arith.constant 16 : index
    %c0_90 = arith.constant 0 : index
    %c0_91 = arith.constant 0 : index
    %119 = vector.load %arg6[%c16, %c0_90, %c0_91] : memref<25x32x64xf32, #tpu.memory_space<vmem>>, vector<1x32x64xf32>
    %120 = vector.shape_cast %119 : vector<1x32x64xf32> to vector<32x64xf32>
    %cst_92 = arith.constant dense<0.000000e+00> : vector<64x64xf32>
    %121 = tpu.matmul %118, %120, %cst_92 {dimension_numbers = #tpu.dot_dimension_numbers<[1], [0], [0], [1], [0, 0, 1, 1], [], []>} : vector<64x32xf32>, vector<32x64xf32>, vector<64x64xf32> -> vector<64x64xf32>
    %122 = arith.addf %94, %121 : vector<64x64xf32>
    %c1088 = arith.constant 1088 : index
    %c0_93 = arith.constant 0 : index
    %123 = vector.load %arg2[%c1088, %c0_93] : memref<1600x200xbf16, #tpu.memory_space<vmem>>, vector<64x200xbf16>
    %124 = arith.extf %123 : vector<64x200xbf16> to vector<64x200xf32>
    %cst_94 = arith.constant dense<0.000000e+00> : vector<64x32xf32>
    %125 = tpu.matmul %124, %7, %cst_94 {dimension_numbers = #tpu.dot_dimension_numbers<[1], [0], [0], [1], [0, 0, 1, 1], [], []>} : vector<64x200xf32>, vector<200x32xf32>, vector<64x32xf32> -> vector<64x32xf32>
    %c17 = arith.constant 17 : index
    %c0_95 = arith.constant 0 : index
    %c0_96 = arith.constant 0 : index
    %126 = vector.load %arg6[%c17, %c0_95, %c0_96] : memref<25x32x64xf32, #tpu.memory_space<vmem>>, vector<1x32x64xf32>
    %127 = vector.shape_cast %126 : vector<1x32x64xf32> to vector<32x64xf32>
    %cst_97 = arith.constant dense<0.000000e+00> : vector<64x64xf32>
    %128 = tpu.matmul %125, %127, %cst_97 {dimension_numbers = #tpu.dot_dimension_numbers<[1], [0], [0], [1], [0, 0, 1, 1], [], []>} : vector<64x32xf32>, vector<32x64xf32>, vector<64x64xf32> -> vector<64x64xf32>
    %129 = arith.addf %101, %128 : vector<64x64xf32>
    %c1152 = arith.constant 1152 : index
    %c0_98 = arith.constant 0 : index
    %130 = vector.load %arg2[%c1152, %c0_98] : memref<1600x200xbf16, #tpu.memory_space<vmem>>, vector<64x200xbf16>
    %131 = arith.extf %130 : vector<64x200xbf16> to vector<64x200xf32>
    %cst_99 = arith.constant dense<0.000000e+00> : vector<64x32xf32>
    %132 = tpu.matmul %131, %7, %cst_99 {dimension_numbers = #tpu.dot_dimension_numbers<[1], [0], [0], [1], [0, 0, 1, 1], [], []>} : vector<64x200xf32>, vector<200x32xf32>, vector<64x32xf32> -> vector<64x32xf32>
    %c18 = arith.constant 18 : index
    %c0_100 = arith.constant 0 : index
    %c0_101 = arith.constant 0 : index
    %133 = vector.load %arg6[%c18, %c0_100, %c0_101] : memref<25x32x64xf32, #tpu.memory_space<vmem>>, vector<1x32x64xf32>
    %134 = vector.shape_cast %133 : vector<1x32x64xf32> to vector<32x64xf32>
    %cst_102 = arith.constant dense<0.000000e+00> : vector<64x64xf32>
    %135 = tpu.matmul %132, %134, %cst_102 {dimension_numbers = #tpu.dot_dimension_numbers<[1], [0], [0], [1], [0, 0, 1, 1], [], []>} : vector<64x32xf32>, vector<32x64xf32>, vector<64x64xf32> -> vector<64x64xf32>
    %136 = arith.addf %108, %135 : vector<64x64xf32>
    %c1216 = arith.constant 1216 : index
    %c0_103 = arith.constant 0 : index
    %137 = vector.load %arg2[%c1216, %c0_103] : memref<1600x200xbf16, #tpu.memory_space<vmem>>, vector<64x200xbf16>
    %138 = arith.extf %137 : vector<64x200xbf16> to vector<64x200xf32>
    %cst_104 = arith.constant dense<0.000000e+00> : vector<64x32xf32>
    %139 = tpu.matmul %138, %7, %cst_104 {dimension_numbers = #tpu.dot_dimension_numbers<[1], [0], [0], [1], [0, 0, 1, 1], [], []>} : vector<64x200xf32>, vector<200x32xf32>, vector<64x32xf32> -> vector<64x32xf32>
    %c19 = arith.constant 19 : index
    %c0_105 = arith.constant 0 : index
    %c0_106 = arith.constant 0 : index
    %140 = vector.load %arg6[%c19, %c0_105, %c0_106] : memref<25x32x64xf32, #tpu.memory_space<vmem>>, vector<1x32x64xf32>
    %141 = vector.shape_cast %140 : vector<1x32x64xf32> to vector<32x64xf32>
    %cst_107 = arith.constant dense<0.000000e+00> : vector<64x64xf32>
    %142 = tpu.matmul %139, %141, %cst_107 {dimension_numbers = #tpu.dot_dimension_numbers<[1], [0], [0], [1], [0, 0, 1, 1], [], []>} : vector<64x32xf32>, vector<32x64xf32>, vector<64x64xf32> -> vector<64x64xf32>
    %143 = arith.addf %115, %142 : vector<64x64xf32>
    %c1280 = arith.constant 1280 : index
    %c0_108 = arith.constant 0 : index
    %144 = vector.load %arg2[%c1280, %c0_108] : memref<1600x200xbf16, #tpu.memory_space<vmem>>, vector<64x200xbf16>
    %145 = arith.extf %144 : vector<64x200xbf16> to vector<64x200xf32>
    %cst_109 = arith.constant dense<0.000000e+00> : vector<64x32xf32>
    %146 = tpu.matmul %145, %7, %cst_109 {dimension_numbers = #tpu.dot_dimension_numbers<[1], [0], [0], [1], [0, 0, 1, 1], [], []>} : vector<64x200xf32>, vector<200x32xf32>, vector<64x32xf32> -> vector<64x32xf32>
    %c20 = arith.constant 20 : index
    %c0_110 = arith.constant 0 : index
    %c0_111 = arith.constant 0 : index
    %147 = vector.load %arg6[%c20, %c0_110, %c0_111] : memref<25x32x64xf32, #tpu.memory_space<vmem>>, vector<1x32x64xf32>
    %148 = vector.shape_cast %147 : vector<1x32x64xf32> to vector<32x64xf32>
    %cst_112 = arith.constant dense<0.000000e+00> : vector<64x64xf32>
    %149 = tpu.matmul %146, %148, %cst_112 {dimension_numbers = #tpu.dot_dimension_numbers<[1], [0], [0], [1], [0, 0, 1, 1], [], []>} : vector<64x32xf32>, vector<32x64xf32>, vector<64x64xf32> -> vector<64x64xf32>
    %150 = arith.addf %122, %149 : vector<64x64xf32>
    %c1344 = arith.constant 1344 : index
    %c0_113 = arith.constant 0 : index
    %151 = vector.load %arg2[%c1344, %c0_113] : memref<1600x200xbf16, #tpu.memory_space<vmem>>, vector<64x200xbf16>
    %152 = arith.extf %151 : vector<64x200xbf16> to vector<64x200xf32>
    %cst_114 = arith.constant dense<0.000000e+00> : vector<64x32xf32>
    %153 = tpu.matmul %152, %7, %cst_114 {dimension_numbers = #tpu.dot_dimension_numbers<[1], [0], [0], [1], [0, 0, 1, 1], [], []>} : vector<64x200xf32>, vector<200x32xf32>, vector<64x32xf32> -> vector<64x32xf32>
    %c21 = arith.constant 21 : index
    %c0_115 = arith.constant 0 : index
    %c0_116 = arith.constant 0 : index
    %154 = vector.load %arg6[%c21, %c0_115, %c0_116] : memref<25x32x64xf32, #tpu.memory_space<vmem>>, vector<1x32x64xf32>
    %155 = vector.shape_cast %154 : vector<1x32x64xf32> to vector<32x64xf32>
    %cst_117 = arith.constant dense<0.000000e+00> : vector<64x64xf32>
    %156 = tpu.matmul %153, %155, %cst_117 {dimension_numbers = #tpu.dot_dimension_numbers<[1], [0], [0], [1], [0, 0, 1, 1], [], []>} : vector<64x32xf32>, vector<32x64xf32>, vector<64x64xf32> -> vector<64x64xf32>
    %157 = arith.addf %129, %156 : vector<64x64xf32>
    %c1408 = arith.constant 1408 : index
    %c0_118 = arith.constant 0 : index
    %158 = vector.load %arg2[%c1408, %c0_118] : memref<1600x200xbf16, #tpu.memory_space<vmem>>, vector<64x200xbf16>
    %159 = arith.extf %158 : vector<64x200xbf16> to vector<64x200xf32>
    %cst_119 = arith.constant dense<0.000000e+00> : vector<64x32xf32>
    %160 = tpu.matmul %159, %7, %cst_119 {dimension_numbers = #tpu.dot_dimension_numbers<[1], [0], [0], [1], [0, 0, 1, 1], [], []>} : vector<64x200xf32>, vector<200x32xf32>, vector<64x32xf32> -> vector<64x32xf32>
    %c22 = arith.constant 22 : index
    %c0_120 = arith.constant 0 : index
    %c0_121 = arith.constant 0 : index
    %161 = vector.load %arg6[%c22, %c0_120, %c0_121] : memref<25x32x64xf32, #tpu.memory_space<vmem>>, vector<1x32x64xf32>
    %162 = vector.shape_cast %161 : vector<1x32x64xf32> to vector<32x64xf32>
    %cst_122 = arith.constant dense<0.000000e+00> : vector<64x64xf32>
    %163 = tpu.matmul %160, %162, %cst_122 {dimension_numbers = #tpu.dot_dimension_numbers<[1], [0], [0], [1], [0, 0, 1, 1], [], []>} : vector<64x32xf32>, vector<32x64xf32>, vector<64x64xf32> -> vector<64x64xf32>
    %164 = arith.addf %136, %163 : vector<64x64xf32>
    %c1472 = arith.constant 1472 : index
    %c0_123 = arith.constant 0 : index
    %165 = vector.load %arg2[%c1472, %c0_123] : memref<1600x200xbf16, #tpu.memory_space<vmem>>, vector<64x200xbf16>
    %166 = arith.extf %165 : vector<64x200xbf16> to vector<64x200xf32>
    %cst_124 = arith.constant dense<0.000000e+00> : vector<64x32xf32>
    %167 = tpu.matmul %166, %7, %cst_124 {dimension_numbers = #tpu.dot_dimension_numbers<[1], [0], [0], [1], [0, 0, 1, 1], [], []>} : vector<64x200xf32>, vector<200x32xf32>, vector<64x32xf32> -> vector<64x32xf32>
    %c23 = arith.constant 23 : index
    %c0_125 = arith.constant 0 : index
    %c0_126 = arith.constant 0 : index
    %168 = vector.load %arg6[%c23, %c0_125, %c0_126] : memref<25x32x64xf32, #tpu.memory_space<vmem>>, vector<1x32x64xf32>
    %169 = vector.shape_cast %168 : vector<1x32x64xf32> to vector<32x64xf32>
    %cst_127 = arith.constant dense<0.000000e+00> : vector<64x64xf32>
    %170 = tpu.matmul %167, %169, %cst_127 {dimension_numbers = #tpu.dot_dimension_numbers<[1], [0], [0], [1], [0, 0, 1, 1], [], []>} : vector<64x32xf32>, vector<32x64xf32>, vector<64x64xf32> -> vector<64x64xf32>
    %171 = arith.addf %143, %170 : vector<64x64xf32>
    %c1536 = arith.constant 1536 : index
    %c0_128 = arith.constant 0 : index
    %172 = vector.load %arg2[%c1536, %c0_128] : memref<1600x200xbf16, #tpu.memory_space<vmem>>, vector<64x200xbf16>
    %173 = arith.extf %172 : vector<64x200xbf16> to vector<64x200xf32>
    %cst_129 = arith.constant dense<0.000000e+00> : vector<64x32xf32>
    %174 = tpu.matmul %173, %7, %cst_129 {dimension_numbers = #tpu.dot_dimension_numbers<[1], [0], [0], [1], [0, 0, 1, 1], [], []>} : vector<64x200xf32>, vector<200x32xf32>, vector<64x32xf32> -> vector<64x32xf32>
    %c24 = arith.constant 24 : index
    %c0_130 = arith.constant 0 : index
    %c0_131 = arith.constant 0 : index
    %175 = vector.load %arg6[%c24, %c0_130, %c0_131] : memref<25x32x64xf32, #tpu.memory_space<vmem>>, vector<1x32x64xf32>
    %176 = vector.shape_cast %175 : vector<1x32x64xf32> to vector<32x64xf32>
    %cst_132 = arith.constant dense<0.000000e+00> : vector<64x64xf32>
    %177 = tpu.matmul %174, %176, %cst_132 {dimension_numbers = #tpu.dot_dimension_numbers<[1], [0], [0], [1], [0, 0, 1, 1], [], []>} : vector<64x32xf32>, vector<32x64xf32>, vector<64x64xf32> -> vector<64x64xf32>
    %178 = arith.addf %150, %177 : vector<64x64xf32>
    %179 = arith.addf %178, %157 : vector<64x64xf32>
    %180 = arith.addf %179, %164 : vector<64x64xf32>
    %181 = arith.addf %180, %171 : vector<64x64xf32>
    %c0_133 = arith.constant 0 : index
    %c0_134 = arith.constant 0 : index
    %182 = vector.load %arg7[%c0_133, %c0_134] : memref<1x64xf32, #tpu.memory_space<vmem>>, vector<1x64xf32>
    %183 = vector.broadcast %182 : vector<1x64xf32> to vector<64x64xf32>
    %184 = arith.addf %181, %183 : vector<64x64xf32>
    %cst_135 = arith.constant 0.000000e+00 : f32
    %185 = vector.broadcast %cst_135 : f32 to vector<64x64xf32>
    %186 = arith.maximumf %184, %185 : vector<64x64xf32>
    %c0_136 = arith.constant 0 : index
    %c0_137 = arith.constant 0 : index
    %187 = vector.load %arg3[%c0_136, %c0_137] : memref<720x64xbf16, #tpu.memory_space<vmem>>, vector<80x64xbf16>
    %188 = arith.extf %187 : vector<80x64xbf16> to vector<80x64xf32>
    %cst_138 = arith.constant dense<0.000000e+00> : vector<80x64xf32>
    %189 = tpu.matmul %188, %186, %cst_138 {dimension_numbers = #tpu.dot_dimension_numbers<[1], [0], [0], [1], [0, 0, 1, 1], [], []>} : vector<80x64xf32>, vector<64x64xf32>, vector<80x64xf32> -> vector<80x64xf32>
    %c0_139 = arith.constant 0 : index
    %c0_140 = arith.constant 0 : index
    %c0_141 = arith.constant 0 : index
    %190 = vector.load %arg8[%c0_139, %c0_140, %c0_141] : memref<9x64x128xf32, #tpu.memory_space<vmem>>, vector<1x64x128xf32>
    %191 = vector.shape_cast %190 : vector<1x64x128xf32> to vector<64x128xf32>
    %cst_142 = arith.constant dense<0.000000e+00> : vector<80x128xf32>
    %192 = tpu.matmul %189, %191, %cst_142 {dimension_numbers = #tpu.dot_dimension_numbers<[1], [0], [0], [1], [0, 0, 1, 1], [], []>} : vector<80x64xf32>, vector<64x128xf32>, vector<80x128xf32> -> vector<80x128xf32>
    %c80 = arith.constant 80 : index
    %c0_143 = arith.constant 0 : index
    %193 = vector.load %arg3[%c80, %c0_143] : memref<720x64xbf16, #tpu.memory_space<vmem>>, vector<80x64xbf16>
    %194 = arith.extf %193 : vector<80x64xbf16> to vector<80x64xf32>
    %cst_144 = arith.constant dense<0.000000e+00> : vector<80x64xf32>
    %195 = tpu.matmul %194, %186, %cst_144 {dimension_numbers = #tpu.dot_dimension_numbers<[1], [0], [0], [1], [0, 0, 1, 1], [], []>} : vector<80x64xf32>, vector<64x64xf32>, vector<80x64xf32> -> vector<80x64xf32>
    %c1_145 = arith.constant 1 : index
    %c0_146 = arith.constant 0 : index
    %c0_147 = arith.constant 0 : index
    %196 = vector.load %arg8[%c1_145, %c0_146, %c0_147] : memref<9x64x128xf32, #tpu.memory_space<vmem>>, vector<1x64x128xf32>
    %197 = vector.shape_cast %196 : vector<1x64x128xf32> to vector<64x128xf32>
    %cst_148 = arith.constant dense<0.000000e+00> : vector<80x128xf32>
    %198 = tpu.matmul %195, %197, %cst_148 {dimension_numbers = #tpu.dot_dimension_numbers<[1], [0], [0], [1], [0, 0, 1, 1], [], []>} : vector<80x64xf32>, vector<64x128xf32>, vector<80x128xf32> -> vector<80x128xf32>
    %c160 = arith.constant 160 : index
    %c0_149 = arith.constant 0 : index
    %199 = vector.load %arg3[%c160, %c0_149] : memref<720x64xbf16, #tpu.memory_space<vmem>>, vector<80x64xbf16>
    %200 = arith.extf %199 : vector<80x64xbf16> to vector<80x64xf32>
    %cst_150 = arith.constant dense<0.000000e+00> : vector<80x64xf32>
    %201 = tpu.matmul %200, %186, %cst_150 {dimension_numbers = #tpu.dot_dimension_numbers<[1], [0], [0], [1], [0, 0, 1, 1], [], []>} : vector<80x64xf32>, vector<64x64xf32>, vector<80x64xf32> -> vector<80x64xf32>
    %c2_151 = arith.constant 2 : index
    %c0_152 = arith.constant 0 : index
    %c0_153 = arith.constant 0 : index
    %202 = vector.load %arg8[%c2_151, %c0_152, %c0_153] : memref<9x64x128xf32, #tpu.memory_space<vmem>>, vector<1x64x128xf32>
    %203 = vector.shape_cast %202 : vector<1x64x128xf32> to vector<64x128xf32>
    %cst_154 = arith.constant dense<0.000000e+00> : vector<80x128xf32>
    %204 = tpu.matmul %201, %203, %cst_154 {dimension_numbers = #tpu.dot_dimension_numbers<[1], [0], [0], [1], [0, 0, 1, 1], [], []>} : vector<80x64xf32>, vector<64x128xf32>, vector<80x128xf32> -> vector<80x128xf32>
    %c240 = arith.constant 240 : index
    %c0_155 = arith.constant 0 : index
    %205 = vector.load %arg3[%c240, %c0_155] : memref<720x64xbf16, #tpu.memory_space<vmem>>, vector<80x64xbf16>
    %206 = arith.extf %205 : vector<80x64xbf16> to vector<80x64xf32>
    %cst_156 = arith.constant dense<0.000000e+00> : vector<80x64xf32>
    %207 = tpu.matmul %206, %186, %cst_156 {dimension_numbers = #tpu.dot_dimension_numbers<[1], [0], [0], [1], [0, 0, 1, 1], [], []>} : vector<80x64xf32>, vector<64x64xf32>, vector<80x64xf32> -> vector<80x64xf32>
    %c3_157 = arith.constant 3 : index
    %c0_158 = arith.constant 0 : index
    %c0_159 = arith.constant 0 : index
    %208 = vector.load %arg8[%c3_157, %c0_158, %c0_159] : memref<9x64x128xf32, #tpu.memory_space<vmem>>, vector<1x64x128xf32>
    %209 = vector.shape_cast %208 : vector<1x64x128xf32> to vector<64x128xf32>
    %cst_160 = arith.constant dense<0.000000e+00> : vector<80x128xf32>
    %210 = tpu.matmul %207, %209, %cst_160 {dimension_numbers = #tpu.dot_dimension_numbers<[1], [0], [0], [1], [0, 0, 1, 1], [], []>} : vector<80x64xf32>, vector<64x128xf32>, vector<80x128xf32> -> vector<80x128xf32>
    %211 = arith.addf %192, %210 : vector<80x128xf32>
    %c320_161 = arith.constant 320 : index
    %c0_162 = arith.constant 0 : index
    %212 = vector.load %arg3[%c320_161, %c0_162] : memref<720x64xbf16, #tpu.memory_space<vmem>>, vector<80x64xbf16>
    %213 = arith.extf %212 : vector<80x64xbf16> to vector<80x64xf32>
    %cst_163 = arith.constant dense<0.000000e+00> : vector<80x64xf32>
    %214 = tpu.matmul %213, %186, %cst_163 {dimension_numbers = #tpu.dot_dimension_numbers<[1], [0], [0], [1], [0, 0, 1, 1], [], []>} : vector<80x64xf32>, vector<64x64xf32>, vector<80x64xf32> -> vector<80x64xf32>
    %c4_164 = arith.constant 4 : index
    %c0_165 = arith.constant 0 : index
    %c0_166 = arith.constant 0 : index
    %215 = vector.load %arg8[%c4_164, %c0_165, %c0_166] : memref<9x64x128xf32, #tpu.memory_space<vmem>>, vector<1x64x128xf32>
    %216 = vector.shape_cast %215 : vector<1x64x128xf32> to vector<64x128xf32>
    %cst_167 = arith.constant dense<0.000000e+00> : vector<80x128xf32>
    %217 = tpu.matmul %214, %216, %cst_167 {dimension_numbers = #tpu.dot_dimension_numbers<[1], [0], [0], [1], [0, 0, 1, 1], [], []>} : vector<80x64xf32>, vector<64x128xf32>, vector<80x128xf32> -> vector<80x128xf32>
    %218 = arith.addf %198, %217 : vector<80x128xf32>
    %c400 = arith.constant 400 : index
    %c0_168 = arith.constant 0 : index
    %219 = vector.load %arg3[%c400, %c0_168] : memref<720x64xbf16, #tpu.memory_space<vmem>>, vector<80x64xbf16>
    %220 = arith.extf %219 : vector<80x64xbf16> to vector<80x64xf32>
    %cst_169 = arith.constant dense<0.000000e+00> : vector<80x64xf32>
    %221 = tpu.matmul %220, %186, %cst_169 {dimension_numbers = #tpu.dot_dimension_numbers<[1], [0], [0], [1], [0, 0, 1, 1], [], []>} : vector<80x64xf32>, vector<64x64xf32>, vector<80x64xf32> -> vector<80x64xf32>
    %c5_170 = arith.constant 5 : index
    %c0_171 = arith.constant 0 : index
    %c0_172 = arith.constant 0 : index
    %222 = vector.load %arg8[%c5_170, %c0_171, %c0_172] : memref<9x64x128xf32, #tpu.memory_space<vmem>>, vector<1x64x128xf32>
    %223 = vector.shape_cast %222 : vector<1x64x128xf32> to vector<64x128xf32>
    %cst_173 = arith.constant dense<0.000000e+00> : vector<80x128xf32>
    %224 = tpu.matmul %221, %223, %cst_173 {dimension_numbers = #tpu.dot_dimension_numbers<[1], [0], [0], [1], [0, 0, 1, 1], [], []>} : vector<80x64xf32>, vector<64x128xf32>, vector<80x128xf32> -> vector<80x128xf32>
    %225 = arith.addf %204, %224 : vector<80x128xf32>
    %c480 = arith.constant 480 : index
    %c0_174 = arith.constant 0 : index
    %226 = vector.load %arg3[%c480, %c0_174] : memref<720x64xbf16, #tpu.memory_space<vmem>>, vector<80x64xbf16>
    %227 = arith.extf %226 : vector<80x64xbf16> to vector<80x64xf32>
    %cst_175 = arith.constant dense<0.000000e+00> : vector<80x64xf32>
    %228 = tpu.matmul %227, %186, %cst_175 {dimension_numbers = #tpu.dot_dimension_numbers<[1], [0], [0], [1], [0, 0, 1, 1], [], []>} : vector<80x64xf32>, vector<64x64xf32>, vector<80x64xf32> -> vector<80x64xf32>
    %c6_176 = arith.constant 6 : index
    %c0_177 = arith.constant 0 : index
    %c0_178 = arith.constant 0 : index
    %229 = vector.load %arg8[%c6_176, %c0_177, %c0_178] : memref<9x64x128xf32, #tpu.memory_space<vmem>>, vector<1x64x128xf32>
    %230 = vector.shape_cast %229 : vector<1x64x128xf32> to vector<64x128xf32>
    %cst_179 = arith.constant dense<0.000000e+00> : vector<80x128xf32>
    %231 = tpu.matmul %228, %230, %cst_179 {dimension_numbers = #tpu.dot_dimension_numbers<[1], [0], [0], [1], [0, 0, 1, 1], [], []>} : vector<80x64xf32>, vector<64x128xf32>, vector<80x128xf32> -> vector<80x128xf32>
    %232 = arith.addf %211, %231 : vector<80x128xf32>
    %c560 = arith.constant 560 : index
    %c0_180 = arith.constant 0 : index
    %233 = vector.load %arg3[%c560, %c0_180] : memref<720x64xbf16, #tpu.memory_space<vmem>>, vector<80x64xbf16>
    %234 = arith.extf %233 : vector<80x64xbf16> to vector<80x64xf32>
    %cst_181 = arith.constant dense<0.000000e+00> : vector<80x64xf32>
    %235 = tpu.matmul %234, %186, %cst_181 {dimension_numbers = #tpu.dot_dimension_numbers<[1], [0], [0], [1], [0, 0, 1, 1], [], []>} : vector<80x64xf32>, vector<64x64xf32>, vector<80x64xf32> -> vector<80x64xf32>
    %c7_182 = arith.constant 7 : index
    %c0_183 = arith.constant 0 : index
    %c0_184 = arith.constant 0 : index
    %236 = vector.load %arg8[%c7_182, %c0_183, %c0_184] : memref<9x64x128xf32, #tpu.memory_space<vmem>>, vector<1x64x128xf32>
    %237 = vector.shape_cast %236 : vector<1x64x128xf32> to vector<64x128xf32>
    %cst_185 = arith.constant dense<0.000000e+00> : vector<80x128xf32>
    %238 = tpu.matmul %235, %237, %cst_185 {dimension_numbers = #tpu.dot_dimension_numbers<[1], [0], [0], [1], [0, 0, 1, 1], [], []>} : vector<80x64xf32>, vector<64x128xf32>, vector<80x128xf32> -> vector<80x128xf32>
    %239 = arith.addf %218, %238 : vector<80x128xf32>
    %c640_186 = arith.constant 640 : index
    %c0_187 = arith.constant 0 : index
    %240 = vector.load %arg3[%c640_186, %c0_187] : memref<720x64xbf16, #tpu.memory_space<vmem>>, vector<80x64xbf16>
    %241 = arith.extf %240 : vector<80x64xbf16> to vector<80x64xf32>
    %cst_188 = arith.constant dense<0.000000e+00> : vector<80x64xf32>
    %242 = tpu.matmul %241, %186, %cst_188 {dimension_numbers = #tpu.dot_dimension_numbers<[1], [0], [0], [1], [0, 0, 1, 1], [], []>} : vector<80x64xf32>, vector<64x64xf32>, vector<80x64xf32> -> vector<80x64xf32>
    %c8_189 = arith.constant 8 : index
    %c0_190 = arith.constant 0 : index
    %c0_191 = arith.constant 0 : index
    %243 = vector.load %arg8[%c8_189, %c0_190, %c0_191] : memref<9x64x128xf32, #tpu.memory_space<vmem>>, vector<1x64x128xf32>
    %244 = vector.shape_cast %243 : vector<1x64x128xf32> to vector<64x128xf32>
    %cst_192 = arith.constant dense<0.000000e+00> : vector<80x128xf32>
    %245 = tpu.matmul %242, %244, %cst_192 {dimension_numbers = #tpu.dot_dimension_numbers<[1], [0], [0], [1], [0, 0, 1, 1], [], []>} : vector<80x64xf32>, vector<64x128xf32>, vector<80x128xf32> -> vector<80x128xf32>
    %246 = arith.addf %225, %245 : vector<80x128xf32>
    %247 = arith.addf %232, %239 : vector<80x128xf32>
    %248 = arith.addf %247, %246 : vector<80x128xf32>
    %c0_193 = arith.constant 0 : index
    %c0_194 = arith.constant 0 : index
    %249 = vector.load %arg9[%c0_193, %c0_194] : memref<1x128xf32, #tpu.memory_space<vmem>>, vector<1x128xf32>
    %250 = vector.broadcast %249 : vector<1x128xf32> to vector<80x128xf32>
    %251 = arith.addf %248, %250 : vector<80x128xf32>
    %cst_195 = arith.constant 0.000000e+00 : f32
    %252 = vector.broadcast %cst_195 : f32 to vector<80x128xf32>
    %253 = arith.maximumf %251, %252 : vector<80x128xf32>
    %254 = vector.extract_strided_slice %253 {offsets = [0, 0], sizes = [80, 64], strides = [1, 1]} : vector<80x128xf32> to vector<80x64xf32>
    %255 = vector.extract_strided_slice %253 {offsets = [0, 64], sizes = [80, 64], strides = [1, 1]} : vector<80x128xf32> to vector<80x64xf32>
    %256 = vector.extract_strided_slice %254 {offsets = [0, 0], sizes = [8, 64], strides = [1, 1]} : vector<80x64xf32> to vector<8x64xf32>
    %c0_196 = arith.constant 0 : index
    %c0_197 = arith.constant 0 : index
    %c0_198 = arith.constant 0 : index
    %257 = vector.load %arg10[%c0_196, %c0_197, %c0_198] : memref<9x64x256xf32, #tpu.memory_space<vmem>>, vector<1x64x256xf32>
    %258 = vector.shape_cast %257 : vector<1x64x256xf32> to vector<64x256xf32>
    %cst_199 = arith.constant dense<0.000000e+00> : vector<8x256xf32>
    %259 = tpu.matmul %256, %258, %cst_199 {dimension_numbers = #tpu.dot_dimension_numbers<[1], [0], [0], [1], [0, 0, 1, 1], [], []>} : vector<8x64xf32>, vector<64x256xf32>, vector<8x256xf32> -> vector<8x256xf32>
    %260 = vector.extract_strided_slice %254 {offsets = [8, 0], sizes = [8, 64], strides = [1, 1]} : vector<80x64xf32> to vector<8x64xf32>
    %c1_200 = arith.constant 1 : index
    %c0_201 = arith.constant 0 : index
    %c0_202 = arith.constant 0 : index
    %261 = vector.load %arg10[%c1_200, %c0_201, %c0_202] : memref<9x64x256xf32, #tpu.memory_space<vmem>>, vector<1x64x256xf32>
    %262 = vector.shape_cast %261 : vector<1x64x256xf32> to vector<64x256xf32>
    %cst_203 = arith.constant dense<0.000000e+00> : vector<8x256xf32>
    %263 = tpu.matmul %260, %262, %cst_203 {dimension_numbers = #tpu.dot_dimension_numbers<[1], [0], [0], [1], [0, 0, 1, 1], [], []>} : vector<8x64xf32>, vector<64x256xf32>, vector<8x256xf32> -> vector<8x256xf32>
    %264 = vector.extract_strided_slice %254 {offsets = [16, 0], sizes = [8, 64], strides = [1, 1]} : vector<80x64xf32> to vector<8x64xf32>
    %c2_204 = arith.constant 2 : index
    %c0_205 = arith.constant 0 : index
    %c0_206 = arith.constant 0 : index
    %265 = vector.load %arg10[%c2_204, %c0_205, %c0_206] : memref<9x64x256xf32, #tpu.memory_space<vmem>>, vector<1x64x256xf32>
    %266 = vector.shape_cast %265 : vector<1x64x256xf32> to vector<64x256xf32>
    %cst_207 = arith.constant dense<0.000000e+00> : vector<8x256xf32>
    %267 = tpu.matmul %264, %266, %cst_207 {dimension_numbers = #tpu.dot_dimension_numbers<[1], [0], [0], [1], [0, 0, 1, 1], [], []>} : vector<8x64xf32>, vector<64x256xf32>, vector<8x256xf32> -> vector<8x256xf32>
    %268 = arith.addf %259, %267 : vector<8x256xf32>
    %269 = vector.extract_strided_slice %254 {offsets = [24, 0], sizes = [8, 64], strides = [1, 1]} : vector<80x64xf32> to vector<8x64xf32>
    %c3_208 = arith.constant 3 : index
    %c0_209 = arith.constant 0 : index
    %c0_210 = arith.constant 0 : index
    %270 = vector.load %arg10[%c3_208, %c0_209, %c0_210] : memref<9x64x256xf32, #tpu.memory_space<vmem>>, vector<1x64x256xf32>
    %271 = vector.shape_cast %270 : vector<1x64x256xf32> to vector<64x256xf32>
    %cst_211 = arith.constant dense<0.000000e+00> : vector<8x256xf32>
    %272 = tpu.matmul %269, %271, %cst_211 {dimension_numbers = #tpu.dot_dimension_numbers<[1], [0], [0], [1], [0, 0, 1, 1], [], []>} : vector<8x64xf32>, vector<64x256xf32>, vector<8x256xf32> -> vector<8x256xf32>
    %273 = arith.addf %263, %272 : vector<8x256xf32>
    %274 = vector.extract_strided_slice %254 {offsets = [32, 0], sizes = [8, 64], strides = [1, 1]} : vector<80x64xf32> to vector<8x64xf32>
    %c4_212 = arith.constant 4 : index
    %c0_213 = arith.constant 0 : index
    %c0_214 = arith.constant 0 : index
    %275 = vector.load %arg10[%c4_212, %c0_213, %c0_214] : memref<9x64x256xf32, #tpu.memory_space<vmem>>, vector<1x64x256xf32>
    %276 = vector.shape_cast %275 : vector<1x64x256xf32> to vector<64x256xf32>
    %cst_215 = arith.constant dense<0.000000e+00> : vector<8x256xf32>
    %277 = tpu.matmul %274, %276, %cst_215 {dimension_numbers = #tpu.dot_dimension_numbers<[1], [0], [0], [1], [0, 0, 1, 1], [], []>} : vector<8x64xf32>, vector<64x256xf32>, vector<8x256xf32> -> vector<8x256xf32>
    %278 = arith.addf %268, %277 : vector<8x256xf32>
    %279 = vector.extract_strided_slice %254 {offsets = [40, 0], sizes = [8, 64], strides = [1, 1]} : vector<80x64xf32> to vector<8x64xf32>
    %c5_216 = arith.constant 5 : index
    %c0_217 = arith.constant 0 : index
    %c0_218 = arith.constant 0 : index
    %280 = vector.load %arg10[%c5_216, %c0_217, %c0_218] : memref<9x64x256xf32, #tpu.memory_space<vmem>>, vector<1x64x256xf32>
    %281 = vector.shape_cast %280 : vector<1x64x256xf32> to vector<64x256xf32>
    %cst_219 = arith.constant dense<0.000000e+00> : vector<8x256xf32>
    %282 = tpu.matmul %279, %281, %cst_219 {dimension_numbers = #tpu.dot_dimension_numbers<[1], [0], [0], [1], [0, 0, 1, 1], [], []>} : vector<8x64xf32>, vector<64x256xf32>, vector<8x256xf32> -> vector<8x256xf32>
    %283 = arith.addf %273, %282 : vector<8x256xf32>
    %284 = vector.extract_strided_slice %254 {offsets = [48, 0], sizes = [8, 64], strides = [1, 1]} : vector<80x64xf32> to vector<8x64xf32>
    %c6_220 = arith.constant 6 : index
    %c0_221 = arith.constant 0 : index
    %c0_222 = arith.constant 0 : index
    %285 = vector.load %arg10[%c6_220, %c0_221, %c0_222] : memref<9x64x256xf32, #tpu.memory_space<vmem>>, vector<1x64x256xf32>
    %286 = vector.shape_cast %285 : vector<1x64x256xf32> to vector<64x256xf32>
    %cst_223 = arith.constant dense<0.000000e+00> : vector<8x256xf32>
    %287 = tpu.matmul %284, %286, %cst_223 {dimension_numbers = #tpu.dot_dimension_numbers<[1], [0], [0], [1], [0, 0, 1, 1], [], []>} : vector<8x64xf32>, vector<64x256xf32>, vector<8x256xf32> -> vector<8x256xf32>
    %288 = arith.addf %278, %287 : vector<8x256xf32>
    %289 = vector.extract_strided_slice %254 {offsets = [56, 0], sizes = [8, 64], strides = [1, 1]} : vector<80x64xf32> to vector<8x64xf32>
    %c7_224 = arith.constant 7 : index
    %c0_225 = arith.constant 0 : index
    %c0_226 = arith.constant 0 : index
    %290 = vector.load %arg10[%c7_224, %c0_225, %c0_226] : memref<9x64x256xf32, #tpu.memory_space<vmem>>, vector<1x64x256xf32>
    %291 = vector.shape_cast %290 : vector<1x64x256xf32> to vector<64x256xf32>
    %cst_227 = arith.constant dense<0.000000e+00> : vector<8x256xf32>
    %292 = tpu.matmul %289, %291, %cst_227 {dimension_numbers = #tpu.dot_dimension_numbers<[1], [0], [0], [1], [0, 0, 1, 1], [], []>} : vector<8x64xf32>, vector<64x256xf32>, vector<8x256xf32> -> vector<8x256xf32>
    %293 = arith.addf %283, %292 : vector<8x256xf32>
    %294 = vector.extract_strided_slice %254 {offsets = [64, 0], sizes = [8, 64], strides = [1, 1]} : vector<80x64xf32> to vector<8x64xf32>
    %c8_228 = arith.constant 8 : index
    %c0_229 = arith.constant 0 : index
    %c0_230 = arith.constant 0 : index
    %295 = vector.load %arg10[%c8_228, %c0_229, %c0_230] : memref<9x64x256xf32, #tpu.memory_space<vmem>>, vector<1x64x256xf32>
    %296 = vector.shape_cast %295 : vector<1x64x256xf32> to vector<64x256xf32>
    %cst_231 = arith.constant dense<0.000000e+00> : vector<8x256xf32>
    %297 = tpu.matmul %294, %296, %cst_231 {dimension_numbers = #tpu.dot_dimension_numbers<[1], [0], [0], [1], [0, 0, 1, 1], [], []>} : vector<8x64xf32>, vector<64x256xf32>, vector<8x256xf32> -> vector<8x256xf32>
    %298 = arith.addf %288, %297 : vector<8x256xf32>
    %299 = arith.addf %298, %293 : vector<8x256xf32>
    %300 = vector.extract_strided_slice %299 {offsets = [0, 0], sizes = [2, 256], strides = [1, 1]} : vector<8x256xf32> to vector<2x256xf32>
    %c0_232 = arith.constant 0 : index
    %c0_233 = arith.constant 0 : index
    %301 = vector.load %arg12[%c0_232, %c0_233] : memref<1x256xf32, #tpu.memory_space<vmem>>, vector<1x256xf32>
    %302 = vector.broadcast %301 : vector<1x256xf32> to vector<2x256xf32>
    %303 = arith.addf %300, %302 : vector<2x256xf32>
    %304 = vector.extract_strided_slice %255 {offsets = [0, 0], sizes = [8, 64], strides = [1, 1]} : vector<80x64xf32> to vector<8x64xf32>
    %c0_234 = arith.constant 0 : index
    %c0_235 = arith.constant 0 : index
    %c0_236 = arith.constant 0 : index
    %305 = vector.load %arg11[%c0_234, %c0_235, %c0_236] : memref<9x64x256xf32, #tpu.memory_space<vmem>>, vector<1x64x256xf32>
    %306 = vector.shape_cast %305 : vector<1x64x256xf32> to vector<64x256xf32>
    %cst_237 = arith.constant dense<0.000000e+00> : vector<8x256xf32>
    %307 = tpu.matmul %304, %306, %cst_237 {dimension_numbers = #tpu.dot_dimension_numbers<[1], [0], [0], [1], [0, 0, 1, 1], [], []>} : vector<8x64xf32>, vector<64x256xf32>, vector<8x256xf32> -> vector<8x256xf32>
    %308 = vector.extract_strided_slice %255 {offsets = [8, 0], sizes = [8, 64], strides = [1, 1]} : vector<80x64xf32> to vector<8x64xf32>
    %c1_238 = arith.constant 1 : index
    %c0_239 = arith.constant 0 : index
    %c0_240 = arith.constant 0 : index
    %309 = vector.load %arg11[%c1_238, %c0_239, %c0_240] : memref<9x64x256xf32, #tpu.memory_space<vmem>>, vector<1x64x256xf32>
    %310 = vector.shape_cast %309 : vector<1x64x256xf32> to vector<64x256xf32>
    %cst_241 = arith.constant dense<0.000000e+00> : vector<8x256xf32>
    %311 = tpu.matmul %308, %310, %cst_241 {dimension_numbers = #tpu.dot_dimension_numbers<[1], [0], [0], [1], [0, 0, 1, 1], [], []>} : vector<8x64xf32>, vector<64x256xf32>, vector<8x256xf32> -> vector<8x256xf32>
    %312 = vector.extract_strided_slice %255 {offsets = [16, 0], sizes = [8, 64], strides = [1, 1]} : vector<80x64xf32> to vector<8x64xf32>
    %c2_242 = arith.constant 2 : index
    %c0_243 = arith.constant 0 : index
    %c0_244 = arith.constant 0 : index
    %313 = vector.load %arg11[%c2_242, %c0_243, %c0_244] : memref<9x64x256xf32, #tpu.memory_space<vmem>>, vector<1x64x256xf32>
    %314 = vector.shape_cast %313 : vector<1x64x256xf32> to vector<64x256xf32>
    %cst_245 = arith.constant dense<0.000000e+00> : vector<8x256xf32>
    %315 = tpu.matmul %312, %314, %cst_245 {dimension_numbers = #tpu.dot_dimension_numbers<[1], [0], [0], [1], [0, 0, 1, 1], [], []>} : vector<8x64xf32>, vector<64x256xf32>, vector<8x256xf32> -> vector<8x256xf32>
    %316 = arith.addf %307, %315 : vector<8x256xf32>
    %317 = vector.extract_strided_slice %255 {offsets = [24, 0], sizes = [8, 64], strides = [1, 1]} : vector<80x64xf32> to vector<8x64xf32>
    %c3_246 = arith.constant 3 : index
    %c0_247 = arith.constant 0 : index
    %c0_248 = arith.constant 0 : index
    %318 = vector.load %arg11[%c3_246, %c0_247, %c0_248] : memref<9x64x256xf32, #tpu.memory_space<vmem>>, vector<1x64x256xf32>
    %319 = vector.shape_cast %318 : vector<1x64x256xf32> to vector<64x256xf32>
    %cst_249 = arith.constant dense<0.000000e+00> : vector<8x256xf32>
    %320 = tpu.matmul %317, %319, %cst_249 {dimension_numbers = #tpu.dot_dimension_numbers<[1], [0], [0], [1], [0, 0, 1, 1], [], []>} : vector<8x64xf32>, vector<64x256xf32>, vector<8x256xf32> -> vector<8x256xf32>
    %321 = arith.addf %311, %320 : vector<8x256xf32>
    %322 = vector.extract_strided_slice %255 {offsets = [32, 0], sizes = [8, 64], strides = [1, 1]} : vector<80x64xf32> to vector<8x64xf32>
    %c4_250 = arith.constant 4 : index
    %c0_251 = arith.constant 0 : index
    %c0_252 = arith.constant 0 : index
    %323 = vector.load %arg11[%c4_250, %c0_251, %c0_252] : memref<9x64x256xf32, #tpu.memory_space<vmem>>, vector<1x64x256xf32>
    %324 = vector.shape_cast %323 : vector<1x64x256xf32> to vector<64x256xf32>
    %cst_253 = arith.constant dense<0.000000e+00> : vector<8x256xf32>
    %325 = tpu.matmul %322, %324, %cst_253 {dimension_numbers = #tpu.dot_dimension_numbers<[1], [0], [0], [1], [0, 0, 1, 1], [], []>} : vector<8x64xf32>, vector<64x256xf32>, vector<8x256xf32> -> vector<8x256xf32>
    %326 = arith.addf %316, %325 : vector<8x256xf32>
    %327 = vector.extract_strided_slice %255 {offsets = [40, 0], sizes = [8, 64], strides = [1, 1]} : vector<80x64xf32> to vector<8x64xf32>
    %c5_254 = arith.constant 5 : index
    %c0_255 = arith.constant 0 : index
    %c0_256 = arith.constant 0 : index
    %328 = vector.load %arg11[%c5_254, %c0_255, %c0_256] : memref<9x64x256xf32, #tpu.memory_space<vmem>>, vector<1x64x256xf32>
    %329 = vector.shape_cast %328 : vector<1x64x256xf32> to vector<64x256xf32>
    %cst_257 = arith.constant dense<0.000000e+00> : vector<8x256xf32>
    %330 = tpu.matmul %327, %329, %cst_257 {dimension_numbers = #tpu.dot_dimension_numbers<[1], [0], [0], [1], [0, 0, 1, 1], [], []>} : vector<8x64xf32>, vector<64x256xf32>, vector<8x256xf32> -> vector<8x256xf32>
    %331 = arith.addf %321, %330 : vector<8x256xf32>
    %332 = vector.extract_strided_slice %255 {offsets = [48, 0], sizes = [8, 64], strides = [1, 1]} : vector<80x64xf32> to vector<8x64xf32>
    %c6_258 = arith.constant 6 : index
    %c0_259 = arith.constant 0 : index
    %c0_260 = arith.constant 0 : index
    %333 = vector.load %arg11[%c6_258, %c0_259, %c0_260] : memref<9x64x256xf32, #tpu.memory_space<vmem>>, vector<1x64x256xf32>
    %334 = vector.shape_cast %333 : vector<1x64x256xf32> to vector<64x256xf32>
    %cst_261 = arith.constant dense<0.000000e+00> : vector<8x256xf32>
    %335 = tpu.matmul %332, %334, %cst_261 {dimension_numbers = #tpu.dot_dimension_numbers<[1], [0], [0], [1], [0, 0, 1, 1], [], []>} : vector<8x64xf32>, vector<64x256xf32>, vector<8x256xf32> -> vector<8x256xf32>
    %336 = arith.addf %326, %335 : vector<8x256xf32>
    %337 = vector.extract_strided_slice %255 {offsets = [56, 0], sizes = [8, 64], strides = [1, 1]} : vector<80x64xf32> to vector<8x64xf32>
    %c7_262 = arith.constant 7 : index
    %c0_263 = arith.constant 0 : index
    %c0_264 = arith.constant 0 : index
    %338 = vector.load %arg11[%c7_262, %c0_263, %c0_264] : memref<9x64x256xf32, #tpu.memory_space<vmem>>, vector<1x64x256xf32>
    %339 = vector.shape_cast %338 : vector<1x64x256xf32> to vector<64x256xf32>
    %cst_265 = arith.constant dense<0.000000e+00> : vector<8x256xf32>
    %340 = tpu.matmul %337, %339, %cst_265 {dimension_numbers = #tpu.dot_dimension_numbers<[1], [0], [0], [1], [0, 0, 1, 1], [], []>} : vector<8x64xf32>, vector<64x256xf32>, vector<8x256xf32> -> vector<8x256xf32>
    %341 = arith.addf %331, %340 : vector<8x256xf32>
    %342 = vector.extract_strided_slice %255 {offsets = [64, 0], sizes = [8, 64], strides = [1, 1]} : vector<80x64xf32> to vector<8x64xf32>
    %c8_266 = arith.constant 8 : index
    %c0_267 = arith.constant 0 : index
    %c0_268 = arith.constant 0 : index
    %343 = vector.load %arg11[%c8_266, %c0_267, %c0_268] : memref<9x64x256xf32, #tpu.memory_space<vmem>>, vector<1x64x256xf32>
    %344 = vector.shape_cast %343 : vector<1x64x256xf32> to vector<64x256xf32>
    %cst_269 = arith.constant dense<0.000000e+00> : vector<8x256xf32>
    %345 = tpu.matmul %342, %344, %cst_269 {dimension_numbers = #tpu.dot_dimension_numbers<[1], [0], [0], [1], [0, 0, 1, 1], [], []>} : vector<8x64xf32>, vector<64x256xf32>, vector<8x256xf32> -> vector<8x256xf32>
    %346 = arith.addf %336, %345 : vector<8x256xf32>
    %347 = arith.addf %346, %341 : vector<8x256xf32>
    %348 = vector.extract_strided_slice %347 {offsets = [0, 0], sizes = [2, 256], strides = [1, 1]} : vector<8x256xf32> to vector<2x256xf32>
    %c0_270 = arith.constant 0 : index
    %c0_271 = arith.constant 0 : index
    %349 = vector.load %arg13[%c0_270, %c0_271] : memref<1x256xf32, #tpu.memory_space<vmem>>, vector<1x256xf32>
    %350 = vector.broadcast %349 : vector<1x256xf32> to vector<2x256xf32>
    %351 = arith.addf %348, %350 : vector<2x256xf32>
    %352 = arith.mulf %303, %303 : vector<2x256xf32>
    %cst_272 = arith.constant dense<0.000000e+00> : vector<2xf32>
    %353 = vector.multi_reduction <add>, %352, %cst_272 [1] : vector<2x256xf32> to vector<2xf32>
    %354 = vector.shape_cast %353 : vector<2xf32> to vector<2x1xf32>
    %355 = math.rsqrt %354 : vector<2x1xf32>
    %356 = vector.broadcast %355 : vector<2x1xf32> to vector<2x256xf32>
    %357 = arith.mulf %303, %356 : vector<2x256xf32>
    %c0_273 = arith.constant 0 : index
    %c0_274 = arith.constant 0 : index
    %358 = vector.load %arg14[%c0_273, %c0_274] : memref<256x64xf32, #tpu.memory_space<vmem>>, vector<256x64xf32>
    %cst_275 = arith.constant dense<0.000000e+00> : vector<2x64xf32>
    %359 = tpu.matmul %351, %358, %cst_275 {dimension_numbers = #tpu.dot_dimension_numbers<[1], [0], [0], [1], [0, 0, 1, 1], [], []>} : vector<2x256xf32>, vector<256x64xf32>, vector<2x64xf32> -> vector<2x64xf32>
    %c0_276 = arith.constant 0 : index
    %c0_277 = arith.constant 0 : index
    %360 = vector.load %arg15[%c0_276, %c0_277] : memref<256x64xf32, #tpu.memory_space<vmem>>, vector<256x64xf32>
    %cst_278 = arith.constant dense<0.000000e+00> : vector<2x64xf32>
    %361 = tpu.matmul %357, %360, %cst_278 {dimension_numbers = #tpu.dot_dimension_numbers<[1], [0], [0], [1], [0, 0, 1, 1], [], []>} : vector<2x256xf32>, vector<256x64xf32>, vector<2x64xf32> -> vector<2x64xf32>
    %362 = arith.addf %359, %361 : vector<2x64xf32>
    %c0_279 = arith.constant 0 : index
    %c0_280 = arith.constant 0 : index
    %363 = vector.load %arg16[%c0_279, %c0_280] : memref<1x64xf32, #tpu.memory_space<vmem>>, vector<1x64xf32>
    %364 = vector.broadcast %363 : vector<1x64xf32> to vector<2x64xf32>
    %365 = arith.addf %362, %364 : vector<2x64xf32>
    %cst_281 = arith.constant 0.000000e+00 : f32
    %366 = vector.broadcast %cst_281 : f32 to vector<2x64xf32>
    %367 = arith.maximumf %365, %366 : vector<2x64xf32>
    %c0_282 = arith.constant 0 : index
    %c0_283 = arith.constant 0 : index
    %368 = vector.load %arg17[%c0_282, %c0_283] : memref<64x64xf32, #tpu.memory_space<vmem>>, vector<64x64xf32>
    %cst_284 = arith.constant dense<0.000000e+00> : vector<2x64xf32>
    %369 = tpu.matmul %367, %368, %cst_284 {dimension_numbers = #tpu.dot_dimension_numbers<[1], [0], [0], [1], [0, 0, 1, 1], [], []>} : vector<2x64xf32>, vector<64x64xf32>, vector<2x64xf32> -> vector<2x64xf32>
    %c0_285 = arith.constant 0 : index
    %c0_286 = arith.constant 0 : index
    %370 = vector.load %arg18[%c0_285, %c0_286] : memref<1x64xf32, #tpu.memory_space<vmem>>, vector<1x64xf32>
    %371 = vector.broadcast %370 : vector<1x64xf32> to vector<2x64xf32>
    %372 = arith.addf %369, %371 : vector<2x64xf32>
    %cst_287 = arith.constant 0.000000e+00 : f32
    %373 = vector.broadcast %cst_287 : f32 to vector<2x64xf32>
    %374 = arith.maximumf %372, %373 : vector<2x64xf32>
    %c0_288 = arith.constant 0 : index
    %c0_289 = arith.constant 0 : index
    %375 = vector.load %arg19[%c0_288, %c0_289] : memref<64x6xf32, #tpu.memory_space<vmem>>, vector<64x6xf32>
    %cst_290 = arith.constant dense<0.000000e+00> : vector<2x6xf32>
    %376 = tpu.matmul %374, %375, %cst_290 {dimension_numbers = #tpu.dot_dimension_numbers<[1], [0], [0], [1], [0, 0, 1, 1], [], []>} : vector<2x64xf32>, vector<64x6xf32>, vector<2x6xf32> -> vector<2x6xf32>
    %c0_291 = arith.constant 0 : index
    %c0_292 = arith.constant 0 : index
    %377 = vector.load %arg20[%c0_291, %c0_292] : memref<1x6xf32, #tpu.memory_space<vmem>>, vector<1x6xf32>
    %378 = vector.broadcast %377 : vector<1x6xf32> to vector<2x6xf32>
    %379 = arith.addf %376, %378 : vector<2x6xf32>
    %c0_293 = arith.constant 0 : index
    %c0_294 = arith.constant 0 : index
    %380 = vector.load %arg21[%c0_293, %c0_294] : memref<2x6xf32, #tpu.memory_space<vmem>>, vector<2x6xf32>
    tpu.vector_store %arg21[%c0_293, %c0_294], %379 {strides = array<i32>} : memref<2x6xf32, #tpu.memory_space<vmem>>, vector<2x6xf32>,
    %c0_295 = arith.constant 0 : index
    %c0_296 = arith.constant 0 : index
    %381 = vector.load %arg22[%c0_295, %c0_296] : memref<2x256xf32, #tpu.memory_space<vmem>>, vector<2x256xf32>
    tpu.vector_store %arg22[%c0_295, %c0_296], %357 {strides = array<i32>} : memref<2x256xf32, #tpu.memory_space<vmem>>, vector<2x256xf32>,
    return
  }
  func.func @transform_0(%arg0: i32) -> (i32, i32) {
    %c0_i32 = arith.constant 0 : i32
    %c0_i32_0 = arith.constant 0 : i32
    %c0_i32_1 = arith.constant 0 : i32
    return %c0_i32, %c0_i32_0 : i32, i32
  }
  func.func @transform_1(%arg0: i32) -> (i32, i32) {
    %c0_i32 = arith.constant 0 : i32
    %c0_i32_0 = arith.constant 0 : i32
    %c0_i32_1 = arith.constant 0 : i32
    return %c0_i32, %c0_i32_0 : i32, i32
  }
  func.func @transform_2(%arg0: i32) -> (i32, i32) {
    %c0_i32 = arith.constant 0 : i32
    %c0_i32_0 = arith.constant 0 : i32
    %c0_i32_1 = arith.constant 0 : i32
    return %c0_i32, %c0_i32_0 : i32, i32
  }
  func.func @transform_3(%arg0: i32) -> (i32, i32) {
    %c0_i32 = arith.constant 0 : i32
    %c0_i32_0 = arith.constant 0 : i32
    %c0_i32_1 = arith.constant 0 : i32
    return %c0_i32, %c0_i32_0 : i32, i32
  }
  func.func @transform_4(%arg0: i32) -> (i32, i32) {
    %c0_i32 = arith.constant 0 : i32
    %c0_i32_0 = arith.constant 0 : i32
    %c0_i32_1 = arith.constant 0 : i32
    return %c0_i32, %c0_i32_0 : i32, i32
  }
  func.func @transform_5(%arg0: i32) -> (i32, i32, i32) {
    %c0_i32 = arith.constant 0 : i32
    %c0_i32_0 = arith.constant 0 : i32
    %c0_i32_1 = arith.constant 0 : i32
    %c0_i32_2 = arith.constant 0 : i32
    return %c0_i32, %c0_i32_0, %c0_i32_1 : i32, i32, i32
  }
  func.func @transform_6(%arg0: i32) -> (i32, i32) {
    %c0_i32 = arith.constant 0 : i32
    %c0_i32_0 = arith.constant 0 : i32
    %c0_i32_1 = arith.constant 0 : i32
    return %c0_i32, %c0_i32_0 : i32, i32
  }
  func.func @transform_7(%arg0: i32) -> (i32, i32, i32) {
    %c0_i32 = arith.constant 0 : i32
    %c0_i32_0 = arith.constant 0 : i32
    %c0_i32_1 = arith.constant 0 : i32
    %c0_i32_2 = arith.constant 0 : i32
    return %c0_i32, %c0_i32_0, %c0_i32_1 : i32, i32, i32
  }
  func.func @transform_8(%arg0: i32) -> (i32, i32) {
    %c0_i32 = arith.constant 0 : i32
    %c0_i32_0 = arith.constant 0 : i32
    %c0_i32_1 = arith.constant 0 : i32
    return %c0_i32, %c0_i32_0 : i32, i32
  }
  func.func @transform_9(%arg0: i32) -> (i32, i32, i32) {
    %c0_i32 = arith.constant 0 : i32
    %c0_i32_0 = arith.constant 0 : i32
    %c0_i32_1 = arith.constant 0 : i32
    %c0_i32_2 = arith.constant 0 : i32
    return %c0_i32, %c0_i32_0, %c0_i32_1 : i32, i32, i32
  }
  func.func @transform_10(%arg0: i32) -> (i32, i32, i32) {
    %c0_i32 = arith.constant 0 : i32
    %c0_i32_0 = arith.constant 0 : i32
    %c0_i32_1 = arith.constant 0 : i32
    %c0_i32_2 = arith.constant 0 : i32
    return %c0_i32, %c0_i32_0, %c0_i32_1 : i32, i32, i32
  }
  func.func @transform_11(%arg0: i32) -> (i32, i32) {
    %c0_i32 = arith.constant 0 : i32
    %c0_i32_0 = arith.constant 0 : i32
    %c0_i32_1 = arith.constant 0 : i32
    return %c0_i32, %c0_i32_0 : i32, i32
  }
  func.func @transform_12(%arg0: i32) -> (i32, i32) {
    %c0_i32 = arith.constant 0 : i32
    %c0_i32_0 = arith.constant 0 : i32
    %c0_i32_1 = arith.constant 0 : i32
    return %c0_i32, %c0_i32_0 : i32, i32
  }
  func.func @transform_13(%arg0: i32) -> (i32, i32) {
    %c0_i32 = arith.constant 0 : i32
    %c0_i32_0 = arith.constant 0 : i32
    %c0_i32_1 = arith.constant 0 : i32
    return %c0_i32, %c0_i32_0 : i32, i32
  }
  func.func @transform_14(%arg0: i32) -> (i32, i32) {
    %c0_i32 = arith.constant 0 : i32
    %c0_i32_0 = arith.constant 0 : i32
    %c0_i32_1 = arith.constant 0 : i32
    return %c0_i32, %c0_i32_0 : i32, i32
  }
  func.func @transform_15(%arg0: i32) -> (i32, i32) {
    %c0_i32 = arith.constant 0 : i32
    %c0_i32_0 = arith.constant 0 : i32
    %c0_i32_1 = arith.constant 0 : i32
    return %c0_i32, %c0_i32_0 : i32, i32
  }
  func.func @transform_16(%arg0: i32) -> (i32, i32) {
    %c0_i32 = arith.constant 0 : i32
    %c0_i32_0 = arith.constant 0 : i32
    %c0_i32_1 = arith.constant 0 : i32
    return %c0_i32, %c0_i32_0 : i32, i32
  }
  func.func @transform_17(%arg0: i32) -> (i32, i32) {
    %c0_i32 = arith.constant 0 : i32
    %c0_i32_0 = arith.constant 0 : i32
    %c0_i32_1 = arith.constant 0 : i32
    return %c0_i32, %c0_i32_0 : i32, i32
  }
  func.func @transform_18(%arg0: i32) -> (i32, i32) {
    %c0_i32 = arith.constant 0 : i32
    %c0_i32_0 = arith.constant 0 : i32
    %c0_i32_1 = arith.constant 0 : i32
    return %c0_i32, %c0_i32_0 : i32, i32
  }
  func.func @transform_19(%arg0: i32) -> (i32, i32) {
    %c0_i32 = arith.constant 0 : i32
    %c0_i32_0 = arith.constant 0 : i32
    %c0_i32_1 = arith.constant 0 : i32
    return %c0_i32, %c0_i32_0 : i32, i32
  }
  func.func @transform_20(%arg0: i32) -> (i32, i32) {
    %c0_i32 = arith.constant 0 : i32
    %c0_i32_0 = arith.constant 0 : i32
    %c0_i32_1 = arith.constant 0 : i32
    return %c0_i32, %c0_i32_0 : i32, i32
  }
  func.func @transform_21(%arg0: i32) -> (i32, i32) {
    %c0_i32 = arith.constant 0 : i32
    %c0_i32_0 = arith.constant 0 : i32
    %c0_i32_1 = arith.constant 0 : i32
    return %c0_i32, %c0_i32_0 : i32, i32
  }
}

</mosaic_0001>

<llo_original>
// kernel: image_task_embedding_forward.1
$region0: #{image_task_embedding_forward.1}
  #allocation0 [shape = 'u32[]', space=smem, size = 0x4, offset = 0x4, fixed_abs, tag = 'smem constant byte address 0x4 - core index']
  #allocation1 [shape = 'u32[72,128]{1,0:T(1,128)}', space=vmem, size = 0x9000, scoped, tag = 'internal scratch']
  %s0 = inlined_call_operand.vmem [shape: f32[200,108], index: 0, kind: input, shape index: {}]
  %s1 = inlined_call_operand.vmem [shape: bf16[1600,200], index: 1, kind: input, shape index: {}]
  %s2 = inlined_call_operand.vmem [shape: bf16[720,64], index: 2, kind: input, shape index: {}]
  %s3 = inlined_call_operand.vmem [shape: f32[108,32], index: 3, kind: input, shape index: {}]
  %s4 = inlined_call_operand.vmem [shape: f32[1,32], index: 4, kind: input, shape index: {}]
  %s5 = inlined_call_operand.vmem [shape: f32[25,32,64], index: 5, kind: input, shape index: {}]
  %s6 = inlined_call_operand.vmem [shape: f32[1,64], index: 6, kind: input, shape index: {}]
  %s7 = inlined_call_operand.vmem [shape: f32[9,64,128], index: 7, kind: input, shape index: {}]
  %s8 = inlined_call_operand.vmem [shape: f32[1,128], index: 8, kind: input, shape index: {}]
  %s9 = inlined_call_operand.vmem [shape: f32[9,64,256], index: 9, kind: input, shape index: {}]
  %s10 = inlined_call_operand.vmem [shape: f32[9,64,256], index: 10, kind: input, shape index: {}]
  %s11 = inlined_call_operand.vmem [shape: f32[1,256], index: 11, kind: input, shape index: {}]
  %s12 = inlined_call_operand.vmem [shape: f32[1,256], index: 12, kind: input, shape index: {}]
  %s13 = inlined_call_operand.vmem [shape: f32[256,64], index: 13, kind: input, shape index: {}]
  %s14 = inlined_call_operand.vmem [shape: f32[256,64], index: 14, kind: input, shape index: {}]
  %s15 = inlined_call_operand.vmem [shape: f32[1,64], index: 15, kind: input, shape index: {}]
  %s16 = inlined_call_operand.vmem [shape: f32[64,64], index: 16, kind: input, shape index: {}]
  %s17 = inlined_call_operand.vmem [shape: f32[1,64], index: 17, kind: input, shape index: {}]
  %s18 = inlined_call_operand.vmem [shape: f32[64,6], index: 18, kind: input, shape index: {}]
  %s19 = inlined_call_operand.vmem [shape: f32[1,6], index: 19, kind: input, shape index: {}]
  %s20 = inlined_call_operand.hbm [shape: f32[2,6], index: 20, kind: output, shape index: {0}]
  %s21 = inlined_call_operand.hbm [shape: f32[2,256], index: 21, kind: output, shape index: {1}]
  %22 = xla_tuple %s20, %s21
  %s23 = sld [smem:[#allocation0]]
  $region98: #{image_task_embedding_forward.1} parent=0
    _
  %s25 = ssub.s32 1, %s23
  %s26 = scalar_select 0, %s25, %s23
  $region1: #{image_task_embedding_forward.1} parent=0
    #allocation2 [shape = 'u8[1024]{0}', space=vmem, size = 0x400, scoped, tag = 'output window, operand 0, single buffered']
    #allocation3 [shape = 's32[1]{0}', space=sflag, size = 0x4, scoped, tag = 'scoped memory for image_task_embedding_forward.1']
    #allocation4 [shape = 'u8[2048]{0}', space=vmem, size = 0x800, scoped, tag = 'output window, operand 1, single buffered']
    #allocation5 [shape = 's32[1]{0}', space=sflag, size = 0x4, scoped, tag = 'scoped memory for image_task_embedding_forward.1']
    %27 = vsyncpa [#allocation3], 0
    %28 = vsyncpa [#allocation5], 0
    // Predicated region
    $region2: #{image_task_embedding_forward.1} parent=1 // pred_check
      _
    $region3: #{image_task_embedding_forward.1} parent=1 // pred_check_branch
      %30 = sbr.rel (0) target = $region5
    $region4: #{image_task_embedding_forward.1} parent=1 // pred_region
      _
    $region5: #{image_task_embedding_forward.1} parent=1 // pred_fallthru
      _
    // Predicated region
    $region6: #{image_task_embedding_forward.1} parent=1 // pred_check
      _
    $region7: #{image_task_embedding_forward.1} parent=1 // pred_check_branch
      %32 = sbr.rel (0) target = $region9
    $region8: #{image_task_embedding_forward.1} parent=1 // pred_region
      _
    $region9: #{image_task_embedding_forward.1} parent=1 // pred_fallthru
      _
    // Predicated region
    $region10: #{image_task_embedding_forward.1} parent=1 // pred_check
      _
    $region11: #{image_task_embedding_forward.1} parent=1 // pred_check_branch
      %34 = sbr.rel (0) target = $region13
    $region12: #{image_task_embedding_forward.1} parent=1 // pred_region
      _
    $region13: #{image_task_embedding_forward.1} parent=1 // pred_fallthru
      _
    // Predicated region
    $region14: #{image_task_embedding_forward.1} parent=1 // pred_check
      _
    $region15: #{image_task_embedding_forward.1} parent=1 // pred_check_branch
      %36 = sbr.rel (0) target = $region17
    $region16: #{image_task_embedding_forward.1} parent=1 // pred_region
      _
    $region17: #{image_task_embedding_forward.1} parent=1 // pred_fallthru
      _
    // Predicated region
    $region18: #{image_task_embedding_forward.1} parent=1 // pred_check
      _
    $region19: #{image_task_embedding_forward.1} parent=1 // pred_check_branch
      %38 = sbr.rel (0) target = $region21
    $region20: #{image_task_embedding_forward.1} parent=1 // pred_region
      _
    $region21: #{image_task_embedding_forward.1} parent=1 // pred_fallthru
      _
    // Predicated region
    $region22: #{image_task_embedding_forward.1} parent=1 // pred_check
      _
    $region23: #{image_task_embedding_forward.1} parent=1 // pred_check_branch
      %40 = sbr.rel (0) target = $region25
    $region24: #{image_task_embedding_forward.1} parent=1 // pred_region
      _
    $region25: #{image_task_embedding_forward.1} parent=1 // pred_fallthru
      _
    // Predicated region
    $region26: #{image_task_embedding_forward.1} parent=1 // pred_check
      _
    $region27: #{image_task_embedding_forward.1} parent=1 // pred_check_branch
      %42 = sbr.rel (0) target = $region29
    $region28: #{image_task_embedding_forward.1} parent=1 // pred_region
      _
    $region29: #{image_task_embedding_forward.1} parent=1 // pred_fallthru
      _
    // Predicated region
    $region30: #{image_task_embedding_forward.1} parent=1 // pred_check
      _
    $region31: #{image_task_embedding_forward.1} parent=1 // pred_check_branch
      %44 = sbr.rel (0) target = $region33
    $region32: #{image_task_embedding_forward.1} parent=1 // pred_region
      _
    $region33: #{image_task_embedding_forward.1} parent=1 // pred_fallthru
      _
    // Predicated region
    $region34: #{image_task_embedding_forward.1} parent=1 // pred_check
      _
    $region35: #{image_task_embedding_forward.1} parent=1 // pred_check_branch
      %46 = sbr.rel (0) target = $region37
    $region36: #{image_task_embedding_forward.1} parent=1 // pred_region
      _
    $region37: #{image_task_embedding_forward.1} parent=1 // pred_fallthru
      _
    // Predicated region
    $region38: #{image_task_embedding_forward.1} parent=1 // pred_check
      _
    $region39: #{image_task_embedding_forward.1} parent=1 // pred_check_branch
      %48 = sbr.rel (0) target = $region41
    $region40: #{image_task_embedding_forward.1} parent=1 // pred_region
      _
    $region41: #{image_task_embedding_forward.1} parent=1 // pred_fallthru
      _
    // Predicated region
    $region42: #{image_task_embedding_forward.1} parent=1 // pred_check
      _
    $region43: #{image_task_embedding_forward.1} parent=1 // pred_check_branch
      %50 = sbr.rel (0) target = $region45
    $region44: #{image_task_embedding_forward.1} parent=1 // pred_region
      _
    $region45: #{image_task_embedding_forward.1} parent=1 // pred_fallthru
      _
    // Predicated region
    $region46: #{image_task_embedding_forward.1} parent=1 // pred_check
      _
    $region47: #{image_task_embedding_forward.1} parent=1 // pred_check_branch
      %52 = sbr.rel (0) target = $region49
    $region48: #{image_task_embedding_forward.1} parent=1 // pred_region
      _
    $region49: #{image_task_embedding_forward.1} parent=1 // pred_fallthru
      _
    // Predicated region
    $region50: #{image_task_embedding_forward.1} parent=1 // pred_check
      _
    $region51: #{image_task_embedding_forward.1} parent=1 // pred_check_branch
      %54 = sbr.rel (0) target = $region53
    $region52: #{image_task_embedding_forward.1} parent=1 // pred_region
      _
    $region53: #{image_task_embedding_forward.1} parent=1 // pred_fallthru
      _
    // Predicated region
    $region54: #{image_task_embedding_forward.1} parent=1 // pred_check
      _
    $region55: #{image_task_embedding_forward.1} parent=1 // pred_check_branch
      %56 = sbr.rel (0) target = $region57
    $region56: #{image_task_embedding_forward.1} parent=1 // pred_region
      _
    $region57: #{image_task_embedding_forward.1} parent=1 // pred_fallthru
      _
    // Predicated region
    $region58: #{image_task_embedding_forward.1} parent=1 // pred_check
      _
    $region59: #{image_task_embedding_forward.1} parent=1 // pred_check_branch
      %58 = sbr.rel (0) target = $region61
    $region60: #{image_task_embedding_forward.1} parent=1 // pred_region
      _
    $region61: #{image_task_embedding_forward.1} parent=1 // pred_fallthru
      _
    // Predicated region
    $region62: #{image_task_embedding_forward.1} parent=1 // pred_check
      _
    $region63: #{image_task_embedding_forward.1} parent=1 // pred_check_branch
      %60 = sbr.rel (0) target = $region65
    $region64: #{image_task_embedding_forward.1} parent=1 // pred_region
      _
    $region65: #{image_task_embedding_forward.1} parent=1 // pred_fallthru
      _
    // Predicated region
    $region66: #{image_task_embedding_forward.1} parent=1 // pred_check
      _
    $region67: #{image_task_embedding_forward.1} parent=1 // pred_check_branch
      %62 = sbr.rel (0) target = $region69
    $region68: #{image_task_embedding_forward.1} parent=1 // pred_region
      _
    $region69: #{image_task_embedding_forward.1} parent=1 // pred_fallthru
      _
    // Predicated region
    $region70: #{image_task_embedding_forward.1} parent=1 // pred_check
      _
    $region71: #{image_task_embedding_forward.1} parent=1 // pred_check_branch
      %64 = sbr.rel (0) target = $region73
    $region72: #{image_task_embedding_forward.1} parent=1 // pred_region
      _
    $region73: #{image_task_embedding_forward.1} parent=1 // pred_fallthru
      _
    // Predicated region
    $region74: #{image_task_embedding_forward.1} parent=1 // pred_check
      _
    $region75: #{image_task_embedding_forward.1} parent=1 // pred_check_branch
      %66 = sbr.rel (0) target = $region77
    $region76: #{image_task_embedding_forward.1} parent=1 // pred_region
      _
    $region77: #{image_task_embedding_forward.1} parent=1 // pred_fallthru
      _
    // Predicated region
    $region78: #{image_task_embedding_forward.1} parent=1 // pred_check
      _
    $region79: #{image_task_embedding_forward.1} parent=1 // pred_check_branch
      %68 = sbr.rel (0) target = $region81
    $region80: #{image_task_embedding_forward.1} parent=1 // pred_region
      _
    $region81: #{image_task_embedding_forward.1} parent=1 // pred_fallthru
      _
    %v69 = vld [vmem:[%s0] sm:$0xff]
    %v70 = vld [vmem:[%s0 + $0x8] sm:$0xff]
    %v71 = vld [vmem:[%s0 + $0x10] sm:$0xff]
    %v72 = vld [vmem:[%s0 + $0x18] sm:$0xff]
    %v73 = vld [vmem:[%s0 + $0x20] sm:$0xff]
    %v74 = vld [vmem:[%s0 + $0x28] sm:$0xff]
    %v75 = vld [vmem:[%s0 + $0x30] sm:$0xff]
    %v76 = vld [vmem:[%s0 + $0x38] sm:$0xff]
    %v77 = vld [vmem:[%s0 + $0x40] sm:$0xff]
    %v78 = vld [vmem:[%s0 + $0x48] sm:$0xff]
    %v79 = vld [vmem:[%s0 + $0x50] sm:$0xff]
    %v80 = vld [vmem:[%s0 + $0x58] sm:$0xff]
    %v81 = vld [vmem:[%s0 + $0x60] sm:$0xff]
    %v82 = vld [vmem:[%s0 + $0x68] sm:$0xff]
    %v83 = vld [vmem:[%s0 + $0x70] sm:$0xff]
    %v84 = vld [vmem:[%s0 + $0x78] sm:$0xff]
    %v85 = vld [vmem:[%s0 + $0x80] sm:$0xff]
    %v86 = vld [vmem:[%s0 + $0x88] sm:$0xff]
    %v87 = vld [vmem:[%s0 + $0x90] sm:$0xff]
    %v88 = vld [vmem:[%s0 + $0x98] sm:$0xff]
    %v89 = vld [vmem:[%s0 + $0xa0] sm:$0xff]
    %v90 = vld [vmem:[%s0 + $0xa8] sm:$0xff]
    %v91 = vld [vmem:[%s0 + $0xb0] sm:$0xff]
    %v92 = vld [vmem:[%s0 + $0xb8] sm:$0xff]
    %v93 = vld [vmem:[%s0 + $0xc0] sm:$0xff]
    %v94 = vld [vmem:[%s3] sm:$0xff]
    %v95 = vld [vmem:[%s3 + $0x8] sm:$0xff]
    %v96 = vld [vmem:[%s3 + $0x10] sm:$0xff]
    %v97 = vld [vmem:[%s3 + $0x18] sm:$0xff]
    %v98 = vld [vmem:[%s3 + $0x20] sm:$0xff]
    %v99 = vld [vmem:[%s3 + $0x28] sm:$0xff]
    %v100 = vld [vmem:[%s3 + $0x30] sm:$0xff]
    %v101 = vld [vmem:[%s3 + $0x38] sm:$0xff]
    %v102 = vld [vmem:[%s3 + $0x40] sm:$0xff]
    %v103 = vld [vmem:[%s3 + $0x48] sm:$0xff]
    %v104 = vld [vmem:[%s3 + $0x50] sm:$0xff]
    %v105 = vld [vmem:[%s3 + $0x58] sm:$0xff]
    %v106 = vld [vmem:[%s3 + $0x60] sm:$0xff]
    %v107 = vld [vmem:[%s3 + $0x68] sm:$0xf]
    %v108 = vld [vmem:[%s4] sm:$0x1]
    %v110 = vperm.slane %v108, 0
    %vm112 = vcmask 883712
    %v114 = vsel %vm112, %v69, 0
    %v117 = vsel %vm112, %v70, 0
    %v120 = vsel %vm112, %v71, 0
    %v123 = vsel %vm112, %v72, 0
    %v126 = vsel %vm112, %v73, 0
    %v129 = vsel %vm112, %v74, 0
    %v132 = vsel %vm112, %v75, 0
    %v135 = vsel %vm112, %v76, 0
    %v138 = vsel %vm112, %v77, 0
    %v141 = vsel %vm112, %v78, 0
    %v144 = vsel %vm112, %v79, 0
    %v147 = vsel %vm112, %v80, 0
    %v150 = vsel %vm112, %v81, 0
    %v153 = vsel %vm112, %v82, 0
    %v156 = vsel %vm112, %v83, 0
    %v159 = vsel %vm112, %v84, 0
    %v162 = vsel %vm112, %v85, 0
    %v165 = vsel %vm112, %v86, 0
    %v168 = vsel %vm112, %v87, 0
    %v171 = vsel %vm112, %v88, 0
    %v174 = vsel %vm112, %v89, 0
    %v177 = vsel %vm112, %v90, 0
    %v180 = vsel %vm112, %v91, 0
    %v183 = vsel %vm112, %v92, 0
    %v186 = vsel %vm112, %v93, 0
    %vm188 = vcmask 1043456
    %v190 = vsel %vm188, %v107, 0
    %192 = vmatpush.msra.mxu0 0.0
    %193 = vmatpush.msra.mxu0 0.0
    %194 = vmatpush.msra.mxu0 %v190
    %195 = vmatpush.msra.mxu0 %v106
    %196 = vmatpush.msra.mxu0 %v105
    %197 = vmatpush.msra.mxu0 %v104
    %198 = vmatpush.msra.mxu0 %v103
    %199 = vmatpush.msra.mxu0 %v102
    %200 = vmatpush.msra.mxu0 %v101
    %201 = vmatpush.msra.mxu0 %v100
    %202 = vmatpush.msra.mxu0 %v99
    %203 = vmatpush.msra.mxu0 %v98
    %204 = vmatpush.msra.mxu0 %v97
    %205 = vmatpush.msra.mxu0 %v96
    %206 = vmatpush.msra.mxu0 %v95
    %207 = vmatpush.msra.mxu0 %v94
    %208 = vmatmul.f32.gmra.mxu0 %v114
    %v209 = vpop.f32.mrf.mxu0
    %v210 = vadd.f32 %v110, %v209
    %211 = vmatmul.f32.gmra.mxu0 %v117
    %v212 = vpop.f32.mrf.mxu0
    %v213 = vadd.f32 %v110, %v212
    %214 = vmatmul.f32.gmra.mxu0 %v120
    %v215 = vpop.f32.mrf.mxu0
    %v216 = vadd.f32 %v110, %v215
    %217 = vmatmul.f32.gmra.mxu0 %v123
    %v218 = vpop.f32.mrf.mxu0
    %v219 = vadd.f32 %v110, %v218
    %220 = vmatmul.f32.gmra.mxu0 %v126
    %v221 = vpop.f32.mrf.mxu0
    %v222 = vadd.f32 %v110, %v221
    %223 = vmatmul.f32.gmra.mxu0 %v129
    %v224 = vpop.f32.mrf.mxu0
    %v225 = vadd.f32 %v110, %v224
    %226 = vmatmul.f32.gmra.mxu0 %v132
    %v227 = vpop.f32.mrf.mxu0
    %v228 = vadd.f32 %v110, %v227
    %229 = vmatmul.f32.gmra.mxu0 %v135
    %v230 = vpop.f32.mrf.mxu0
    %v231 = vadd.f32 %v110, %v230
    %232 = vmatmul.f32.gmra.mxu0 %v138
    %v233 = vpop.f32.mrf.mxu0
    %v234 = vadd.f32 %v110, %v233
    %235 = vmatmul.f32.gmra.mxu0 %v141
    %v236 = vpop.f32.mrf.mxu0
    %v237 = vadd.f32 %v110, %v236
    %238 = vmatmul.f32.gmra.mxu0 %v144
    %v239 = vpop.f32.mrf.mxu0
    %v240 = vadd.f32 %v110, %v239
    %241 = vmatmul.f32.gmra.mxu0 %v147
    %v242 = vpop.f32.mrf.mxu0
    %v243 = vadd.f32 %v110, %v242
    %244 = vmatmul.f32.gmra.mxu0 %v150
    %v245 = vpop.f32.mrf.mxu0
    %v246 = vadd.f32 %v110, %v245
    %247 = vmatmul.f32.gmra.mxu0 %v153
    %v248 = vpop.f32.mrf.mxu0
    %v249 = vadd.f32 %v110, %v248
    %250 = vmatmul.f32.gmra.mxu0 %v156
    %v251 = vpop.f32.mrf.mxu0
    %v252 = vadd.f32 %v110, %v251
    %253 = vmatmul.f32.gmra.mxu0 %v159
    %v254 = vpop.f32.mrf.mxu0
    %v255 = vadd.f32 %v110, %v254
    %256 = vmatmul.f32.gmra.mxu0 %v162
    %v257 = vpop.f32.mrf.mxu0
    %v258 = vadd.f32 %v110, %v257
    %259 = vmatmul.f32.gmra.mxu0 %v165
    %v260 = vpop.f32.mrf.mxu0
    %v261 = vadd.f32 %v110, %v260
    %262 = vmatmul.f32.gmra.mxu0 %v168
    %v263 = vpop.f32.mrf.mxu0
    %v264 = vadd.f32 %v110, %v263
    %265 = vmatmul.f32.gmra.mxu0 %v171
    %v266 = vpop.f32.mrf.mxu0
    %v267 = vadd.f32 %v110, %v266
    %268 = vmatmul.f32.gmra.mxu0 %v174
    %v269 = vpop.f32.mrf.mxu0
    %v270 = vadd.f32 %v110, %v269
    %271 = vmatmul.f32.gmra.mxu0 %v177
    %v272 = vpop.f32.mrf.mxu0
    %v273 = vadd.f32 %v110, %v272
    %274 = vmatmul.f32.gmra.mxu0 %v180
    %v275 = vpop.f32.mrf.mxu0
    %v276 = vadd.f32 %v110, %v275
    %277 = vmatmul.f32.gmra.mxu0 %v183
    %v278 = vpop.f32.mrf.mxu0
    %v279 = vadd.f32 %v110, %v278
    %280 = vmatmul.f32.gmra.mxu0 %v186
    %v281 = vpop.f32.mrf.mxu0
    %v282 = vadd.f32 %v110, %v281
    %283 = vdwg.mxu0
    %v284 = vmax.f32 %v210, 0.0
    %v285 = vmax.f32 %v213, 0.0
    %v286 = vmax.f32 %v216, 0.0
    %v287 = vmax.f32 %v219, 0.0
    %v288 = vmax.f32 %v222, 0.0
    %v289 = vmax.f32 %v225, 0.0
    %v290 = vmax.f32 %v228, 0.0
    %v291 = vmax.f32 %v231, 0.0
    %v292 = vmax.f32 %v234, 0.0
    %v293 = vmax.f32 %v237, 0.0
    %v294 = vmax.f32 %v240, 0.0
    %v295 = vmax.f32 %v243, 0.0
    %v296 = vmax.f32 %v246, 0.0
    %v297 = vmax.f32 %v249, 0.0
    %v298 = vmax.f32 %v252, 0.0
    %v299 = vmax.f32 %v255, 0.0
    %v300 = vmax.f32 %v258, 0.0
    %v301 = vmax.f32 %v261, 0.0
    %v302 = vmax.f32 %v264, 0.0
    %v303 = vmax.f32 %v267, 0.0
    %v304 = vmax.f32 %v270, 0.0
    %v305 = vmax.f32 %v273, 0.0
    %v306 = vmax.f32 %v276, 0.0
    %v307 = vmax.f32 %v279, 0.0
    %v308 = vmax.f32 %v282, 0.0
    %v309 = vld [vmem:[%s1] sm:$0xff]
    %v310 = vld [vmem:[%s1 + $0x8] sm:$0xff]
    %v311 = vld [vmem:[%s1 + $0x10] sm:$0xff]
    %v312 = vld [vmem:[%s1 + $0x18] sm:$0xff]
    %v313 = vld [vmem:[%s1 + $0x20] sm:$0xff]
    %v314 = vld [vmem:[%s1 + $0x28] sm:$0xff]
    %v315 = vld [vmem:[%s1 + $0x30] sm:$0xff]
    %v316 = vld [vmem:[%s1 + $0x38] sm:$0xff]
    %v317 = vunpack.c.l.bf16 %v309
    %v318 = vunpack.c.h.bf16 %v309
    %v319 = vunpack.c.l.bf16 %v310
    %v320 = vunpack.c.h.bf16 %v310
    %v321 = vunpack.c.l.bf16 %v311
    %v322 = vunpack.c.h.bf16 %v311
    %v323 = vunpack.c.l.bf16 %v312
    %v324 = vunpack.c.h.bf16 %v312
    %v325 = vunpack.c.l.bf16 %v313
    %v326 = vunpack.c.h.bf16 %v313
    %v327 = vunpack.c.l.bf16 %v314
    %v328 = vunpack.c.h.bf16 %v314
    %v329 = vunpack.c.l.bf16 %v315
    %v330 = vunpack.c.h.bf16 %v315
    %v331 = vunpack.c.l.bf16 %v316
    %v332 = vunpack.c.h.bf16 %v316
    %vm333 = vcmask 588800
    %v335 = vsel %vm333, %v318, 0
    %v338 = vsel %vm333, %v320, 0
    %v341 = vsel %vm333, %v322, 0
    %v344 = vsel %vm333, %v324, 0
    %v347 = vsel %vm333, %v326, 0
    %v350 = vsel %vm333, %v328, 0
    %v353 = vsel %vm333, %v330, 0
    %v356 = vsel %vm333, %v332, 0
    %358 = vmatpush.msra.mxu0 %v299
    %359 = vmatpush.msra.mxu0 %v298
    %360 = vmatpush.msra.mxu0 %v297
    %361 = vmatpush.msra.mxu0 %v296
    %362 = vmatpush.msra.mxu0 %v295
    %363 = vmatpush.msra.mxu0 %v294
    %364 = vmatpush.msra.mxu0 %v293
    %365 = vmatpush.msra.mxu0 %v292
    %366 = vmatpush.msra.mxu0 %v291
    %367 = vmatpush.msra.mxu0 %v290
    %368 = vmatpush.msra.mxu0 %v289
    %369 = vmatpush.msra.mxu0 %v288
    %370 = vmatpush.msra.mxu0 %v287
    %371 = vmatpush.msra.mxu0 %v286
    %372 = vmatpush.msra.mxu0 %v285
    %373 = vmatpush.msra.mxu0 %v284
    %374 = vmatmul.f32.gmra.mxu0 %v317
    %v375 = vpop.f32.mrf.mxu0
    %v376 = vadd.f32 0.0, %v375
    %377 = vmatmul.f32.gmra.mxu0 %v319
    %v378 = vpop.f32.mrf.mxu0
    %v379 = vadd.f32 0.0, %v378
    %380 = vmatmul.f32.gmra.mxu0 %v321
    %v381 = vpop.f32.mrf.mxu0
    %v382 = vadd.f32 0.0, %v381
    %383 = vmatmul.f32.gmra.mxu0 %v323
    %v384 = vpop.f32.mrf.mxu0
    %v385 = vadd.f32 0.0, %v384
    %386 = vmatmul.f32.gmra.mxu0 %v325
    %v387 = vpop.f32.mrf.mxu0
    %v388 = vadd.f32 0.0, %v387
    %389 = vmatmul.f32.gmra.mxu0 %v327
    %v390 = vpop.f32.mrf.mxu0
    %v391 = vadd.f32 0.0, %v390
    %392 = vmatmul.f32.gmra.mxu0 %v329
    %v393 = vpop.f32.mrf.mxu0
    %v394 = vadd.f32 0.0, %v393
    %395 = vmatmul.f32.gmra.mxu0 %v331
    %v396 = vpop.f32.mrf.mxu0
    %v397 = vadd.f32 0.0, %v396
    %398 = vdwg.mxu0
    %399 = vmatpush.msra.mxu0 0.0
    %400 = vmatpush.msra.mxu0 0.0
    %401 = vmatpush.msra.mxu0 0.0
    %402 = vmatpush.msra.mxu0 0.0
    %403 = vmatpush.msra.mxu0 0.0
    %404 = vmatpush.msra.mxu0 0.0
    %405 = vmatpush.msra.mxu0 0.0
    %406 = vmatpush.msra.mxu0 %v308
    %407 = vmatpush.msra.mxu0 %v307
    %408 = vmatpush.msra.mxu0 %v306
    %409 = vmatpush.msra.mxu0 %v305
    %410 = vmatpush.msra.mxu0 %v304
    %411 = vmatpush.msra.mxu0 %v303
    %412 = vmatpush.msra.mxu0 %v302
    %413 = vmatpush.msra.mxu0 %v301
    %414 = vmatpush.msra.mxu0 %v300
    %415 = vmatmul.f32.gmra.mxu0 %v335
    %v416 = vpop.f32.mrf.mxu0
    %v417 = vadd.f32 %v376, %v416
    %418 = vmatmul.f32.gmra.mxu0 %v338
    %v419 = vpop.f32.mrf.mxu0
    %v420 = vadd.f32 %v379, %v419
    %421 = vmatmul.f32.gmra.mxu0 %v341
    %v422 = vpop.f32.mrf.mxu0
    %v423 = vadd.f32 %v382, %v422
    %424 = vmatmul.f32.gmra.mxu0 %v344
    %v425 = vpop.f32.mrf.mxu0
    %v426 = vadd.f32 %v385, %v425
    %427 = vmatmul.f32.gmra.mxu0 %v347
    %v428 = vpop.f32.mrf.mxu0
    %v429 = vadd.f32 %v388, %v428
    %430 = vmatmul.f32.gmra.mxu0 %v350
    %v431 = vpop.f32.mrf.mxu0
    %v432 = vadd.f32 %v391, %v431
    %433 = vmatmul.f32.gmra.mxu0 %v353
    %v434 = vpop.f32.mrf.mxu0
    %v435 = vadd.f32 %v394, %v434
    %436 = vmatmul.f32.gmra.mxu0 %v356
    %v437 = vpop.f32.mrf.mxu0
    %v438 = vadd.f32 %v397, %v437
    %439 = vdwg.mxu0
    %v440 = vld [vmem:[%s5] sm:$0xff]
    %v441 = vld [vmem:[%s5 + $0x8] sm:$0xff]
    %v442 = vld [vmem:[%s5 + $0x10] sm:$0xff]
    %v443 = vld [vmem:[%s5 + $0x18] sm:$0xff]
    %v444 = vld [vmem:[%s1 + $0x40] sm:$0xff]
    %v445 = vld [vmem:[%s1 + $0x48] sm:$0xff]
    %v446 = vld [vmem:[%s1 + $0x50] sm:$0xff]
    %v447 = vld [vmem:[%s1 + $0x58] sm:$0xff]
    %v448 = vld [vmem:[%s1 + $0x60] sm:$0xff]
    %v449 = vld [vmem:[%s1 + $0x68] sm:$0xff]
    %v450 = vld [vmem:[%s1 + $0x70] sm:$0xff]
    %v451 = vld [vmem:[%s1 + $0x78] sm:$0xff]
    %v452 = vunpack.c.l.bf16 %v444
    %v453 = vunpack.c.h.bf16 %v444
    %v454 = vunpack.c.l.bf16 %v445
    %v455 = vunpack.c.h.bf16 %v445
    %v456 = vunpack.c.l.bf16 %v446
    %v457 = vunpack.c.h.bf16 %v446
    %v458 = vunpack.c.l.bf16 %v447
    %v459 = vunpack.c.h.bf16 %v447
    %v460 = vunpack.c.l.bf16 %v448
    %v461 = vunpack.c.h.bf16 %v448
    %v462 = vunpack.c.l.bf16 %v449
    %v463 = vunpack.c.h.bf16 %v449
    %v464 = vunpack.c.l.bf16 %v450
    %v465 = vunpack.c.h.bf16 %v450
    %v466 = vunpack.c.l.bf16 %v451
    %v467 = vunpack.c.h.bf16 %v451
    %v469 = vsel %vm333, %v453, 0
    %v472 = vsel %vm333, %v455, 0
    %v475 = vsel %vm333, %v457, 0
    %v478 = vsel %vm333, %v459, 0
    %v481 = vsel %vm333, %v461, 0
    %v484 = vsel %vm333, %v463, 0
    %v487 = vsel %vm333, %v465, 0
    %v490 = vsel %vm333, %v467, 0
    %492 = vmatpush.msra.mxu0 %v299
    %493 = vmatpush.msra.mxu0 %v298
    %494 = vmatpush.msra.mxu0 %v297
    %495 = vmatpush.msra.mxu0 %v296
    %496 = vmatpush.msra.mxu0 %v295
    %497 = vmatpush.msra.mxu0 %v294
    %498 = vmatpush.msra.mxu0 %v293
    %499 = vmatpush.msra.mxu0 %v292
    %500 = vmatpush.msra.mxu0 %v291
    %501 = vmatpush.msra.mxu0 %v290
    %502 = vmatpush.msra.mxu0 %v289
    %503 = vmatpush.msra.mxu0 %v288
    %504 = vmatpush.msra.mxu0 %v287
    %505 = vmatpush.msra.mxu0 %v286
    %506 = vmatpush.msra.mxu0 %v285
    %507 = vmatpush.msra.mxu0 %v284
    %508 = vmatmul.f32.gmra.mxu0 %v452
    %v509 = vpop.f32.mrf.mxu0
    %v510 = vadd.f32 0.0, %v509
    %511 = vmatmul.f32.gmra.mxu0 %v454
    %v512 = vpop.f32.mrf.mxu0
    %v513 = vadd.f32 0.0, %v512
    %514 = vmatmul.f32.gmra.mxu0 %v456
    %v515 = vpop.f32.mrf.mxu0
    %v516 = vadd.f32 0.0, %v515
    %517 = vmatmul.f32.gmra.mxu0 %v458
    %v518 = vpop.f32.mrf.mxu0
    %v519 = vadd.f32 0.0, %v518
    %520 = vmatmul.f32.gmra.mxu0 %v460
    %v521 = vpop.f32.mrf.mxu0
    %v522 = vadd.f32 0.0, %v521
    %523 = vmatmul.f32.gmra.mxu0 %v462
    %v524 = vpop.f32.mrf.mxu0
    %v525 = vadd.f32 0.0, %v524
    %526 = vmatmul.f32.gmra.mxu0 %v464
    %v527 = vpop.f32.mrf.mxu0
    %v528 = vadd.f32 0.0, %v527
    %529 = vmatmul.f32.gmra.mxu0 %v466
    %v530 = vpop.f32.mrf.mxu0
    %v531 = vadd.f32 0.0, %v530
    %532 = vdwg.mxu0
    %533 = vmatpush.msra.mxu0 0.0
    %534 = vmatpush.msra.mxu0 0.0
    %535 = vmatpush.msra.mxu0 0.0
    %536 = vmatpush.msra.mxu0 0.0
    %537 = vmatpush.msra.mxu0 0.0
    %538 = vmatpush.msra.mxu0 0.0
    %539 = vmatpush.msra.mxu0 0.0
    %540 = vmatpush.msra.mxu0 %v308
    %541 = vmatpush.msra.mxu0 %v307
    %542 = vmatpush.msra.mxu0 %v306
    %543 = vmatpush.msra.mxu0 %v305
    %544 = vmatpush.msra.mxu0 %v304
    %545 = vmatpush.msra.mxu0 %v303
    %546 = vmatpush.msra.mxu0 %v302
    %547 = vmatpush.msra.mxu0 %v301
    %548 = vmatpush.msra.mxu0 %v300
    %549 = vmatmul.f32.gmra.mxu0 %v469
    %v550 = vpop.f32.mrf.mxu0
    %v551 = vadd.f32 %v510, %v550
    %552 = vmatmul.f32.gmra.mxu0 %v472
    %v553 = vpop.f32.mrf.mxu0
    %v554 = vadd.f32 %v513, %v553
    %555 = vmatmul.f32.gmra.mxu0 %v475
    %v556 = vpop.f32.mrf.mxu0
    %v557 = vadd.f32 %v516, %v556
    %558 = vmatmul.f32.gmra.mxu0 %v478
    %v559 = vpop.f32.mrf.mxu0
    %v560 = vadd.f32 %v519, %v559
    %561 = vmatmul.f32.gmra.mxu0 %v481
    %v562 = vpop.f32.mrf.mxu0
    %v563 = vadd.f32 %v522, %v562
    %564 = vmatmul.f32.gmra.mxu0 %v484
    %v565 = vpop.f32.mrf.mxu0
    %v566 = vadd.f32 %v525, %v565
    %567 = vmatmul.f32.gmra.mxu0 %v487
    %v568 = vpop.f32.mrf.mxu0
    %v569 = vadd.f32 %v528, %v568
    %570 = vmatmul.f32.gmra.mxu0 %v490
    %v571 = vpop.f32.mrf.mxu0
    %v572 = vadd.f32 %v531, %v571
    %573 = vdwg.mxu0
    %s574 = scalar_lea.vmem %s5, 32
    %v575 = vld [vmem:[%s574] sm:$0xff]
    %v576 = vld [vmem:[%s574 + $0x8] sm:$0xff]
    %v577 = vld [vmem:[%s574 + $0x10] sm:$0xff]
    %v578 = vld [vmem:[%s574 + $0x18] sm:$0xff]
    %v579 = vld [vmem:[%s1 + $0x80] sm:$0xff]
    %v580 = vld [vmem:[%s1 + $0x88] sm:$0xff]
    %v581 = vld [vmem:[%s1 + $0x90] sm:$0xff]
    %v582 = vld [vmem:[%s1 + $0x98] sm:$0xff]
    %v583 = vld [vmem:[%s1 + $0xa0] sm:$0xff]
    %v584 = vld [vmem:[%s1 + $0xa8] sm:$0xff]
    %v585 = vld [vmem:[%s1 + $0xb0] sm:$0xff]
    %v586 = vld [vmem:[%s1 + $0xb8] sm:$0xff]
    %v587 = vunpack.c.l.bf16 %v579
    %v588 = vunpack.c.h.bf16 %v579
    %v589 = vunpack.c.l.bf16 %v580
    %v590 = vunpack.c.h.bf16 %v580
    %v591 = vunpack.c.l.bf16 %v581
    %v592 = vunpack.c.h.bf16 %v581
    %v593 = vunpack.c.l.bf16 %v582
    %v594 = vunpack.c.h.bf16 %v582
    %v595 = vunpack.c.l.bf16 %v583
    %v596 = vunpack.c.h.bf16 %v583
    %v597 = vunpack.c.l.bf16 %v584
    %v598 = vunpack.c.h.bf16 %v584
    %v599 = vunpack.c.l.bf16 %v585
    %v600 = vunpack.c.h.bf16 %v585
    %v601 = vunpack.c.l.bf16 %v586
    %v602 = vunpack.c.h.bf16 %v586
    %v604 = vsel %vm333, %v588, 0
    %v607 = vsel %vm333, %v590, 0
    %v610 = vsel %vm333, %v592, 0
    %v613 = vsel %vm333, %v594, 0
    %v616 = vsel %vm333, %v596, 0
    %v619 = vsel %vm333, %v598, 0
    %v622 = vsel %vm333, %v600, 0
    %v625 = vsel %vm333, %v602, 0
    %627 = vmatpush.msra.mxu0 %v299
    %628 = vmatpush.msra.mxu0 %v298
    %629 = vmatpush.msra.mxu0 %v297
    %630 = vmatpush.msra.mxu0 %v296
    %631 = vmatpush.msra.mxu0 %v295
    %632 = vmatpush.msra.mxu0 %v294
    %633 = vmatpush.msra.mxu0 %v293
    %634 = vmatpush.msra.mxu0 %v292
    %635 = vmatpush.msra.mxu0 %v291
    %636 = vmatpush.msra.mxu0 %v290
    %637 = vmatpush.msra.mxu0 %v289
    %638 = vmatpush.msra.mxu0 %v288
    %639 = vmatpush.msra.mxu0 %v287
    %640 = vmatpush.msra.mxu0 %v286
    %641 = vmatpush.msra.mxu0 %v285
    %642 = vmatpush.msra.mxu0 %v284
    %643 = vmatmul.f32.gmra.mxu0 %v587
    %v644 = vpop.f32.mrf.mxu0
    %v645 = vadd.f32 0.0, %v644
    %646 = vmatmul.f32.gmra.mxu0 %v589
    %v647 = vpop.f32.mrf.mxu0
    %v648 = vadd.f32 0.0, %v647
    %649 = vmatmul.f32.gmra.mxu0 %v591
    %v650 = vpop.f32.mrf.mxu0
    %v651 = vadd.f32 0.0, %v650
    %652 = vmatmul.f32.gmra.mxu0 %v593
    %v653 = vpop.f32.mrf.mxu0
    %v654 = vadd.f32 0.0, %v653
    %655 = vmatmul.f32.gmra.mxu0 %v595
    %v656 = vpop.f32.mrf.mxu0
    %v657 = vadd.f32 0.0, %v656
    %658 = vmatmul.f32.gmra.mxu0 %v597
    %v659 = vpop.f32.mrf.mxu0
    %v660 = vadd.f32 0.0, %v659
    %661 = vmatmul.f32.gmra.mxu0 %v599
    %v662 = vpop.f32.mrf.mxu0
    %v663 = vadd.f32 0.0, %v662
    %664 = vmatmul.f32.gmra.mxu0 %v601
    %v665 = vpop.f32.mrf.mxu0
    %v666 = vadd.f32 0.0, %v665
    %667 = vdwg.mxu0
    %668 = vmatpush.msra.mxu0 0.0
    %669 = vmatpush.msra.mxu0 0.0
    %670 = vmatpush.msra.mxu0 0.0
    %671 = vmatpush.msra.mxu0 0.0
    %672 = vmatpush.msra.mxu0 0.0
    %673 = vmatpush.msra.mxu0 0.0
    %674 = vmatpush.msra.mxu0 0.0
    %675 = vmatpush.msra.mxu0 %v308
    %676 = vmatpush.msra.mxu0 %v307
    %677 = vmatpush.msra.mxu0 %v306
    %678 = vmatpush.msra.mxu0 %v305
    %679 = vmatpush.msra.mxu0 %v304
    %680 = vmatpush.msra.mxu0 %v303
    %681 = vmatpush.msra.mxu0 %v302
    %682 = vmatpush.msra.mxu0 %v301
    %683 = vmatpush.msra.mxu0 %v300
    %684 = vmatmul.f32.gmra.mxu0 %v604
    %v685 = vpop.f32.mrf.mxu0
    %v686 = vadd.f32 %v645, %v685
    %687 = vmatmul.f32.gmra.mxu0 %v607
    %v688 = vpop.f32.mrf.mxu0
    %v689 = vadd.f32 %v648, %v688
    %690 = vmatmul.f32.gmra.mxu0 %v610
    %v691 = vpop.f32.mrf.mxu0
    %v692 = vadd.f32 %v651, %v691
    %693 = vmatmul.f32.gmra.mxu0 %v613
    %v694 = vpop.f32.mrf.mxu0
    %v695 = vadd.f32 %v654, %v694
    %696 = vmatmul.f32.gmra.mxu0 %v616
    %v697 = vpop.f32.mrf.mxu0
    %v698 = vadd.f32 %v657, %v697
    %699 = vmatmul.f32.gmra.mxu0 %v619
    %v700 = vpop.f32.mrf.mxu0
    %v701 = vadd.f32 %v660, %v700
    %702 = vmatmul.f32.gmra.mxu0 %v622
    %v703 = vpop.f32.mrf.mxu0
    %v704 = vadd.f32 %v663, %v703
    %705 = vmatmul.f32.gmra.mxu0 %v625
    %v706 = vpop.f32.mrf.mxu0
    %v707 = vadd.f32 %v666, %v706
    %708 = vdwg.mxu0
    %s709 = scalar_lea.vmem %s5, 64
    %v710 = vld [vmem:[%s709] sm:$0xff]
    %v711 = vld [vmem:[%s709 + $0x8] sm:$0xff]
    %v712 = vld [vmem:[%s709 + $0x10] sm:$0xff]
    %v713 = vld [vmem:[%s709 + $0x18] sm:$0xff]
    %v714 = vld [vmem:[%s1 + $0xc0] sm:$0xff]
    %v715 = vld [vmem:[%s1 + $0xc8] sm:$0xff]
    %v716 = vld [vmem:[%s1 + $0xd0] sm:$0xff]
    %v717 = vld [vmem:[%s1 + $0xd8] sm:$0xff]
    %v718 = vld [vmem:[%s1 + $0xe0] sm:$0xff]
    %v719 = vld [vmem:[%s1 + $0xe8] sm:$0xff]
    %v720 = vld [vmem:[%s1 + $0xf0] sm:$0xff]
    %v721 = vld [vmem:[%s1 + $0xf8] sm:$0xff]
    %v722 = vunpack.c.l.bf16 %v714
    %v723 = vunpack.c.h.bf16 %v714
    %v724 = vunpack.c.l.bf16 %v715
    %v725 = vunpack.c.h.bf16 %v715
    %v726 = vunpack.c.l.bf16 %v716
    %v727 = vunpack.c.h.bf16 %v716
    %v728 = vunpack.c.l.bf16 %v717
    %v729 = vunpack.c.h.bf16 %v717
    %v730 = vunpack.c.l.bf16 %v718
    %v731 = vunpack.c.h.bf16 %v718
    %v732 = vunpack.c.l.bf16 %v719
    %v733 = vunpack.c.h.bf16 %v719
    %v734 = vunpack.c.l.bf16 %v720
    %v735 = vunpack.c.h.bf16 %v720
    %v736 = vunpack.c.l.bf16 %v721
    %v737 = vunpack.c.h.bf16 %v721
    %v739 = vsel %vm333, %v723, 0
    %v742 = vsel %vm333, %v725, 0
    %v745 = vsel %vm333, %v727, 0
    %v748 = vsel %vm333, %v729, 0
    %v751 = vsel %vm333, %v731, 0
    %v754 = vsel %vm333, %v733, 0
    %v757 = vsel %vm333, %v735, 0
    %v760 = vsel %vm333, %v737, 0
    %762 = vmatpush.msra.mxu0 %v299
    %763 = vmatpush.msra.mxu0 %v298
    %764 = vmatpush.msra.mxu0 %v297
    %765 = vmatpush.msra.mxu0 %v296
    %766 = vmatpush.msra.mxu0 %v295
    %767 = vmatpush.msra.mxu0 %v294
    %768 = vmatpush.msra.mxu0 %v293
    %769 = vmatpush.msra.mxu0 %v292
    %770 = vmatpush.msra.mxu0 %v291
    %771 = vmatpush.msra.mxu0 %v290
    %772 = vmatpush.msra.mxu0 %v289
    %773 = vmatpush.msra.mxu0 %v288
    %774 = vmatpush.msra.mxu0 %v287
    %775 = vmatpush.msra.mxu0 %v286
    %776 = vmatpush.msra.mxu0 %v285
    %777 = vmatpush.msra.mxu0 %v284
    %778 = vmatmul.f32.gmra.mxu0 %v722
    %v779 = vpop.f32.mrf.mxu0
    %v780 = vadd.f32 0.0, %v779
    %781 = vmatmul.f32.gmra.mxu0 %v724
    %v782 = vpop.f32.mrf.mxu0
    %v783 = vadd.f32 0.0, %v782
    %784 = vmatmul.f32.gmra.mxu0 %v726
    %v785 = vpop.f32.mrf.mxu0
    %v786 = vadd.f32 0.0, %v785
    %787 = vmatmul.f32.gmra.mxu0 %v728
    %v788 = vpop.f32.mrf.mxu0
    %v789 = vadd.f32 0.0, %v788
    %790 = vmatmul.f32.gmra.mxu0 %v730
    %v791 = vpop.f32.mrf.mxu0
    %v792 = vadd.f32 0.0, %v791
    %793 = vmatmul.f32.gmra.mxu0 %v732
    %v794 = vpop.f32.mrf.mxu0
    %v795 = vadd.f32 0.0, %v794
    %796 = vmatmul.f32.gmra.mxu0 %v734
    %v797 = vpop.f32.mrf.mxu0
    %v798 = vadd.f32 0.0, %v797
    %799 = vmatmul.f32.gmra.mxu0 %v736
    %v800 = vpop.f32.mrf.mxu0
    %v801 = vadd.f32 0.0, %v800
    %802 = vdwg.mxu0
    %803 = vmatpush.msra.mxu0 0.0
    %804 = vmatpush.msra.mxu0 0.0
    %805 = vmatpush.msra.mxu0 0.0
    %806 = vmatpush.msra.mxu0 0.0
    %807 = vmatpush.msra.mxu0 0.0
    %808 = vmatpush.msra.mxu0 0.0
    %809 = vmatpush.msra.mxu0 0.0
    %810 = vmatpush.msra.mxu0 %v308
    %811 = vmatpush.msra.mxu0 %v307
    %812 = vmatpush.msra.mxu0 %v306
    %813 = vmatpush.msra.mxu0 %v305
    %814 = vmatpush.msra.mxu0 %v304
    %815 = vmatpush.msra.mxu0 %v303
    %816 = vmatpush.msra.mxu0 %v302
    %817 = vmatpush.msra.mxu0 %v301
    %818 = vmatpush.msra.mxu0 %v300
    %819 = vmatmul.f32.gmra.mxu0 %v739
    %v820 = vpop.f32.mrf.mxu0
    %v821 = vadd.f32 %v780, %v820
    %822 = vmatmul.f32.gmra.mxu0 %v742
    %v823 = vpop.f32.mrf.mxu0
    %v824 = vadd.f32 %v783, %v823
    %825 = vmatmul.f32.gmra.mxu0 %v745
    %v826 = vpop.f32.mrf.mxu0
    %v827 = vadd.f32 %v786, %v826
    %828 = vmatmul.f32.gmra.mxu0 %v748
    %v829 = vpop.f32.mrf.mxu0
    %v830 = vadd.f32 %v789, %v829
    %831 = vmatmul.f32.gmra.mxu0 %v751
    %v832 = vpop.f32.mrf.mxu0
    %v833 = vadd.f32 %v792, %v832
    %834 = vmatmul.f32.gmra.mxu0 %v754
    %v835 = vpop.f32.mrf.mxu0
    %v836 = vadd.f32 %v795, %v835
    %837 = vmatmul.f32.gmra.mxu0 %v757
    %v838 = vpop.f32.mrf.mxu0
    %v839 = vadd.f32 %v798, %v838
    %840 = vmatmul.f32.gmra.mxu0 %v760
    %v841 = vpop.f32.mrf.mxu0
    %v842 = vadd.f32 %v801, %v841
    %843 = vdwg.mxu0
    %s844 = scalar_lea.vmem %s5, 96
    %v845 = vld [vmem:[%s844] sm:$0xff]
    %v846 = vld [vmem:[%s844 + $0x8] sm:$0xff]
    %v847 = vld [vmem:[%s844 + $0x10] sm:$0xff]
    %v848 = vld [vmem:[%s844 + $0x18] sm:$0xff]
    %v849 = vld [vmem:[%s1 + $0x100] sm:$0xff]
    %v850 = vld [vmem:[%s1 + $0x108] sm:$0xff]
    %v851 = vld [vmem:[%s1 + $0x110] sm:$0xff]
    %v852 = vld [vmem:[%s1 + $0x118] sm:$0xff]
    %v853 = vld [vmem:[%s1 + $0x120] sm:$0xff]
    %v854 = vld [vmem:[%s1 + $0x128] sm:$0xff]
    %v855 = vld [vmem:[%s1 + $0x130] sm:$0xff]
    %v856 = vld [vmem:[%s1 + $0x138] sm:$0xff]
    %v857 = vunpack.c.l.bf16 %v849
    %v858 = vunpack.c.h.bf16 %v849
    %v859 = vunpack.c.l.bf16 %v850
    %v860 = vunpack.c.h.bf16 %v850
    %v861 = vunpack.c.l.bf16 %v851
    %v862 = vunpack.c.h.bf16 %v851
    %v863 = vunpack.c.l.bf16 %v852
    %v864 = vunpack.c.h.bf16 %v852
    %v865 = vunpack.c.l.bf16 %v853
    %v866 = vunpack.c.h.bf16 %v853
    %v867 = vunpack.c.l.bf16 %v854
    %v868 = vunpack.c.h.bf16 %v854
    %v869 = vunpack.c.l.bf16 %v855
    %v870 = vunpack.c.h.bf16 %v855
    %v871 = vunpack.c.l.bf16 %v856
    %v872 = vunpack.c.h.bf16 %v856
    %v874 = vsel %vm333, %v858, 0
    %v877 = vsel %vm333, %v860, 0
    %v880 = vsel %vm333, %v862, 0
    %v883 = vsel %vm333, %v864, 0
    %v886 = vsel %vm333, %v866, 0
    %v889 = vsel %vm333, %v868, 0
    %v892 = vsel %vm333, %v870, 0
    %v895 = vsel %vm333, %v872, 0
    %897 = vmatpush.msra.mxu0 %v299
    %898 = vmatpush.msra.mxu0 %v298
    %899 = vmatpush.msra.mxu0 %v297
    %900 = vmatpush.msra.mxu0 %v296
    %901 = vmatpush.msra.mxu0 %v295
    %902 = vmatpush.msra.mxu0 %v294
    %903 = vmatpush.msra.mxu0 %v293
    %904 = vmatpush.msra.mxu0 %v292
    %905 = vmatpush.msra.mxu0 %v291
    %906 = vmatpush.msra.mxu0 %v290
    %907 = vmatpush.msra.mxu0 %v289
    %908 = vmatpush.msra.mxu0 %v288
    %909 = vmatpush.msra.mxu0 %v287
    %910 = vmatpush.msra.mxu0 %v286
    %911 = vmatpush.msra.mxu0 %v285
    %912 = vmatpush.msra.mxu0 %v284
    %913 = vmatmul.f32.gmra.mxu0 %v857
    %v914 = vpop.f32.mrf.mxu0
    %v915 = vadd.f32 0.0, %v914
    %916 = vmatmul.f32.gmra.mxu0 %v859
    %v917 = vpop.f32.mrf.mxu0
    %v918 = vadd.f32 0.0, %v917
    %919 = vmatmul.f32.gmra.mxu0 %v861
    %v920 = vpop.f32.mrf.mxu0
    %v921 = vadd.f32 0.0, %v920
    %922 = vmatmul.f32.gmra.mxu0 %v863
    %v923 = vpop.f32.mrf.mxu0
    %v924 = vadd.f32 0.0, %v923
    %925 = vmatmul.f32.gmra.mxu0 %v865
    %v926 = vpop.f32.mrf.mxu0
    %v927 = vadd.f32 0.0, %v926
    %928 = vmatmul.f32.gmra.mxu0 %v867
    %v929 = vpop.f32.mrf.mxu0
    %v930 = vadd.f32 0.0, %v929
    %931 = vmatmul.f32.gmra.mxu0 %v869
    %v932 = vpop.f32.mrf.mxu0
    %v933 = vadd.f32 0.0, %v932
    %934 = vmatmul.f32.gmra.mxu0 %v871
    %v935 = vpop.f32.mrf.mxu0
    %v936 = vadd.f32 0.0, %v935
    %937 = vdwg.mxu0
    %938 = vmatpush.msra.mxu0 0.0
    %939 = vmatpush.msra.mxu0 0.0
    %940 = vmatpush.msra.mxu0 0.0
    %941 = vmatpush.msra.mxu0 0.0
    %942 = vmatpush.msra.mxu0 0.0
    %943 = vmatpush.msra.mxu0 0.0
    %944 = vmatpush.msra.mxu0 0.0
    %945 = vmatpush.msra.mxu0 %v308
    %946 = vmatpush.msra.mxu0 %v307
    %947 = vmatpush.msra.mxu0 %v306
    %948 = vmatpush.msra.mxu0 %v305
    %949 = vmatpush.msra.mxu0 %v304
    %950 = vmatpush.msra.mxu0 %v303
    %951 = vmatpush.msra.mxu0 %v302
    %952 = vmatpush.msra.mxu0 %v301
    %953 = vmatpush.msra.mxu0 %v300
    %954 = vmatmul.f32.gmra.mxu0 %v874
    %v955 = vpop.f32.mrf.mxu0
    %v956 = vadd.f32 %v915, %v955
    %957 = vmatmul.f32.gmra.mxu0 %v877
    %v958 = vpop.f32.mrf.mxu0
    %v959 = vadd.f32 %v918, %v958
    %960 = vmatmul.f32.gmra.mxu0 %v880
    %v961 = vpop.f32.mrf.mxu0
    %v962 = vadd.f32 %v921, %v961
    %963 = vmatmul.f32.gmra.mxu0 %v883
    %v964 = vpop.f32.mrf.mxu0
    %v965 = vadd.f32 %v924, %v964
    %966 = vmatmul.f32.gmra.mxu0 %v886
    %v967 = vpop.f32.mrf.mxu0
    %v968 = vadd.f32 %v927, %v967
    %969 = vmatmul.f32.gmra.mxu0 %v889
    %v970 = vpop.f32.mrf.mxu0
    %v971 = vadd.f32 %v930, %v970
    %972 = vmatmul.f32.gmra.mxu0 %v892
    %v973 = vpop.f32.mrf.mxu0
    %v974 = vadd.f32 %v933, %v973
    %975 = vmatmul.f32.gmra.mxu0 %v895
    %v976 = vpop.f32.mrf.mxu0
    %v977 = vadd.f32 %v936, %v976
    %978 = vdwg.mxu0
    %s979 = scalar_lea.vmem %s5, 128
    %v980 = vld [vmem:[%s979] sm:$0xff]
    %v981 = vld [vmem:[%s979 + $0x8] sm:$0xff]
    %v982 = vld [vmem:[%s979 + $0x10] sm:$0xff]
    %v983 = vld [vmem:[%s979 + $0x18] sm:$0xff]
    %vm984 = vcmask 261120
    %v986 = vsel %vm984, %v956, 0
    %v989 = vsel %vm984, %v959, 0
    %v992 = vsel %vm984, %v962, 0
    %v995 = vsel %vm984, %v965, 0
    %v998 = vsel %vm984, %v968, 0
    %v1001 = vsel %vm984, %v971, 0
    %v1004 = vsel %vm984, %v974, 0
    %v1007 = vsel %vm984, %v977, 0
    %1009 = vmatpush.msra.mxu0 0.0
    %1010 = vmatpush.msra.mxu0 0.0
    %1011 = vmatpush.msra.mxu0 0.0
    %1012 = vmatpush.msra.mxu0 0.0
    %1013 = vmatpush.msra.mxu0 0.0
    %1014 = vmatpush.msra.mxu0 0.0
    %1015 = vmatpush.msra.mxu0 0.0
    %1016 = vmatpush.msra.mxu0 0.0
    %1017 = vmatpush.msra.mxu0 0.0
    %1018 = vmatpush.msra.mxu0 0.0
    %1019 = vmatpush.msra.mxu0 0.0
    %1020 = vmatpush.msra.mxu0 0.0
    %1021 = vmatpush.msra.mxu0 %v983
    %1022 = vmatpush.msra.mxu0 %v982
    %1023 = vmatpush.msra.mxu0 %v981
    %1024 = vmatpush.msra.mxu0 %v980
    %1025 = vmatmul.f32.gmra.mxu0 %v986
    %v1026 = vpop.f32.mrf.mxu0
    %v1027 = vadd.f32 0.0, %v1026
    %1028 = vmatmul.f32.gmra.mxu0 %v989
    %v1029 = vpop.f32.mrf.mxu0
    %v1030 = vadd.f32 0.0, %v1029
    %1031 = vmatmul.f32.gmra.mxu0 %v992
    %v1032 = vpop.f32.mrf.mxu0
    %v1033 = vadd.f32 0.0, %v1032
    %1034 = vmatmul.f32.gmra.mxu0 %v995
    %v1035 = vpop.f32.mrf.mxu0
    %v1036 = vadd.f32 0.0, %v1035
    %1037 = vmatmul.f32.gmra.mxu0 %v998
    %v1038 = vpop.f32.mrf.mxu0
    %v1039 = vadd.f32 0.0, %v1038
    %1040 = vmatmul.f32.gmra.mxu0 %v1001
    %v1041 = vpop.f32.mrf.mxu0
    %v1042 = vadd.f32 0.0, %v1041
    %1043 = vmatmul.f32.gmra.mxu0 %v1004
    %v1044 = vpop.f32.mrf.mxu0
    %v1045 = vadd.f32 0.0, %v1044
    %1046 = vmatmul.f32.gmra.mxu0 %v1007
    %v1047 = vpop.f32.mrf.mxu0
    %v1048 = vadd.f32 0.0, %v1047
    %1049 = vdwg.mxu0
    %v1051 = vsel %vm984, %v417, 0
    %v1054 = vsel %vm984, %v420, 0
    %v1057 = vsel %vm984, %v423, 0
    %v1060 = vsel %vm984, %v426, 0
    %v1063 = vsel %vm984, %v429, 0
    %v1066 = vsel %vm984, %v432, 0
    %v1069 = vsel %vm984, %v435, 0
    %v1072 = vsel %vm984, %v438, 0
    %1074 = vmatpush.msra.mxu0 0.0
    %1075 = vmatpush.msra.mxu0 0.0
    %1076 = vmatpush.msra.mxu0 0.0
    %1077 = vmatpush.msra.mxu0 0.0
    %1078 = vmatpush.msra.mxu0 0.0
    %1079 = vmatpush.msra.mxu0 0.0
    %1080 = vmatpush.msra.mxu0 0.0
    %1081 = vmatpush.msra.mxu0 0.0
    %1082 = vmatpush.msra.mxu0 0.0
    %1083 = vmatpush.msra.mxu0 0.0
    %1084 = vmatpush.msra.mxu0 0.0
    %1085 = vmatpush.msra.mxu0 0.0
    %1086 = vmatpush.msra.mxu0 %v443
    %1087 = vmatpush.msra.mxu0 %v442
    %1088 = vmatpush.msra.mxu0 %v441
    %1089 = vmatpush.msra.mxu0 %v440
    %1090 = vmatmul.f32.gmra.mxu0 %v1051
    %v1091 = vpop.f32.mrf.mxu0
    %v1092 = vadd.f32 %v1027, %v1091
    %1093 = vmatmul.f32.gmra.mxu0 %v1054
    %v1094 = vpop.f32.mrf.mxu0
    %v1095 = vadd.f32 %v1030, %v1094
    %1096 = vmatmul.f32.gmra.mxu0 %v1057
    %v1097 = vpop.f32.mrf.mxu0
    %v1098 = vadd.f32 %v1033, %v1097
    %1099 = vmatmul.f32.gmra.mxu0 %v1060
    %v1100 = vpop.f32.mrf.mxu0
    %v1101 = vadd.f32 %v1036, %v1100
    %1102 = vmatmul.f32.gmra.mxu0 %v1063
    %v1103 = vpop.f32.mrf.mxu0
    %v1104 = vadd.f32 %v1039, %v1103
    %1105 = vmatmul.f32.gmra.mxu0 %v1066
    %v1106 = vpop.f32.mrf.mxu0
    %v1107 = vadd.f32 %v1042, %v1106
    %1108 = vmatmul.f32.gmra.mxu0 %v1069
    %v1109 = vpop.f32.mrf.mxu0
    %v1110 = vadd.f32 %v1045, %v1109
    %1111 = vmatmul.f32.gmra.mxu0 %v1072
    %v1112 = vpop.f32.mrf.mxu0
    %v1113 = vadd.f32 %v1048, %v1112
    %1114 = vdwg.mxu0
    %v1115 = vld [vmem:[%s1 + $0x140] sm:$0xff]
    %v1116 = vld [vmem:[%s1 + $0x148] sm:$0xff]
    %v1117 = vld [vmem:[%s1 + $0x150] sm:$0xff]
    %v1118 = vld [vmem:[%s1 + $0x158] sm:$0xff]
    %v1119 = vld [vmem:[%s1 + $0x160] sm:$0xff]
    %v1120 = vld [vmem:[%s1 + $0x168] sm:$0xff]
    %v1121 = vld [vmem:[%s1 + $0x170] sm:$0xff]
    %v1122 = vld [vmem:[%s1 + $0x178] sm:$0xff]
    %v1123 = vunpack.c.l.bf16 %v1115
    %v1124 = vunpack.c.h.bf16 %v1115
    %v1125 = vunpack.c.l.bf16 %v1116
    %v1126 = vunpack.c.h.bf16 %v1116
    %v1127 = vunpack.c.l.bf16 %v1117
    %v1128 = vunpack.c.h.bf16 %v1117
    %v1129 = vunpack.c.l.bf16 %v1118
    %v1130 = vunpack.c.h.bf16 %v1118
    %v1131 = vunpack.c.l.bf16 %v1119
    %v1132 = vunpack.c.h.bf16 %v1119
    %v1133 = vunpack.c.l.bf16 %v1120
    %v1134 = vunpack.c.h.bf16 %v1120
    %v1135 = vunpack.c.l.bf16 %v1121
    %v1136 = vunpack.c.h.bf16 %v1121
    %v1137 = vunpack.c.l.bf16 %v1122
    %v1138 = vunpack.c.h.bf16 %v1122
    %v1140 = vsel %vm333, %v1124, 0
    %v1143 = vsel %vm333, %v1126, 0
    %v1146 = vsel %vm333, %v1128, 0
    %v1149 = vsel %vm333, %v1130, 0
    %v1152 = vsel %vm333, %v1132, 0
    %v1155 = vsel %vm333, %v1134, 0
    %v1158 = vsel %vm333, %v1136, 0
    %v1161 = vsel %vm333, %v1138, 0
    %1163 = vmatpush.msra.mxu0 %v299
    %1164 = vmatpush.msra.mxu0 %v298
    %1165 = vmatpush.msra.mxu0 %v297
    %1166 = vmatpush.msra.mxu0 %v296
    %1167 = vmatpush.msra.mxu0 %v295
    %1168 = vmatpush.msra.mxu0 %v294
    %1169 = vmatpush.msra.mxu0 %v293
    %1170 = vmatpush.msra.mxu0 %v292
    %1171 = vmatpush.msra.mxu0 %v291
    %1172 = vmatpush.msra.mxu0 %v290
    %1173 = vmatpush.msra.mxu0 %v289
    %1174 = vmatpush.msra.mxu0 %v288
    %1175 = vmatpush.msra.mxu0 %v287
    %1176 = vmatpush.msra.mxu0 %v286
    %1177 = vmatpush.msra.mxu0 %v285
    %1178 = vmatpush.msra.mxu0 %v284
    %1179 = vmatmul.f32.gmra.mxu0 %v1123
    %v1180 = vpop.f32.mrf.mxu0
    %v1181 = vadd.f32 0.0, %v1180
    %1182 = vmatmul.f32.gmra.mxu0 %v1125
    %v1183 = vpop.f32.mrf.mxu0
    %v1184 = vadd.f32 0.0, %v1183
    %1185 = vmatmul.f32.gmra.mxu0 %v1127
    %v1186 = vpop.f32.mrf.mxu0
    %v1187 = vadd.f32 0.0, %v1186
    %1188 = vmatmul.f32.gmra.mxu0 %v1129
    %v1189 = vpop.f32.mrf.mxu0
    %v1190 = vadd.f32 0.0, %v1189
    %1191 = vmatmul.f32.gmra.mxu0 %v1131
    %v1192 = vpop.f32.mrf.mxu0
    %v1193 = vadd.f32 0.0, %v1192
    %1194 = vmatmul.f32.gmra.mxu0 %v1133
    %v1195 = vpop.f32.mrf.mxu0
    %v1196 = vadd.f32 0.0, %v1195
    %1197 = vmatmul.f32.gmra.mxu0 %v1135
    %v1198 = vpop.f32.mrf.mxu0
    %v1199 = vadd.f32 0.0, %v1198
    %1200 = vmatmul.f32.gmra.mxu0 %v1137
    %v1201 = vpop.f32.mrf.mxu0
    %v1202 = vadd.f32 0.0, %v1201
    %1203 = vdwg.mxu0
    %1204 = vmatpush.msra.mxu0 0.0
    %1205 = vmatpush.msra.mxu0 0.0
    %1206 = vmatpush.msra.mxu0 0.0
    %1207 = vmatpush.msra.mxu0 0.0
    %1208 = vmatpush.msra.mxu0 0.0
    %1209 = vmatpush.msra.mxu0 0.0
    %1210 = vmatpush.msra.mxu0 0.0
    %1211 = vmatpush.msra.mxu0 %v308
    %1212 = vmatpush.msra.mxu0 %v307
    %1213 = vmatpush.msra.mxu0 %v306
    %1214 = vmatpush.msra.mxu0 %v305
    %1215 = vmatpush.msra.mxu0 %v304
    %1216 = vmatpush.msra.mxu0 %v303
    %1217 = vmatpush.msra.mxu0 %v302
    %1218 = vmatpush.msra.mxu0 %v301
    %1219 = vmatpush.msra.mxu0 %v300
    %1220 = vmatmul.f32.gmra.mxu0 %v1140
    %v1221 = vpop.f32.mrf.mxu0
    %v1222 = vadd.f32 %v1181, %v1221
    %1223 = vmatmul.f32.gmra.mxu0 %v1143
    %v1224 = vpop.f32.mrf.mxu0
    %v1225 = vadd.f32 %v1184, %v1224
    %1226 = vmatmul.f32.gmra.mxu0 %v1146
    %v1227 = vpop.f32.mrf.mxu0
    %v1228 = vadd.f32 %v1187, %v1227
    %1229 = vmatmul.f32.gmra.mxu0 %v1149
    %v1230 = vpop.f32.mrf.mxu0
    %v1231 = vadd.f32 %v1190, %v1230
    %1232 = vmatmul.f32.gmra.mxu0 %v1152
    %v1233 = vpop.f32.mrf.mxu0
    %v1234 = vadd.f32 %v1193, %v1233
    %1235 = vmatmul.f32.gmra.mxu0 %v1155
    %v1236 = vpop.f32.mrf.mxu0
    %v1237 = vadd.f32 %v1196, %v1236
    %1238 = vmatmul.f32.gmra.mxu0 %v1158
    %v1239 = vpop.f32.mrf.mxu0
    %v1240 = vadd.f32 %v1199, %v1239
    %1241 = vmatmul.f32.gmra.mxu0 %v1161
    %v1242 = vpop.f32.mrf.mxu0
    %v1243 = vadd.f32 %v1202, %v1242
    %1244 = vdwg.mxu0
    %s1245 = scalar_lea.vmem %s5, 160
    %v1246 = vld [vmem:[%s1245] sm:$0xff]
    %v1247 = vld [vmem:[%s1245 + $0x8] sm:$0xff]
    %v1248 = vld [vmem:[%s1245 + $0x10] sm:$0xff]
    %v1249 = vld [vmem:[%s1245 + $0x18] sm:$0xff]
    %v1251 = vsel %vm984, %v1222, 0
    %v1254 = vsel %vm984, %v1225, 0
    %v1257 = vsel %vm984, %v1228, 0
    %v1260 = vsel %vm984, %v1231, 0
    %v1263 = vsel %vm984, %v1234, 0
    %v1266 = vsel %vm984, %v1237, 0
    %v1269 = vsel %vm984, %v1240, 0
    %v1272 = vsel %vm984, %v1243, 0
    %1274 = vmatpush.msra.mxu0 0.0
    %1275 = vmatpush.msra.mxu0 0.0
    %1276 = vmatpush.msra.mxu0 0.0
    %1277 = vmatpush.msra.mxu0 0.0
    %1278 = vmatpush.msra.mxu0 0.0
    %1279 = vmatpush.msra.mxu0 0.0
    %1280 = vmatpush.msra.mxu0 0.0
    %1281 = vmatpush.msra.mxu0 0.0
    %1282 = vmatpush.msra.mxu0 0.0
    %1283 = vmatpush.msra.mxu0 0.0
    %1284 = vmatpush.msra.mxu0 0.0
    %1285 = vmatpush.msra.mxu0 0.0
    %1286 = vmatpush.msra.mxu0 %v1249
    %1287 = vmatpush.msra.mxu0 %v1248
    %1288 = vmatpush.msra.mxu0 %v1247
    %1289 = vmatpush.msra.mxu0 %v1246
    %1290 = vmatmul.f32.gmra.mxu0 %v1251
    %v1291 = vpop.f32.mrf.mxu0
    %v1292 = vadd.f32 0.0, %v1291
    %1293 = vmatmul.f32.gmra.mxu0 %v1254
    %v1294 = vpop.f32.mrf.mxu0
    %v1295 = vadd.f32 0.0, %v1294
    %1296 = vmatmul.f32.gmra.mxu0 %v1257
    %v1297 = vpop.f32.mrf.mxu0
    %v1298 = vadd.f32 0.0, %v1297
    %1299 = vmatmul.f32.gmra.mxu0 %v1260
    %v1300 = vpop.f32.mrf.mxu0
    %v1301 = vadd.f32 0.0, %v1300
    %1302 = vmatmul.f32.gmra.mxu0 %v1263
    %v1303 = vpop.f32.mrf.mxu0
    %v1304 = vadd.f32 0.0, %v1303
    %1305 = vmatmul.f32.gmra.mxu0 %v1266
    %v1306 = vpop.f32.mrf.mxu0
    %v1307 = vadd.f32 0.0, %v1306
    %1308 = vmatmul.f32.gmra.mxu0 %v1269
    %v1309 = vpop.f32.mrf.mxu0
    %v1310 = vadd.f32 0.0, %v1309
    %1311 = vmatmul.f32.gmra.mxu0 %v1272
    %v1312 = vpop.f32.mrf.mxu0
    %v1313 = vadd.f32 0.0, %v1312
    %1314 = vdwg.mxu0
    %v1316 = vsel %vm984, %v551, 0
    %v1319 = vsel %vm984, %v554, 0
    %v1322 = vsel %vm984, %v557, 0
    %v1325 = vsel %vm984, %v560, 0
    %v1328 = vsel %vm984, %v563, 0
    %v1331 = vsel %vm984, %v566, 0
    %v1334 = vsel %vm984, %v569, 0
    %v1337 = vsel %vm984, %v572, 0
    %1339 = vmatpush.msra.mxu0 0.0
    %1340 = vmatpush.msra.mxu0 0.0
    %1341 = vmatpush.msra.mxu0 0.0
    %1342 = vmatpush.msra.mxu0 0.0
    %1343 = vmatpush.msra.mxu0 0.0
    %1344 = vmatpush.msra.mxu0 0.0
    %1345 = vmatpush.msra.mxu0 0.0
    %1346 = vmatpush.msra.mxu0 0.0
    %1347 = vmatpush.msra.mxu0 0.0
    %1348 = vmatpush.msra.mxu0 0.0
    %1349 = vmatpush.msra.mxu0 0.0
    %1350 = vmatpush.msra.mxu0 0.0
    %1351 = vmatpush.msra.mxu0 %v578
    %1352 = vmatpush.msra.mxu0 %v577
    %1353 = vmatpush.msra.mxu0 %v576
    %1354 = vmatpush.msra.mxu0 %v575
    %1355 = vmatmul.f32.gmra.mxu0 %v1316
    %v1356 = vpop.f32.mrf.mxu0
    %v1357 = vadd.f32 %v1292, %v1356
    %1358 = vmatmul.f32.gmra.mxu0 %v1319
    %v1359 = vpop.f32.mrf.mxu0
    %v1360 = vadd.f32 %v1295, %v1359
    %1361 = vmatmul.f32.gmra.mxu0 %v1322
    %v1362 = vpop.f32.mrf.mxu0
    %v1363 = vadd.f32 %v1298, %v1362
    %1364 = vmatmul.f32.gmra.mxu0 %v1325
    %v1365 = vpop.f32.mrf.mxu0
    %v1366 = vadd.f32 %v1301, %v1365
    %1367 = vmatmul.f32.gmra.mxu0 %v1328
    %v1368 = vpop.f32.mrf.mxu0
    %v1369 = vadd.f32 %v1304, %v1368
    %1370 = vmatmul.f32.gmra.mxu0 %v1331
    %v1371 = vpop.f32.mrf.mxu0
    %v1372 = vadd.f32 %v1307, %v1371
    %1373 = vmatmul.f32.gmra.mxu0 %v1334
    %v1374 = vpop.f32.mrf.mxu0
    %v1375 = vadd.f32 %v1310, %v1374
    %1376 = vmatmul.f32.gmra.mxu0 %v1337
    %v1377 = vpop.f32.mrf.mxu0
    %v1378 = vadd.f32 %v1313, %v1377
    %1379 = vdwg.mxu0
    %v1380 = vld [vmem:[%s1 + $0x180] sm:$0xff]
    %v1381 = vld [vmem:[%s1 + $0x188] sm:$0xff]
    %v1382 = vld [vmem:[%s1 + $0x190] sm:$0xff]
    %v1383 = vld [vmem:[%s1 + $0x198] sm:$0xff]
    %v1384 = vld [vmem:[%s1 + $0x1a0] sm:$0xff]
    %v1385 = vld [vmem:[%s1 + $0x1a8] sm:$0xff]
    %v1386 = vld [vmem:[%s1 + $0x1b0] sm:$0xff]
    %v1387 = vld [vmem:[%s1 + $0x1b8] sm:$0xff]
    %v1388 = vunpack.c.l.bf16 %v1380
    %v1389 = vunpack.c.h.bf16 %v1380
    %v1390 = vunpack.c.l.bf16 %v1381
    %v1391 = vunpack.c.h.bf16 %v1381
    %v1392 = vunpack.c.l.bf16 %v1382
    %v1393 = vunpack.c.h.bf16 %v1382
    %v1394 = vunpack.c.l.bf16 %v1383
    %v1395 = vunpack.c.h.bf16 %v1383
    %v1396 = vunpack.c.l.bf16 %v1384
    %v1397 = vunpack.c.h.bf16 %v1384
    %v1398 = vunpack.c.l.bf16 %v1385
    %v1399 = vunpack.c.h.bf16 %v1385
    %v1400 = vunpack.c.l.bf16 %v1386
    %v1401 = vunpack.c.h.bf16 %v1386
    %v1402 = vunpack.c.l.bf16 %v1387
    %v1403 = vunpack.c.h.bf16 %v1387
    %v1405 = vsel %vm333, %v1389, 0
    %v1408 = vsel %vm333, %v1391, 0
    %v1411 = vsel %vm333, %v1393, 0
    %v1414 = vsel %vm333, %v1395, 0
    %v1417 = vsel %vm333, %v1397, 0
    %v1420 = vsel %vm333, %v1399, 0
    %v1423 = vsel %vm333, %v1401, 0
    %v1426 = vsel %vm333, %v1403, 0
    %1428 = vmatpush.msra.mxu0 %v299
    %1429 = vmatpush.msra.mxu0 %v298
    %1430 = vmatpush.msra.mxu0 %v297
    %1431 = vmatpush.msra.mxu0 %v296
    %1432 = vmatpush.msra.mxu0 %v295
    %1433 = vmatpush.msra.mxu0 %v294
    %1434 = vmatpush.msra.mxu0 %v293
    %1435 = vmatpush.msra.mxu0 %v292
    %1436 = vmatpush.msra.mxu0 %v291
    %1437 = vmatpush.msra.mxu0 %v290
    %1438 = vmatpush.msra.mxu0 %v289
    %1439 = vmatpush.msra.mxu0 %v288
    %1440 = vmatpush.msra.mxu0 %v287
    %1441 = vmatpush.msra.mxu0 %v286
    %1442 = vmatpush.msra.mxu0 %v285
    %1443 = vmatpush.msra.mxu0 %v284
    %1444 = vmatmul.f32.gmra.mxu0 %v1388
    %v1445 = vpop.f32.mrf.mxu0
    %v1446 = vadd.f32 0.0, %v1445
    %1447 = vmatmul.f32.gmra.mxu0 %v1390
    %v1448 = vpop.f32.mrf.mxu0
    %v1449 = vadd.f32 0.0, %v1448
    %1450 = vmatmul.f32.gmra.mxu0 %v1392
    %v1451 = vpop.f32.mrf.mxu0
    %v1452 = vadd.f32 0.0, %v1451
    %1453 = vmatmul.f32.gmra.mxu0 %v1394
    %v1454 = vpop.f32.mrf.mxu0
    %v1455 = vadd.f32 0.0, %v1454
    %1456 = vmatmul.f32.gmra.mxu0 %v1396
    %v1457 = vpop.f32.mrf.mxu0
    %v1458 = vadd.f32 0.0, %v1457
    %1459 = vmatmul.f32.gmra.mxu0 %v1398
    %v1460 = vpop.f32.mrf.mxu0
    %v1461 = vadd.f32 0.0, %v1460
    %1462 = vmatmul.f32.gmra.mxu0 %v1400
    %v1463 = vpop.f32.mrf.mxu0
    %v1464 = vadd.f32 0.0, %v1463
    %1465 = vmatmul.f32.gmra.mxu0 %v1402
    %v1466 = vpop.f32.mrf.mxu0
    %v1467 = vadd.f32 0.0, %v1466
    %1468 = vdwg.mxu0
    %1469 = vmatpush.msra.mxu0 0.0
    %1470 = vmatpush.msra.mxu0 0.0
    %1471 = vmatpush.msra.mxu0 0.0
    %1472 = vmatpush.msra.mxu0 0.0
    %1473 = vmatpush.msra.mxu0 0.0
    %1474 = vmatpush.msra.mxu0 0.0
    %1475 = vmatpush.msra.mxu0 0.0
    %1476 = vmatpush.msra.mxu0 %v308
    %1477 = vmatpush.msra.mxu0 %v307
    %1478 = vmatpush.msra.mxu0 %v306
    %1479 = vmatpush.msra.mxu0 %v305
    %1480 = vmatpush.msra.mxu0 %v304
    %1481 = vmatpush.msra.mxu0 %v303
    %1482 = vmatpush.msra.mxu0 %v302
    %1483 = vmatpush.msra.mxu0 %v301
    %1484 = vmatpush.msra.mxu0 %v300
    %1485 = vmatmul.f32.gmra.mxu0 %v1405
    %v1486 = vpop.f32.mrf.mxu0
    %v1487 = vadd.f32 %v1446, %v1486
    %1488 = vmatmul.f32.gmra.mxu0 %v1408
    %v1489 = vpop.f32.mrf.mxu0
    %v1490 = vadd.f32 %v1449, %v1489
    %1491 = vmatmul.f32.gmra.mxu0 %v1411
    %v1492 = vpop.f32.mrf.mxu0
    %v1493 = vadd.f32 %v1452, %v1492
    %1494 = vmatmul.f32.gmra.mxu0 %v1414
    %v1495 = vpop.f32.mrf.mxu0
    %v1496 = vadd.f32 %v1455, %v1495
    %1497 = vmatmul.f32.gmra.mxu0 %v1417
    %v1498 = vpop.f32.mrf.mxu0
    %v1499 = vadd.f32 %v1458, %v1498
    %1500 = vmatmul.f32.gmra.mxu0 %v1420
    %v1501 = vpop.f32.mrf.mxu0
    %v1502 = vadd.f32 %v1461, %v1501
    %1503 = vmatmul.f32.gmra.mxu0 %v1423
    %v1504 = vpop.f32.mrf.mxu0
    %v1505 = vadd.f32 %v1464, %v1504
    %1506 = vmatmul.f32.gmra.mxu0 %v1426
    %v1507 = vpop.f32.mrf.mxu0
    %v1508 = vadd.f32 %v1467, %v1507
    %1509 = vdwg.mxu0
    %s1510 = scalar_lea.vmem %s5, 192
    %v1511 = vld [vmem:[%s1510] sm:$0xff]
    %v1512 = vld [vmem:[%s1510 + $0x8] sm:$0xff]
    %v1513 = vld [vmem:[%s1510 + $0x10] sm:$0xff]
    %v1514 = vld [vmem:[%s1510 + $0x18] sm:$0xff]
    %v1516 = vsel %vm984, %v1487, 0
    %v1519 = vsel %vm984, %v1490, 0
    %v1522 = vsel %vm984, %v1493, 0
    %v1525 = vsel %vm984, %v1496, 0
    %v1528 = vsel %vm984, %v1499, 0
    %v1531 = vsel %vm984, %v1502, 0
    %v1534 = vsel %vm984, %v1505, 0
    %v1537 = vsel %vm984, %v1508, 0
    %1539 = vmatpush.msra.mxu0 0.0
    %1540 = vmatpush.msra.mxu0 0.0
    %1541 = vmatpush.msra.mxu0 0.0
    %1542 = vmatpush.msra.mxu0 0.0
    %1543 = vmatpush.msra.mxu0 0.0
    %1544 = vmatpush.msra.mxu0 0.0
    %1545 = vmatpush.msra.mxu0 0.0
    %1546 = vmatpush.msra.mxu0 0.0
    %1547 = vmatpush.msra.mxu0 0.0
    %1548 = vmatpush.msra.mxu0 0.0
    %1549 = vmatpush.msra.mxu0 0.0
    %1550 = vmatpush.msra.mxu0 0.0
    %1551 = vmatpush.msra.mxu0 %v1514
    %1552 = vmatpush.msra.mxu0 %v1513
    %1553 = vmatpush.msra.mxu0 %v1512
    %1554 = vmatpush.msra.mxu0 %v1511
    %1555 = vmatmul.f32.gmra.mxu0 %v1516
    %v1556 = vpop.f32.mrf.mxu0
    %v1557 = vadd.f32 0.0, %v1556
    %1558 = vmatmul.f32.gmra.mxu0 %v1519
    %v1559 = vpop.f32.mrf.mxu0
    %v1560 = vadd.f32 0.0, %v1559
    %1561 = vmatmul.f32.gmra.mxu0 %v1522
    %v1562 = vpop.f32.mrf.mxu0
    %v1563 = vadd.f32 0.0, %v1562
    %1564 = vmatmul.f32.gmra.mxu0 %v1525
    %v1565 = vpop.f32.mrf.mxu0
    %v1566 = vadd.f32 0.0, %v1565
    %1567 = vmatmul.f32.gmra.mxu0 %v1528
    %v1568 = vpop.f32.mrf.mxu0
    %v1569 = vadd.f32 0.0, %v1568
    %1570 = vmatmul.f32.gmra.mxu0 %v1531
    %v1571 = vpop.f32.mrf.mxu0
    %v1572 = vadd.f32 0.0, %v1571
    %1573 = vmatmul.f32.gmra.mxu0 %v1534
    %v1574 = vpop.f32.mrf.mxu0
    %v1575 = vadd.f32 0.0, %v1574
    %1576 = vmatmul.f32.gmra.mxu0 %v1537
    %v1577 = vpop.f32.mrf.mxu0
    %v1578 = vadd.f32 0.0, %v1577
    %1579 = vdwg.mxu0
    %v1581 = vsel %vm984, %v686, 0
    %v1584 = vsel %vm984, %v689, 0
    %v1587 = vsel %vm984, %v692, 0
    %v1590 = vsel %vm984, %v695, 0
    %v1593 = vsel %vm984, %v698, 0
    %v1596 = vsel %vm984, %v701, 0
    %v1599 = vsel %vm984, %v704, 0
    %v1602 = vsel %vm984, %v707, 0
    %1604 = vmatpush.msra.mxu0 0.0
    %1605 = vmatpush.msra.mxu0 0.0
    %1606 = vmatpush.msra.mxu0 0.0
    %1607 = vmatpush.msra.mxu0 0.0
    %1608 = vmatpush.msra.mxu0 0.0
    %1609 = vmatpush.msra.mxu0 0.0
    %1610 = vmatpush.msra.mxu0 0.0
    %1611 = vmatpush.msra.mxu0 0.0
    %1612 = vmatpush.msra.mxu0 0.0
    %1613 = vmatpush.msra.mxu0 0.0
    %1614 = vmatpush.msra.mxu0 0.0
    %1615 = vmatpush.msra.mxu0 0.0
    %1616 = vmatpush.msra.mxu0 %v713
    %1617 = vmatpush.msra.mxu0 %v712
    %1618 = vmatpush.msra.mxu0 %v711
    %1619 = vmatpush.msra.mxu0 %v710
    %1620 = vmatmul.f32.gmra.mxu0 %v1581
    %v1621 = vpop.f32.mrf.mxu0
    %v1622 = vadd.f32 %v1557, %v1621
    %1623 = vmatmul.f32.gmra.mxu0 %v1584
    %v1624 = vpop.f32.mrf.mxu0
    %v1625 = vadd.f32 %v1560, %v1624
    %1626 = vmatmul.f32.gmra.mxu0 %v1587
    %v1627 = vpop.f32.mrf.mxu0
    %v1628 = vadd.f32 %v1563, %v1627
    %1629 = vmatmul.f32.gmra.mxu0 %v1590
    %v1630 = vpop.f32.mrf.mxu0
    %v1631 = vadd.f32 %v1566, %v1630
    %1632 = vmatmul.f32.gmra.mxu0 %v1593
    %v1633 = vpop.f32.mrf.mxu0
    %v1634 = vadd.f32 %v1569, %v1633
    %1635 = vmatmul.f32.gmra.mxu0 %v1596
    %v1636 = vpop.f32.mrf.mxu0
    %v1637 = vadd.f32 %v1572, %v1636
    %1638 = vmatmul.f32.gmra.mxu0 %v1599
    %v1639 = vpop.f32.mrf.mxu0
    %v1640 = vadd.f32 %v1575, %v1639
    %1641 = vmatmul.f32.gmra.mxu0 %v1602
    %v1642 = vpop.f32.mrf.mxu0
    %v1643 = vadd.f32 %v1578, %v1642
    %1644 = vdwg.mxu0
    %v1645 = vld [vmem:[%s1 + $0x1c0] sm:$0xff]
    %v1646 = vld [vmem:[%s1 + $0x1c8] sm:$0xff]
    %v1647 = vld [vmem:[%s1 + $0x1d0] sm:$0xff]
    %v1648 = vld [vmem:[%s1 + $0x1d8] sm:$0xff]
    %v1649 = vld [vmem:[%s1 + $0x1e0] sm:$0xff]
    %v1650 = vld [vmem:[%s1 + $0x1e8] sm:$0xff]
    %v1651 = vld [vmem:[%s1 + $0x1f0] sm:$0xff]
    %v1652 = vld [vmem:[%s1 + $0x1f8] sm:$0xff]
    %v1653 = vunpack.c.l.bf16 %v1645
    %v1654 = vunpack.c.h.bf16 %v1645
    %v1655 = vunpack.c.l.bf16 %v1646
    %v1656 = vunpack.c.h.bf16 %v1646
    %v1657 = vunpack.c.l.bf16 %v1647
    %v1658 = vunpack.c.h.bf16 %v1647
    %v1659 = vunpack.c.l.bf16 %v1648
    %v1660 = vunpack.c.h.bf16 %v1648
    %v1661 = vunpack.c.l.bf16 %v1649
    %v1662 = vunpack.c.h.bf16 %v1649
    %v1663 = vunpack.c.l.bf16 %v1650
    %v1664 = vunpack.c.h.bf16 %v1650
    %v1665 = vunpack.c.l.bf16 %v1651
    %v1666 = vunpack.c.h.bf16 %v1651
    %v1667 = vunpack.c.l.bf16 %v1652
    %v1668 = vunpack.c.h.bf16 %v1652
    %v1670 = vsel %vm333, %v1654, 0
    %v1673 = vsel %vm333, %v1656, 0
    %v1676 = vsel %vm333, %v1658, 0
    %v1679 = vsel %vm333, %v1660, 0
    %v1682 = vsel %vm333, %v1662, 0
    %v1685 = vsel %vm333, %v1664, 0
    %v1688 = vsel %vm333, %v1666, 0
    %v1691 = vsel %vm333, %v1668, 0
    %1693 = vmatpush.msra.mxu0 %v299
    %1694 = vmatpush.msra.mxu0 %v298
    %1695 = vmatpush.msra.mxu0 %v297
    %1696 = vmatpush.msra.mxu0 %v296
    %1697 = vmatpush.msra.mxu0 %v295
    %1698 = vmatpush.msra.mxu0 %v294
    %1699 = vmatpush.msra.mxu0 %v293
    %1700 = vmatpush.msra.mxu0 %v292
    %1701 = vmatpush.msra.mxu0 %v291
    %1702 = vmatpush.msra.mxu0 %v290
    %1703 = vmatpush.msra.mxu0 %v289
    %1704 = vmatpush.msra.mxu0 %v288
    %1705 = vmatpush.msra.mxu0 %v287
    %1706 = vmatpush.msra.mxu0 %v286
    %1707 = vmatpush.msra.mxu0 %v285
    %1708 = vmatpush.msra.mxu0 %v284
    %1709 = vmatmul.f32.gmra.mxu0 %v1653
    %v1710 = vpop.f32.mrf.mxu0
    %v1711 = vadd.f32 0.0, %v1710
    %1712 = vmatmul.f32.gmra.mxu0 %v1655
    %v1713 = vpop.f32.mrf.mxu0
    %v1714 = vadd.f32 0.0, %v1713
    %1715 = vmatmul.f32.gmra.mxu0 %v1657
    %v1716 = vpop.f32.mrf.mxu0
    %v1717 = vadd.f32 0.0, %v1716
    %1718 = vmatmul.f32.gmra.mxu0 %v1659
    %v1719 = vpop.f32.mrf.mxu0
    %v1720 = vadd.f32 0.0, %v1719
    %1721 = vmatmul.f32.gmra.mxu0 %v1661
    %v1722 = vpop.f32.mrf.mxu0
    %v1723 = vadd.f32 0.0, %v1722
    %1724 = vmatmul.f32.gmra.mxu0 %v1663
    %v1725 = vpop.f32.mrf.mxu0
    %v1726 = vadd.f32 0.0, %v1725
    %1727 = vmatmul.f32.gmra.mxu0 %v1665
    %v1728 = vpop.f32.mrf.mxu0
    %v1729 = vadd.f32 0.0, %v1728
    %1730 = vmatmul.f32.gmra.mxu0 %v1667
    %v1731 = vpop.f32.mrf.mxu0
    %v1732 = vadd.f32 0.0, %v1731
    %1733 = vdwg.mxu0
    %1734 = vmatpush.msra.mxu0 0.0
    %1735 = vmatpush.msra.mxu0 0.0
    %1736 = vmatpush.msra.mxu0 0.0
    %1737 = vmatpush.msra.mxu0 0.0
    %1738 = vmatpush.msra.mxu0 0.0
    %1739 = vmatpush.msra.mxu0 0.0
    %1740 = vmatpush.msra.mxu0 0.0
    %1741 = vmatpush.msra.mxu0 %v308
    %1742 = vmatpush.msra.mxu0 %v307
    %1743 = vmatpush.msra.mxu0 %v306
    %1744 = vmatpush.msra.mxu0 %v305
    %1745 = vmatpush.msra.mxu0 %v304
    %1746 = vmatpush.msra.mxu0 %v303
    %1747 = vmatpush.msra.mxu0 %v302
    %1748 = vmatpush.msra.mxu0 %v301
    %1749 = vmatpush.msra.mxu0 %v300
    %1750 = vmatmul.f32.gmra.mxu0 %v1670
    %v1751 = vpop.f32.mrf.mxu0
    %v1752 = vadd.f32 %v1711, %v1751
    %1753 = vmatmul.f32.gmra.mxu0 %v1673
    %v1754 = vpop.f32.mrf.mxu0
    %v1755 = vadd.f32 %v1714, %v1754
    %1756 = vmatmul.f32.gmra.mxu0 %v1676
    %v1757 = vpop.f32.mrf.mxu0
    %v1758 = vadd.f32 %v1717, %v1757
    %1759 = vmatmul.f32.gmra.mxu0 %v1679
    %v1760 = vpop.f32.mrf.mxu0
    %v1761 = vadd.f32 %v1720, %v1760
    %1762 = vmatmul.f32.gmra.mxu0 %v1682
    %v1763 = vpop.f32.mrf.mxu0
    %v1764 = vadd.f32 %v1723, %v1763
    %1765 = vmatmul.f32.gmra.mxu0 %v1685
    %v1766 = vpop.f32.mrf.mxu0
    %v1767 = vadd.f32 %v1726, %v1766
    %1768 = vmatmul.f32.gmra.mxu0 %v1688
    %v1769 = vpop.f32.mrf.mxu0
    %v1770 = vadd.f32 %v1729, %v1769
    %1771 = vmatmul.f32.gmra.mxu0 %v1691
    %v1772 = vpop.f32.mrf.mxu0
    %v1773 = vadd.f32 %v1732, %v1772
    %1774 = vdwg.mxu0
    %s1775 = scalar_lea.vmem %s5, 224
    %v1776 = vld [vmem:[%s1775] sm:$0xff]
    %v1777 = vld [vmem:[%s1775 + $0x8] sm:$0xff]
    %v1778 = vld [vmem:[%s1775 + $0x10] sm:$0xff]
    %v1779 = vld [vmem:[%s1775 + $0x18] sm:$0xff]
    %v1781 = vsel %vm984, %v1752, 0
    %v1784 = vsel %vm984, %v1755, 0
    %v1787 = vsel %vm984, %v1758, 0
    %v1790 = vsel %vm984, %v1761, 0
    %v1793 = vsel %vm984, %v1764, 0
    %v1796 = vsel %vm984, %v1767, 0
    %v1799 = vsel %vm984, %v1770, 0
    %v1802 = vsel %vm984, %v1773, 0
    %1804 = vmatpush.msra.mxu0 0.0
    %1805 = vmatpush.msra.mxu0 0.0
    %1806 = vmatpush.msra.mxu0 0.0
    %1807 = vmatpush.msra.mxu0 0.0
    %1808 = vmatpush.msra.mxu0 0.0
    %1809 = vmatpush.msra.mxu0 0.0
    %1810 = vmatpush.msra.mxu0 0.0
    %1811 = vmatpush.msra.mxu0 0.0
    %1812 = vmatpush.msra.mxu0 0.0
    %1813 = vmatpush.msra.mxu0 0.0
    %1814 = vmatpush.msra.mxu0 0.0
    %1815 = vmatpush.msra.mxu0 0.0
    %1816 = vmatpush.msra.mxu0 %v1779
    %1817 = vmatpush.msra.mxu0 %v1778
    %1818 = vmatpush.msra.mxu0 %v1777
    %1819 = vmatpush.msra.mxu0 %v1776
    %1820 = vmatmul.f32.gmra.mxu0 %v1781
    %v1821 = vpop.f32.mrf.mxu0
    %v1822 = vadd.f32 0.0, %v1821
    %1823 = vmatmul.f32.gmra.mxu0 %v1784
    %v1824 = vpop.f32.mrf.mxu0
    %v1825 = vadd.f32 0.0, %v1824
    %1826 = vmatmul.f32.gmra.mxu0 %v1787
    %v1827 = vpop.f32.mrf.mxu0
    %v1828 = vadd.f32 0.0, %v1827
    %1829 = vmatmul.f32.gmra.mxu0 %v1790
    %v1830 = vpop.f32.mrf.mxu0
    %v1831 = vadd.f32 0.0, %v1830
    %1832 = vmatmul.f32.gmra.mxu0 %v1793
    %v1833 = vpop.f32.mrf.mxu0
    %v1834 = vadd.f32 0.0, %v1833
    %1835 = vmatmul.f32.gmra.mxu0 %v1796
    %v1836 = vpop.f32.mrf.mxu0
    %v1837 = vadd.f32 0.0, %v1836
    %1838 = vmatmul.f32.gmra.mxu0 %v1799
    %v1839 = vpop.f32.mrf.mxu0
    %v1840 = vadd.f32 0.0, %v1839
    %1841 = vmatmul.f32.gmra.mxu0 %v1802
    %v1842 = vpop.f32.mrf.mxu0
    %v1843 = vadd.f32 0.0, %v1842
    %1844 = vdwg.mxu0
    %v1846 = vsel %vm984, %v821, 0
    %v1849 = vsel %vm984, %v824, 0
    %v1852 = vsel %vm984, %v827, 0
    %v1855 = vsel %vm984, %v830, 0
    %v1858 = vsel %vm984, %v833, 0
    %v1861 = vsel %vm984, %v836, 0
    %v1864 = vsel %vm984, %v839, 0
    %v1867 = vsel %vm984, %v842, 0
    %1869 = vmatpush.msra.mxu0 0.0
    %1870 = vmatpush.msra.mxu0 0.0
    %1871 = vmatpush.msra.mxu0 0.0
    %1872 = vmatpush.msra.mxu0 0.0
    %1873 = vmatpush.msra.mxu0 0.0
    %1874 = vmatpush.msra.mxu0 0.0
    %1875 = vmatpush.msra.mxu0 0.0
    %1876 = vmatpush.msra.mxu0 0.0
    %1877 = vmatpush.msra.mxu0 0.0
    %1878 = vmatpush.msra.mxu0 0.0
    %1879 = vmatpush.msra.mxu0 0.0
    %1880 = vmatpush.msra.mxu0 0.0
    %1881 = vmatpush.msra.mxu0 %v848
    %1882 = vmatpush.msra.mxu0 %v847
    %1883 = vmatpush.msra.mxu0 %v846
    %1884 = vmatpush.msra.mxu0 %v845
    %1885 = vmatmul.f32.gmra.mxu0 %v1846
    %v1886 = vpop.f32.mrf.mxu0
    %v1887 = vadd.f32 %v1822, %v1886
    %1888 = vmatmul.f32.gmra.mxu0 %v1849
    %v1889 = vpop.f32.mrf.mxu0
    %v1890 = vadd.f32 %v1825, %v1889
    %1891 = vmatmul.f32.gmra.mxu0 %v1852
    %v1892 = vpop.f32.mrf.mxu0
    %v1893 = vadd.f32 %v1828, %v1892
    %1894 = vmatmul.f32.gmra.mxu0 %v1855
    %v1895 = vpop.f32.mrf.mxu0
    %v1896 = vadd.f32 %v1831, %v1895
    %1897 = vmatmul.f32.gmra.mxu0 %v1858
    %v1898 = vpop.f32.mrf.mxu0
    %v1899 = vadd.f32 %v1834, %v1898
    %1900 = vmatmul.f32.gmra.mxu0 %v1861
    %v1901 = vpop.f32.mrf.mxu0
    %v1902 = vadd.f32 %v1837, %v1901
    %1903 = vmatmul.f32.gmra.mxu0 %v1864
    %v1904 = vpop.f32.mrf.mxu0
    %v1905 = vadd.f32 %v1840, %v1904
    %1906 = vmatmul.f32.gmra.mxu0 %v1867
    %v1907 = vpop.f32.mrf.mxu0
    %v1908 = vadd.f32 %v1843, %v1907
    %1909 = vdwg.mxu0
    %v1910 = vld [vmem:[%s1 + $0x200] sm:$0xff]
    %v1911 = vld [vmem:[%s1 + $0x208] sm:$0xff]
    %v1912 = vld [vmem:[%s1 + $0x210] sm:$0xff]
    %v1913 = vld [vmem:[%s1 + $0x218] sm:$0xff]
    %v1914 = vld [vmem:[%s1 + $0x220] sm:$0xff]
    %v1915 = vld [vmem:[%s1 + $0x228] sm:$0xff]
    %v1916 = vld [vmem:[%s1 + $0x230] sm:$0xff]
    %v1917 = vld [vmem:[%s1 + $0x238] sm:$0xff]
    %v1918 = vunpack.c.l.bf16 %v1910
    %v1919 = vunpack.c.h.bf16 %v1910
    %v1920 = vunpack.c.l.bf16 %v1911
    %v1921 = vunpack.c.h.bf16 %v1911
    %v1922 = vunpack.c.l.bf16 %v1912
    %v1923 = vunpack.c.h.bf16 %v1912
    %v1924 = vunpack.c.l.bf16 %v1913
    %v1925 = vunpack.c.h.bf16 %v1913
    %v1926 = vunpack.c.l.bf16 %v1914
    %v1927 = vunpack.c.h.bf16 %v1914
    %v1928 = vunpack.c.l.bf16 %v1915
    %v1929 = vunpack.c.h.bf16 %v1915
    %v1930 = vunpack.c.l.bf16 %v1916
    %v1931 = vunpack.c.h.bf16 %v1916
    %v1932 = vunpack.c.l.bf16 %v1917
    %v1933 = vunpack.c.h.bf16 %v1917
    %v1935 = vsel %vm333, %v1919, 0
    %v1938 = vsel %vm333, %v1921, 0
    %v1941 = vsel %vm333, %v1923, 0
    %v1944 = vsel %vm333, %v1925, 0
    %v1947 = vsel %vm333, %v1927, 0
    %v1950 = vsel %vm333, %v1929, 0
    %v1953 = vsel %vm333, %v1931, 0
    %v1956 = vsel %vm333, %v1933, 0
    %1958 = vmatpush.msra.mxu0 %v299
    %1959 = vmatpush.msra.mxu0 %v298
    %1960 = vmatpush.msra.mxu0 %v297
    %1961 = vmatpush.msra.mxu0 %v296
    %1962 = vmatpush.msra.mxu0 %v295
    %1963 = vmatpush.msra.mxu0 %v294
    %1964 = vmatpush.msra.mxu0 %v293
    %1965 = vmatpush.msra.mxu0 %v292
    %1966 = vmatpush.msra.mxu0 %v291
    %1967 = vmatpush.msra.mxu0 %v290
    %1968 = vmatpush.msra.mxu0 %v289
    %1969 = vmatpush.msra.mxu0 %v288
    %1970 = vmatpush.msra.mxu0 %v287
    %1971 = vmatpush.msra.mxu0 %v286
    %1972 = vmatpush.msra.mxu0 %v285
    %1973 = vmatpush.msra.mxu0 %v284
    %1974 = vmatmul.f32.gmra.mxu0 %v1918
    %v1975 = vpop.f32.mrf.mxu0
    %v1976 = vadd.f32 0.0, %v1975
    %1977 = vmatmul.f32.gmra.mxu0 %v1920
    %v1978 = vpop.f32.mrf.mxu0
    %v1979 = vadd.f32 0.0, %v1978
    %1980 = vmatmul.f32.gmra.mxu0 %v1922
    %v1981 = vpop.f32.mrf.mxu0
    %v1982 = vadd.f32 0.0, %v1981
    %1983 = vmatmul.f32.gmra.mxu0 %v1924
    %v1984 = vpop.f32.mrf.mxu0
    %v1985 = vadd.f32 0.0, %v1984
    %1986 = vmatmul.f32.gmra.mxu0 %v1926
    %v1987 = vpop.f32.mrf.mxu0
    %v1988 = vadd.f32 0.0, %v1987
    %1989 = vmatmul.f32.gmra.mxu0 %v1928
    %v1990 = vpop.f32.mrf.mxu0
    %v1991 = vadd.f32 0.0, %v1990
    %1992 = vmatmul.f32.gmra.mxu0 %v1930
    %v1993 = vpop.f32.mrf.mxu0
    %v1994 = vadd.f32 0.0, %v1993
    %1995 = vmatmul.f32.gmra.mxu0 %v1932
    %v1996 = vpop.f32.mrf.mxu0
    %v1997 = vadd.f32 0.0, %v1996
    %1998 = vdwg.mxu0
    %1999 = vmatpush.msra.mxu0 0.0
    %2000 = vmatpush.msra.mxu0 0.0
    %2001 = vmatpush.msra.mxu0 0.0
    %2002 = vmatpush.msra.mxu0 0.0
    %2003 = vmatpush.msra.mxu0 0.0
    %2004 = vmatpush.msra.mxu0 0.0
    %2005 = vmatpush.msra.mxu0 0.0
    %2006 = vmatpush.msra.mxu0 %v308
    %2007 = vmatpush.msra.mxu0 %v307
    %2008 = vmatpush.msra.mxu0 %v306
    %2009 = vmatpush.msra.mxu0 %v305
    %2010 = vmatpush.msra.mxu0 %v304
    %2011 = vmatpush.msra.mxu0 %v303
    %2012 = vmatpush.msra.mxu0 %v302
    %2013 = vmatpush.msra.mxu0 %v301
    %2014 = vmatpush.msra.mxu0 %v300
    %2015 = vmatmul.f32.gmra.mxu0 %v1935
    %v2016 = vpop.f32.mrf.mxu0
    %v2017 = vadd.f32 %v1976, %v2016
    %2018 = vmatmul.f32.gmra.mxu0 %v1938
    %v2019 = vpop.f32.mrf.mxu0
    %v2020 = vadd.f32 %v1979, %v2019
    %2021 = vmatmul.f32.gmra.mxu0 %v1941
    %v2022 = vpop.f32.mrf.mxu0
    %v2023 = vadd.f32 %v1982, %v2022
    %2024 = vmatmul.f32.gmra.mxu0 %v1944
    %v2025 = vpop.f32.mrf.mxu0
    %v2026 = vadd.f32 %v1985, %v2025
    %2027 = vmatmul.f32.gmra.mxu0 %v1947
    %v2028 = vpop.f32.mrf.mxu0
    %v2029 = vadd.f32 %v1988, %v2028
    %2030 = vmatmul.f32.gmra.mxu0 %v1950
    %v2031 = vpop.f32.mrf.mxu0
    %v2032 = vadd.f32 %v1991, %v2031
    %2033 = vmatmul.f32.gmra.mxu0 %v1953
    %v2034 = vpop.f32.mrf.mxu0
    %v2035 = vadd.f32 %v1994, %v2034
    %2036 = vmatmul.f32.gmra.mxu0 %v1956
    %v2037 = vpop.f32.mrf.mxu0
    %v2038 = vadd.f32 %v1997, %v2037
    %2039 = vdwg.mxu0
    %s2040 = scalar_lea.vmem %s5, 256
    %v2041 = vld [vmem:[%s2040] sm:$0xff]
    %v2042 = vld [vmem:[%s2040 + $0x8] sm:$0xff]
    %v2043 = vld [vmem:[%s2040 + $0x10] sm:$0xff]
    %v2044 = vld [vmem:[%s2040 + $0x18] sm:$0xff]
    %v2046 = vsel %vm984, %v2017, 0
    %v2049 = vsel %vm984, %v2020, 0
    %v2052 = vsel %vm984, %v2023, 0
    %v2055 = vsel %vm984, %v2026, 0
    %v2058 = vsel %vm984, %v2029, 0
    %v2061 = vsel %vm984, %v2032, 0
    %v2064 = vsel %vm984, %v2035, 0
    %v2067 = vsel %vm984, %v2038, 0
    %2069 = vmatpush.msra.mxu0 0.0
    %2070 = vmatpush.msra.mxu0 0.0
    %2071 = vmatpush.msra.mxu0 0.0
    %2072 = vmatpush.msra.mxu0 0.0
    %2073 = vmatpush.msra.mxu0 0.0
    %2074 = vmatpush.msra.mxu0 0.0
    %2075 = vmatpush.msra.mxu0 0.0
    %2076 = vmatpush.msra.mxu0 0.0
    %2077 = vmatpush.msra.mxu0 0.0
    %2078 = vmatpush.msra.mxu0 0.0
    %2079 = vmatpush.msra.mxu0 0.0
    %2080 = vmatpush.msra.mxu0 0.0
    %2081 = vmatpush.msra.mxu0 %v2044
    %2082 = vmatpush.msra.mxu0 %v2043
    %2083 = vmatpush.msra.mxu0 %v2042
    %2084 = vmatpush.msra.mxu0 %v2041
    %2085 = vmatmul.f32.gmra.mxu0 %v2046
    %v2086 = vpop.f32.mrf.mxu0
    %v2087 = vadd.f32 0.0, %v2086
    %2088 = vmatmul.f32.gmra.mxu0 %v2049
    %v2089 = vpop.f32.mrf.mxu0
    %v2090 = vadd.f32 0.0, %v2089
    %2091 = vmatmul.f32.gmra.mxu0 %v2052
    %v2092 = vpop.f32.mrf.mxu0
    %v2093 = vadd.f32 0.0, %v2092
    %2094 = vmatmul.f32.gmra.mxu0 %v2055
    %v2095 = vpop.f32.mrf.mxu0
    %v2096 = vadd.f32 0.0, %v2095
    %2097 = vmatmul.f32.gmra.mxu0 %v2058
    %v2098 = vpop.f32.mrf.mxu0
    %v2099 = vadd.f32 0.0, %v2098
    %2100 = vmatmul.f32.gmra.mxu0 %v2061
    %v2101 = vpop.f32.mrf.mxu0
    %v2102 = vadd.f32 0.0, %v2101
    %2103 = vmatmul.f32.gmra.mxu0 %v2064
    %v2104 = vpop.f32.mrf.mxu0
    %v2105 = vadd.f32 0.0, %v2104
    %2106 = vmatmul.f32.gmra.mxu0 %v2067
    %v2107 = vpop.f32.mrf.mxu0
    %v2108 = vadd.f32 0.0, %v2107
    %2109 = vdwg.mxu0
    %v2110 = vadd.f32 %v1092, %v2087
    %v2111 = vadd.f32 %v1095, %v2090
    %v2112 = vadd.f32 %v1098, %v2093
    %v2113 = vadd.f32 %v1101, %v2096
    %v2114 = vadd.f32 %v1104, %v2099
    %v2115 = vadd.f32 %v1107, %v2102
    %v2116 = vadd.f32 %v1110, %v2105
    %v2117 = vadd.f32 %v1113, %v2108
    %v2118 = vld [vmem:[%s1 + $0x240] sm:$0xff]
    %v2119 = vld [vmem:[%s1 + $0x248] sm:$0xff]
    %v2120 = vld [vmem:[%s1 + $0x250] sm:$0xff]
    %v2121 = vld [vmem:[%s1 + $0x258] sm:$0xff]
    %v2122 = vld [vmem:[%s1 + $0x260] sm:$0xff]
    %v2123 = vld [vmem:[%s1 + $0x268] sm:$0xff]
    %v2124 = vld [vmem:[%s1 + $0x270] sm:$0xff]
    %v2125 = vld [vmem:[%s1 + $0x278] sm:$0xff]
    %v2126 = vunpack.c.l.bf16 %v2118
    %v2127 = vunpack.c.h.bf16 %v2118
    %v2128 = vunpack.c.l.bf16 %v2119
    %v2129 = vunpack.c.h.bf16 %v2119
    %v2130 = vunpack.c.l.bf16 %v2120
    %v2131 = vunpack.c.h.bf16 %v2120
    %v2132 = vunpack.c.l.bf16 %v2121
    %v2133 = vunpack.c.h.bf16 %v2121
    %v2134 = vunpack.c.l.bf16 %v2122
    %v2135 = vunpack.c.h.bf16 %v2122
    %v2136 = vunpack.c.l.bf16 %v2123
    %v2137 = vunpack.c.h.bf16 %v2123
    %v2138 = vunpack.c.l.bf16 %v2124
    %v2139 = vunpack.c.h.bf16 %v2124
    %v2140 = vunpack.c.l.bf16 %v2125
    %v2141 = vunpack.c.h.bf16 %v2125
    %v2143 = vsel %vm333, %v2127, 0
    %v2146 = vsel %vm333, %v2129, 0
    %v2149 = vsel %vm333, %v2131, 0
    %v2152 = vsel %vm333, %v2133, 0
    %v2155 = vsel %vm333, %v2135, 0
    %v2158 = vsel %vm333, %v2137, 0
    %v2161 = vsel %vm333, %v2139, 0
    %v2164 = vsel %vm333, %v2141, 0
    %2166 = vmatpush.msra.mxu0 %v299
    %2167 = vmatpush.msra.mxu0 %v298
    %2168 = vmatpush.msra.mxu0 %v297
    %2169 = vmatpush.msra.mxu0 %v296
    %2170 = vmatpush.msra.mxu0 %v295
    %2171 = vmatpush.msra.mxu0 %v294
    %2172 = vmatpush.msra.mxu0 %v293
    %2173 = vmatpush.msra.mxu0 %v292
    %2174 = vmatpush.msra.mxu0 %v291
    %2175 = vmatpush.msra.mxu0 %v290
    %2176 = vmatpush.msra.mxu0 %v289
    %2177 = vmatpush.msra.mxu0 %v288
    %2178 = vmatpush.msra.mxu0 %v287
    %2179 = vmatpush.msra.mxu0 %v286
    %2180 = vmatpush.msra.mxu0 %v285
    %2181 = vmatpush.msra.mxu0 %v284
    %2182 = vmatmul.f32.gmra.mxu0 %v2126
    %v2183 = vpop.f32.mrf.mxu0
    %v2184 = vadd.f32 0.0, %v2183
    %2185 = vmatmul.f32.gmra.mxu0 %v2128
    %v2186 = vpop.f32.mrf.mxu0
    %v2187 = vadd.f32 0.0, %v2186
    %2188 = vmatmul.f32.gmra.mxu0 %v2130
    %v2189 = vpop.f32.mrf.mxu0
    %v2190 = vadd.f32 0.0, %v2189
    %2191 = vmatmul.f32.gmra.mxu0 %v2132
    %v2192 = vpop.f32.mrf.mxu0
    %v2193 = vadd.f32 0.0, %v2192
    %2194 = vmatmul.f32.gmra.mxu0 %v2134
    %v2195 = vpop.f32.mrf.mxu0
    %v2196 = vadd.f32 0.0, %v2195
    %2197 = vmatmul.f32.gmra.mxu0 %v2136
    %v2198 = vpop.f32.mrf.mxu0
    %v2199 = vadd.f32 0.0, %v2198
    %2200 = vmatmul.f32.gmra.mxu0 %v2138
    %v2201 = vpop.f32.mrf.mxu0
    %v2202 = vadd.f32 0.0, %v2201
    %2203 = vmatmul.f32.gmra.mxu0 %v2140
    %v2204 = vpop.f32.mrf.mxu0
    %v2205 = vadd.f32 0.0, %v2204
    %2206 = vdwg.mxu0
    %2207 = vmatpush.msra.mxu0 0.0
    %2208 = vmatpush.msra.mxu0 0.0
    %2209 = vmatpush.msra.mxu0 0.0
    %2210 = vmatpush.msra.mxu0 0.0
    %2211 = vmatpush.msra.mxu0 0.0
    %2212 = vmatpush.msra.mxu0 0.0
    %2213 = vmatpush.msra.mxu0 0.0
    %2214 = vmatpush.msra.mxu0 %v308
    %2215 = vmatpush.msra.mxu0 %v307
    %2216 = vmatpush.msra.mxu0 %v306
    %2217 = vmatpush.msra.mxu0 %v305
    %2218 = vmatpush.msra.mxu0 %v304
    %2219 = vmatpush.msra.mxu0 %v303
    %2220 = vmatpush.msra.mxu0 %v302
    %2221 = vmatpush.msra.mxu0 %v301
    %2222 = vmatpush.msra.mxu0 %v300
    %2223 = vmatmul.f32.gmra.mxu0 %v2143
    %v2224 = vpop.f32.mrf.mxu0
    %v2225 = vadd.f32 %v2184, %v2224
    %2226 = vmatmul.f32.gmra.mxu0 %v2146
    %v2227 = vpop.f32.mrf.mxu0
    %v2228 = vadd.f32 %v2187, %v2227
    %2229 = vmatmul.f32.gmra.mxu0 %v2149
    %v2230 = vpop.f32.mrf.mxu0
    %v2231 = vadd.f32 %v2190, %v2230
    %2232 = vmatmul.f32.gmra.mxu0 %v2152
    %v2233 = vpop.f32.mrf.mxu0
    %v2234 = vadd.f32 %v2193, %v2233
    %2235 = vmatmul.f32.gmra.mxu0 %v2155
    %v2236 = vpop.f32.mrf.mxu0
    %v2237 = vadd.f32 %v2196, %v2236
    %2238 = vmatmul.f32.gmra.mxu0 %v2158
    %v2239 = vpop.f32.mrf.mxu0
    %v2240 = vadd.f32 %v2199, %v2239
    %2241 = vmatmul.f32.gmra.mxu0 %v2161
    %v2242 = vpop.f32.mrf.mxu0
    %v2243 = vadd.f32 %v2202, %v2242
    %2244 = vmatmul.f32.gmra.mxu0 %v2164
    %v2245 = vpop.f32.mrf.mxu0
    %v2246 = vadd.f32 %v2205, %v2245
    %2247 = vdwg.mxu0
    %s2248 = scalar_lea.vmem %s5, 288
    %v2249 = vld [vmem:[%s2248] sm:$0xff]
    %v2250 = vld [vmem:[%s2248 + $0x8] sm:$0xff]
    %v2251 = vld [vmem:[%s2248 + $0x10] sm:$0xff]
    %v2252 = vld [vmem:[%s2248 + $0x18] sm:$0xff]
    %v2254 = vsel %vm984, %v2225, 0
    %v2257 = vsel %vm984, %v2228, 0
    %v2260 = vsel %vm984, %v2231, 0
    %v2263 = vsel %vm984, %v2234, 0
    %v2266 = vsel %vm984, %v2237, 0
    %v2269 = vsel %vm984, %v2240, 0
    %v2272 = vsel %vm984, %v2243, 0
    %v2275 = vsel %vm984, %v2246, 0
    %2277 = vmatpush.msra.mxu0 0.0
    %2278 = vmatpush.msra.mxu0 0.0
    %2279 = vmatpush.msra.mxu0 0.0
    %2280 = vmatpush.msra.mxu0 0.0
    %2281 = vmatpush.msra.mxu0 0.0
    %2282 = vmatpush.msra.mxu0 0.0
    %2283 = vmatpush.msra.mxu0 0.0
    %2284 = vmatpush.msra.mxu0 0.0
    %2285 = vmatpush.msra.mxu0 0.0
    %2286 = vmatpush.msra.mxu0 0.0
    %2287 = vmatpush.msra.mxu0 0.0
    %2288 = vmatpush.msra.mxu0 0.0
    %2289 = vmatpush.msra.mxu0 %v2252
    %2290 = vmatpush.msra.mxu0 %v2251
    %2291 = vmatpush.msra.mxu0 %v2250
    %2292 = vmatpush.msra.mxu0 %v2249
    %2293 = vmatmul.f32.gmra.mxu0 %v2254
    %v2294 = vpop.f32.mrf.mxu0
    %v2295 = vadd.f32 0.0, %v2294
    %2296 = vmatmul.f32.gmra.mxu0 %v2257
    %v2297 = vpop.f32.mrf.mxu0
    %v2298 = vadd.f32 0.0, %v2297
    %2299 = vmatmul.f32.gmra.mxu0 %v2260
    %v2300 = vpop.f32.mrf.mxu0
    %v2301 = vadd.f32 0.0, %v2300
    %2302 = vmatmul.f32.gmra.mxu0 %v2263
    %v2303 = vpop.f32.mrf.mxu0
    %v2304 = vadd.f32 0.0, %v2303
    %2305 = vmatmul.f32.gmra.mxu0 %v2266
    %v2306 = vpop.f32.mrf.mxu0
    %v2307 = vadd.f32 0.0, %v2306
    %2308 = vmatmul.f32.gmra.mxu0 %v2269
    %v2309 = vpop.f32.mrf.mxu0
    %v2310 = vadd.f32 0.0, %v2309
    %2311 = vmatmul.f32.gmra.mxu0 %v2272
    %v2312 = vpop.f32.mrf.mxu0
    %v2313 = vadd.f32 0.0, %v2312
    %2314 = vmatmul.f32.gmra.mxu0 %v2275
    %v2315 = vpop.f32.mrf.mxu0
    %v2316 = vadd.f32 0.0, %v2315
    %2317 = vdwg.mxu0
    %v2318 = vadd.f32 %v1357, %v2295
    %v2319 = vadd.f32 %v1360, %v2298
    %v2320 = vadd.f32 %v1363, %v2301
    %v2321 = vadd.f32 %v1366, %v2304
    %v2322 = vadd.f32 %v1369, %v2307
    %v2323 = vadd.f32 %v1372, %v2310
    %v2324 = vadd.f32 %v1375, %v2313
    %v2325 = vadd.f32 %v1378, %v2316
    %v2326 = vld [vmem:[%s1 + $0x280] sm:$0xff]
    %v2327 = vld [vmem:[%s1 + $0x288] sm:$0xff]
    %v2328 = vld [vmem:[%s1 + $0x290] sm:$0xff]
    %v2329 = vld [vmem:[%s1 + $0x298] sm:$0xff]
    %v2330 = vld [vmem:[%s1 + $0x2a0] sm:$0xff]
    %v2331 = vld [vmem:[%s1 + $0x2a8] sm:$0xff]
    %v2332 = vld [vmem:[%s1 + $0x2b0] sm:$0xff]
    %v2333 = vld [vmem:[%s1 + $0x2b8] sm:$0xff]
    %v2334 = vunpack.c.l.bf16 %v2326
    %v2335 = vunpack.c.h.bf16 %v2326
    %v2336 = vunpack.c.l.bf16 %v2327
    %v2337 = vunpack.c.h.bf16 %v2327
    %v2338 = vunpack.c.l.bf16 %v2328
    %v2339 = vunpack.c.h.bf16 %v2328
    %v2340 = vunpack.c.l.bf16 %v2329
    %v2341 = vunpack.c.h.bf16 %v2329
    %v2342 = vunpack.c.l.bf16 %v2330
    %v2343 = vunpack.c.h.bf16 %v2330
    %v2344 = vunpack.c.l.bf16 %v2331
    %v2345 = vunpack.c.h.bf16 %v2331
    %v2346 = vunpack.c.l.bf16 %v2332
    %v2347 = vunpack.c.h.bf16 %v2332
    %v2348 = vunpack.c.l.bf16 %v2333
    %v2349 = vunpack.c.h.bf16 %v2333
    %v2351 = vsel %vm333, %v2335, 0
    %v2354 = vsel %vm333, %v2337, 0
    %v2357 = vsel %vm333, %v2339, 0
    %v2360 = vsel %vm333, %v2341, 0
    %v2363 = vsel %vm333, %v2343, 0
    %v2366 = vsel %vm333, %v2345, 0
    %v2369 = vsel %vm333, %v2347, 0
    %v2372 = vsel %vm333, %v2349, 0
    %2374 = vmatpush.msra.mxu0 %v299
    %2375 = vmatpush.msra.mxu0 %v298
    %2376 = vmatpush.msra.mxu0 %v297
    %2377 = vmatpush.msra.mxu0 %v296
    %2378 = vmatpush.msra.mxu0 %v295
    %2379 = vmatpush.msra.mxu0 %v294
    %2380 = vmatpush.msra.mxu0 %v293
    %2381 = vmatpush.msra.mxu0 %v292
    %2382 = vmatpush.msra.mxu0 %v291
    %2383 = vmatpush.msra.mxu0 %v290
    %2384 = vmatpush.msra.mxu0 %v289
    %2385 = vmatpush.msra.mxu0 %v288
    %2386 = vmatpush.msra.mxu0 %v287
    %2387 = vmatpush.msra.mxu0 %v286
    %2388 = vmatpush.msra.mxu0 %v285
    %2389 = vmatpush.msra.mxu0 %v284
    %2390 = vmatmul.f32.gmra.mxu0 %v2334
    %v2391 = vpop.f32.mrf.mxu0
    %v2392 = vadd.f32 0.0, %v2391
    %2393 = vmatmul.f32.gmra.mxu0 %v2336
    %v2394 = vpop.f32.mrf.mxu0
    %v2395 = vadd.f32 0.0, %v2394
    %2396 = vmatmul.f32.gmra.mxu0 %v2338
    %v2397 = vpop.f32.mrf.mxu0
    %v2398 = vadd.f32 0.0, %v2397
    %2399 = vmatmul.f32.gmra.mxu0 %v2340
    %v2400 = vpop.f32.mrf.mxu0
    %v2401 = vadd.f32 0.0, %v2400
    %2402 = vmatmul.f32.gmra.mxu0 %v2342
    %v2403 = vpop.f32.mrf.mxu0
    %v2404 = vadd.f32 0.0, %v2403
    %2405 = vmatmul.f32.gmra.mxu0 %v2344
    %v2406 = vpop.f32.mrf.mxu0
    %v2407 = vadd.f32 0.0, %v2406
    %2408 = vmatmul.f32.gmra.mxu0 %v2346
    %v2409 = vpop.f32.mrf.mxu0
    %v2410 = vadd.f32 0.0, %v2409
    %2411 = vmatmul.f32.gmra.mxu0 %v2348
    %v2412 = vpop.f32.mrf.mxu0
    %v2413 = vadd.f32 0.0, %v2412
    %2414 = vdwg.mxu0
    %2415 = vmatpush.msra.mxu0 0.0
    %2416 = vmatpush.msra.mxu0 0.0
    %2417 = vmatpush.msra.mxu0 0.0
    %2418 = vmatpush.msra.mxu0 0.0
    %2419 = vmatpush.msra.mxu0 0.0
    %2420 = vmatpush.msra.mxu0 0.0
    %2421 = vmatpush.msra.mxu0 0.0
    %2422 = vmatpush.msra.mxu0 %v308
    %2423 = vmatpush.msra.mxu0 %v307
    %2424 = vmatpush.msra.mxu0 %v306
    %2425 = vmatpush.msra.mxu0 %v305
    %2426 = vmatpush.msra.mxu0 %v304
    %2427 = vmatpush.msra.mxu0 %v303
    %2428 = vmatpush.msra.mxu0 %v302
    %2429 = vmatpush.msra.mxu0 %v301
    %2430 = vmatpush.msra.mxu0 %v300
    %2431 = vmatmul.f32.gmra.mxu0 %v2351
    %v2432 = vpop.f32.mrf.mxu0
    %v2433 = vadd.f32 %v2392, %v2432
    %2434 = vmatmul.f32.gmra.mxu0 %v2354
    %v2435 = vpop.f32.mrf.mxu0
    %v2436 = vadd.f32 %v2395, %v2435
    %2437 = vmatmul.f32.gmra.mxu0 %v2357
    %v2438 = vpop.f32.mrf.mxu0
    %v2439 = vadd.f32 %v2398, %v2438
    %2440 = vmatmul.f32.gmra.mxu0 %v2360
    %v2441 = vpop.f32.mrf.mxu0
    %v2442 = vadd.f32 %v2401, %v2441
    %2443 = vmatmul.f32.gmra.mxu0 %v2363
    %v2444 = vpop.f32.mrf.mxu0
    %v2445 = vadd.f32 %v2404, %v2444
    %2446 = vmatmul.f32.gmra.mxu0 %v2366
    %v2447 = vpop.f32.mrf.mxu0
    %v2448 = vadd.f32 %v2407, %v2447
    %2449 = vmatmul.f32.gmra.mxu0 %v2369
    %v2450 = vpop.f32.mrf.mxu0
    %v2451 = vadd.f32 %v2410, %v2450
    %2452 = vmatmul.f32.gmra.mxu0 %v2372
    %v2453 = vpop.f32.mrf.mxu0
    %v2454 = vadd.f32 %v2413, %v2453
    %2455 = vdwg.mxu0
    %s2456 = scalar_lea.vmem %s5, 320
    %v2457 = vld [vmem:[%s2456] sm:$0xff]
    %v2458 = vld [vmem:[%s2456 + $0x8] sm:$0xff]
    %v2459 = vld [vmem:[%s2456 + $0x10] sm:$0xff]
    %v2460 = vld [vmem:[%s2456 + $0x18] sm:$0xff]
    %v2462 = vsel %vm984, %v2433, 0
    %v2465 = vsel %vm984, %v2436, 0
    %v2468 = vsel %vm984, %v2439, 0
    %v2471 = vsel %vm984, %v2442, 0
    %v2474 = vsel %vm984, %v2445, 0
    %v2477 = vsel %vm984, %v2448, 0
    %v2480 = vsel %vm984, %v2451, 0
    %v2483 = vsel %vm984, %v2454, 0
    %2485 = vmatpush.msra.mxu0 0.0
    %2486 = vmatpush.msra.mxu0 0.0
    %2487 = vmatpush.msra.mxu0 0.0
    %2488 = vmatpush.msra.mxu0 0.0
    %2489 = vmatpush.msra.mxu0 0.0
    %2490 = vmatpush.msra.mxu0 0.0
    %2491 = vmatpush.msra.mxu0 0.0
    %2492 = vmatpush.msra.mxu0 0.0
    %2493 = vmatpush.msra.mxu0 0.0
    %2494 = vmatpush.msra.mxu0 0.0
    %2495 = vmatpush.msra.mxu0 0.0
    %2496 = vmatpush.msra.mxu0 0.0
    %2497 = vmatpush.msra.mxu0 %v2460
    %2498 = vmatpush.msra.mxu0 %v2459
    %2499 = vmatpush.msra.mxu0 %v2458
    %2500 = vmatpush.msra.mxu0 %v2457
    %2501 = vmatmul.f32.gmra.mxu0 %v2462
    %v2502 = vpop.f32.mrf.mxu0
    %v2503 = vadd.f32 0.0, %v2502
    %2504 = vmatmul.f32.gmra.mxu0 %v2465
    %v2505 = vpop.f32.mrf.mxu0
    %v2506 = vadd.f32 0.0, %v2505
    %2507 = vmatmul.f32.gmra.mxu0 %v2468
    %v2508 = vpop.f32.mrf.mxu0
    %v2509 = vadd.f32 0.0, %v2508
    %2510 = vmatmul.f32.gmra.mxu0 %v2471
    %v2511 = vpop.f32.mrf.mxu0
    %v2512 = vadd.f32 0.0, %v2511
    %2513 = vmatmul.f32.gmra.mxu0 %v2474
    %v2514 = vpop.f32.mrf.mxu0
    %v2515 = vadd.f32 0.0, %v2514
    %2516 = vmatmul.f32.gmra.mxu0 %v2477
    %v2517 = vpop.f32.mrf.mxu0
    %v2518 = vadd.f32 0.0, %v2517
    %2519 = vmatmul.f32.gmra.mxu0 %v2480
    %v2520 = vpop.f32.mrf.mxu0
    %v2521 = vadd.f32 0.0, %v2520
    %2522 = vmatmul.f32.gmra.mxu0 %v2483
    %v2523 = vpop.f32.mrf.mxu0
    %v2524 = vadd.f32 0.0, %v2523
    %2525 = vdwg.mxu0
    %v2526 = vadd.f32 %v1622, %v2503
    %v2527 = vadd.f32 %v1625, %v2506
    %v2528 = vadd.f32 %v1628, %v2509
    %v2529 = vadd.f32 %v1631, %v2512
    %v2530 = vadd.f32 %v1634, %v2515
    %v2531 = vadd.f32 %v1637, %v2518
    %v2532 = vadd.f32 %v1640, %v2521
    %v2533 = vadd.f32 %v1643, %v2524
    %v2534 = vld [vmem:[%s1 + $0x2c0] sm:$0xff]
    %v2535 = vld [vmem:[%s1 + $0x2c8] sm:$0xff]
    %v2536 = vld [vmem:[%s1 + $0x2d0] sm:$0xff]
    %v2537 = vld [vmem:[%s1 + $0x2d8] sm:$0xff]
    %v2538 = vld [vmem:[%s1 + $0x2e0] sm:$0xff]
    %v2539 = vld [vmem:[%s1 + $0x2e8] sm:$0xff]
    %v2540 = vld [vmem:[%s1 + $0x2f0] sm:$0xff]
    %v2541 = vld [vmem:[%s1 + $0x2f8] sm:$0xff]
    %v2542 = vunpack.c.l.bf16 %v2534
    %v2543 = vunpack.c.h.bf16 %v2534
    %v2544 = vunpack.c.l.bf16 %v2535
    %v2545 = vunpack.c.h.bf16 %v2535
    %v2546 = vunpack.c.l.bf16 %v2536
    %v2547 = vunpack.c.h.bf16 %v2536
    %v2548 = vunpack.c.l.bf16 %v2537
    %v2549 = vunpack.c.h.bf16 %v2537
    %v2550 = vunpack.c.l.bf16 %v2538
    %v2551 = vunpack.c.h.bf16 %v2538
    %v2552 = vunpack.c.l.bf16 %v2539
    %v2553 = vunpack.c.h.bf16 %v2539
    %v2554 = vunpack.c.l.bf16 %v2540
    %v2555 = vunpack.c.h.bf16 %v2540
    %v2556 = vunpack.c.l.bf16 %v2541
    %v2557 = vunpack.c.h.bf16 %v2541
    %v2559 = vsel %vm333, %v2543, 0
    %v2562 = vsel %vm333, %v2545, 0
    %v2565 = vsel %vm333, %v2547, 0
    %v2568 = vsel %vm333, %v2549, 0
    %v2571 = vsel %vm333, %v2551, 0
    %v2574 = vsel %vm333, %v2553, 0
    %v2577 = vsel %vm333, %v2555, 0
    %v2580 = vsel %vm333, %v2557, 0
    %2582 = vmatpush.msra.mxu0 %v299
    %2583 = vmatpush.msra.mxu0 %v298
    %2584 = vmatpush.msra.mxu0 %v297
    %2585 = vmatpush.msra.mxu0 %v296
    %2586 = vmatpush.msra.mxu0 %v295
    %2587 = vmatpush.msra.mxu0 %v294
    %2588 = vmatpush.msra.mxu0 %v293
    %2589 = vmatpush.msra.mxu0 %v292
    %2590 = vmatpush.msra.mxu0 %v291
    %2591 = vmatpush.msra.mxu0 %v290
    %2592 = vmatpush.msra.mxu0 %v289
    %2593 = vmatpush.msra.mxu0 %v288
    %2594 = vmatpush.msra.mxu0 %v287
    %2595 = vmatpush.msra.mxu0 %v286
    %2596 = vmatpush.msra.mxu0 %v285
    %2597 = vmatpush.msra.mxu0 %v284
    %2598 = vmatmul.f32.gmra.mxu0 %v2542
    %v2599 = vpop.f32.mrf.mxu0
    %v2600 = vadd.f32 0.0, %v2599
    %2601 = vmatmul.f32.gmra.mxu0 %v2544
    %v2602 = vpop.f32.mrf.mxu0
    %v2603 = vadd.f32 0.0, %v2602
    %2604 = vmatmul.f32.gmra.mxu0 %v2546
    %v2605 = vpop.f32.mrf.mxu0
    %v2606 = vadd.f32 0.0, %v2605
    %2607 = vmatmul.f32.gmra.mxu0 %v2548
    %v2608 = vpop.f32.mrf.mxu0
    %v2609 = vadd.f32 0.0, %v2608
    %2610 = vmatmul.f32.gmra.mxu0 %v2550
    %v2611 = vpop.f32.mrf.mxu0
    %v2612 = vadd.f32 0.0, %v2611
    %2613 = vmatmul.f32.gmra.mxu0 %v2552
    %v2614 = vpop.f32.mrf.mxu0
    %v2615 = vadd.f32 0.0, %v2614
    %2616 = vmatmul.f32.gmra.mxu0 %v2554
    %v2617 = vpop.f32.mrf.mxu0
    %v2618 = vadd.f32 0.0, %v2617
    %2619 = vmatmul.f32.gmra.mxu0 %v2556
    %v2620 = vpop.f32.mrf.mxu0
    %v2621 = vadd.f32 0.0, %v2620
    %2622 = vdwg.mxu0
    %2623 = vmatpush.msra.mxu0 0.0
    %2624 = vmatpush.msra.mxu0 0.0
    %2625 = vmatpush.msra.mxu0 0.0
    %2626 = vmatpush.msra.mxu0 0.0
    %2627 = vmatpush.msra.mxu0 0.0
    %2628 = vmatpush.msra.mxu0 0.0
    %2629 = vmatpush.msra.mxu0 0.0
    %2630 = vmatpush.msra.mxu0 %v308
    %2631 = vmatpush.msra.mxu0 %v307
    %2632 = vmatpush.msra.mxu0 %v306
    %2633 = vmatpush.msra.mxu0 %v305
    %2634 = vmatpush.msra.mxu0 %v304
    %2635 = vmatpush.msra.mxu0 %v303
    %2636 = vmatpush.msra.mxu0 %v302
    %2637 = vmatpush.msra.mxu0 %v301
    %2638 = vmatpush.msra.mxu0 %v300
    %2639 = vmatmul.f32.gmra.mxu0 %v2559
    %v2640 = vpop.f32.mrf.mxu0
    %v2641 = vadd.f32 %v2600, %v2640
    %2642 = vmatmul.f32.gmra.mxu0 %v2562
    %v2643 = vpop.f32.mrf.mxu0
    %v2644 = vadd.f32 %v2603, %v2643
    %2645 = vmatmul.f32.gmra.mxu0 %v2565
    %v2646 = vpop.f32.mrf.mxu0
    %v2647 = vadd.f32 %v2606, %v2646
    %2648 = vmatmul.f32.gmra.mxu0 %v2568
    %v2649 = vpop.f32.mrf.mxu0
    %v2650 = vadd.f32 %v2609, %v2649
    %2651 = vmatmul.f32.gmra.mxu0 %v2571
    %v2652 = vpop.f32.mrf.mxu0
    %v2653 = vadd.f32 %v2612, %v2652
    %2654 = vmatmul.f32.gmra.mxu0 %v2574
    %v2655 = vpop.f32.mrf.mxu0
    %v2656 = vadd.f32 %v2615, %v2655
    %2657 = vmatmul.f32.gmra.mxu0 %v2577
    %v2658 = vpop.f32.mrf.mxu0
    %v2659 = vadd.f32 %v2618, %v2658
    %2660 = vmatmul.f32.gmra.mxu0 %v2580
    %v2661 = vpop.f32.mrf.mxu0
    %v2662 = vadd.f32 %v2621, %v2661
    %2663 = vdwg.mxu0
    %s2664 = scalar_lea.vmem %s5, 352
    %v2665 = vld [vmem:[%s2664] sm:$0xff]
    %v2666 = vld [vmem:[%s2664 + $0x8] sm:$0xff]
    %v2667 = vld [vmem:[%s2664 + $0x10] sm:$0xff]
    %v2668 = vld [vmem:[%s2664 + $0x18] sm:$0xff]
    %v2670 = vsel %vm984, %v2641, 0
    %v2673 = vsel %vm984, %v2644, 0
    %v2676 = vsel %vm984, %v2647, 0
    %v2679 = vsel %vm984, %v2650, 0
    %v2682 = vsel %vm984, %v2653, 0
    %v2685 = vsel %vm984, %v2656, 0
    %v2688 = vsel %vm984, %v2659, 0
    %v2691 = vsel %vm984, %v2662, 0
    %2693 = vmatpush.msra.mxu0 0.0
    %2694 = vmatpush.msra.mxu0 0.0
    %2695 = vmatpush.msra.mxu0 0.0
    %2696 = vmatpush.msra.mxu0 0.0
    %2697 = vmatpush.msra.mxu0 0.0
    %2698 = vmatpush.msra.mxu0 0.0
    %2699 = vmatpush.msra.mxu0 0.0
    %2700 = vmatpush.msra.mxu0 0.0
    %2701 = vmatpush.msra.mxu0 0.0
    %2702 = vmatpush.msra.mxu0 0.0
    %2703 = vmatpush.msra.mxu0 0.0
    %2704 = vmatpush.msra.mxu0 0.0
    %2705 = vmatpush.msra.mxu0 %v2668
    %2706 = vmatpush.msra.mxu0 %v2667
    %2707 = vmatpush.msra.mxu0 %v2666
    %2708 = vmatpush.msra.mxu0 %v2665
    %2709 = vmatmul.f32.gmra.mxu0 %v2670
    %v2710 = vpop.f32.mrf.mxu0
    %v2711 = vadd.f32 0.0, %v2710
    %2712 = vmatmul.f32.gmra.mxu0 %v2673
    %v2713 = vpop.f32.mrf.mxu0
    %v2714 = vadd.f32 0.0, %v2713
    %2715 = vmatmul.f32.gmra.mxu0 %v2676
    %v2716 = vpop.f32.mrf.mxu0
    %v2717 = vadd.f32 0.0, %v2716
    %2718 = vmatmul.f32.gmra.mxu0 %v2679
    %v2719 = vpop.f32.mrf.mxu0
    %v2720 = vadd.f32 0.0, %v2719
    %2721 = vmatmul.f32.gmra.mxu0 %v2682
    %v2722 = vpop.f32.mrf.mxu0
    %v2723 = vadd.f32 0.0, %v2722
    %2724 = vmatmul.f32.gmra.mxu0 %v2685
    %v2725 = vpop.f32.mrf.mxu0
    %v2726 = vadd.f32 0.0, %v2725
    %2727 = vmatmul.f32.gmra.mxu0 %v2688
    %v2728 = vpop.f32.mrf.mxu0
    %v2729 = vadd.f32 0.0, %v2728
    %2730 = vmatmul.f32.gmra.mxu0 %v2691
    %v2731 = vpop.f32.mrf.mxu0
    %v2732 = vadd.f32 0.0, %v2731
    %2733 = vdwg.mxu0
    %v2734 = vadd.f32 %v1887, %v2711
    %v2735 = vadd.f32 %v1890, %v2714
    %v2736 = vadd.f32 %v1893, %v2717
    %v2737 = vadd.f32 %v1896, %v2720
    %v2738 = vadd.f32 %v1899, %v2723
    %v2739 = vadd.f32 %v1902, %v2726
    %v2740 = vadd.f32 %v1905, %v2729
    %v2741 = vadd.f32 %v1908, %v2732
    %v2742 = vld [vmem:[%s1 + $0x300] sm:$0xff]
    %v2743 = vld [vmem:[%s1 + $0x308] sm:$0xff]
    %v2744 = vld [vmem:[%s1 + $0x310] sm:$0xff]
    %v2745 = vld [vmem:[%s1 + $0x318] sm:$0xff]
    %v2746 = vld [vmem:[%s1 + $0x320] sm:$0xff]
    %v2747 = vld [vmem:[%s1 + $0x328] sm:$0xff]
    %v2748 = vld [vmem:[%s1 + $0x330] sm:$0xff]
    %v2749 = vld [vmem:[%s1 + $0x338] sm:$0xff]
    %v2750 = vunpack.c.l.bf16 %v2742
    %v2751 = vunpack.c.h.bf16 %v2742
    %v2752 = vunpack.c.l.bf16 %v2743
    %v2753 = vunpack.c.h.bf16 %v2743
    %v2754 = vunpack.c.l.bf16 %v2744
    %v2755 = vunpack.c.h.bf16 %v2744
    %v2756 = vunpack.c.l.bf16 %v2745
    %v2757 = vunpack.c.h.bf16 %v2745
    %v2758 = vunpack.c.l.bf16 %v2746
    %v2759 = vunpack.c.h.bf16 %v2746
    %v2760 = vunpack.c.l.bf16 %v2747
    %v2761 = vunpack.c.h.bf16 %v2747
    %v2762 = vunpack.c.l.bf16 %v2748
    %v2763 = vunpack.c.h.bf16 %v2748
    %v2764 = vunpack.c.l.bf16 %v2749
    %v2765 = vunpack.c.h.bf16 %v2749
    %v2767 = vsel %vm333, %v2751, 0
    %v2770 = vsel %vm333, %v2753, 0
    %v2773 = vsel %vm333, %v2755, 0
    %v2776 = vsel %vm333, %v2757, 0
    %v2779 = vsel %vm333, %v2759, 0
    %v2782 = vsel %vm333, %v2761, 0
    %v2785 = vsel %vm333, %v2763, 0
    %v2788 = vsel %vm333, %v2765, 0
    %2790 = vmatpush.msra.mxu0 %v299
    %2791 = vmatpush.msra.mxu0 %v298
    %2792 = vmatpush.msra.mxu0 %v297
    %2793 = vmatpush.msra.mxu0 %v296
    %2794 = vmatpush.msra.mxu0 %v295
    %2795 = vmatpush.msra.mxu0 %v294
    %2796 = vmatpush.msra.mxu0 %v293
    %2797 = vmatpush.msra.mxu0 %v292
    %2798 = vmatpush.msra.mxu0 %v291
    %2799 = vmatpush.msra.mxu0 %v290
    %2800 = vmatpush.msra.mxu0 %v289
    %2801 = vmatpush.msra.mxu0 %v288
    %2802 = vmatpush.msra.mxu0 %v287
    %2803 = vmatpush.msra.mxu0 %v286
    %2804 = vmatpush.msra.mxu0 %v285
    %2805 = vmatpush.msra.mxu0 %v284
    %2806 = vmatmul.f32.gmra.mxu0 %v2750
    %v2807 = vpop.f32.mrf.mxu0
    %v2808 = vadd.f32 0.0, %v2807
    %2809 = vmatmul.f32.gmra.mxu0 %v2752
    %v2810 = vpop.f32.mrf.mxu0
    %v2811 = vadd.f32 0.0, %v2810
    %2812 = vmatmul.f32.gmra.mxu0 %v2754
    %v2813 = vpop.f32.mrf.mxu0
    %v2814 = vadd.f32 0.0, %v2813
    %2815 = vmatmul.f32.gmra.mxu0 %v2756
    %v2816 = vpop.f32.mrf.mxu0
    %v2817 = vadd.f32 0.0, %v2816
    %2818 = vmatmul.f32.gmra.mxu0 %v2758
    %v2819 = vpop.f32.mrf.mxu0
    %v2820 = vadd.f32 0.0, %v2819
    %2821 = vmatmul.f32.gmra.mxu0 %v2760
    %v2822 = vpop.f32.mrf.mxu0
    %v2823 = vadd.f32 0.0, %v2822
    %2824 = vmatmul.f32.gmra.mxu0 %v2762
    %v2825 = vpop.f32.mrf.mxu0
    %v2826 = vadd.f32 0.0, %v2825
    %2827 = vmatmul.f32.gmra.mxu0 %v2764
    %v2828 = vpop.f32.mrf.mxu0
    %v2829 = vadd.f32 0.0, %v2828
    %2830 = vdwg.mxu0
    %2831 = vmatpush.msra.mxu0 0.0
    %2832 = vmatpush.msra.mxu0 0.0
    %2833 = vmatpush.msra.mxu0 0.0
    %2834 = vmatpush.msra.mxu0 0.0
    %2835 = vmatpush.msra.mxu0 0.0
    %2836 = vmatpush.msra.mxu0 0.0
    %2837 = vmatpush.msra.mxu0 0.0
    %2838 = vmatpush.msra.mxu0 %v308
    %2839 = vmatpush.msra.mxu0 %v307
    %2840 = vmatpush.msra.mxu0 %v306
    %2841 = vmatpush.msra.mxu0 %v305
    %2842 = vmatpush.msra.mxu0 %v304
    %2843 = vmatpush.msra.mxu0 %v303
    %2844 = vmatpush.msra.mxu0 %v302
    %2845 = vmatpush.msra.mxu0 %v301
    %2846 = vmatpush.msra.mxu0 %v300
    %2847 = vmatmul.f32.gmra.mxu0 %v2767
    %v2848 = vpop.f32.mrf.mxu0
    %v2849 = vadd.f32 %v2808, %v2848
    %2850 = vmatmul.f32.gmra.mxu0 %v2770
    %v2851 = vpop.f32.mrf.mxu0
    %v2852 = vadd.f32 %v2811, %v2851
    %2853 = vmatmul.f32.gmra.mxu0 %v2773
    %v2854 = vpop.f32.mrf.mxu0
    %v2855 = vadd.f32 %v2814, %v2854
    %2856 = vmatmul.f32.gmra.mxu0 %v2776
    %v2857 = vpop.f32.mrf.mxu0
    %v2858 = vadd.f32 %v2817, %v2857
    %2859 = vmatmul.f32.gmra.mxu0 %v2779
    %v2860 = vpop.f32.mrf.mxu0
    %v2861 = vadd.f32 %v2820, %v2860
    %2862 = vmatmul.f32.gmra.mxu0 %v2782
    %v2863 = vpop.f32.mrf.mxu0
    %v2864 = vadd.f32 %v2823, %v2863
    %2865 = vmatmul.f32.gmra.mxu0 %v2785
    %v2866 = vpop.f32.mrf.mxu0
    %v2867 = vadd.f32 %v2826, %v2866
    %2868 = vmatmul.f32.gmra.mxu0 %v2788
    %v2869 = vpop.f32.mrf.mxu0
    %v2870 = vadd.f32 %v2829, %v2869
    %2871 = vdwg.mxu0
    %s2872 = scalar_lea.vmem %s5, 384
    %v2873 = vld [vmem:[%s2872] sm:$0xff]
    %v2874 = vld [vmem:[%s2872 + $0x8] sm:$0xff]
    %v2875 = vld [vmem:[%s2872 + $0x10] sm:$0xff]
    %v2876 = vld [vmem:[%s2872 + $0x18] sm:$0xff]
    %v2878 = vsel %vm984, %v2849, 0
    %v2881 = vsel %vm984, %v2852, 0
    %v2884 = vsel %vm984, %v2855, 0
    %v2887 = vsel %vm984, %v2858, 0
    %v2890 = vsel %vm984, %v2861, 0
    %v2893 = vsel %vm984, %v2864, 0
    %v2896 = vsel %vm984, %v2867, 0
    %v2899 = vsel %vm984, %v2870, 0
    %2901 = vmatpush.msra.mxu0 0.0
    %2902 = vmatpush.msra.mxu0 0.0
    %2903 = vmatpush.msra.mxu0 0.0
    %2904 = vmatpush.msra.mxu0 0.0
    %2905 = vmatpush.msra.mxu0 0.0
    %2906 = vmatpush.msra.mxu0 0.0
    %2907 = vmatpush.msra.mxu0 0.0
    %2908 = vmatpush.msra.mxu0 0.0
    %2909 = vmatpush.msra.mxu0 0.0
    %2910 = vmatpush.msra.mxu0 0.0
    %2911 = vmatpush.msra.mxu0 0.0
    %2912 = vmatpush.msra.mxu0 0.0
    %2913 = vmatpush.msra.mxu0 %v2876
    %2914 = vmatpush.msra.mxu0 %v2875
    %2915 = vmatpush.msra.mxu0 %v2874
    %2916 = vmatpush.msra.mxu0 %v2873
    %2917 = vmatmul.f32.gmra.mxu0 %v2878
    %v2918 = vpop.f32.mrf.mxu0
    %v2919 = vadd.f32 0.0, %v2918
    %2920 = vmatmul.f32.gmra.mxu0 %v2881
    %v2921 = vpop.f32.mrf.mxu0
    %v2922 = vadd.f32 0.0, %v2921
    %2923 = vmatmul.f32.gmra.mxu0 %v2884
    %v2924 = vpop.f32.mrf.mxu0
    %v2925 = vadd.f32 0.0, %v2924
    %2926 = vmatmul.f32.gmra.mxu0 %v2887
    %v2927 = vpop.f32.mrf.mxu0
    %v2928 = vadd.f32 0.0, %v2927
    %2929 = vmatmul.f32.gmra.mxu0 %v2890
    %v2930 = vpop.f32.mrf.mxu0
    %v2931 = vadd.f32 0.0, %v2930
    %2932 = vmatmul.f32.gmra.mxu0 %v2893
    %v2933 = vpop.f32.mrf.mxu0
    %v2934 = vadd.f32 0.0, %v2933
    %2935 = vmatmul.f32.gmra.mxu0 %v2896
    %v2936 = vpop.f32.mrf.mxu0
    %v2937 = vadd.f32 0.0, %v2936
    %2938 = vmatmul.f32.gmra.mxu0 %v2899
    %v2939 = vpop.f32.mrf.mxu0
    %v2940 = vadd.f32 0.0, %v2939
    %2941 = vdwg.mxu0
    %v2942 = vadd.f32 %v2110, %v2919
    %v2943 = vadd.f32 %v2111, %v2922
    %v2944 = vadd.f32 %v2112, %v2925
    %v2945 = vadd.f32 %v2113, %v2928
    %v2946 = vadd.f32 %v2114, %v2931
    %v2947 = vadd.f32 %v2115, %v2934
    %v2948 = vadd.f32 %v2116, %v2937
    %v2949 = vadd.f32 %v2117, %v2940
    %v2950 = vld [vmem:[%s1 + $0x340] sm:$0xff]
    %v2951 = vld [vmem:[%s1 + $0x348] sm:$0xff]
    %v2952 = vld [vmem:[%s1 + $0x350] sm:$0xff]
    %v2953 = vld [vmem:[%s1 + $0x358] sm:$0xff]
    %v2954 = vld [vmem:[%s1 + $0x360] sm:$0xff]
    %v2955 = vld [vmem:[%s1 + $0x368] sm:$0xff]
    %v2956 = vld [vmem:[%s1 + $0x370] sm:$0xff]
    %v2957 = vld [vmem:[%s1 + $0x378] sm:$0xff]
    %v2958 = vunpack.c.l.bf16 %v2950
    %v2959 = vunpack.c.h.bf16 %v2950
    %v2960 = vunpack.c.l.bf16 %v2951
    %v2961 = vunpack.c.h.bf16 %v2951
    %v2962 = vunpack.c.l.bf16 %v2952
    %v2963 = vunpack.c.h.bf16 %v2952
    %v2964 = vunpack.c.l.bf16 %v2953
    %v2965 = vunpack.c.h.bf16 %v2953
    %v2966 = vunpack.c.l.bf16 %v2954
    %v2967 = vunpack.c.h.bf16 %v2954
    %v2968 = vunpack.c.l.bf16 %v2955
    %v2969 = vunpack.c.h.bf16 %v2955
    %v2970 = vunpack.c.l.bf16 %v2956
    %v2971 = vunpack.c.h.bf16 %v2956
    %v2972 = vunpack.c.l.bf16 %v2957
    %v2973 = vunpack.c.h.bf16 %v2957
    %v2975 = vsel %vm333, %v2959, 0
    %v2978 = vsel %vm333, %v2961, 0
    %v2981 = vsel %vm333, %v2963, 0
    %v2984 = vsel %vm333, %v2965, 0
    %v2987 = vsel %vm333, %v2967, 0
    %v2990 = vsel %vm333, %v2969, 0
    %v2993 = vsel %vm333, %v2971, 0
    %v2996 = vsel %vm333, %v2973, 0
    %2998 = vmatpush.msra.mxu0 %v299
    %2999 = vmatpush.msra.mxu0 %v298
    %3000 = vmatpush.msra.mxu0 %v297
    %3001 = vmatpush.msra.mxu0 %v296
    %3002 = vmatpush.msra.mxu0 %v295
    %3003 = vmatpush.msra.mxu0 %v294
    %3004 = vmatpush.msra.mxu0 %v293
    %3005 = vmatpush.msra.mxu0 %v292
    %3006 = vmatpush.msra.mxu0 %v291
    %3007 = vmatpush.msra.mxu0 %v290
    %3008 = vmatpush.msra.mxu0 %v289
    %3009 = vmatpush.msra.mxu0 %v288
    %3010 = vmatpush.msra.mxu0 %v287
    %3011 = vmatpush.msra.mxu0 %v286
    %3012 = vmatpush.msra.mxu0 %v285
    %3013 = vmatpush.msra.mxu0 %v284
    %3014 = vmatmul.f32.gmra.mxu0 %v2958
    %v3015 = vpop.f32.mrf.mxu0
    %v3016 = vadd.f32 0.0, %v3015
    %3017 = vmatmul.f32.gmra.mxu0 %v2960
    %v3018 = vpop.f32.mrf.mxu0
    %v3019 = vadd.f32 0.0, %v3018
    %3020 = vmatmul.f32.gmra.mxu0 %v2962
    %v3021 = vpop.f32.mrf.mxu0
    %v3022 = vadd.f32 0.0, %v3021
    %3023 = vmatmul.f32.gmra.mxu0 %v2964
    %v3024 = vpop.f32.mrf.mxu0
    %v3025 = vadd.f32 0.0, %v3024
    %3026 = vmatmul.f32.gmra.mxu0 %v2966
    %v3027 = vpop.f32.mrf.mxu0
    %v3028 = vadd.f32 0.0, %v3027
    %3029 = vmatmul.f32.gmra.mxu0 %v2968
    %v3030 = vpop.f32.mrf.mxu0
    %v3031 = vadd.f32 0.0, %v3030
    %3032 = vmatmul.f32.gmra.mxu0 %v2970
    %v3033 = vpop.f32.mrf.mxu0
    %v3034 = vadd.f32 0.0, %v3033
    %3035 = vmatmul.f32.gmra.mxu0 %v2972
    %v3036 = vpop.f32.mrf.mxu0
    %v3037 = vadd.f32 0.0, %v3036
    %3038 = vdwg.mxu0
    %3039 = vmatpush.msra.mxu0 0.0
    %3040 = vmatpush.msra.mxu0 0.0
    %3041 = vmatpush.msra.mxu0 0.0
    %3042 = vmatpush.msra.mxu0 0.0
    %3043 = vmatpush.msra.mxu0 0.0
    %3044 = vmatpush.msra.mxu0 0.0
    %3045 = vmatpush.msra.mxu0 0.0
    %3046 = vmatpush.msra.mxu0 %v308
    %3047 = vmatpush.msra.mxu0 %v307
    %3048 = vmatpush.msra.mxu0 %v306
    %3049 = vmatpush.msra.mxu0 %v305
    %3050 = vmatpush.msra.mxu0 %v304
    %3051 = vmatpush.msra.mxu0 %v303
    %3052 = vmatpush.msra.mxu0 %v302
    %3053 = vmatpush.msra.mxu0 %v301
    %3054 = vmatpush.msra.mxu0 %v300
    %3055 = vmatmul.f32.gmra.mxu0 %v2975
    %v3056 = vpop.f32.mrf.mxu0
    %v3057 = vadd.f32 %v3016, %v3056
    %3058 = vmatmul.f32.gmra.mxu0 %v2978
    %v3059 = vpop.f32.mrf.mxu0
    %v3060 = vadd.f32 %v3019, %v3059
    %3061 = vmatmul.f32.gmra.mxu0 %v2981
    %v3062 = vpop.f32.mrf.mxu0
    %v3063 = vadd.f32 %v3022, %v3062
    %3064 = vmatmul.f32.gmra.mxu0 %v2984
    %v3065 = vpop.f32.mrf.mxu0
    %v3066 = vadd.f32 %v3025, %v3065
    %3067 = vmatmul.f32.gmra.mxu0 %v2987
    %v3068 = vpop.f32.mrf.mxu0
    %v3069 = vadd.f32 %v3028, %v3068
    %3070 = vmatmul.f32.gmra.mxu0 %v2990
    %v3071 = vpop.f32.mrf.mxu0
    %v3072 = vadd.f32 %v3031, %v3071
    %3073 = vmatmul.f32.gmra.mxu0 %v2993
    %v3074 = vpop.f32.mrf.mxu0
    %v3075 = vadd.f32 %v3034, %v3074
    %3076 = vmatmul.f32.gmra.mxu0 %v2996
    %v3077 = vpop.f32.mrf.mxu0
    %v3078 = vadd.f32 %v3037, %v3077
    %3079 = vdwg.mxu0
    %s3080 = scalar_lea.vmem %s5, 416
    %v3081 = vld [vmem:[%s3080] sm:$0xff]
    %v3082 = vld [vmem:[%s3080 + $0x8] sm:$0xff]
    %v3083 = vld [vmem:[%s3080 + $0x10] sm:$0xff]
    %v3084 = vld [vmem:[%s3080 + $0x18] sm:$0xff]
    %v3086 = vsel %vm984, %v3057, 0
    %v3089 = vsel %vm984, %v3060, 0
    %v3092 = vsel %vm984, %v3063, 0
    %v3095 = vsel %vm984, %v3066, 0
    %v3098 = vsel %vm984, %v3069, 0
    %v3101 = vsel %vm984, %v3072, 0
    %v3104 = vsel %vm984, %v3075, 0
    %v3107 = vsel %vm984, %v3078, 0
    %3109 = vmatpush.msra.mxu0 0.0
    %3110 = vmatpush.msra.mxu0 0.0
    %3111 = vmatpush.msra.mxu0 0.0
    %3112 = vmatpush.msra.mxu0 0.0
    %3113 = vmatpush.msra.mxu0 0.0
    %3114 = vmatpush.msra.mxu0 0.0
    %3115 = vmatpush.msra.mxu0 0.0
    %3116 = vmatpush.msra.mxu0 0.0
    %3117 = vmatpush.msra.mxu0 0.0
    %3118 = vmatpush.msra.mxu0 0.0
    %3119 = vmatpush.msra.mxu0 0.0
    %3120 = vmatpush.msra.mxu0 0.0
    %3121 = vmatpush.msra.mxu0 %v3084
    %3122 = vmatpush.msra.mxu0 %v3083
    %3123 = vmatpush.msra.mxu0 %v3082
    %3124 = vmatpush.msra.mxu0 %v3081
    %3125 = vmatmul.f32.gmra.mxu0 %v3086
    %v3126 = vpop.f32.mrf.mxu0
    %v3127 = vadd.f32 0.0, %v3126
    %3128 = vmatmul.f32.gmra.mxu0 %v3089
    %v3129 = vpop.f32.mrf.mxu0
    %v3130 = vadd.f32 0.0, %v3129
    %3131 = vmatmul.f32.gmra.mxu0 %v3092
    %v3132 = vpop.f32.mrf.mxu0
    %v3133 = vadd.f32 0.0, %v3132
    %3134 = vmatmul.f32.gmra.mxu0 %v3095
    %v3135 = vpop.f32.mrf.mxu0
    %v3136 = vadd.f32 0.0, %v3135
    %3137 = vmatmul.f32.gmra.mxu0 %v3098
    %v3138 = vpop.f32.mrf.mxu0
    %v3139 = vadd.f32 0.0, %v3138
    %3140 = vmatmul.f32.gmra.mxu0 %v3101
    %v3141 = vpop.f32.mrf.mxu0
    %v3142 = vadd.f32 0.0, %v3141
    %3143 = vmatmul.f32.gmra.mxu0 %v3104
    %v3144 = vpop.f32.mrf.mxu0
    %v3145 = vadd.f32 0.0, %v3144
    %3146 = vmatmul.f32.gmra.mxu0 %v3107
    %v3147 = vpop.f32.mrf.mxu0
    %v3148 = vadd.f32 0.0, %v3147
    %3149 = vdwg.mxu0
    %v3150 = vadd.f32 %v2318, %v3127
    %v3151 = vadd.f32 %v2319, %v3130
    %v3152 = vadd.f32 %v2320, %v3133
    %v3153 = vadd.f32 %v2321, %v3136
    %v3154 = vadd.f32 %v2322, %v3139
    %v3155 = vadd.f32 %v2323, %v3142
    %v3156 = vadd.f32 %v2324, %v3145
    %v3157 = vadd.f32 %v2325, %v3148
    %v3158 = vld [vmem:[%s1 + $0x380] sm:$0xff]
    %v3159 = vld [vmem:[%s1 + $0x388] sm:$0xff]
    %v3160 = vld [vmem:[%s1 + $0x390] sm:$0xff]
    %v3161 = vld [vmem:[%s1 + $0x398] sm:$0xff]
    %v3162 = vld [vmem:[%s1 + $0x3a0] sm:$0xff]
    %v3163 = vld [vmem:[%s1 + $0x3a8] sm:$0xff]
    %v3164 = vld [vmem:[%s1 + $0x3b0] sm:$0xff]
    %v3165 = vld [vmem:[%s1 + $0x3b8] sm:$0xff]
    %v3166 = vunpack.c.l.bf16 %v3158
    %v3167 = vunpack.c.h.bf16 %v3158
    %v3168 = vunpack.c.l.bf16 %v3159
    %v3169 = vunpack.c.h.bf16 %v3159
    %v3170 = vunpack.c.l.bf16 %v3160
    %v3171 = vunpack.c.h.bf16 %v3160
    %v3172 = vunpack.c.l.bf16 %v3161
    %v3173 = vunpack.c.h.bf16 %v3161
    %v3174 = vunpack.c.l.bf16 %v3162
    %v3175 = vunpack.c.h.bf16 %v3162
    %v3176 = vunpack.c.l.bf16 %v3163
    %v3177 = vunpack.c.h.bf16 %v3163
    %v3178 = vunpack.c.l.bf16 %v3164
    %v3179 = vunpack.c.h.bf16 %v3164
    %v3180 = vunpack.c.l.bf16 %v3165
    %v3181 = vunpack.c.h.bf16 %v3165
    %v3183 = vsel %vm333, %v3167, 0
    %v3186 = vsel %vm333, %v3169, 0
    %v3189 = vsel %vm333, %v3171, 0
    %v3192 = vsel %vm333, %v3173, 0
    %v3195 = vsel %vm333, %v3175, 0
    %v3198 = vsel %vm333, %v3177, 0
    %v3201 = vsel %vm333, %v3179, 0
    %v3204 = vsel %vm333, %v3181, 0
    %3206 = vmatpush.msra.mxu0 %v299
    %3207 = vmatpush.msra.mxu0 %v298
    %3208 = vmatpush.msra.mxu0 %v297
    %3209 = vmatpush.msra.mxu0 %v296
    %3210 = vmatpush.msra.mxu0 %v295
    %3211 = vmatpush.msra.mxu0 %v294
    %3212 = vmatpush.msra.mxu0 %v293
    %3213 = vmatpush.msra.mxu0 %v292
    %3214 = vmatpush.msra.mxu0 %v291
    %3215 = vmatpush.msra.mxu0 %v290
    %3216 = vmatpush.msra.mxu0 %v289
    %3217 = vmatpush.msra.mxu0 %v288
    %3218 = vmatpush.msra.mxu0 %v287
    %3219 = vmatpush.msra.mxu0 %v286
    %3220 = vmatpush.msra.mxu0 %v285
    %3221 = vmatpush.msra.mxu0 %v284
    %3222 = vmatmul.f32.gmra.mxu0 %v3166
    %v3223 = vpop.f32.mrf.mxu0
    %v3224 = vadd.f32 0.0, %v3223
    %3225 = vmatmul.f32.gmra.mxu0 %v3168
    %v3226 = vpop.f32.mrf.mxu0
    %v3227 = vadd.f32 0.0, %v3226
    %3228 = vmatmul.f32.gmra.mxu0 %v3170
    %v3229 = vpop.f32.mrf.mxu0
    %v3230 = vadd.f32 0.0, %v3229
    %3231 = vmatmul.f32.gmra.mxu0 %v3172
    %v3232 = vpop.f32.mrf.mxu0
    %v3233 = vadd.f32 0.0, %v3232
    %3234 = vmatmul.f32.gmra.mxu0 %v3174
    %v3235 = vpop.f32.mrf.mxu0
    %v3236 = vadd.f32 0.0, %v3235
    %3237 = vmatmul.f32.gmra.mxu0 %v3176
    %v3238 = vpop.f32.mrf.mxu0
    %v3239 = vadd.f32 0.0, %v3238
    %3240 = vmatmul.f32.gmra.mxu0 %v3178
    %v3241 = vpop.f32.mrf.mxu0
    %v3242 = vadd.f32 0.0, %v3241
    %3243 = vmatmul.f32.gmra.mxu0 %v3180
    %v3244 = vpop.f32.mrf.mxu0
    %v3245 = vadd.f32 0.0, %v3244
    %3246 = vdwg.mxu0
    %3247 = vmatpush.msra.mxu0 0.0
    %3248 = vmatpush.msra.mxu0 0.0
    %3249 = vmatpush.msra.mxu0 0.0
    %3250 = vmatpush.msra.mxu0 0.0
    %3251 = vmatpush.msra.mxu0 0.0
    %3252 = vmatpush.msra.mxu0 0.0
    %3253 = vmatpush.msra.mxu0 0.0
    %3254 = vmatpush.msra.mxu0 %v308
    %3255 = vmatpush.msra.mxu0 %v307
    %3256 = vmatpush.msra.mxu0 %v306
    %3257 = vmatpush.msra.mxu0 %v305
    %3258 = vmatpush.msra.mxu0 %v304
    %3259 = vmatpush.msra.mxu0 %v303
    %3260 = vmatpush.msra.mxu0 %v302
    %3261 = vmatpush.msra.mxu0 %v301
    %3262 = vmatpush.msra.mxu0 %v300
    %3263 = vmatmul.f32.gmra.mxu0 %v3183
    %v3264 = vpop.f32.mrf.mxu0
    %v3265 = vadd.f32 %v3224, %v3264
    %3266 = vmatmul.f32.gmra.mxu0 %v3186
    %v3267 = vpop.f32.mrf.mxu0
    %v3268 = vadd.f32 %v3227, %v3267
    %3269 = vmatmul.f32.gmra.mxu0 %v3189
    %v3270 = vpop.f32.mrf.mxu0
    %v3271 = vadd.f32 %v3230, %v3270
    %3272 = vmatmul.f32.gmra.mxu0 %v3192
    %v3273 = vpop.f32.mrf.mxu0
    %v3274 = vadd.f32 %v3233, %v3273
    %3275 = vmatmul.f32.gmra.mxu0 %v3195
    %v3276 = vpop.f32.mrf.mxu0
    %v3277 = vadd.f32 %v3236, %v3276
    %3278 = vmatmul.f32.gmra.mxu0 %v3198
    %v3279 = vpop.f32.mrf.mxu0
    %v3280 = vadd.f32 %v3239, %v3279
    %3281 = vmatmul.f32.gmra.mxu0 %v3201
    %v3282 = vpop.f32.mrf.mxu0
    %v3283 = vadd.f32 %v3242, %v3282
    %3284 = vmatmul.f32.gmra.mxu0 %v3204
    %v3285 = vpop.f32.mrf.mxu0
    %v3286 = vadd.f32 %v3245, %v3285
    %3287 = vdwg.mxu0
    %s3288 = scalar_lea.vmem %s5, 448
    %v3289 = vld [vmem:[%s3288] sm:$0xff]
    %v3290 = vld [vmem:[%s3288 + $0x8] sm:$0xff]
    %v3291 = vld [vmem:[%s3288 + $0x10] sm:$0xff]
    %v3292 = vld [vmem:[%s3288 + $0x18] sm:$0xff]
    %v3294 = vsel %vm984, %v3265, 0
    %v3297 = vsel %vm984, %v3268, 0
    %v3300 = vsel %vm984, %v3271, 0
    %v3303 = vsel %vm984, %v3274, 0
    %v3306 = vsel %vm984, %v3277, 0
    %v3309 = vsel %vm984, %v3280, 0
    %v3312 = vsel %vm984, %v3283, 0
    %v3315 = vsel %vm984, %v3286, 0
    %3317 = vmatpush.msra.mxu0 0.0
    %3318 = vmatpush.msra.mxu0 0.0
    %3319 = vmatpush.msra.mxu0 0.0
    %3320 = vmatpush.msra.mxu0 0.0
    %3321 = vmatpush.msra.mxu0 0.0
    %3322 = vmatpush.msra.mxu0 0.0
    %3323 = vmatpush.msra.mxu0 0.0
    %3324 = vmatpush.msra.mxu0 0.0
    %3325 = vmatpush.msra.mxu0 0.0
    %3326 = vmatpush.msra.mxu0 0.0
    %3327 = vmatpush.msra.mxu0 0.0
    %3328 = vmatpush.msra.mxu0 0.0
    %3329 = vmatpush.msra.mxu0 %v3292
    %3330 = vmatpush.msra.mxu0 %v3291
    %3331 = vmatpush.msra.mxu0 %v3290
    %3332 = vmatpush.msra.mxu0 %v3289
    %3333 = vmatmul.f32.gmra.mxu0 %v3294
    %v3334 = vpop.f32.mrf.mxu0
    %v3335 = vadd.f32 0.0, %v3334
    %3336 = vmatmul.f32.gmra.mxu0 %v3297
    %v3337 = vpop.f32.mrf.mxu0
    %v3338 = vadd.f32 0.0, %v3337
    %3339 = vmatmul.f32.gmra.mxu0 %v3300
    %v3340 = vpop.f32.mrf.mxu0
    %v3341 = vadd.f32 0.0, %v3340
    %3342 = vmatmul.f32.gmra.mxu0 %v3303
    %v3343 = vpop.f32.mrf.mxu0
    %v3344 = vadd.f32 0.0, %v3343
    %3345 = vmatmul.f32.gmra.mxu0 %v3306
    %v3346 = vpop.f32.mrf.mxu0
    %v3347 = vadd.f32 0.0, %v3346
    %3348 = vmatmul.f32.gmra.mxu0 %v3309
    %v3349 = vpop.f32.mrf.mxu0
    %v3350 = vadd.f32 0.0, %v3349
    %3351 = vmatmul.f32.gmra.mxu0 %v3312
    %v3352 = vpop.f32.mrf.mxu0
    %v3353 = vadd.f32 0.0, %v3352
    %3354 = vmatmul.f32.gmra.mxu0 %v3315
    %v3355 = vpop.f32.mrf.mxu0
    %v3356 = vadd.f32 0.0, %v3355
    %3357 = vdwg.mxu0
    %v3358 = vadd.f32 %v2526, %v3335
    %v3359 = vadd.f32 %v2527, %v3338
    %v3360 = vadd.f32 %v2528, %v3341
    %v3361 = vadd.f32 %v2529, %v3344
    %v3362 = vadd.f32 %v2530, %v3347
    %v3363 = vadd.f32 %v2531, %v3350
    %v3364 = vadd.f32 %v2532, %v3353
    %v3365 = vadd.f32 %v2533, %v3356
    %v3366 = vld [vmem:[%s1 + $0x3c0] sm:$0xff]
    %v3367 = vld [vmem:[%s1 + $0x3c8] sm:$0xff]
    %v3368 = vld [vmem:[%s1 + $0x3d0] sm:$0xff]
    %v3369 = vld [vmem:[%s1 + $0x3d8] sm:$0xff]
    %v3370 = vld [vmem:[%s1 + $0x3e0] sm:$0xff]
    %v3371 = vld [vmem:[%s1 + $0x3e8] sm:$0xff]
    %v3372 = vld [vmem:[%s1 + $0x3f0] sm:$0xff]
    %v3373 = vld [vmem:[%s1 + $0x3f8] sm:$0xff]
    %v3374 = vunpack.c.l.bf16 %v3366
    %v3375 = vunpack.c.h.bf16 %v3366
    %v3376 = vunpack.c.l.bf16 %v3367
    %v3377 = vunpack.c.h.bf16 %v3367
    %v3378 = vunpack.c.l.bf16 %v3368
    %v3379 = vunpack.c.h.bf16 %v3368
    %v3380 = vunpack.c.l.bf16 %v3369
    %v3381 = vunpack.c.h.bf16 %v3369
    %v3382 = vunpack.c.l.bf16 %v3370
    %v3383 = vunpack.c.h.bf16 %v3370
    %v3384 = vunpack.c.l.bf16 %v3371
    %v3385 = vunpack.c.h.bf16 %v3371
    %v3386 = vunpack.c.l.bf16 %v3372
    %v3387 = vunpack.c.h.bf16 %v3372
    %v3388 = vunpack.c.l.bf16 %v3373
    %v3389 = vunpack.c.h.bf16 %v3373
    %v3391 = vsel %vm333, %v3375, 0
    %v3394 = vsel %vm333, %v3377, 0
    %v3397 = vsel %vm333, %v3379, 0
    %v3400 = vsel %vm333, %v3381, 0
    %v3403 = vsel %vm333, %v3383, 0
    %v3406 = vsel %vm333, %v3385, 0
    %v3409 = vsel %vm333, %v3387, 0
    %v3412 = vsel %vm333, %v3389, 0
    %3414 = vmatpush.msra.mxu0 %v299
    %3415 = vmatpush.msra.mxu0 %v298
    %3416 = vmatpush.msra.mxu0 %v297
    %3417 = vmatpush.msra.mxu0 %v296
    %3418 = vmatpush.msra.mxu0 %v295
    %3419 = vmatpush.msra.mxu0 %v294
    %3420 = vmatpush.msra.mxu0 %v293
    %3421 = vmatpush.msra.mxu0 %v292
    %3422 = vmatpush.msra.mxu0 %v291
    %3423 = vmatpush.msra.mxu0 %v290
    %3424 = vmatpush.msra.mxu0 %v289
    %3425 = vmatpush.msra.mxu0 %v288
    %3426 = vmatpush.msra.mxu0 %v287
    %3427 = vmatpush.msra.mxu0 %v286
    %3428 = vmatpush.msra.mxu0 %v285
    %3429 = vmatpush.msra.mxu0 %v284
    %3430 = vmatmul.f32.gmra.mxu0 %v3374
    %v3431 = vpop.f32.mrf.mxu0
    %v3432 = vadd.f32 0.0, %v3431
    %3433 = vmatmul.f32.gmra.mxu0 %v3376
    %v3434 = vpop.f32.mrf.mxu0
    %v3435 = vadd.f32 0.0, %v3434
    %3436 = vmatmul.f32.gmra.mxu0 %v3378
    %v3437 = vpop.f32.mrf.mxu0
    %v3438 = vadd.f32 0.0, %v3437
    %3439 = vmatmul.f32.gmra.mxu0 %v3380
    %v3440 = vpop.f32.mrf.mxu0
    %v3441 = vadd.f32 0.0, %v3440
    %3442 = vmatmul.f32.gmra.mxu0 %v3382
    %v3443 = vpop.f32.mrf.mxu0
    %v3444 = vadd.f32 0.0, %v3443
    %3445 = vmatmul.f32.gmra.mxu0 %v3384
    %v3446 = vpop.f32.mrf.mxu0
    %v3447 = vadd.f32 0.0, %v3446
    %3448 = vmatmul.f32.gmra.mxu0 %v3386
    %v3449 = vpop.f32.mrf.mxu0
    %v3450 = vadd.f32 0.0, %v3449
    %3451 = vmatmul.f32.gmra.mxu0 %v3388
    %v3452 = vpop.f32.mrf.mxu0
    %v3453 = vadd.f32 0.0, %v3452
    %3454 = vdwg.mxu0
    %3455 = vmatpush.msra.mxu0 0.0
    %3456 = vmatpush.msra.mxu0 0.0
    %3457 = vmatpush.msra.mxu0 0.0
    %3458 = vmatpush.msra.mxu0 0.0
    %3459 = vmatpush.msra.mxu0 0.0
    %3460 = vmatpush.msra.mxu0 0.0
    %3461 = vmatpush.msra.mxu0 0.0
    %3462 = vmatpush.msra.mxu0 %v308
    %3463 = vmatpush.msra.mxu0 %v307
    %3464 = vmatpush.msra.mxu0 %v306
    %3465 = vmatpush.msra.mxu0 %v305
    %3466 = vmatpush.msra.mxu0 %v304
    %3467 = vmatpush.msra.mxu0 %v303
    %3468 = vmatpush.msra.mxu0 %v302
    %3469 = vmatpush.msra.mxu0 %v301
    %3470 = vmatpush.msra.mxu0 %v300
    %3471 = vmatmul.f32.gmra.mxu0 %v3391
    %v3472 = vpop.f32.mrf.mxu0
    %v3473 = vadd.f32 %v3432, %v3472
    %3474 = vmatmul.f32.gmra.mxu0 %v3394
    %v3475 = vpop.f32.mrf.mxu0
    %v3476 = vadd.f32 %v3435, %v3475
    %3477 = vmatmul.f32.gmra.mxu0 %v3397
    %v3478 = vpop.f32.mrf.mxu0
    %v3479 = vadd.f32 %v3438, %v3478
    %3480 = vmatmul.f32.gmra.mxu0 %v3400
    %v3481 = vpop.f32.mrf.mxu0
    %v3482 = vadd.f32 %v3441, %v3481
    %3483 = vmatmul.f32.gmra.mxu0 %v3403
    %v3484 = vpop.f32.mrf.mxu0
    %v3485 = vadd.f32 %v3444, %v3484
    %3486 = vmatmul.f32.gmra.mxu0 %v3406
    %v3487 = vpop.f32.mrf.mxu0
    %v3488 = vadd.f32 %v3447, %v3487
    %3489 = vmatmul.f32.gmra.mxu0 %v3409
    %v3490 = vpop.f32.mrf.mxu0
    %v3491 = vadd.f32 %v3450, %v3490
    %3492 = vmatmul.f32.gmra.mxu0 %v3412
    %v3493 = vpop.f32.mrf.mxu0
    %v3494 = vadd.f32 %v3453, %v3493
    %3495 = vdwg.mxu0
    %s3496 = scalar_lea.vmem %s5, 480
    %v3497 = vld [vmem:[%s3496] sm:$0xff]
    %v3498 = vld [vmem:[%s3496 + $0x8] sm:$0xff]
    %v3499 = vld [vmem:[%s3496 + $0x10] sm:$0xff]
    %v3500 = vld [vmem:[%s3496 + $0x18] sm:$0xff]
    %v3502 = vsel %vm984, %v3473, 0
    %v3505 = vsel %vm984, %v3476, 0
    %v3508 = vsel %vm984, %v3479, 0
    %v3511 = vsel %vm984, %v3482, 0
    %v3514 = vsel %vm984, %v3485, 0
    %v3517 = vsel %vm984, %v3488, 0
    %v3520 = vsel %vm984, %v3491, 0
    %v3523 = vsel %vm984, %v3494, 0
    %3525 = vmatpush.msra.mxu0 0.0
    %3526 = vmatpush.msra.mxu0 0.0
    %3527 = vmatpush.msra.mxu0 0.0
    %3528 = vmatpush.msra.mxu0 0.0
    %3529 = vmatpush.msra.mxu0 0.0
    %3530 = vmatpush.msra.mxu0 0.0
    %3531 = vmatpush.msra.mxu0 0.0
    %3532 = vmatpush.msra.mxu0 0.0
    %3533 = vmatpush.msra.mxu0 0.0
    %3534 = vmatpush.msra.mxu0 0.0
    %3535 = vmatpush.msra.mxu0 0.0
    %3536 = vmatpush.msra.mxu0 0.0
    %3537 = vmatpush.msra.mxu0 %v3500
    %3538 = vmatpush.msra.mxu0 %v3499
    %3539 = vmatpush.msra.mxu0 %v3498
    %3540 = vmatpush.msra.mxu0 %v3497
    %3541 = vmatmul.f32.gmra.mxu0 %v3502
    %v3542 = vpop.f32.mrf.mxu0
    %v3543 = vadd.f32 0.0, %v3542
    %3544 = vmatmul.f32.gmra.mxu0 %v3505
    %v3545 = vpop.f32.mrf.mxu0
    %v3546 = vadd.f32 0.0, %v3545
    %3547 = vmatmul.f32.gmra.mxu0 %v3508
    %v3548 = vpop.f32.mrf.mxu0
    %v3549 = vadd.f32 0.0, %v3548
    %3550 = vmatmul.f32.gmra.mxu0 %v3511
    %v3551 = vpop.f32.mrf.mxu0
    %v3552 = vadd.f32 0.0, %v3551
    %3553 = vmatmul.f32.gmra.mxu0 %v3514
    %v3554 = vpop.f32.mrf.mxu0
    %v3555 = vadd.f32 0.0, %v3554
    %3556 = vmatmul.f32.gmra.mxu0 %v3517
    %v3557 = vpop.f32.mrf.mxu0
    %v3558 = vadd.f32 0.0, %v3557
    %3559 = vmatmul.f32.gmra.mxu0 %v3520
    %v3560 = vpop.f32.mrf.mxu0
    %v3561 = vadd.f32 0.0, %v3560
    %3562 = vmatmul.f32.gmra.mxu0 %v3523
    %v3563 = vpop.f32.mrf.mxu0
    %v3564 = vadd.f32 0.0, %v3563
    %3565 = vdwg.mxu0
    %v3566 = vadd.f32 %v2734, %v3543
    %v3567 = vadd.f32 %v2735, %v3546
    %v3568 = vadd.f32 %v2736, %v3549
    %v3569 = vadd.f32 %v2737, %v3552
    %v3570 = vadd.f32 %v2738, %v3555
    %v3571 = vadd.f32 %v2739, %v3558
    %v3572 = vadd.f32 %v2740, %v3561
    %v3573 = vadd.f32 %v2741, %v3564
    %v3574 = vld [vmem:[%s1 + $0x400] sm:$0xff]
    %v3575 = vld [vmem:[%s1 + $0x408] sm:$0xff]
    %v3576 = vld [vmem:[%s1 + $0x410] sm:$0xff]
    %v3577 = vld [vmem:[%s1 + $0x418] sm:$0xff]
    %v3578 = vld [vmem:[%s1 + $0x420] sm:$0xff]
    %v3579 = vld [vmem:[%s1 + $0x428] sm:$0xff]
    %v3580 = vld [vmem:[%s1 + $0x430] sm:$0xff]
    %v3581 = vld [vmem:[%s1 + $0x438] sm:$0xff]
    %v3582 = vunpack.c.l.bf16 %v3574
    %v3583 = vunpack.c.h.bf16 %v3574
    %v3584 = vunpack.c.l.bf16 %v3575
    %v3585 = vunpack.c.h.bf16 %v3575
    %v3586 = vunpack.c.l.bf16 %v3576
    %v3587 = vunpack.c.h.bf16 %v3576
    %v3588 = vunpack.c.l.bf16 %v3577
    %v3589 = vunpack.c.h.bf16 %v3577
    %v3590 = vunpack.c.l.bf16 %v3578
    %v3591 = vunpack.c.h.bf16 %v3578
    %v3592 = vunpack.c.l.bf16 %v3579
    %v3593 = vunpack.c.h.bf16 %v3579
    %v3594 = vunpack.c.l.bf16 %v3580
    %v3595 = vunpack.c.h.bf16 %v3580
    %v3596 = vunpack.c.l.bf16 %v3581
    %v3597 = vunpack.c.h.bf16 %v3581
    %v3599 = vsel %vm333, %v3583, 0
    %v3602 = vsel %vm333, %v3585, 0
    %v3605 = vsel %vm333, %v3587, 0
    %v3608 = vsel %vm333, %v3589, 0
    %v3611 = vsel %vm333, %v3591, 0
    %v3614 = vsel %vm333, %v3593, 0
    %v3617 = vsel %vm333, %v3595, 0
    %v3620 = vsel %vm333, %v3597, 0
    %3622 = vmatpush.msra.mxu0 %v299
    %3623 = vmatpush.msra.mxu0 %v298
    %3624 = vmatpush.msra.mxu0 %v297
    %3625 = vmatpush.msra.mxu0 %v296
    %3626 = vmatpush.msra.mxu0 %v295
    %3627 = vmatpush.msra.mxu0 %v294
    %3628 = vmatpush.msra.mxu0 %v293
    %3629 = vmatpush.msra.mxu0 %v292
    %3630 = vmatpush.msra.mxu0 %v291
    %3631 = vmatpush.msra.mxu0 %v290
    %3632 = vmatpush.msra.mxu0 %v289
    %3633 = vmatpush.msra.mxu0 %v288
    %3634 = vmatpush.msra.mxu0 %v287
    %3635 = vmatpush.msra.mxu0 %v286
    %3636 = vmatpush.msra.mxu0 %v285
    %3637 = vmatpush.msra.mxu0 %v284
    %3638 = vmatmul.f32.gmra.mxu0 %v3582
    %v3639 = vpop.f32.mrf.mxu0
    %v3640 = vadd.f32 0.0, %v3639
    %3641 = vmatmul.f32.gmra.mxu0 %v3584
    %v3642 = vpop.f32.mrf.mxu0
    %v3643 = vadd.f32 0.0, %v3642
    %3644 = vmatmul.f32.gmra.mxu0 %v3586
    %v3645 = vpop.f32.mrf.mxu0
    %v3646 = vadd.f32 0.0, %v3645
    %3647 = vmatmul.f32.gmra.mxu0 %v3588
    %v3648 = vpop.f32.mrf.mxu0
    %v3649 = vadd.f32 0.0, %v3648
    %3650 = vmatmul.f32.gmra.mxu0 %v3590
    %v3651 = vpop.f32.mrf.mxu0
    %v3652 = vadd.f32 0.0, %v3651
    %3653 = vmatmul.f32.gmra.mxu0 %v3592
    %v3654 = vpop.f32.mrf.mxu0
    %v3655 = vadd.f32 0.0, %v3654
    %3656 = vmatmul.f32.gmra.mxu0 %v3594
    %v3657 = vpop.f32.mrf.mxu0
    %v3658 = vadd.f32 0.0, %v3657
    %3659 = vmatmul.f32.gmra.mxu0 %v3596
    %v3660 = vpop.f32.mrf.mxu0
    %v3661 = vadd.f32 0.0, %v3660
    %3662 = vdwg.mxu0
    %3663 = vmatpush.msra.mxu0 0.0
    %3664 = vmatpush.msra.mxu0 0.0
    %3665 = vmatpush.msra.mxu0 0.0
    %3666 = vmatpush.msra.mxu0 0.0
    %3667 = vmatpush.msra.mxu0 0.0
    %3668 = vmatpush.msra.mxu0 0.0
    %3669 = vmatpush.msra.mxu0 0.0
    %3670 = vmatpush.msra.mxu0 %v308
    %3671 = vmatpush.msra.mxu0 %v307
    %3672 = vmatpush.msra.mxu0 %v306
    %3673 = vmatpush.msra.mxu0 %v305
    %3674 = vmatpush.msra.mxu0 %v304
    %3675 = vmatpush.msra.mxu0 %v303
    %3676 = vmatpush.msra.mxu0 %v302
    %3677 = vmatpush.msra.mxu0 %v301
    %3678 = vmatpush.msra.mxu0 %v300
    %3679 = vmatmul.f32.gmra.mxu0 %v3599
    %v3680 = vpop.f32.mrf.mxu0
    %v3681 = vadd.f32 %v3640, %v3680
    %3682 = vmatmul.f32.gmra.mxu0 %v3602
    %v3683 = vpop.f32.mrf.mxu0
    %v3684 = vadd.f32 %v3643, %v3683
    %3685 = vmatmul.f32.gmra.mxu0 %v3605
    %v3686 = vpop.f32.mrf.mxu0
    %v3687 = vadd.f32 %v3646, %v3686
    %3688 = vmatmul.f32.gmra.mxu0 %v3608
    %v3689 = vpop.f32.mrf.mxu0
    %v3690 = vadd.f32 %v3649, %v3689
    %3691 = vmatmul.f32.gmra.mxu0 %v3611
    %v3692 = vpop.f32.mrf.mxu0
    %v3693 = vadd.f32 %v3652, %v3692
    %3694 = vmatmul.f32.gmra.mxu0 %v3614
    %v3695 = vpop.f32.mrf.mxu0
    %v3696 = vadd.f32 %v3655, %v3695
    %3697 = vmatmul.f32.gmra.mxu0 %v3617
    %v3698 = vpop.f32.mrf.mxu0
    %v3699 = vadd.f32 %v3658, %v3698
    %3700 = vmatmul.f32.gmra.mxu0 %v3620
    %v3701 = vpop.f32.mrf.mxu0
    %v3702 = vadd.f32 %v3661, %v3701
    %3703 = vdwg.mxu0
    %s3704 = scalar_lea.vmem %s5, 512
    %v3705 = vld [vmem:[%s3704] sm:$0xff]
    %v3706 = vld [vmem:[%s3704 + $0x8] sm:$0xff]
    %v3707 = vld [vmem:[%s3704 + $0x10] sm:$0xff]
    %v3708 = vld [vmem:[%s3704 + $0x18] sm:$0xff]
    %v3710 = vsel %vm984, %v3681, 0
    %v3713 = vsel %vm984, %v3684, 0
    %v3716 = vsel %vm984, %v3687, 0
    %v3719 = vsel %vm984, %v3690, 0
    %v3722 = vsel %vm984, %v3693, 0
    %v3725 = vsel %vm984, %v3696, 0
    %v3728 = vsel %vm984, %v3699, 0
    %v3731 = vsel %vm984, %v3702, 0
    %3733 = vmatpush.msra.mxu0 0.0
    %3734 = vmatpush.msra.mxu0 0.0
    %3735 = vmatpush.msra.mxu0 0.0
    %3736 = vmatpush.msra.mxu0 0.0
    %3737 = vmatpush.msra.mxu0 0.0
    %3738 = vmatpush.msra.mxu0 0.0
    %3739 = vmatpush.msra.mxu0 0.0
    %3740 = vmatpush.msra.mxu0 0.0
    %3741 = vmatpush.msra.mxu0 0.0
    %3742 = vmatpush.msra.mxu0 0.0
    %3743 = vmatpush.msra.mxu0 0.0
    %3744 = vmatpush.msra.mxu0 0.0
    %3745 = vmatpush.msra.mxu0 %v3708
    %3746 = vmatpush.msra.mxu0 %v3707
    %3747 = vmatpush.msra.mxu0 %v3706
    %3748 = vmatpush.msra.mxu0 %v3705
    %3749 = vmatmul.f32.gmra.mxu0 %v3710
    %v3750 = vpop.f32.mrf.mxu0
    %v3751 = vadd.f32 0.0, %v3750
    %3752 = vmatmul.f32.gmra.mxu0 %v3713
    %v3753 = vpop.f32.mrf.mxu0
    %v3754 = vadd.f32 0.0, %v3753
    %3755 = vmatmul.f32.gmra.mxu0 %v3716
    %v3756 = vpop.f32.mrf.mxu0
    %v3757 = vadd.f32 0.0, %v3756
    %3758 = vmatmul.f32.gmra.mxu0 %v3719
    %v3759 = vpop.f32.mrf.mxu0
    %v3760 = vadd.f32 0.0, %v3759
    %3761 = vmatmul.f32.gmra.mxu0 %v3722
    %v3762 = vpop.f32.mrf.mxu0
    %v3763 = vadd.f32 0.0, %v3762
    %3764 = vmatmul.f32.gmra.mxu0 %v3725
    %v3765 = vpop.f32.mrf.mxu0
    %v3766 = vadd.f32 0.0, %v3765
    %3767 = vmatmul.f32.gmra.mxu0 %v3728
    %v3768 = vpop.f32.mrf.mxu0
    %v3769 = vadd.f32 0.0, %v3768
    %3770 = vmatmul.f32.gmra.mxu0 %v3731
    %v3771 = vpop.f32.mrf.mxu0
    %v3772 = vadd.f32 0.0, %v3771
    %3773 = vdwg.mxu0
    %v3774 = vadd.f32 %v2942, %v3751
    %v3775 = vadd.f32 %v2943, %v3754
    %v3776 = vadd.f32 %v2944, %v3757
    %v3777 = vadd.f32 %v2945, %v3760
    %v3778 = vadd.f32 %v2946, %v3763
    %v3779 = vadd.f32 %v2947, %v3766
    %v3780 = vadd.f32 %v2948, %v3769
    %v3781 = vadd.f32 %v2949, %v3772
    %v3782 = vld [vmem:[%s1 + $0x440] sm:$0xff]
    %v3783 = vld [vmem:[%s1 + $0x448] sm:$0xff]
    %v3784 = vld [vmem:[%s1 + $0x450] sm:$0xff]
    %v3785 = vld [vmem:[%s1 + $0x458] sm:$0xff]
    %v3786 = vld [vmem:[%s1 + $0x460] sm:$0xff]
    %v3787 = vld [vmem:[%s1 + $0x468] sm:$0xff]
    %v3788 = vld [vmem:[%s1 + $0x470] sm:$0xff]
    %v3789 = vld [vmem:[%s1 + $0x478] sm:$0xff]
    %v3790 = vunpack.c.l.bf16 %v3782
    %v3791 = vunpack.c.h.bf16 %v3782
    %v3792 = vunpack.c.l.bf16 %v3783
    %v3793 = vunpack.c.h.bf16 %v3783
    %v3794 = vunpack.c.l.bf16 %v3784
    %v3795 = vunpack.c.h.bf16 %v3784
    %v3796 = vunpack.c.l.bf16 %v3785
    %v3797 = vunpack.c.h.bf16 %v3785
    %v3798 = vunpack.c.l.bf16 %v3786
    %v3799 = vunpack.c.h.bf16 %v3786
    %v3800 = vunpack.c.l.bf16 %v3787
    %v3801 = vunpack.c.h.bf16 %v3787
    %v3802 = vunpack.c.l.bf16 %v3788
    %v3803 = vunpack.c.h.bf16 %v3788
    %v3804 = vunpack.c.l.bf16 %v3789
    %v3805 = vunpack.c.h.bf16 %v3789
    %v3807 = vsel %vm333, %v3791, 0
    %v3810 = vsel %vm333, %v3793, 0
    %v3813 = vsel %vm333, %v3795, 0
    %v3816 = vsel %vm333, %v3797, 0
    %v3819 = vsel %vm333, %v3799, 0
    %v3822 = vsel %vm333, %v3801, 0
    %v3825 = vsel %vm333, %v3803, 0
    %v3828 = vsel %vm333, %v3805, 0
    %3830 = vmatpush.msra.mxu0 %v299
    %3831 = vmatpush.msra.mxu0 %v298
    %3832 = vmatpush.msra.mxu0 %v297
    %3833 = vmatpush.msra.mxu0 %v296
    %3834 = vmatpush.msra.mxu0 %v295
    %3835 = vmatpush.msra.mxu0 %v294
    %3836 = vmatpush.msra.mxu0 %v293
    %3837 = vmatpush.msra.mxu0 %v292
    %3838 = vmatpush.msra.mxu0 %v291
    %3839 = vmatpush.msra.mxu0 %v290
    %3840 = vmatpush.msra.mxu0 %v289
    %3841 = vmatpush.msra.mxu0 %v288
    %3842 = vmatpush.msra.mxu0 %v287
    %3843 = vmatpush.msra.mxu0 %v286
    %3844 = vmatpush.msra.mxu0 %v285
    %3845 = vmatpush.msra.mxu0 %v284
    %3846 = vmatmul.f32.gmra.mxu0 %v3790
    %v3847 = vpop.f32.mrf.mxu0
    %v3848 = vadd.f32 0.0, %v3847
    %3849 = vmatmul.f32.gmra.mxu0 %v3792
    %v3850 = vpop.f32.mrf.mxu0
    %v3851 = vadd.f32 0.0, %v3850
    %3852 = vmatmul.f32.gmra.mxu0 %v3794
    %v3853 = vpop.f32.mrf.mxu0
    %v3854 = vadd.f32 0.0, %v3853
    %3855 = vmatmul.f32.gmra.mxu0 %v3796
    %v3856 = vpop.f32.mrf.mxu0
    %v3857 = vadd.f32 0.0, %v3856
    %3858 = vmatmul.f32.gmra.mxu0 %v3798
    %v3859 = vpop.f32.mrf.mxu0
    %v3860 = vadd.f32 0.0, %v3859
    %3861 = vmatmul.f32.gmra.mxu0 %v3800
    %v3862 = vpop.f32.mrf.mxu0
    %v3863 = vadd.f32 0.0, %v3862
    %3864 = vmatmul.f32.gmra.mxu0 %v3802
    %v3865 = vpop.f32.mrf.mxu0
    %v3866 = vadd.f32 0.0, %v3865
    %3867 = vmatmul.f32.gmra.mxu0 %v3804
    %v3868 = vpop.f32.mrf.mxu0
    %v3869 = vadd.f32 0.0, %v3868
    %3870 = vdwg.mxu0
    %3871 = vmatpush.msra.mxu0 0.0
    %3872 = vmatpush.msra.mxu0 0.0
    %3873 = vmatpush.msra.mxu0 0.0
    %3874 = vmatpush.msra.mxu0 0.0
    %3875 = vmatpush.msra.mxu0 0.0
    %3876 = vmatpush.msra.mxu0 0.0
    %3877 = vmatpush.msra.mxu0 0.0
    %3878 = vmatpush.msra.mxu0 %v308
    %3879 = vmatpush.msra.mxu0 %v307
    %3880 = vmatpush.msra.mxu0 %v306
    %3881 = vmatpush.msra.mxu0 %v305
    %3882 = vmatpush.msra.mxu0 %v304
    %3883 = vmatpush.msra.mxu0 %v303
    %3884 = vmatpush.msra.mxu0 %v302
    %3885 = vmatpush.msra.mxu0 %v301
    %3886 = vmatpush.msra.mxu0 %v300
    %3887 = vmatmul.f32.gmra.mxu0 %v3807
    %v3888 = vpop.f32.mrf.mxu0
    %v3889 = vadd.f32 %v3848, %v3888
    %3890 = vmatmul.f32.gmra.mxu0 %v3810
    %v3891 = vpop.f32.mrf.mxu0
    %v3892 = vadd.f32 %v3851, %v3891
    %3893 = vmatmul.f32.gmra.mxu0 %v3813
    %v3894 = vpop.f32.mrf.mxu0
    %v3895 = vadd.f32 %v3854, %v3894
    %3896 = vmatmul.f32.gmra.mxu0 %v3816
    %v3897 = vpop.f32.mrf.mxu0
    %v3898 = vadd.f32 %v3857, %v3897
    %3899 = vmatmul.f32.gmra.mxu0 %v3819
    %v3900 = vpop.f32.mrf.mxu0
    %v3901 = vadd.f32 %v3860, %v3900
    %3902 = vmatmul.f32.gmra.mxu0 %v3822
    %v3903 = vpop.f32.mrf.mxu0
    %v3904 = vadd.f32 %v3863, %v3903
    %3905 = vmatmul.f32.gmra.mxu0 %v3825
    %v3906 = vpop.f32.mrf.mxu0
    %v3907 = vadd.f32 %v3866, %v3906
    %3908 = vmatmul.f32.gmra.mxu0 %v3828
    %v3909 = vpop.f32.mrf.mxu0
    %v3910 = vadd.f32 %v3869, %v3909
    %3911 = vdwg.mxu0
    %s3912 = scalar_lea.vmem %s5, 544
    %v3913 = vld [vmem:[%s3912] sm:$0xff]
    %v3914 = vld [vmem:[%s3912 + $0x8] sm:$0xff]
    %v3915 = vld [vmem:[%s3912 + $0x10] sm:$0xff]
    %v3916 = vld [vmem:[%s3912 + $0x18] sm:$0xff]
    %v3918 = vsel %vm984, %v3889, 0
    %v3921 = vsel %vm984, %v3892, 0
    %v3924 = vsel %vm984, %v3895, 0
    %v3927 = vsel %vm984, %v3898, 0
    %v3930 = vsel %vm984, %v3901, 0
    %v3933 = vsel %vm984, %v3904, 0
    %v3936 = vsel %vm984, %v3907, 0
    %v3939 = vsel %vm984, %v3910, 0
    %3941 = vmatpush.msra.mxu0 0.0
    %3942 = vmatpush.msra.mxu0 0.0
    %3943 = vmatpush.msra.mxu0 0.0
    %3944 = vmatpush.msra.mxu0 0.0
    %3945 = vmatpush.msra.mxu0 0.0
    %3946 = vmatpush.msra.mxu0 0.0
    %3947 = vmatpush.msra.mxu0 0.0
    %3948 = vmatpush.msra.mxu0 0.0
    %3949 = vmatpush.msra.mxu0 0.0
    %3950 = vmatpush.msra.mxu0 0.0
    %3951 = vmatpush.msra.mxu0 0.0
    %3952 = vmatpush.msra.mxu0 0.0
    %3953 = vmatpush.msra.mxu0 %v3916
    %3954 = vmatpush.msra.mxu0 %v3915
    %3955 = vmatpush.msra.mxu0 %v3914
    %3956 = vmatpush.msra.mxu0 %v3913
    %3957 = vmatmul.f32.gmra.mxu0 %v3918
    %v3958 = vpop.f32.mrf.mxu0
    %v3959 = vadd.f32 0.0, %v3958
    %3960 = vmatmul.f32.gmra.mxu0 %v3921
    %v3961 = vpop.f32.mrf.mxu0
    %v3962 = vadd.f32 0.0, %v3961
    %3963 = vmatmul.f32.gmra.mxu0 %v3924
    %v3964 = vpop.f32.mrf.mxu0
    %v3965 = vadd.f32 0.0, %v3964
    %3966 = vmatmul.f32.gmra.mxu0 %v3927
    %v3967 = vpop.f32.mrf.mxu0
    %v3968 = vadd.f32 0.0, %v3967
    %3969 = vmatmul.f32.gmra.mxu0 %v3930
    %v3970 = vpop.f32.mrf.mxu0
    %v3971 = vadd.f32 0.0, %v3970
    %3972 = vmatmul.f32.gmra.mxu0 %v3933
    %v3973 = vpop.f32.mrf.mxu0
    %v3974 = vadd.f32 0.0, %v3973
    %3975 = vmatmul.f32.gmra.mxu0 %v3936
    %v3976 = vpop.f32.mrf.mxu0
    %v3977 = vadd.f32 0.0, %v3976
    %3978 = vmatmul.f32.gmra.mxu0 %v3939
    %v3979 = vpop.f32.mrf.mxu0
    %v3980 = vadd.f32 0.0, %v3979
    %3981 = vdwg.mxu0
    %v3982 = vadd.f32 %v3150, %v3959
    %v3983 = vadd.f32 %v3151, %v3962
    %v3984 = vadd.f32 %v3152, %v3965
    %v3985 = vadd.f32 %v3153, %v3968
    %v3986 = vadd.f32 %v3154, %v3971
    %v3987 = vadd.f32 %v3155, %v3974
    %v3988 = vadd.f32 %v3156, %v3977
    %v3989 = vadd.f32 %v3157, %v3980
    %v3990 = vld [vmem:[%s1 + $0x480] sm:$0xff]
    %v3991 = vld [vmem:[%s1 + $0x488] sm:$0xff]
    %v3992 = vld [vmem:[%s1 + $0x490] sm:$0xff]
    %v3993 = vld [vmem:[%s1 + $0x498] sm:$0xff]
    %v3994 = vld [vmem:[%s1 + $0x4a0] sm:$0xff]
    %v3995 = vld [vmem:[%s1 + $0x4a8] sm:$0xff]
    %v3996 = vld [vmem:[%s1 + $0x4b0] sm:$0xff]
    %v3997 = vld [vmem:[%s1 + $0x4b8] sm:$0xff]
    %v3998 = vunpack.c.l.bf16 %v3990
    %v3999 = vunpack.c.h.bf16 %v3990
    %v4000 = vunpack.c.l.bf16 %v3991
    %v4001 = vunpack.c.h.bf16 %v3991
    %v4002 = vunpack.c.l.bf16 %v3992
    %v4003 = vunpack.c.h.bf16 %v3992
    %v4004 = vunpack.c.l.bf16 %v3993
    %v4005 = vunpack.c.h.bf16 %v3993
    %v4006 = vunpack.c.l.bf16 %v3994
    %v4007 = vunpack.c.h.bf16 %v3994
    %v4008 = vunpack.c.l.bf16 %v3995
    %v4009 = vunpack.c.h.bf16 %v3995
    %v4010 = vunpack.c.l.bf16 %v3996
    %v4011 = vunpack.c.h.bf16 %v3996
    %v4012 = vunpack.c.l.bf16 %v3997
    %v4013 = vunpack.c.h.bf16 %v3997
    %v4015 = vsel %vm333, %v3999, 0
    %v4018 = vsel %vm333, %v4001, 0
    %v4021 = vsel %vm333, %v4003, 0
    %v4024 = vsel %vm333, %v4005, 0
    %v4027 = vsel %vm333, %v4007, 0
    %v4030 = vsel %vm333, %v4009, 0
    %v4033 = vsel %vm333, %v4011, 0
    %v4036 = vsel %vm333, %v4013, 0
    %4038 = vmatpush.msra.mxu0 %v299
    %4039 = vmatpush.msra.mxu0 %v298
    %4040 = vmatpush.msra.mxu0 %v297
    %4041 = vmatpush.msra.mxu0 %v296
    %4042 = vmatpush.msra.mxu0 %v295
    %4043 = vmatpush.msra.mxu0 %v294
    %4044 = vmatpush.msra.mxu0 %v293
    %4045 = vmatpush.msra.mxu0 %v292
    %4046 = vmatpush.msra.mxu0 %v291
    %4047 = vmatpush.msra.mxu0 %v290
    %4048 = vmatpush.msra.mxu0 %v289
    %4049 = vmatpush.msra.mxu0 %v288
    %4050 = vmatpush.msra.mxu0 %v287
    %4051 = vmatpush.msra.mxu0 %v286
    %4052 = vmatpush.msra.mxu0 %v285
    %4053 = vmatpush.msra.mxu0 %v284
    %4054 = vmatmul.f32.gmra.mxu0 %v3998
    %v4055 = vpop.f32.mrf.mxu0
    %v4056 = vadd.f32 0.0, %v4055
    %4057 = vmatmul.f32.gmra.mxu0 %v4000
    %v4058 = vpop.f32.mrf.mxu0
    %v4059 = vadd.f32 0.0, %v4058
    %4060 = vmatmul.f32.gmra.mxu0 %v4002
    %v4061 = vpop.f32.mrf.mxu0
    %v4062 = vadd.f32 0.0, %v4061
    %4063 = vmatmul.f32.gmra.mxu0 %v4004
    %v4064 = vpop.f32.mrf.mxu0
    %v4065 = vadd.f32 0.0, %v4064
    %4066 = vmatmul.f32.gmra.mxu0 %v4006
    %v4067 = vpop.f32.mrf.mxu0
    %v4068 = vadd.f32 0.0, %v4067
    %4069 = vmatmul.f32.gmra.mxu0 %v4008
    %v4070 = vpop.f32.mrf.mxu0
    %v4071 = vadd.f32 0.0, %v4070
    %4072 = vmatmul.f32.gmra.mxu0 %v4010
    %v4073 = vpop.f32.mrf.mxu0
    %v4074 = vadd.f32 0.0, %v4073
    %4075 = vmatmul.f32.gmra.mxu0 %v4012
    %v4076 = vpop.f32.mrf.mxu0
    %v4077 = vadd.f32 0.0, %v4076
    %4078 = vdwg.mxu0
    %4079 = vmatpush.msra.mxu0 0.0
    %4080 = vmatpush.msra.mxu0 0.0
    %4081 = vmatpush.msra.mxu0 0.0
    %4082 = vmatpush.msra.mxu0 0.0
    %4083 = vmatpush.msra.mxu0 0.0
    %4084 = vmatpush.msra.mxu0 0.0
    %4085 = vmatpush.msra.mxu0 0.0
    %4086 = vmatpush.msra.mxu0 %v308
    %4087 = vmatpush.msra.mxu0 %v307
    %4088 = vmatpush.msra.mxu0 %v306
    %4089 = vmatpush.msra.mxu0 %v305
    %4090 = vmatpush.msra.mxu0 %v304
    %4091 = vmatpush.msra.mxu0 %v303
    %4092 = vmatpush.msra.mxu0 %v302
    %4093 = vmatpush.msra.mxu0 %v301
    %4094 = vmatpush.msra.mxu0 %v300
    %4095 = vmatmul.f32.gmra.mxu0 %v4015
    %v4096 = vpop.f32.mrf.mxu0
    %v4097 = vadd.f32 %v4056, %v4096
    %4098 = vmatmul.f32.gmra.mxu0 %v4018
    %v4099 = vpop.f32.mrf.mxu0
    %v4100 = vadd.f32 %v4059, %v4099
    %4101 = vmatmul.f32.gmra.mxu0 %v4021
    %v4102 = vpop.f32.mrf.mxu0
    %v4103 = vadd.f32 %v4062, %v4102
    %4104 = vmatmul.f32.gmra.mxu0 %v4024
    %v4105 = vpop.f32.mrf.mxu0
    %v4106 = vadd.f32 %v4065, %v4105
    %4107 = vmatmul.f32.gmra.mxu0 %v4027
    %v4108 = vpop.f32.mrf.mxu0
    %v4109 = vadd.f32 %v4068, %v4108
    %4110 = vmatmul.f32.gmra.mxu0 %v4030
    %v4111 = vpop.f32.mrf.mxu0
    %v4112 = vadd.f32 %v4071, %v4111
    %4113 = vmatmul.f32.gmra.mxu0 %v4033
    %v4114 = vpop.f32.mrf.mxu0
    %v4115 = vadd.f32 %v4074, %v4114
    %4116 = vmatmul.f32.gmra.mxu0 %v4036
    %v4117 = vpop.f32.mrf.mxu0
    %v4118 = vadd.f32 %v4077, %v4117
    %4119 = vdwg.mxu0
    %s4120 = scalar_lea.vmem %s5, 576
    %v4121 = vld [vmem:[%s4120] sm:$0xff]
    %v4122 = vld [vmem:[%s4120 + $0x8] sm:$0xff]
    %v4123 = vld [vmem:[%s4120 + $0x10] sm:$0xff]
    %v4124 = vld [vmem:[%s4120 + $0x18] sm:$0xff]
    %v4126 = vsel %vm984, %v4097, 0
    %v4129 = vsel %vm984, %v4100, 0
    %v4132 = vsel %vm984, %v4103, 0
    %v4135 = vsel %vm984, %v4106, 0
    %v4138 = vsel %vm984, %v4109, 0
    %v4141 = vsel %vm984, %v4112, 0
    %v4144 = vsel %vm984, %v4115, 0
    %v4147 = vsel %vm984, %v4118, 0
    %4149 = vmatpush.msra.mxu0 0.0
    %4150 = vmatpush.msra.mxu0 0.0
    %4151 = vmatpush.msra.mxu0 0.0
    %4152 = vmatpush.msra.mxu0 0.0
    %4153 = vmatpush.msra.mxu0 0.0
    %4154 = vmatpush.msra.mxu0 0.0
    %4155 = vmatpush.msra.mxu0 0.0
    %4156 = vmatpush.msra.mxu0 0.0
    %4157 = vmatpush.msra.mxu0 0.0
    %4158 = vmatpush.msra.mxu0 0.0
    %4159 = vmatpush.msra.mxu0 0.0
    %4160 = vmatpush.msra.mxu0 0.0
    %4161 = vmatpush.msra.mxu0 %v4124
    %4162 = vmatpush.msra.mxu0 %v4123
    %4163 = vmatpush.msra.mxu0 %v4122
    %4164 = vmatpush.msra.mxu0 %v4121
    %4165 = vmatmul.f32.gmra.mxu0 %v4126
    %v4166 = vpop.f32.mrf.mxu0
    %v4167 = vadd.f32 0.0, %v4166
    %4168 = vmatmul.f32.gmra.mxu0 %v4129
    %v4169 = vpop.f32.mrf.mxu0
    %v4170 = vadd.f32 0.0, %v4169
    %4171 = vmatmul.f32.gmra.mxu0 %v4132
    %v4172 = vpop.f32.mrf.mxu0
    %v4173 = vadd.f32 0.0, %v4172
    %4174 = vmatmul.f32.gmra.mxu0 %v4135
    %v4175 = vpop.f32.mrf.mxu0
    %v4176 = vadd.f32 0.0, %v4175
    %4177 = vmatmul.f32.gmra.mxu0 %v4138
    %v4178 = vpop.f32.mrf.mxu0
    %v4179 = vadd.f32 0.0, %v4178
    %4180 = vmatmul.f32.gmra.mxu0 %v4141
    %v4181 = vpop.f32.mrf.mxu0
    %v4182 = vadd.f32 0.0, %v4181
    %4183 = vmatmul.f32.gmra.mxu0 %v4144
    %v4184 = vpop.f32.mrf.mxu0
    %v4185 = vadd.f32 0.0, %v4184
    %4186 = vmatmul.f32.gmra.mxu0 %v4147
    %v4187 = vpop.f32.mrf.mxu0
    %v4188 = vadd.f32 0.0, %v4187
    %4189 = vdwg.mxu0
    %v4190 = vadd.f32 %v3358, %v4167
    %v4191 = vadd.f32 %v3359, %v4170
    %v4192 = vadd.f32 %v3360, %v4173
    %v4193 = vadd.f32 %v3361, %v4176
    %v4194 = vadd.f32 %v3362, %v4179
    %v4195 = vadd.f32 %v3363, %v4182
    %v4196 = vadd.f32 %v3364, %v4185
    %v4197 = vadd.f32 %v3365, %v4188
    %v4198 = vld [vmem:[%s1 + $0x4c0] sm:$0xff]
    %v4199 = vld [vmem:[%s1 + $0x4c8] sm:$0xff]
    %v4200 = vld [vmem:[%s1 + $0x4d0] sm:$0xff]
    %v4201 = vld [vmem:[%s1 + $0x4d8] sm:$0xff]
    %v4202 = vld [vmem:[%s1 + $0x4e0] sm:$0xff]
    %v4203 = vld [vmem:[%s1 + $0x4e8] sm:$0xff]
    %v4204 = vld [vmem:[%s1 + $0x4f0] sm:$0xff]
    %v4205 = vld [vmem:[%s1 + $0x4f8] sm:$0xff]
    %v4206 = vunpack.c.l.bf16 %v4198
    %v4207 = vunpack.c.h.bf16 %v4198
    %v4208 = vunpack.c.l.bf16 %v4199
    %v4209 = vunpack.c.h.bf16 %v4199
    %v4210 = vunpack.c.l.bf16 %v4200
    %v4211 = vunpack.c.h.bf16 %v4200
    %v4212 = vunpack.c.l.bf16 %v4201
    %v4213 = vunpack.c.h.bf16 %v4201
    %v4214 = vunpack.c.l.bf16 %v4202
    %v4215 = vunpack.c.h.bf16 %v4202
    %v4216 = vunpack.c.l.bf16 %v4203
    %v4217 = vunpack.c.h.bf16 %v4203
    %v4218 = vunpack.c.l.bf16 %v4204
    %v4219 = vunpack.c.h.bf16 %v4204
    %v4220 = vunpack.c.l.bf16 %v4205
    %v4221 = vunpack.c.h.bf16 %v4205
    %v4223 = vsel %vm333, %v4207, 0
    %v4226 = vsel %vm333, %v4209, 0
    %v4229 = vsel %vm333, %v4211, 0
    %v4232 = vsel %vm333, %v4213, 0
    %v4235 = vsel %vm333, %v4215, 0
    %v4238 = vsel %vm333, %v4217, 0
    %v4241 = vsel %vm333, %v4219, 0
    %v4244 = vsel %vm333, %v4221, 0
    %4246 = vmatpush.msra.mxu0 %v299
    %4247 = vmatpush.msra.mxu0 %v298
    %4248 = vmatpush.msra.mxu0 %v297
    %4249 = vmatpush.msra.mxu0 %v296
    %4250 = vmatpush.msra.mxu0 %v295
    %4251 = vmatpush.msra.mxu0 %v294
    %4252 = vmatpush.msra.mxu0 %v293
    %4253 = vmatpush.msra.mxu0 %v292
    %4254 = vmatpush.msra.mxu0 %v291
    %4255 = vmatpush.msra.mxu0 %v290
    %4256 = vmatpush.msra.mxu0 %v289
    %4257 = vmatpush.msra.mxu0 %v288
    %4258 = vmatpush.msra.mxu0 %v287
    %4259 = vmatpush.msra.mxu0 %v286
    %4260 = vmatpush.msra.mxu0 %v285
    %4261 = vmatpush.msra.mxu0 %v284
    %4262 = vmatmul.f32.gmra.mxu0 %v4206
    %v4263 = vpop.f32.mrf.mxu0
    %v4264 = vadd.f32 0.0, %v4263
    %4265 = vmatmul.f32.gmra.mxu0 %v4208
    %v4266 = vpop.f32.mrf.mxu0
    %v4267 = vadd.f32 0.0, %v4266
    %4268 = vmatmul.f32.gmra.mxu0 %v4210
    %v4269 = vpop.f32.mrf.mxu0
    %v4270 = vadd.f32 0.0, %v4269
    %4271 = vmatmul.f32.gmra.mxu0 %v4212
    %v4272 = vpop.f32.mrf.mxu0
    %v4273 = vadd.f32 0.0, %v4272
    %4274 = vmatmul.f32.gmra.mxu0 %v4214
    %v4275 = vpop.f32.mrf.mxu0
    %v4276 = vadd.f32 0.0, %v4275
    %4277 = vmatmul.f32.gmra.mxu0 %v4216
    %v4278 = vpop.f32.mrf.mxu0
    %v4279 = vadd.f32 0.0, %v4278
    %4280 = vmatmul.f32.gmra.mxu0 %v4218
    %v4281 = vpop.f32.mrf.mxu0
    %v4282 = vadd.f32 0.0, %v4281
    %4283 = vmatmul.f32.gmra.mxu0 %v4220
    %v4284 = vpop.f32.mrf.mxu0
    %v4285 = vadd.f32 0.0, %v4284
    %4286 = vdwg.mxu0
    %4287 = vmatpush.msra.mxu0 0.0
    %4288 = vmatpush.msra.mxu0 0.0
    %4289 = vmatpush.msra.mxu0 0.0
    %4290 = vmatpush.msra.mxu0 0.0
    %4291 = vmatpush.msra.mxu0 0.0
    %4292 = vmatpush.msra.mxu0 0.0
    %4293 = vmatpush.msra.mxu0 0.0
    %4294 = vmatpush.msra.mxu0 %v308
    %4295 = vmatpush.msra.mxu0 %v307
    %4296 = vmatpush.msra.mxu0 %v306
    %4297 = vmatpush.msra.mxu0 %v305
    %4298 = vmatpush.msra.mxu0 %v304
    %4299 = vmatpush.msra.mxu0 %v303
    %4300 = vmatpush.msra.mxu0 %v302
    %4301 = vmatpush.msra.mxu0 %v301
    %4302 = vmatpush.msra.mxu0 %v300
    %4303 = vmatmul.f32.gmra.mxu0 %v4223
    %v4304 = vpop.f32.mrf.mxu0
    %v4305 = vadd.f32 %v4264, %v4304
    %4306 = vmatmul.f32.gmra.mxu0 %v4226
    %v4307 = vpop.f32.mrf.mxu0
    %v4308 = vadd.f32 %v4267, %v4307
    %4309 = vmatmul.f32.gmra.mxu0 %v4229
    %v4310 = vpop.f32.mrf.mxu0
    %v4311 = vadd.f32 %v4270, %v4310
    %4312 = vmatmul.f32.gmra.mxu0 %v4232
    %v4313 = vpop.f32.mrf.mxu0
    %v4314 = vadd.f32 %v4273, %v4313
    %4315 = vmatmul.f32.gmra.mxu0 %v4235
    %v4316 = vpop.f32.mrf.mxu0
    %v4317 = vadd.f32 %v4276, %v4316
    %4318 = vmatmul.f32.gmra.mxu0 %v4238
    %v4319 = vpop.f32.mrf.mxu0
    %v4320 = vadd.f32 %v4279, %v4319
    %4321 = vmatmul.f32.gmra.mxu0 %v4241
    %v4322 = vpop.f32.mrf.mxu0
    %v4323 = vadd.f32 %v4282, %v4322
    %4324 = vmatmul.f32.gmra.mxu0 %v4244
    %v4325 = vpop.f32.mrf.mxu0
    %v4326 = vadd.f32 %v4285, %v4325
    %4327 = vdwg.mxu0
    %s4328 = scalar_lea.vmem %s5, 608
    %v4329 = vld [vmem:[%s4328] sm:$0xff]
    %v4330 = vld [vmem:[%s4328 + $0x8] sm:$0xff]
    %v4331 = vld [vmem:[%s4328 + $0x10] sm:$0xff]
    %v4332 = vld [vmem:[%s4328 + $0x18] sm:$0xff]
    %v4334 = vsel %vm984, %v4305, 0
    %v4337 = vsel %vm984, %v4308, 0
    %v4340 = vsel %vm984, %v4311, 0
    %v4343 = vsel %vm984, %v4314, 0
    %v4346 = vsel %vm984, %v4317, 0
    %v4349 = vsel %vm984, %v4320, 0
    %v4352 = vsel %vm984, %v4323, 0
    %v4355 = vsel %vm984, %v4326, 0
    %4357 = vmatpush.msra.mxu0 0.0
    %4358 = vmatpush.msra.mxu0 0.0
    %4359 = vmatpush.msra.mxu0 0.0
    %4360 = vmatpush.msra.mxu0 0.0
    %4361 = vmatpush.msra.mxu0 0.0
    %4362 = vmatpush.msra.mxu0 0.0
    %4363 = vmatpush.msra.mxu0 0.0
    %4364 = vmatpush.msra.mxu0 0.0
    %4365 = vmatpush.msra.mxu0 0.0
    %4366 = vmatpush.msra.mxu0 0.0
    %4367 = vmatpush.msra.mxu0 0.0
    %4368 = vmatpush.msra.mxu0 0.0
    %4369 = vmatpush.msra.mxu0 %v4332
    %4370 = vmatpush.msra.mxu0 %v4331
    %4371 = vmatpush.msra.mxu0 %v4330
    %4372 = vmatpush.msra.mxu0 %v4329
    %4373 = vmatmul.f32.gmra.mxu0 %v4334
    %v4374 = vpop.f32.mrf.mxu0
    %v4375 = vadd.f32 0.0, %v4374
    %4376 = vmatmul.f32.gmra.mxu0 %v4337
    %v4377 = vpop.f32.mrf.mxu0
    %v4378 = vadd.f32 0.0, %v4377
    %4379 = vmatmul.f32.gmra.mxu0 %v4340
    %v4380 = vpop.f32.mrf.mxu0
    %v4381 = vadd.f32 0.0, %v4380
    %4382 = vmatmul.f32.gmra.mxu0 %v4343
    %v4383 = vpop.f32.mrf.mxu0
    %v4384 = vadd.f32 0.0, %v4383
    %4385 = vmatmul.f32.gmra.mxu0 %v4346
    %v4386 = vpop.f32.mrf.mxu0
    %v4387 = vadd.f32 0.0, %v4386
    %4388 = vmatmul.f32.gmra.mxu0 %v4349
    %v4389 = vpop.f32.mrf.mxu0
    %v4390 = vadd.f32 0.0, %v4389
    %4391 = vmatmul.f32.gmra.mxu0 %v4352
    %v4392 = vpop.f32.mrf.mxu0
    %v4393 = vadd.f32 0.0, %v4392
    %4394 = vmatmul.f32.gmra.mxu0 %v4355
    %v4395 = vpop.f32.mrf.mxu0
    %v4396 = vadd.f32 0.0, %v4395
    %4397 = vdwg.mxu0
    %v4398 = vadd.f32 %v3566, %v4375
    %v4399 = vadd.f32 %v3567, %v4378
    %v4400 = vadd.f32 %v3568, %v4381
    %v4401 = vadd.f32 %v3569, %v4384
    %v4402 = vadd.f32 %v3570, %v4387
    %v4403 = vadd.f32 %v3571, %v4390
    %v4404 = vadd.f32 %v3572, %v4393
    %v4405 = vadd.f32 %v3573, %v4396
    %v4406 = vld [vmem:[%s1 + $0x500] sm:$0xff]
    %v4407 = vld [vmem:[%s1 + $0x508] sm:$0xff]
    %v4408 = vld [vmem:[%s1 + $0x510] sm:$0xff]
    %v4409 = vld [vmem:[%s1 + $0x518] sm:$0xff]
    %v4410 = vld [vmem:[%s1 + $0x520] sm:$0xff]
    %v4411 = vld [vmem:[%s1 + $0x528] sm:$0xff]
    %v4412 = vld [vmem:[%s1 + $0x530] sm:$0xff]
    %v4413 = vld [vmem:[%s1 + $0x538] sm:$0xff]
    %v4414 = vunpack.c.l.bf16 %v4406
    %v4415 = vunpack.c.h.bf16 %v4406
    %v4416 = vunpack.c.l.bf16 %v4407
    %v4417 = vunpack.c.h.bf16 %v4407
    %v4418 = vunpack.c.l.bf16 %v4408
    %v4419 = vunpack.c.h.bf16 %v4408
    %v4420 = vunpack.c.l.bf16 %v4409
    %v4421 = vunpack.c.h.bf16 %v4409
    %v4422 = vunpack.c.l.bf16 %v4410
    %v4423 = vunpack.c.h.bf16 %v4410
    %v4424 = vunpack.c.l.bf16 %v4411
    %v4425 = vunpack.c.h.bf16 %v4411
    %v4426 = vunpack.c.l.bf16 %v4412
    %v4427 = vunpack.c.h.bf16 %v4412
    %v4428 = vunpack.c.l.bf16 %v4413
    %v4429 = vunpack.c.h.bf16 %v4413
    %v4431 = vsel %vm333, %v4415, 0
    %v4434 = vsel %vm333, %v4417, 0
    %v4437 = vsel %vm333, %v4419, 0
    %v4440 = vsel %vm333, %v4421, 0
    %v4443 = vsel %vm333, %v4423, 0
    %v4446 = vsel %vm333, %v4425, 0
    %v4449 = vsel %vm333, %v4427, 0
    %v4452 = vsel %vm333, %v4429, 0
    %4454 = vmatpush.msra.mxu0 %v299
    %4455 = vmatpush.msra.mxu0 %v298
    %4456 = vmatpush.msra.mxu0 %v297
    %4457 = vmatpush.msra.mxu0 %v296
    %4458 = vmatpush.msra.mxu0 %v295
    %4459 = vmatpush.msra.mxu0 %v294
    %4460 = vmatpush.msra.mxu0 %v293
    %4461 = vmatpush.msra.mxu0 %v292
    %4462 = vmatpush.msra.mxu0 %v291
    %4463 = vmatpush.msra.mxu0 %v290
    %4464 = vmatpush.msra.mxu0 %v289
    %4465 = vmatpush.msra.mxu0 %v288
    %4466 = vmatpush.msra.mxu0 %v287
    %4467 = vmatpush.msra.mxu0 %v286
    %4468 = vmatpush.msra.mxu0 %v285
    %4469 = vmatpush.msra.mxu0 %v284
    %4470 = vmatmul.f32.gmra.mxu0 %v4414
    %v4471 = vpop.f32.mrf.mxu0
    %v4472 = vadd.f32 0.0, %v4471
    %4473 = vmatmul.f32.gmra.mxu0 %v4416
    %v4474 = vpop.f32.mrf.mxu0
    %v4475 = vadd.f32 0.0, %v4474
    %4476 = vmatmul.f32.gmra.mxu0 %v4418
    %v4477 = vpop.f32.mrf.mxu0
    %v4478 = vadd.f32 0.0, %v4477
    %4479 = vmatmul.f32.gmra.mxu0 %v4420
    %v4480 = vpop.f32.mrf.mxu0
    %v4481 = vadd.f32 0.0, %v4480
    %4482 = vmatmul.f32.gmra.mxu0 %v4422
    %v4483 = vpop.f32.mrf.mxu0
    %v4484 = vadd.f32 0.0, %v4483
    %4485 = vmatmul.f32.gmra.mxu0 %v4424
    %v4486 = vpop.f32.mrf.mxu0
    %v4487 = vadd.f32 0.0, %v4486
    %4488 = vmatmul.f32.gmra.mxu0 %v4426
    %v4489 = vpop.f32.mrf.mxu0
    %v4490 = vadd.f32 0.0, %v4489
    %4491 = vmatmul.f32.gmra.mxu0 %v4428
    %v4492 = vpop.f32.mrf.mxu0
    %v4493 = vadd.f32 0.0, %v4492
    %4494 = vdwg.mxu0
    %4495 = vmatpush.msra.mxu0 0.0
    %4496 = vmatpush.msra.mxu0 0.0
    %4497 = vmatpush.msra.mxu0 0.0
    %4498 = vmatpush.msra.mxu0 0.0
    %4499 = vmatpush.msra.mxu0 0.0
    %4500 = vmatpush.msra.mxu0 0.0
    %4501 = vmatpush.msra.mxu0 0.0
    %4502 = vmatpush.msra.mxu0 %v308
    %4503 = vmatpush.msra.mxu0 %v307
    %4504 = vmatpush.msra.mxu0 %v306
    %4505 = vmatpush.msra.mxu0 %v305
    %4506 = vmatpush.msra.mxu0 %v304
    %4507 = vmatpush.msra.mxu0 %v303
    %4508 = vmatpush.msra.mxu0 %v302
    %4509 = vmatpush.msra.mxu0 %v301
    %4510 = vmatpush.msra.mxu0 %v300
    %4511 = vmatmul.f32.gmra.mxu0 %v4431
    %v4512 = vpop.f32.mrf.mxu0
    %v4513 = vadd.f32 %v4472, %v4512
    %4514 = vmatmul.f32.gmra.mxu0 %v4434
    %v4515 = vpop.f32.mrf.mxu0
    %v4516 = vadd.f32 %v4475, %v4515
    %4517 = vmatmul.f32.gmra.mxu0 %v4437
    %v4518 = vpop.f32.mrf.mxu0
    %v4519 = vadd.f32 %v4478, %v4518
    %4520 = vmatmul.f32.gmra.mxu0 %v4440
    %v4521 = vpop.f32.mrf.mxu0
    %v4522 = vadd.f32 %v4481, %v4521
    %4523 = vmatmul.f32.gmra.mxu0 %v4443
    %v4524 = vpop.f32.mrf.mxu0
    %v4525 = vadd.f32 %v4484, %v4524
    %4526 = vmatmul.f32.gmra.mxu0 %v4446
    %v4527 = vpop.f32.mrf.mxu0
    %v4528 = vadd.f32 %v4487, %v4527
    %4529 = vmatmul.f32.gmra.mxu0 %v4449
    %v4530 = vpop.f32.mrf.mxu0
    %v4531 = vadd.f32 %v4490, %v4530
    %4532 = vmatmul.f32.gmra.mxu0 %v4452
    %v4533 = vpop.f32.mrf.mxu0
    %v4534 = vadd.f32 %v4493, %v4533
    %4535 = vdwg.mxu0
    %s4536 = scalar_lea.vmem %s5, 640
    %v4537 = vld [vmem:[%s4536] sm:$0xff]
    %v4538 = vld [vmem:[%s4536 + $0x8] sm:$0xff]
    %v4539 = vld [vmem:[%s4536 + $0x10] sm:$0xff]
    %v4540 = vld [vmem:[%s4536 + $0x18] sm:$0xff]
    %v4542 = vsel %vm984, %v4513, 0
    %v4545 = vsel %vm984, %v4516, 0
    %v4548 = vsel %vm984, %v4519, 0
    %v4551 = vsel %vm984, %v4522, 0
    %v4554 = vsel %vm984, %v4525, 0
    %v4557 = vsel %vm984, %v4528, 0
    %v4560 = vsel %vm984, %v4531, 0
    %v4563 = vsel %vm984, %v4534, 0
    %4565 = vmatpush.msra.mxu0 0.0
    %4566 = vmatpush.msra.mxu0 0.0
    %4567 = vmatpush.msra.mxu0 0.0
    %4568 = vmatpush.msra.mxu0 0.0
    %4569 = vmatpush.msra.mxu0 0.0
    %4570 = vmatpush.msra.mxu0 0.0
    %4571 = vmatpush.msra.mxu0 0.0
    %4572 = vmatpush.msra.mxu0 0.0
    %4573 = vmatpush.msra.mxu0 0.0
    %4574 = vmatpush.msra.mxu0 0.0
    %4575 = vmatpush.msra.mxu0 0.0
    %4576 = vmatpush.msra.mxu0 0.0
    %4577 = vmatpush.msra.mxu0 %v4540
    %4578 = vmatpush.msra.mxu0 %v4539
    %4579 = vmatpush.msra.mxu0 %v4538
    %4580 = vmatpush.msra.mxu0 %v4537
    %4581 = vmatmul.f32.gmra.mxu0 %v4542
    %v4582 = vpop.f32.mrf.mxu0
    %v4583 = vadd.f32 0.0, %v4582
    %4584 = vmatmul.f32.gmra.mxu0 %v4545
    %v4585 = vpop.f32.mrf.mxu0
    %v4586 = vadd.f32 0.0, %v4585
    %4587 = vmatmul.f32.gmra.mxu0 %v4548
    %v4588 = vpop.f32.mrf.mxu0
    %v4589 = vadd.f32 0.0, %v4588
    %4590 = vmatmul.f32.gmra.mxu0 %v4551
    %v4591 = vpop.f32.mrf.mxu0
    %v4592 = vadd.f32 0.0, %v4591
    %4593 = vmatmul.f32.gmra.mxu0 %v4554
    %v4594 = vpop.f32.mrf.mxu0
    %v4595 = vadd.f32 0.0, %v4594
    %4596 = vmatmul.f32.gmra.mxu0 %v4557
    %v4597 = vpop.f32.mrf.mxu0
    %v4598 = vadd.f32 0.0, %v4597
    %4599 = vmatmul.f32.gmra.mxu0 %v4560
    %v4600 = vpop.f32.mrf.mxu0
    %v4601 = vadd.f32 0.0, %v4600
    %4602 = vmatmul.f32.gmra.mxu0 %v4563
    %v4603 = vpop.f32.mrf.mxu0
    %v4604 = vadd.f32 0.0, %v4603
    %4605 = vdwg.mxu0
    %v4606 = vadd.f32 %v3774, %v4583
    %v4607 = vadd.f32 %v3775, %v4586
    %v4608 = vadd.f32 %v3776, %v4589
    %v4609 = vadd.f32 %v3777, %v4592
    %v4610 = vadd.f32 %v3778, %v4595
    %v4611 = vadd.f32 %v3779, %v4598
    %v4612 = vadd.f32 %v3780, %v4601
    %v4613 = vadd.f32 %v3781, %v4604
    %v4614 = vld [vmem:[%s1 + $0x540] sm:$0xff]
    %v4615 = vld [vmem:[%s1 + $0x548] sm:$0xff]
    %v4616 = vld [vmem:[%s1 + $0x550] sm:$0xff]
    %v4617 = vld [vmem:[%s1 + $0x558] sm:$0xff]
    %v4618 = vld [vmem:[%s1 + $0x560] sm:$0xff]
    %v4619 = vld [vmem:[%s1 + $0x568] sm:$0xff]
    %v4620 = vld [vmem:[%s1 + $0x570] sm:$0xff]
    %v4621 = vld [vmem:[%s1 + $0x578] sm:$0xff]
    %v4622 = vunpack.c.l.bf16 %v4614
    %v4623 = vunpack.c.h.bf16 %v4614
    %v4624 = vunpack.c.l.bf16 %v4615
    %v4625 = vunpack.c.h.bf16 %v4615
    %v4626 = vunpack.c.l.bf16 %v4616
    %v4627 = vunpack.c.h.bf16 %v4616
    %v4628 = vunpack.c.l.bf16 %v4617
    %v4629 = vunpack.c.h.bf16 %v4617
    %v4630 = vunpack.c.l.bf16 %v4618
    %v4631 = vunpack.c.h.bf16 %v4618
    %v4632 = vunpack.c.l.bf16 %v4619
    %v4633 = vunpack.c.h.bf16 %v4619
    %v4634 = vunpack.c.l.bf16 %v4620
    %v4635 = vunpack.c.h.bf16 %v4620
    %v4636 = vunpack.c.l.bf16 %v4621
    %v4637 = vunpack.c.h.bf16 %v4621
    %v4639 = vsel %vm333, %v4623, 0
    %v4642 = vsel %vm333, %v4625, 0
    %v4645 = vsel %vm333, %v4627, 0
    %v4648 = vsel %vm333, %v4629, 0
    %v4651 = vsel %vm333, %v4631, 0
    %v4654 = vsel %vm333, %v4633, 0
    %v4657 = vsel %vm333, %v4635, 0
    %v4660 = vsel %vm333, %v4637, 0
    %4662 = vmatpush.msra.mxu0 %v299
    %4663 = vmatpush.msra.mxu0 %v298
    %4664 = vmatpush.msra.mxu0 %v297
    %4665 = vmatpush.msra.mxu0 %v296
    %4666 = vmatpush.msra.mxu0 %v295
    %4667 = vmatpush.msra.mxu0 %v294
    %4668 = vmatpush.msra.mxu0 %v293
    %4669 = vmatpush.msra.mxu0 %v292
    %4670 = vmatpush.msra.mxu0 %v291
    %4671 = vmatpush.msra.mxu0 %v290
    %4672 = vmatpush.msra.mxu0 %v289
    %4673 = vmatpush.msra.mxu0 %v288
    %4674 = vmatpush.msra.mxu0 %v287
    %4675 = vmatpush.msra.mxu0 %v286
    %4676 = vmatpush.msra.mxu0 %v285
    %4677 = vmatpush.msra.mxu0 %v284
    %4678 = vmatmul.f32.gmra.mxu0 %v4622
    %v4679 = vpop.f32.mrf.mxu0
    %v4680 = vadd.f32 0.0, %v4679
    %4681 = vmatmul.f32.gmra.mxu0 %v4624
    %v4682 = vpop.f32.mrf.mxu0
    %v4683 = vadd.f32 0.0, %v4682
    %4684 = vmatmul.f32.gmra.mxu0 %v4626
    %v4685 = vpop.f32.mrf.mxu0
    %v4686 = vadd.f32 0.0, %v4685
    %4687 = vmatmul.f32.gmra.mxu0 %v4628
    %v4688 = vpop.f32.mrf.mxu0
    %v4689 = vadd.f32 0.0, %v4688
    %4690 = vmatmul.f32.gmra.mxu0 %v4630
    %v4691 = vpop.f32.mrf.mxu0
    %v4692 = vadd.f32 0.0, %v4691
    %4693 = vmatmul.f32.gmra.mxu0 %v4632
    %v4694 = vpop.f32.mrf.mxu0
    %v4695 = vadd.f32 0.0, %v4694
    %4696 = vmatmul.f32.gmra.mxu0 %v4634
    %v4697 = vpop.f32.mrf.mxu0
    %v4698 = vadd.f32 0.0, %v4697
    %4699 = vmatmul.f32.gmra.mxu0 %v4636
    %v4700 = vpop.f32.mrf.mxu0
    %v4701 = vadd.f32 0.0, %v4700
    %4702 = vdwg.mxu0
    %4703 = vmatpush.msra.mxu0 0.0
    %4704 = vmatpush.msra.mxu0 0.0
    %4705 = vmatpush.msra.mxu0 0.0
    %4706 = vmatpush.msra.mxu0 0.0
    %4707 = vmatpush.msra.mxu0 0.0
    %4708 = vmatpush.msra.mxu0 0.0
    %4709 = vmatpush.msra.mxu0 0.0
    %4710 = vmatpush.msra.mxu0 %v308
    %4711 = vmatpush.msra.mxu0 %v307
    %4712 = vmatpush.msra.mxu0 %v306
    %4713 = vmatpush.msra.mxu0 %v305
    %4714 = vmatpush.msra.mxu0 %v304
    %4715 = vmatpush.msra.mxu0 %v303
    %4716 = vmatpush.msra.mxu0 %v302
    %4717 = vmatpush.msra.mxu0 %v301
    %4718 = vmatpush.msra.mxu0 %v300
    %4719 = vmatmul.f32.gmra.mxu0 %v4639
    %v4720 = vpop.f32.mrf.mxu0
    %v4721 = vadd.f32 %v4680, %v4720
    %4722 = vmatmul.f32.gmra.mxu0 %v4642
    %v4723 = vpop.f32.mrf.mxu0
    %v4724 = vadd.f32 %v4683, %v4723
    %4725 = vmatmul.f32.gmra.mxu0 %v4645
    %v4726 = vpop.f32.mrf.mxu0
    %v4727 = vadd.f32 %v4686, %v4726
    %4728 = vmatmul.f32.gmra.mxu0 %v4648
    %v4729 = vpop.f32.mrf.mxu0
    %v4730 = vadd.f32 %v4689, %v4729
    %4731 = vmatmul.f32.gmra.mxu0 %v4651
    %v4732 = vpop.f32.mrf.mxu0
    %v4733 = vadd.f32 %v4692, %v4732
    %4734 = vmatmul.f32.gmra.mxu0 %v4654
    %v4735 = vpop.f32.mrf.mxu0
    %v4736 = vadd.f32 %v4695, %v4735
    %4737 = vmatmul.f32.gmra.mxu0 %v4657
    %v4738 = vpop.f32.mrf.mxu0
    %v4739 = vadd.f32 %v4698, %v4738
    %4740 = vmatmul.f32.gmra.mxu0 %v4660
    %v4741 = vpop.f32.mrf.mxu0
    %v4742 = vadd.f32 %v4701, %v4741
    %4743 = vdwg.mxu0
    %s4744 = scalar_lea.vmem %s5, 672
    %v4745 = vld [vmem:[%s4744] sm:$0xff]
    %v4746 = vld [vmem:[%s4744 + $0x8] sm:$0xff]
    %v4747 = vld [vmem:[%s4744 + $0x10] sm:$0xff]
    %v4748 = vld [vmem:[%s4744 + $0x18] sm:$0xff]
    %v4750 = vsel %vm984, %v4721, 0
    %v4753 = vsel %vm984, %v4724, 0
    %v4756 = vsel %vm984, %v4727, 0
    %v4759 = vsel %vm984, %v4730, 0
    %v4762 = vsel %vm984, %v4733, 0
    %v4765 = vsel %vm984, %v4736, 0
    %v4768 = vsel %vm984, %v4739, 0
    %v4771 = vsel %vm984, %v4742, 0
    %4773 = vmatpush.msra.mxu0 0.0
    %4774 = vmatpush.msra.mxu0 0.0
    %4775 = vmatpush.msra.mxu0 0.0
    %4776 = vmatpush.msra.mxu0 0.0
    %4777 = vmatpush.msra.mxu0 0.0
    %4778 = vmatpush.msra.mxu0 0.0
    %4779 = vmatpush.msra.mxu0 0.0
    %4780 = vmatpush.msra.mxu0 0.0
    %4781 = vmatpush.msra.mxu0 0.0
    %4782 = vmatpush.msra.mxu0 0.0
    %4783 = vmatpush.msra.mxu0 0.0
    %4784 = vmatpush.msra.mxu0 0.0
    %4785 = vmatpush.msra.mxu0 %v4748
    %4786 = vmatpush.msra.mxu0 %v4747
    %4787 = vmatpush.msra.mxu0 %v4746
    %4788 = vmatpush.msra.mxu0 %v4745
    %4789 = vmatmul.f32.gmra.mxu0 %v4750
    %v4790 = vpop.f32.mrf.mxu0
    %v4791 = vadd.f32 0.0, %v4790
    %4792 = vmatmul.f32.gmra.mxu0 %v4753
    %v4793 = vpop.f32.mrf.mxu0
    %v4794 = vadd.f32 0.0, %v4793
    %4795 = vmatmul.f32.gmra.mxu0 %v4756
    %v4796 = vpop.f32.mrf.mxu0
    %v4797 = vadd.f32 0.0, %v4796
    %4798 = vmatmul.f32.gmra.mxu0 %v4759
    %v4799 = vpop.f32.mrf.mxu0
    %v4800 = vadd.f32 0.0, %v4799
    %4801 = vmatmul.f32.gmra.mxu0 %v4762
    %v4802 = vpop.f32.mrf.mxu0
    %v4803 = vadd.f32 0.0, %v4802
    %4804 = vmatmul.f32.gmra.mxu0 %v4765
    %v4805 = vpop.f32.mrf.mxu0
    %v4806 = vadd.f32 0.0, %v4805
    %4807 = vmatmul.f32.gmra.mxu0 %v4768
    %v4808 = vpop.f32.mrf.mxu0
    %v4809 = vadd.f32 0.0, %v4808
    %4810 = vmatmul.f32.gmra.mxu0 %v4771
    %v4811 = vpop.f32.mrf.mxu0
    %v4812 = vadd.f32 0.0, %v4811
    %4813 = vdwg.mxu0
    %v4814 = vadd.f32 %v3982, %v4791
    %v4815 = vadd.f32 %v3983, %v4794
    %v4816 = vadd.f32 %v3984, %v4797
    %v4817 = vadd.f32 %v3985, %v4800
    %v4818 = vadd.f32 %v3986, %v4803
    %v4819 = vadd.f32 %v3987, %v4806
    %v4820 = vadd.f32 %v3988, %v4809
    %v4821 = vadd.f32 %v3989, %v4812
    %v4822 = vld [vmem:[%s1 + $0x580] sm:$0xff]
    %v4823 = vld [vmem:[%s1 + $0x588] sm:$0xff]
    %v4824 = vld [vmem:[%s1 + $0x590] sm:$0xff]
    %v4825 = vld [vmem:[%s1 + $0x598] sm:$0xff]
    %v4826 = vld [vmem:[%s1 + $0x5a0] sm:$0xff]
    %v4827 = vld [vmem:[%s1 + $0x5a8] sm:$0xff]
    %v4828 = vld [vmem:[%s1 + $0x5b0] sm:$0xff]
    %v4829 = vld [vmem:[%s1 + $0x5b8] sm:$0xff]
    %v4830 = vunpack.c.l.bf16 %v4822
    %v4831 = vunpack.c.h.bf16 %v4822
    %v4832 = vunpack.c.l.bf16 %v4823
    %v4833 = vunpack.c.h.bf16 %v4823
    %v4834 = vunpack.c.l.bf16 %v4824
    %v4835 = vunpack.c.h.bf16 %v4824
    %v4836 = vunpack.c.l.bf16 %v4825
    %v4837 = vunpack.c.h.bf16 %v4825
    %v4838 = vunpack.c.l.bf16 %v4826
    %v4839 = vunpack.c.h.bf16 %v4826
    %v4840 = vunpack.c.l.bf16 %v4827
    %v4841 = vunpack.c.h.bf16 %v4827
    %v4842 = vunpack.c.l.bf16 %v4828
    %v4843 = vunpack.c.h.bf16 %v4828
    %v4844 = vunpack.c.l.bf16 %v4829
    %v4845 = vunpack.c.h.bf16 %v4829
    %v4847 = vsel %vm333, %v4831, 0
    %v4850 = vsel %vm333, %v4833, 0
    %v4853 = vsel %vm333, %v4835, 0
    %v4856 = vsel %vm333, %v4837, 0
    %v4859 = vsel %vm333, %v4839, 0
    %v4862 = vsel %vm333, %v4841, 0
    %v4865 = vsel %vm333, %v4843, 0
    %v4868 = vsel %vm333, %v4845, 0
    %4870 = vmatpush.msra.mxu0 %v299
    %4871 = vmatpush.msra.mxu0 %v298
    %4872 = vmatpush.msra.mxu0 %v297
    %4873 = vmatpush.msra.mxu0 %v296
    %4874 = vmatpush.msra.mxu0 %v295
    %4875 = vmatpush.msra.mxu0 %v294
    %4876 = vmatpush.msra.mxu0 %v293
    %4877 = vmatpush.msra.mxu0 %v292
    %4878 = vmatpush.msra.mxu0 %v291
    %4879 = vmatpush.msra.mxu0 %v290
    %4880 = vmatpush.msra.mxu0 %v289
    %4881 = vmatpush.msra.mxu0 %v288
    %4882 = vmatpush.msra.mxu0 %v287
    %4883 = vmatpush.msra.mxu0 %v286
    %4884 = vmatpush.msra.mxu0 %v285
    %4885 = vmatpush.msra.mxu0 %v284
    %4886 = vmatmul.f32.gmra.mxu0 %v4830
    %v4887 = vpop.f32.mrf.mxu0
    %v4888 = vadd.f32 0.0, %v4887
    %4889 = vmatmul.f32.gmra.mxu0 %v4832
    %v4890 = vpop.f32.mrf.mxu0
    %v4891 = vadd.f32 0.0, %v4890
    %4892 = vmatmul.f32.gmra.mxu0 %v4834
    %v4893 = vpop.f32.mrf.mxu0
    %v4894 = vadd.f32 0.0, %v4893
    %4895 = vmatmul.f32.gmra.mxu0 %v4836
    %v4896 = vpop.f32.mrf.mxu0
    %v4897 = vadd.f32 0.0, %v4896
    %4898 = vmatmul.f32.gmra.mxu0 %v4838
    %v4899 = vpop.f32.mrf.mxu0
    %v4900 = vadd.f32 0.0, %v4899
    %4901 = vmatmul.f32.gmra.mxu0 %v4840
    %v4902 = vpop.f32.mrf.mxu0
    %v4903 = vadd.f32 0.0, %v4902
    %4904 = vmatmul.f32.gmra.mxu0 %v4842
    %v4905 = vpop.f32.mrf.mxu0
    %v4906 = vadd.f32 0.0, %v4905
    %4907 = vmatmul.f32.gmra.mxu0 %v4844
    %v4908 = vpop.f32.mrf.mxu0
    %v4909 = vadd.f32 0.0, %v4908
    %4910 = vdwg.mxu0
    %4911 = vmatpush.msra.mxu0 0.0
    %4912 = vmatpush.msra.mxu0 0.0
    %4913 = vmatpush.msra.mxu0 0.0
    %4914 = vmatpush.msra.mxu0 0.0
    %4915 = vmatpush.msra.mxu0 0.0
    %4916 = vmatpush.msra.mxu0 0.0
    %4917 = vmatpush.msra.mxu0 0.0
    %4918 = vmatpush.msra.mxu0 %v308
    %4919 = vmatpush.msra.mxu0 %v307
    %4920 = vmatpush.msra.mxu0 %v306
    %4921 = vmatpush.msra.mxu0 %v305
    %4922 = vmatpush.msra.mxu0 %v304
    %4923 = vmatpush.msra.mxu0 %v303
    %4924 = vmatpush.msra.mxu0 %v302
    %4925 = vmatpush.msra.mxu0 %v301
    %4926 = vmatpush.msra.mxu0 %v300
    %4927 = vmatmul.f32.gmra.mxu0 %v4847
    %v4928 = vpop.f32.mrf.mxu0
    %v4929 = vadd.f32 %v4888, %v4928
    %4930 = vmatmul.f32.gmra.mxu0 %v4850
    %v4931 = vpop.f32.mrf.mxu0
    %v4932 = vadd.f32 %v4891, %v4931
    %4933 = vmatmul.f32.gmra.mxu0 %v4853
    %v4934 = vpop.f32.mrf.mxu0
    %v4935 = vadd.f32 %v4894, %v4934
    %4936 = vmatmul.f32.gmra.mxu0 %v4856
    %v4937 = vpop.f32.mrf.mxu0
    %v4938 = vadd.f32 %v4897, %v4937
    %4939 = vmatmul.f32.gmra.mxu0 %v4859
    %v4940 = vpop.f32.mrf.mxu0
    %v4941 = vadd.f32 %v4900, %v4940
    %4942 = vmatmul.f32.gmra.mxu0 %v4862
    %v4943 = vpop.f32.mrf.mxu0
    %v4944 = vadd.f32 %v4903, %v4943
    %4945 = vmatmul.f32.gmra.mxu0 %v4865
    %v4946 = vpop.f32.mrf.mxu0
    %v4947 = vadd.f32 %v4906, %v4946
    %4948 = vmatmul.f32.gmra.mxu0 %v4868
    %v4949 = vpop.f32.mrf.mxu0
    %v4950 = vadd.f32 %v4909, %v4949
    %4951 = vdwg.mxu0
    %s4952 = scalar_lea.vmem %s5, 704
    %v4953 = vld [vmem:[%s4952] sm:$0xff]
    %v4954 = vld [vmem:[%s4952 + $0x8] sm:$0xff]
    %v4955 = vld [vmem:[%s4952 + $0x10] sm:$0xff]
    %v4956 = vld [vmem:[%s4952 + $0x18] sm:$0xff]
    %v4958 = vsel %vm984, %v4929, 0
    %v4961 = vsel %vm984, %v4932, 0
    %v4964 = vsel %vm984, %v4935, 0
    %v4967 = vsel %vm984, %v4938, 0
    %v4970 = vsel %vm984, %v4941, 0
    %v4973 = vsel %vm984, %v4944, 0
    %v4976 = vsel %vm984, %v4947, 0
    %v4979 = vsel %vm984, %v4950, 0
    %4981 = vmatpush.msra.mxu0 0.0
    %4982 = vmatpush.msra.mxu0 0.0
    %4983 = vmatpush.msra.mxu0 0.0
    %4984 = vmatpush.msra.mxu0 0.0
    %4985 = vmatpush.msra.mxu0 0.0
    %4986 = vmatpush.msra.mxu0 0.0
    %4987 = vmatpush.msra.mxu0 0.0
    %4988 = vmatpush.msra.mxu0 0.0
    %4989 = vmatpush.msra.mxu0 0.0
    %4990 = vmatpush.msra.mxu0 0.0
    %4991 = vmatpush.msra.mxu0 0.0
    %4992 = vmatpush.msra.mxu0 0.0
    %4993 = vmatpush.msra.mxu0 %v4956
    %4994 = vmatpush.msra.mxu0 %v4955
    %4995 = vmatpush.msra.mxu0 %v4954
    %4996 = vmatpush.msra.mxu0 %v4953
    %4997 = vmatmul.f32.gmra.mxu0 %v4958
    %v4998 = vpop.f32.mrf.mxu0
    %v4999 = vadd.f32 0.0, %v4998
    %5000 = vmatmul.f32.gmra.mxu0 %v4961
    %v5001 = vpop.f32.mrf.mxu0
    %v5002 = vadd.f32 0.0, %v5001
    %5003 = vmatmul.f32.gmra.mxu0 %v4964
    %v5004 = vpop.f32.mrf.mxu0
    %v5005 = vadd.f32 0.0, %v5004
    %5006 = vmatmul.f32.gmra.mxu0 %v4967
    %v5007 = vpop.f32.mrf.mxu0
    %v5008 = vadd.f32 0.0, %v5007
    %5009 = vmatmul.f32.gmra.mxu0 %v4970
    %v5010 = vpop.f32.mrf.mxu0
    %v5011 = vadd.f32 0.0, %v5010
    %5012 = vmatmul.f32.gmra.mxu0 %v4973
    %v5013 = vpop.f32.mrf.mxu0
    %v5014 = vadd.f32 0.0, %v5013
    %5015 = vmatmul.f32.gmra.mxu0 %v4976
    %v5016 = vpop.f32.mrf.mxu0
    %v5017 = vadd.f32 0.0, %v5016
    %5018 = vmatmul.f32.gmra.mxu0 %v4979
    %v5019 = vpop.f32.mrf.mxu0
    %v5020 = vadd.f32 0.0, %v5019
    %5021 = vdwg.mxu0
    %v5022 = vadd.f32 %v4190, %v4999
    %v5023 = vadd.f32 %v4191, %v5002
    %v5024 = vadd.f32 %v4192, %v5005
    %v5025 = vadd.f32 %v4193, %v5008
    %v5026 = vadd.f32 %v4194, %v5011
    %v5027 = vadd.f32 %v4195, %v5014
    %v5028 = vadd.f32 %v4196, %v5017
    %v5029 = vadd.f32 %v4197, %v5020
    %v5030 = vld [vmem:[%s1 + $0x5c0] sm:$0xff]
    %v5031 = vld [vmem:[%s1 + $0x5c8] sm:$0xff]
    %v5032 = vld [vmem:[%s1 + $0x5d0] sm:$0xff]
    %v5033 = vld [vmem:[%s1 + $0x5d8] sm:$0xff]
    %v5034 = vld [vmem:[%s1 + $0x5e0] sm:$0xff]
    %v5035 = vld [vmem:[%s1 + $0x5e8] sm:$0xff]
    %v5036 = vld [vmem:[%s1 + $0x5f0] sm:$0xff]
    %v5037 = vld [vmem:[%s1 + $0x5f8] sm:$0xff]
    %v5038 = vunpack.c.l.bf16 %v5030
    %v5039 = vunpack.c.h.bf16 %v5030
    %v5040 = vunpack.c.l.bf16 %v5031
    %v5041 = vunpack.c.h.bf16 %v5031
    %v5042 = vunpack.c.l.bf16 %v5032
    %v5043 = vunpack.c.h.bf16 %v5032
    %v5044 = vunpack.c.l.bf16 %v5033
    %v5045 = vunpack.c.h.bf16 %v5033
    %v5046 = vunpack.c.l.bf16 %v5034
    %v5047 = vunpack.c.h.bf16 %v5034
    %v5048 = vunpack.c.l.bf16 %v5035
    %v5049 = vunpack.c.h.bf16 %v5035
    %v5050 = vunpack.c.l.bf16 %v5036
    %v5051 = vunpack.c.h.bf16 %v5036
    %v5052 = vunpack.c.l.bf16 %v5037
    %v5053 = vunpack.c.h.bf16 %v5037
    %v5055 = vsel %vm333, %v5039, 0
    %v5058 = vsel %vm333, %v5041, 0
    %v5061 = vsel %vm333, %v5043, 0
    %v5064 = vsel %vm333, %v5045, 0
    %v5067 = vsel %vm333, %v5047, 0
    %v5070 = vsel %vm333, %v5049, 0
    %v5073 = vsel %vm333, %v5051, 0
    %v5076 = vsel %vm333, %v5053, 0
    %5078 = vmatpush.msra.mxu0 %v299
    %5079 = vmatpush.msra.mxu0 %v298
    %5080 = vmatpush.msra.mxu0 %v297
    %5081 = vmatpush.msra.mxu0 %v296
    %5082 = vmatpush.msra.mxu0 %v295
    %5083 = vmatpush.msra.mxu0 %v294
    %5084 = vmatpush.msra.mxu0 %v293
    %5085 = vmatpush.msra.mxu0 %v292
    %5086 = vmatpush.msra.mxu0 %v291
    %5087 = vmatpush.msra.mxu0 %v290
    %5088 = vmatpush.msra.mxu0 %v289
    %5089 = vmatpush.msra.mxu0 %v288
    %5090 = vmatpush.msra.mxu0 %v287
    %5091 = vmatpush.msra.mxu0 %v286
    %5092 = vmatpush.msra.mxu0 %v285
    %5093 = vmatpush.msra.mxu0 %v284
    %5094 = vmatmul.f32.gmra.mxu0 %v5038
    %v5095 = vpop.f32.mrf.mxu0
    %v5096 = vadd.f32 0.0, %v5095
    %5097 = vmatmul.f32.gmra.mxu0 %v5040
    %v5098 = vpop.f32.mrf.mxu0
    %v5099 = vadd.f32 0.0, %v5098
    %5100 = vmatmul.f32.gmra.mxu0 %v5042
    %v5101 = vpop.f32.mrf.mxu0
    %v5102 = vadd.f32 0.0, %v5101
    %5103 = vmatmul.f32.gmra.mxu0 %v5044
    %v5104 = vpop.f32.mrf.mxu0
    %v5105 = vadd.f32 0.0, %v5104
    %5106 = vmatmul.f32.gmra.mxu0 %v5046
    %v5107 = vpop.f32.mrf.mxu0
    %v5108 = vadd.f32 0.0, %v5107
    %5109 = vmatmul.f32.gmra.mxu0 %v5048
    %v5110 = vpop.f32.mrf.mxu0
    %v5111 = vadd.f32 0.0, %v5110
    %5112 = vmatmul.f32.gmra.mxu0 %v5050
    %v5113 = vpop.f32.mrf.mxu0
    %v5114 = vadd.f32 0.0, %v5113
    %5115 = vmatmul.f32.gmra.mxu0 %v5052
    %v5116 = vpop.f32.mrf.mxu0
    %v5117 = vadd.f32 0.0, %v5116
    %5118 = vdwg.mxu0
    %5119 = vmatpush.msra.mxu0 0.0
    %5120 = vmatpush.msra.mxu0 0.0
    %5121 = vmatpush.msra.mxu0 0.0
    %5122 = vmatpush.msra.mxu0 0.0
    %5123 = vmatpush.msra.mxu0 0.0
    %5124 = vmatpush.msra.mxu0 0.0
    %5125 = vmatpush.msra.mxu0 0.0
    %5126 = vmatpush.msra.mxu0 %v308
    %5127 = vmatpush.msra.mxu0 %v307
    %5128 = vmatpush.msra.mxu0 %v306
    %5129 = vmatpush.msra.mxu0 %v305
    %5130 = vmatpush.msra.mxu0 %v304
    %5131 = vmatpush.msra.mxu0 %v303
    %5132 = vmatpush.msra.mxu0 %v302
    %5133 = vmatpush.msra.mxu0 %v301
    %5134 = vmatpush.msra.mxu0 %v300
    %5135 = vmatmul.f32.gmra.mxu0 %v5055
    %v5136 = vpop.f32.mrf.mxu0
    %v5137 = vadd.f32 %v5096, %v5136
    %5138 = vmatmul.f32.gmra.mxu0 %v5058
    %v5139 = vpop.f32.mrf.mxu0
    %v5140 = vadd.f32 %v5099, %v5139
    %5141 = vmatmul.f32.gmra.mxu0 %v5061
    %v5142 = vpop.f32.mrf.mxu0
    %v5143 = vadd.f32 %v5102, %v5142
    %5144 = vmatmul.f32.gmra.mxu0 %v5064
    %v5145 = vpop.f32.mrf.mxu0
    %v5146 = vadd.f32 %v5105, %v5145
    %5147 = vmatmul.f32.gmra.mxu0 %v5067
    %v5148 = vpop.f32.mrf.mxu0
    %v5149 = vadd.f32 %v5108, %v5148
    %5150 = vmatmul.f32.gmra.mxu0 %v5070
    %v5151 = vpop.f32.mrf.mxu0
    %v5152 = vadd.f32 %v5111, %v5151
    %5153 = vmatmul.f32.gmra.mxu0 %v5073
    %v5154 = vpop.f32.mrf.mxu0
    %v5155 = vadd.f32 %v5114, %v5154
    %5156 = vmatmul.f32.gmra.mxu0 %v5076
    %v5157 = vpop.f32.mrf.mxu0
    %v5158 = vadd.f32 %v5117, %v5157
    %5159 = vdwg.mxu0
    %s5160 = scalar_lea.vmem %s5, 736
    %v5161 = vld [vmem:[%s5160] sm:$0xff]
    %v5162 = vld [vmem:[%s5160 + $0x8] sm:$0xff]
    %v5163 = vld [vmem:[%s5160 + $0x10] sm:$0xff]
    %v5164 = vld [vmem:[%s5160 + $0x18] sm:$0xff]
    %v5166 = vsel %vm984, %v5137, 0
    %v5169 = vsel %vm984, %v5140, 0
    %v5172 = vsel %vm984, %v5143, 0
    %v5175 = vsel %vm984, %v5146, 0
    %v5178 = vsel %vm984, %v5149, 0
    %v5181 = vsel %vm984, %v5152, 0
    %v5184 = vsel %vm984, %v5155, 0
    %v5187 = vsel %vm984, %v5158, 0
    %5189 = vmatpush.msra.mxu0 0.0
    %5190 = vmatpush.msra.mxu0 0.0
    %5191 = vmatpush.msra.mxu0 0.0
    %5192 = vmatpush.msra.mxu0 0.0
    %5193 = vmatpush.msra.mxu0 0.0
    %5194 = vmatpush.msra.mxu0 0.0
    %5195 = vmatpush.msra.mxu0 0.0
    %5196 = vmatpush.msra.mxu0 0.0
    %5197 = vmatpush.msra.mxu0 0.0
    %5198 = vmatpush.msra.mxu0 0.0
    %5199 = vmatpush.msra.mxu0 0.0
    %5200 = vmatpush.msra.mxu0 0.0
    %5201 = vmatpush.msra.mxu0 %v5164
    %5202 = vmatpush.msra.mxu0 %v5163
    %5203 = vmatpush.msra.mxu0 %v5162
    %5204 = vmatpush.msra.mxu0 %v5161
    %5205 = vmatmul.f32.gmra.mxu0 %v5166
    %v5206 = vpop.f32.mrf.mxu0
    %v5207 = vadd.f32 0.0, %v5206
    %5208 = vmatmul.f32.gmra.mxu0 %v5169
    %v5209 = vpop.f32.mrf.mxu0
    %v5210 = vadd.f32 0.0, %v5209
    %5211 = vmatmul.f32.gmra.mxu0 %v5172
    %v5212 = vpop.f32.mrf.mxu0
    %v5213 = vadd.f32 0.0, %v5212
    %5214 = vmatmul.f32.gmra.mxu0 %v5175
    %v5215 = vpop.f32.mrf.mxu0
    %v5216 = vadd.f32 0.0, %v5215
    %5217 = vmatmul.f32.gmra.mxu0 %v5178
    %v5218 = vpop.f32.mrf.mxu0
    %v5219 = vadd.f32 0.0, %v5218
    %5220 = vmatmul.f32.gmra.mxu0 %v5181
    %v5221 = vpop.f32.mrf.mxu0
    %v5222 = vadd.f32 0.0, %v5221
    %5223 = vmatmul.f32.gmra.mxu0 %v5184
    %v5224 = vpop.f32.mrf.mxu0
    %v5225 = vadd.f32 0.0, %v5224
    %5226 = vmatmul.f32.gmra.mxu0 %v5187
    %v5227 = vpop.f32.mrf.mxu0
    %v5228 = vadd.f32 0.0, %v5227
    %5229 = vdwg.mxu0
    %v5230 = vadd.f32 %v4398, %v5207
    %v5231 = vadd.f32 %v4399, %v5210
    %v5232 = vadd.f32 %v4400, %v5213
    %v5233 = vadd.f32 %v4401, %v5216
    %v5234 = vadd.f32 %v4402, %v5219
    %v5235 = vadd.f32 %v4403, %v5222
    %v5236 = vadd.f32 %v4404, %v5225
    %v5237 = vadd.f32 %v4405, %v5228
    %v5238 = vld [vmem:[%s1 + $0x600] sm:$0xff]
    %v5239 = vld [vmem:[%s1 + $0x608] sm:$0xff]
    %v5240 = vld [vmem:[%s1 + $0x610] sm:$0xff]
    %v5241 = vld [vmem:[%s1 + $0x618] sm:$0xff]
    %v5242 = vld [vmem:[%s1 + $0x620] sm:$0xff]
    %v5243 = vld [vmem:[%s1 + $0x628] sm:$0xff]
    %v5244 = vld [vmem:[%s1 + $0x630] sm:$0xff]
    %v5245 = vld [vmem:[%s1 + $0x638] sm:$0xff]
    %v5246 = vunpack.c.l.bf16 %v5238
    %v5247 = vunpack.c.h.bf16 %v5238
    %v5248 = vunpack.c.l.bf16 %v5239
    %v5249 = vunpack.c.h.bf16 %v5239
    %v5250 = vunpack.c.l.bf16 %v5240
    %v5251 = vunpack.c.h.bf16 %v5240
    %v5252 = vunpack.c.l.bf16 %v5241
    %v5253 = vunpack.c.h.bf16 %v5241
    %v5254 = vunpack.c.l.bf16 %v5242
    %v5255 = vunpack.c.h.bf16 %v5242
    %v5256 = vunpack.c.l.bf16 %v5243
    %v5257 = vunpack.c.h.bf16 %v5243
    %v5258 = vunpack.c.l.bf16 %v5244
    %v5259 = vunpack.c.h.bf16 %v5244
    %v5260 = vunpack.c.l.bf16 %v5245
    %v5261 = vunpack.c.h.bf16 %v5245
    %v5263 = vsel %vm333, %v5247, 0
    %v5266 = vsel %vm333, %v5249, 0
    %v5269 = vsel %vm333, %v5251, 0
    %v5272 = vsel %vm333, %v5253, 0
    %v5275 = vsel %vm333, %v5255, 0
    %v5278 = vsel %vm333, %v5257, 0
    %v5281 = vsel %vm333, %v5259, 0
    %v5284 = vsel %vm333, %v5261, 0
    %5286 = vmatpush.msra.mxu0 %v299
    %5287 = vmatpush.msra.mxu0 %v298
    %5288 = vmatpush.msra.mxu0 %v297
    %5289 = vmatpush.msra.mxu0 %v296
    %5290 = vmatpush.msra.mxu0 %v295
    %5291 = vmatpush.msra.mxu0 %v294
    %5292 = vmatpush.msra.mxu0 %v293
    %5293 = vmatpush.msra.mxu0 %v292
    %5294 = vmatpush.msra.mxu0 %v291
    %5295 = vmatpush.msra.mxu0 %v290
    %5296 = vmatpush.msra.mxu0 %v289
    %5297 = vmatpush.msra.mxu0 %v288
    %5298 = vmatpush.msra.mxu0 %v287
    %5299 = vmatpush.msra.mxu0 %v286
    %5300 = vmatpush.msra.mxu0 %v285
    %5301 = vmatpush.msra.mxu0 %v284
    %5302 = vmatmul.f32.gmra.mxu0 %v5246
    %v5303 = vpop.f32.mrf.mxu0
    %v5304 = vadd.f32 0.0, %v5303
    %5305 = vmatmul.f32.gmra.mxu0 %v5248
    %v5306 = vpop.f32.mrf.mxu0
    %v5307 = vadd.f32 0.0, %v5306
    %5308 = vmatmul.f32.gmra.mxu0 %v5250
    %v5309 = vpop.f32.mrf.mxu0
    %v5310 = vadd.f32 0.0, %v5309
    %5311 = vmatmul.f32.gmra.mxu0 %v5252
    %v5312 = vpop.f32.mrf.mxu0
    %v5313 = vadd.f32 0.0, %v5312
    %5314 = vmatmul.f32.gmra.mxu0 %v5254
    %v5315 = vpop.f32.mrf.mxu0
    %v5316 = vadd.f32 0.0, %v5315
    %5317 = vmatmul.f32.gmra.mxu0 %v5256
    %v5318 = vpop.f32.mrf.mxu0
    %v5319 = vadd.f32 0.0, %v5318
    %5320 = vmatmul.f32.gmra.mxu0 %v5258
    %v5321 = vpop.f32.mrf.mxu0
    %v5322 = vadd.f32 0.0, %v5321
    %5323 = vmatmul.f32.gmra.mxu0 %v5260
    %v5324 = vpop.f32.mrf.mxu0
    %v5325 = vadd.f32 0.0, %v5324
    %5326 = vdwg.mxu0
    %5327 = vmatpush.msra.mxu0 0.0
    %5328 = vmatpush.msra.mxu0 0.0
    %5329 = vmatpush.msra.mxu0 0.0
    %5330 = vmatpush.msra.mxu0 0.0
    %5331 = vmatpush.msra.mxu0 0.0
    %5332 = vmatpush.msra.mxu0 0.0
    %5333 = vmatpush.msra.mxu0 0.0
    %5334 = vmatpush.msra.mxu0 %v308
    %5335 = vmatpush.msra.mxu0 %v307
    %5336 = vmatpush.msra.mxu0 %v306
    %5337 = vmatpush.msra.mxu0 %v305
    %5338 = vmatpush.msra.mxu0 %v304
    %5339 = vmatpush.msra.mxu0 %v303
    %5340 = vmatpush.msra.mxu0 %v302
    %5341 = vmatpush.msra.mxu0 %v301
    %5342 = vmatpush.msra.mxu0 %v300
    %5343 = vmatmul.f32.gmra.mxu0 %v5263
    %v5344 = vpop.f32.mrf.mxu0
    %v5345 = vadd.f32 %v5304, %v5344
    %5346 = vmatmul.f32.gmra.mxu0 %v5266
    %v5347 = vpop.f32.mrf.mxu0
    %v5348 = vadd.f32 %v5307, %v5347
    %5349 = vmatmul.f32.gmra.mxu0 %v5269
    %v5350 = vpop.f32.mrf.mxu0
    %v5351 = vadd.f32 %v5310, %v5350
    %5352 = vmatmul.f32.gmra.mxu0 %v5272
    %v5353 = vpop.f32.mrf.mxu0
    %v5354 = vadd.f32 %v5313, %v5353
    %5355 = vmatmul.f32.gmra.mxu0 %v5275
    %v5356 = vpop.f32.mrf.mxu0
    %v5357 = vadd.f32 %v5316, %v5356
    %5358 = vmatmul.f32.gmra.mxu0 %v5278
    %v5359 = vpop.f32.mrf.mxu0
    %v5360 = vadd.f32 %v5319, %v5359
    %5361 = vmatmul.f32.gmra.mxu0 %v5281
    %v5362 = vpop.f32.mrf.mxu0
    %v5363 = vadd.f32 %v5322, %v5362
    %5364 = vmatmul.f32.gmra.mxu0 %v5284
    %v5365 = vpop.f32.mrf.mxu0
    %v5366 = vadd.f32 %v5325, %v5365
    %5367 = vdwg.mxu0
    %s5368 = scalar_lea.vmem %s5, 768
    %v5369 = vld [vmem:[%s5368] sm:$0xff]
    %v5370 = vld [vmem:[%s5368 + $0x8] sm:$0xff]
    %v5371 = vld [vmem:[%s5368 + $0x10] sm:$0xff]
    %v5372 = vld [vmem:[%s5368 + $0x18] sm:$0xff]
    %v5374 = vsel %vm984, %v5345, 0
    %v5377 = vsel %vm984, %v5348, 0
    %v5380 = vsel %vm984, %v5351, 0
    %v5383 = vsel %vm984, %v5354, 0
    %v5386 = vsel %vm984, %v5357, 0
    %v5389 = vsel %vm984, %v5360, 0
    %v5392 = vsel %vm984, %v5363, 0
    %v5395 = vsel %vm984, %v5366, 0
    %5397 = vmatpush.msra.mxu0 0.0
    %5398 = vmatpush.msra.mxu0 0.0
    %5399 = vmatpush.msra.mxu0 0.0
    %5400 = vmatpush.msra.mxu0 0.0
    %5401 = vmatpush.msra.mxu0 0.0
    %5402 = vmatpush.msra.mxu0 0.0
    %5403 = vmatpush.msra.mxu0 0.0
    %5404 = vmatpush.msra.mxu0 0.0
    %5405 = vmatpush.msra.mxu0 0.0
    %5406 = vmatpush.msra.mxu0 0.0
    %5407 = vmatpush.msra.mxu0 0.0
    %5408 = vmatpush.msra.mxu0 0.0
    %5409 = vmatpush.msra.mxu0 %v5372
    %5410 = vmatpush.msra.mxu0 %v5371
    %5411 = vmatpush.msra.mxu0 %v5370
    %5412 = vmatpush.msra.mxu0 %v5369
    %5413 = vmatmul.f32.gmra.mxu0 %v5374
    %v5414 = vpop.f32.mrf.mxu0
    %v5415 = vadd.f32 0.0, %v5414
    %5416 = vmatmul.f32.gmra.mxu0 %v5377
    %v5417 = vpop.f32.mrf.mxu0
    %v5418 = vadd.f32 0.0, %v5417
    %5419 = vmatmul.f32.gmra.mxu0 %v5380
    %v5420 = vpop.f32.mrf.mxu0
    %v5421 = vadd.f32 0.0, %v5420
    %5422 = vmatmul.f32.gmra.mxu0 %v5383
    %v5423 = vpop.f32.mrf.mxu0
    %v5424 = vadd.f32 0.0, %v5423
    %5425 = vmatmul.f32.gmra.mxu0 %v5386
    %v5426 = vpop.f32.mrf.mxu0
    %v5427 = vadd.f32 0.0, %v5426
    %5428 = vmatmul.f32.gmra.mxu0 %v5389
    %v5429 = vpop.f32.mrf.mxu0
    %v5430 = vadd.f32 0.0, %v5429
    %5431 = vmatmul.f32.gmra.mxu0 %v5392
    %v5432 = vpop.f32.mrf.mxu0
    %v5433 = vadd.f32 0.0, %v5432
    %5434 = vmatmul.f32.gmra.mxu0 %v5395
    %v5435 = vpop.f32.mrf.mxu0
    %v5436 = vadd.f32 0.0, %v5435
    %5437 = vdwg.mxu0
    %v5438 = vadd.f32 %v4606, %v5415
    %v5439 = vadd.f32 %v4607, %v5418
    %v5440 = vadd.f32 %v4608, %v5421
    %v5441 = vadd.f32 %v4609, %v5424
    %v5442 = vadd.f32 %v4610, %v5427
    %v5443 = vadd.f32 %v4611, %v5430
    %v5444 = vadd.f32 %v4612, %v5433
    %v5445 = vadd.f32 %v4613, %v5436
    %v5446 = vadd.f32 %v5438, %v4814
    %v5447 = vadd.f32 %v5439, %v4815
    %v5448 = vadd.f32 %v5440, %v4816
    %v5449 = vadd.f32 %v5441, %v4817
    %v5450 = vadd.f32 %v5442, %v4818
    %v5451 = vadd.f32 %v5443, %v4819
    %v5452 = vadd.f32 %v5444, %v4820
    %v5453 = vadd.f32 %v5445, %v4821
    %v5454 = vadd.f32 %v5446, %v5022
    %v5455 = vadd.f32 %v5447, %v5023
    %v5456 = vadd.f32 %v5448, %v5024
    %v5457 = vadd.f32 %v5449, %v5025
    %v5458 = vadd.f32 %v5450, %v5026
    %v5459 = vadd.f32 %v5451, %v5027
    %v5460 = vadd.f32 %v5452, %v5028
    %v5461 = vadd.f32 %v5453, %v5029
    %v5462 = vadd.f32 %v5454, %v5230
    %v5463 = vadd.f32 %v5455, %v5231
    %v5464 = vadd.f32 %v5456, %v5232
    %v5465 = vadd.f32 %v5457, %v5233
    %v5466 = vadd.f32 %v5458, %v5234
    %v5467 = vadd.f32 %v5459, %v5235
    %v5468 = vadd.f32 %v5460, %v5236
    %v5469 = vadd.f32 %v5461, %v5237
    %v5470 = vld [vmem:[%s6] sm:$0x1]
    %v5472 = vperm.slane %v5470, 0
    %v5474 = vadd.f32 %v5462, %v5472
    %v5475 = vadd.f32 %v5463, %v5472
    %v5476 = vadd.f32 %v5464, %v5472
    %v5477 = vadd.f32 %v5465, %v5472
    %v5478 = vadd.f32 %v5466, %v5472
    %v5479 = vadd.f32 %v5467, %v5472
    %v5480 = vadd.f32 %v5468, %v5472
    %v5481 = vadd.f32 %v5469, %v5472
    %v5482 = vmax.f32 %v5474, 0.0
    %v5483 = vmax.f32 %v5475, 0.0
    %v5484 = vmax.f32 %v5476, 0.0
    %v5485 = vmax.f32 %v5477, 0.0
    %v5486 = vmax.f32 %v5478, 0.0
    %v5487 = vmax.f32 %v5479, 0.0
    %v5488 = vmax.f32 %v5480, 0.0
    %v5489 = vmax.f32 %v5481, 0.0
    %v5490 = vld [vmem:[%s2] sm:$0xf]
    %v5491 = vld [vmem:[%s2 + $0x4] sm:$0xf]
    %v5492 = vld [vmem:[%s2 + $0x8] sm:$0xf]
    %v5493 = vld [vmem:[%s2 + $0xc] sm:$0xf]
    %v5494 = vld [vmem:[%s2 + $0x10] sm:$0xf]
    %v5495 = vld [vmem:[%s2 + $0x14] sm:$0xf]
    %v5496 = vld [vmem:[%s2 + $0x18] sm:$0xf]
    %v5497 = vld [vmem:[%s2 + $0x1c] sm:$0xf]
    %v5498 = vld [vmem:[%s2 + $0x20] sm:$0xf]
    %v5499 = vld [vmem:[%s2 + $0x24] sm:$0xf]
    %v5500 = vunpack.c.l.bf16 %v5490
    %v5501 = vunpack.c.l.bf16 %v5491
    %v5502 = vunpack.c.l.bf16 %v5492
    %v5503 = vunpack.c.l.bf16 %v5493
    %v5504 = vunpack.c.l.bf16 %v5494
    %v5505 = vunpack.c.l.bf16 %v5495
    %v5506 = vunpack.c.l.bf16 %v5496
    %v5507 = vunpack.c.l.bf16 %v5497
    %v5508 = vunpack.c.l.bf16 %v5498
    %v5509 = vunpack.c.l.bf16 %v5499
    %vm5510 = vcmask 523264
    %v5512 = vsel %vm5510, %v5500, 0
    %v5515 = vsel %vm5510, %v5501, 0
    %v5518 = vsel %vm5510, %v5502, 0
    %v5521 = vsel %vm5510, %v5503, 0
    %v5524 = vsel %vm5510, %v5504, 0
    %v5527 = vsel %vm5510, %v5505, 0
    %v5530 = vsel %vm5510, %v5506, 0
    %v5533 = vsel %vm5510, %v5507, 0
    %v5536 = vsel %vm5510, %v5508, 0
    %v5539 = vsel %vm5510, %v5509, 0
    %5541 = vmatpush.msra.mxu0 0.0
    %5542 = vmatpush.msra.mxu0 0.0
    %5543 = vmatpush.msra.mxu0 0.0
    %5544 = vmatpush.msra.mxu0 0.0
    %5545 = vmatpush.msra.mxu0 0.0
    %5546 = vmatpush.msra.mxu0 0.0
    %5547 = vmatpush.msra.mxu0 0.0
    %5548 = vmatpush.msra.mxu0 0.0
    %5549 = vmatpush.msra.mxu0 %v5489
    %5550 = vmatpush.msra.mxu0 %v5488
    %5551 = vmatpush.msra.mxu0 %v5487
    %5552 = vmatpush.msra.mxu0 %v5486
    %5553 = vmatpush.msra.mxu0 %v5485
    %5554 = vmatpush.msra.mxu0 %v5484
    %5555 = vmatpush.msra.mxu0 %v5483
    %5556 = vmatpush.msra.mxu0 %v5482
    %5557 = vmatmul.f32.gmra.mxu0 %v5512
    %v5558 = vpop.f32.mrf.mxu0
    %v5559 = vadd.f32 0.0, %v5558
    %5560 = vmatmul.f32.gmra.mxu0 %v5515
    %v5561 = vpop.f32.mrf.mxu0
    %v5562 = vadd.f32 0.0, %v5561
    %5563 = vmatmul.f32.gmra.mxu0 %v5518
    %v5564 = vpop.f32.mrf.mxu0
    %v5565 = vadd.f32 0.0, %v5564
    %5566 = vmatmul.f32.gmra.mxu0 %v5521
    %v5567 = vpop.f32.mrf.mxu0
    %v5568 = vadd.f32 0.0, %v5567
    %5569 = vmatmul.f32.gmra.mxu0 %v5524
    %v5570 = vpop.f32.mrf.mxu0
    %v5571 = vadd.f32 0.0, %v5570
    %5572 = vmatmul.f32.gmra.mxu0 %v5527
    %v5573 = vpop.f32.mrf.mxu0
    %v5574 = vadd.f32 0.0, %v5573
    %5575 = vmatmul.f32.gmra.mxu0 %v5530
    %v5576 = vpop.f32.mrf.mxu0
    %v5577 = vadd.f32 0.0, %v5576
    %5578 = vmatmul.f32.gmra.mxu0 %v5533
    %v5579 = vpop.f32.mrf.mxu0
    %v5580 = vadd.f32 0.0, %v5579
    %5581 = vmatmul.f32.gmra.mxu0 %v5536
    %v5582 = vpop.f32.mrf.mxu0
    %v5583 = vadd.f32 0.0, %v5582
    %5584 = vmatmul.f32.gmra.mxu0 %v5539
    %v5585 = vpop.f32.mrf.mxu0
    %v5586 = vadd.f32 0.0, %v5585
    %5587 = vdwg.mxu0
    %v5588 = vld [vmem:[%s7] sm:$0xff]
    %v5589 = vld [vmem:[%s7 + $0x8] sm:$0xff]
    %v5590 = vld [vmem:[%s7 + $0x10] sm:$0xff]
    %v5591 = vld [vmem:[%s7 + $0x18] sm:$0xff]
    %v5592 = vld [vmem:[%s7 + $0x20] sm:$0xff]
    %v5593 = vld [vmem:[%s7 + $0x28] sm:$0xff]
    %v5594 = vld [vmem:[%s7 + $0x30] sm:$0xff]
    %v5595 = vld [vmem:[%s7 + $0x38] sm:$0xff]
    %v5596 = vld [vmem:[%s2 + $0x28] sm:$0xf]
    %v5597 = vld [vmem:[%s2 + $0x2c] sm:$0xf]
    %v5598 = vld [vmem:[%s2 + $0x30] sm:$0xf]
    %v5599 = vld [vmem:[%s2 + $0x34] sm:$0xf]
    %v5600 = vld [vmem:[%s2 + $0x38] sm:$0xf]
    %v5601 = vld [vmem:[%s2 + $0x3c] sm:$0xf]
    %v5602 = vld [vmem:[%s2 + $0x40] sm:$0xf]
    %v5603 = vld [vmem:[%s2 + $0x44] sm:$0xf]
    %v5604 = vld [vmem:[%s2 + $0x48] sm:$0xf]
    %v5605 = vld [vmem:[%s2 + $0x4c] sm:$0xf]
    %v5606 = vunpack.c.l.bf16 %v5596
    %v5607 = vunpack.c.l.bf16 %v5597
    %v5608 = vunpack.c.l.bf16 %v5598
    %v5609 = vunpack.c.l.bf16 %v5599
    %v5610 = vunpack.c.l.bf16 %v5600
    %v5611 = vunpack.c.l.bf16 %v5601
    %v5612 = vunpack.c.l.bf16 %v5602
    %v5613 = vunpack.c.l.bf16 %v5603
    %v5614 = vunpack.c.l.bf16 %v5604
    %v5615 = vunpack.c.l.bf16 %v5605
    %v5617 = vsel %vm5510, %v5606, 0
    %v5620 = vsel %vm5510, %v5607, 0
    %v5623 = vsel %vm5510, %v5608, 0
    %v5626 = vsel %vm5510, %v5609, 0
    %v5629 = vsel %vm5510, %v5610, 0
    %v5632 = vsel %vm5510, %v5611, 0
    %v5635 = vsel %vm5510, %v5612, 0
    %v5638 = vsel %vm5510, %v5613, 0
    %v5641 = vsel %vm5510, %v5614, 0
    %v5644 = vsel %vm5510, %v5615, 0
    %5646 = vmatpush.msra.mxu0 0.0
    %5647 = vmatpush.msra.mxu0 0.0
    %5648 = vmatpush.msra.mxu0 0.0
    %5649 = vmatpush.msra.mxu0 0.0
    %5650 = vmatpush.msra.mxu0 0.0
    %5651 = vmatpush.msra.mxu0 0.0
    %5652 = vmatpush.msra.mxu0 0.0
    %5653 = vmatpush.msra.mxu0 0.0
    %5654 = vmatpush.msra.mxu0 %v5489
    %5655 = vmatpush.msra.mxu0 %v5488
    %5656 = vmatpush.msra.mxu0 %v5487
    %5657 = vmatpush.msra.mxu0 %v5486
    %5658 = vmatpush.msra.mxu0 %v5485
    %5659 = vmatpush.msra.mxu0 %v5484
    %5660 = vmatpush.msra.mxu0 %v5483
    %5661 = vmatpush.msra.mxu0 %v5482
    %5662 = vmatmul.f32.gmra.mxu0 %v5617
    %v5663 = vpop.f32.mrf.mxu0
    %v5664 = vadd.f32 0.0, %v5663
    %5665 = vmatmul.f32.gmra.mxu0 %v5620
    %v5666 = vpop.f32.mrf.mxu0
    %v5667 = vadd.f32 0.0, %v5666
    %5668 = vmatmul.f32.gmra.mxu0 %v5623
    %v5669 = vpop.f32.mrf.mxu0
    %v5670 = vadd.f32 0.0, %v5669
    %5671 = vmatmul.f32.gmra.mxu0 %v5626
    %v5672 = vpop.f32.mrf.mxu0
    %v5673 = vadd.f32 0.0, %v5672
    %5674 = vmatmul.f32.gmra.mxu0 %v5629
    %v5675 = vpop.f32.mrf.mxu0
    %v5676 = vadd.f32 0.0, %v5675
    %5677 = vmatmul.f32.gmra.mxu0 %v5632
    %v5678 = vpop.f32.mrf.mxu0
    %v5679 = vadd.f32 0.0, %v5678
    %5680 = vmatmul.f32.gmra.mxu0 %v5635
    %v5681 = vpop.f32.mrf.mxu0
    %v5682 = vadd.f32 0.0, %v5681
    %5683 = vmatmul.f32.gmra.mxu0 %v5638
    %v5684 = vpop.f32.mrf.mxu0
    %v5685 = vadd.f32 0.0, %v5684
    %5686 = vmatmul.f32.gmra.mxu0 %v5641
    %v5687 = vpop.f32.mrf.mxu0
    %v5688 = vadd.f32 0.0, %v5687
    %5689 = vmatmul.f32.gmra.mxu0 %v5644
    %v5690 = vpop.f32.mrf.mxu0
    %v5691 = vadd.f32 0.0, %v5690
    %5692 = vdwg.mxu0
    %s5693 = scalar_lea.vmem %s7, 64
    %v5694 = vld [vmem:[%s5693] sm:$0xff]
    %v5695 = vld [vmem:[%s5693 + $0x8] sm:$0xff]
    %v5696 = vld [vmem:[%s5693 + $0x10] sm:$0xff]
    %v5697 = vld [vmem:[%s5693 + $0x18] sm:$0xff]
    %v5698 = vld [vmem:[%s5693 + $0x20] sm:$0xff]
    %v5699 = vld [vmem:[%s5693 + $0x28] sm:$0xff]
    %v5700 = vld [vmem:[%s5693 + $0x30] sm:$0xff]
    %v5701 = vld [vmem:[%s5693 + $0x38] sm:$0xff]
    %v5702 = vld [vmem:[%s2 + $0x50] sm:$0xf]
    %v5703 = vld [vmem:[%s2 + $0x54] sm:$0xf]
    %v5704 = vld [vmem:[%s2 + $0x58] sm:$0xf]
    %v5705 = vld [vmem:[%s2 + $0x5c] sm:$0xf]
    %v5706 = vld [vmem:[%s2 + $0x60] sm:$0xf]
    %v5707 = vld [vmem:[%s2 + $0x64] sm:$0xf]
    %v5708 = vld [vmem:[%s2 + $0x68] sm:$0xf]
    %v5709 = vld [vmem:[%s2 + $0x6c] sm:$0xf]
    %v5710 = vld [vmem:[%s2 + $0x70] sm:$0xf]
    %v5711 = vld [vmem:[%s2 + $0x74] sm:$0xf]
    %v5712 = vunpack.c.l.bf16 %v5702
    %v5713 = vunpack.c.l.bf16 %v5703
    %v5714 = vunpack.c.l.bf16 %v5704
    %v5715 = vunpack.c.l.bf16 %v5705
    %v5716 = vunpack.c.l.bf16 %v5706
    %v5717 = vunpack.c.l.bf16 %v5707
    %v5718 = vunpack.c.l.bf16 %v5708
    %v5719 = vunpack.c.l.bf16 %v5709
    %v5720 = vunpack.c.l.bf16 %v5710
    %v5721 = vunpack.c.l.bf16 %v5711
    %v5723 = vsel %vm5510, %v5712, 0
    %v5726 = vsel %vm5510, %v5713, 0
    %v5729 = vsel %vm5510, %v5714, 0
    %v5732 = vsel %vm5510, %v5715, 0
    %v5735 = vsel %vm5510, %v5716, 0
    %v5738 = vsel %vm5510, %v5717, 0
    %v5741 = vsel %vm5510, %v5718, 0
    %v5744 = vsel %vm5510, %v5719, 0
    %v5747 = vsel %vm5510, %v5720, 0
    %v5750 = vsel %vm5510, %v5721, 0
    %5752 = vmatpush.msra.mxu0 0.0
    %5753 = vmatpush.msra.mxu0 0.0
    %5754 = vmatpush.msra.mxu0 0.0
    %5755 = vmatpush.msra.mxu0 0.0
    %5756 = vmatpush.msra.mxu0 0.0
    %5757 = vmatpush.msra.mxu0 0.0
    %5758 = vmatpush.msra.mxu0 0.0
    %5759 = vmatpush.msra.mxu0 0.0
    %5760 = vmatpush.msra.mxu0 %v5489
    %5761 = vmatpush.msra.mxu0 %v5488
    %5762 = vmatpush.msra.mxu0 %v5487
    %5763 = vmatpush.msra.mxu0 %v5486
    %5764 = vmatpush.msra.mxu0 %v5485
    %5765 = vmatpush.msra.mxu0 %v5484
    %5766 = vmatpush.msra.mxu0 %v5483
    %5767 = vmatpush.msra.mxu0 %v5482
    %5768 = vmatmul.f32.gmra.mxu0 %v5723
    %v5769 = vpop.f32.mrf.mxu0
    %v5770 = vadd.f32 0.0, %v5769
    %5771 = vmatmul.f32.gmra.mxu0 %v5726
    %v5772 = vpop.f32.mrf.mxu0
    %v5773 = vadd.f32 0.0, %v5772
    %5774 = vmatmul.f32.gmra.mxu0 %v5729
    %v5775 = vpop.f32.mrf.mxu0
    %v5776 = vadd.f32 0.0, %v5775
    %5777 = vmatmul.f32.gmra.mxu0 %v5732
    %v5778 = vpop.f32.mrf.mxu0
    %v5779 = vadd.f32 0.0, %v5778
    %5780 = vmatmul.f32.gmra.mxu0 %v5735
    %v5781 = vpop.f32.mrf.mxu0
    %v5782 = vadd.f32 0.0, %v5781
    %5783 = vmatmul.f32.gmra.mxu0 %v5738
    %v5784 = vpop.f32.mrf.mxu0
    %v5785 = vadd.f32 0.0, %v5784
    %5786 = vmatmul.f32.gmra.mxu0 %v5741
    %v5787 = vpop.f32.mrf.mxu0
    %v5788 = vadd.f32 0.0, %v5787
    %5789 = vmatmul.f32.gmra.mxu0 %v5744
    %v5790 = vpop.f32.mrf.mxu0
    %v5791 = vadd.f32 0.0, %v5790
    %5792 = vmatmul.f32.gmra.mxu0 %v5747
    %v5793 = vpop.f32.mrf.mxu0
    %v5794 = vadd.f32 0.0, %v5793
    %5795 = vmatmul.f32.gmra.mxu0 %v5750
    %v5796 = vpop.f32.mrf.mxu0
    %v5797 = vadd.f32 0.0, %v5796
    %5798 = vdwg.mxu0
    %s5799 = scalar_lea.vmem %s7, 128
    %v5800 = vld [vmem:[%s5799] sm:$0xff]
    %v5801 = vld [vmem:[%s5799 + $0x8] sm:$0xff]
    %v5802 = vld [vmem:[%s5799 + $0x10] sm:$0xff]
    %v5803 = vld [vmem:[%s5799 + $0x18] sm:$0xff]
    %v5804 = vld [vmem:[%s5799 + $0x20] sm:$0xff]
    %v5805 = vld [vmem:[%s5799 + $0x28] sm:$0xff]
    %v5806 = vld [vmem:[%s5799 + $0x30] sm:$0xff]
    %v5807 = vld [vmem:[%s5799 + $0x38] sm:$0xff]
    %v5808 = vld [vmem:[%s2 + $0x78] sm:$0xf]
    %v5809 = vld [vmem:[%s2 + $0x7c] sm:$0xf]
    %v5810 = vld [vmem:[%s2 + $0x80] sm:$0xf]
    %v5811 = vld [vmem:[%s2 + $0x84] sm:$0xf]
    %v5812 = vld [vmem:[%s2 + $0x88] sm:$0xf]
    %v5813 = vld [vmem:[%s2 + $0x8c] sm:$0xf]
    %v5814 = vld [vmem:[%s2 + $0x90] sm:$0xf]
    %v5815 = vld [vmem:[%s2 + $0x94] sm:$0xf]
    %v5816 = vld [vmem:[%s2 + $0x98] sm:$0xf]
    %v5817 = vld [vmem:[%s2 + $0x9c] sm:$0xf]
    %v5818 = vunpack.c.l.bf16 %v5808
    %v5819 = vunpack.c.l.bf16 %v5809
    %v5820 = vunpack.c.l.bf16 %v5810
    %v5821 = vunpack.c.l.bf16 %v5811
    %v5822 = vunpack.c.l.bf16 %v5812
    %v5823 = vunpack.c.l.bf16 %v5813
    %v5824 = vunpack.c.l.bf16 %v5814
    %v5825 = vunpack.c.l.bf16 %v5815
    %v5826 = vunpack.c.l.bf16 %v5816
    %v5827 = vunpack.c.l.bf16 %v5817
    %v5829 = vsel %vm5510, %v5818, 0
    %v5832 = vsel %vm5510, %v5819, 0
    %v5835 = vsel %vm5510, %v5820, 0
    %v5838 = vsel %vm5510, %v5821, 0
    %v5841 = vsel %vm5510, %v5822, 0
    %v5844 = vsel %vm5510, %v5823, 0
    %v5847 = vsel %vm5510, %v5824, 0
    %v5850 = vsel %vm5510, %v5825, 0
    %v5853 = vsel %vm5510, %v5826, 0
    %v5856 = vsel %vm5510, %v5827, 0
    %5858 = vmatpush.msra.mxu0 0.0
    %5859 = vmatpush.msra.mxu0 0.0
    %5860 = vmatpush.msra.mxu0 0.0
    %5861 = vmatpush.msra.mxu0 0.0
    %5862 = vmatpush.msra.mxu0 0.0
    %5863 = vmatpush.msra.mxu0 0.0
    %5864 = vmatpush.msra.mxu0 0.0
    %5865 = vmatpush.msra.mxu0 0.0
    %5866 = vmatpush.msra.mxu0 %v5489
    %5867 = vmatpush.msra.mxu0 %v5488
    %5868 = vmatpush.msra.mxu0 %v5487
    %5869 = vmatpush.msra.mxu0 %v5486
    %5870 = vmatpush.msra.mxu0 %v5485
    %5871 = vmatpush.msra.mxu0 %v5484
    %5872 = vmatpush.msra.mxu0 %v5483
    %5873 = vmatpush.msra.mxu0 %v5482
    %5874 = vmatmul.f32.gmra.mxu0 %v5829
    %v5875 = vpop.f32.mrf.mxu0
    %v5876 = vadd.f32 0.0, %v5875
    %5877 = vmatmul.f32.gmra.mxu0 %v5832
    %v5878 = vpop.f32.mrf.mxu0
    %v5879 = vadd.f32 0.0, %v5878
    %5880 = vmatmul.f32.gmra.mxu0 %v5835
    %v5881 = vpop.f32.mrf.mxu0
    %v5882 = vadd.f32 0.0, %v5881
    %5883 = vmatmul.f32.gmra.mxu0 %v5838
    %v5884 = vpop.f32.mrf.mxu0
    %v5885 = vadd.f32 0.0, %v5884
    %5886 = vmatmul.f32.gmra.mxu0 %v5841
    %v5887 = vpop.f32.mrf.mxu0
    %v5888 = vadd.f32 0.0, %v5887
    %5889 = vmatmul.f32.gmra.mxu0 %v5844
    %v5890 = vpop.f32.mrf.mxu0
    %v5891 = vadd.f32 0.0, %v5890
    %5892 = vmatmul.f32.gmra.mxu0 %v5847
    %v5893 = vpop.f32.mrf.mxu0
    %v5894 = vadd.f32 0.0, %v5893
    %5895 = vmatmul.f32.gmra.mxu0 %v5850
    %v5896 = vpop.f32.mrf.mxu0
    %v5897 = vadd.f32 0.0, %v5896
    %5898 = vmatmul.f32.gmra.mxu0 %v5853
    %v5899 = vpop.f32.mrf.mxu0
    %v5900 = vadd.f32 0.0, %v5899
    %5901 = vmatmul.f32.gmra.mxu0 %v5856
    %v5902 = vpop.f32.mrf.mxu0
    %v5903 = vadd.f32 0.0, %v5902
    %5904 = vdwg.mxu0
    %s5905 = scalar_lea.vmem %s7, 192
    %v5906 = vld [vmem:[%s5905] sm:$0xff]
    %v5907 = vld [vmem:[%s5905 + $0x8] sm:$0xff]
    %v5908 = vld [vmem:[%s5905 + $0x10] sm:$0xff]
    %v5909 = vld [vmem:[%s5905 + $0x18] sm:$0xff]
    %v5910 = vld [vmem:[%s5905 + $0x20] sm:$0xff]
    %v5911 = vld [vmem:[%s5905 + $0x28] sm:$0xff]
    %v5912 = vld [vmem:[%s5905 + $0x30] sm:$0xff]
    %v5913 = vld [vmem:[%s5905 + $0x38] sm:$0xff]
    %v5915 = vsel %vm5510, %v5876, 0
    %v5918 = vsel %vm5510, %v5879, 0
    %v5921 = vsel %vm5510, %v5882, 0
    %v5924 = vsel %vm5510, %v5885, 0
    %v5927 = vsel %vm5510, %v5888, 0
    %v5930 = vsel %vm5510, %v5891, 0
    %v5933 = vsel %vm5510, %v5894, 0
    %v5936 = vsel %vm5510, %v5897, 0
    %v5939 = vsel %vm5510, %v5900, 0
    %v5942 = vsel %vm5510, %v5903, 0
    %5944 = vmatpush.msra.mxu0 0.0
    %5945 = vmatpush.msra.mxu0 0.0
    %5946 = vmatpush.msra.mxu0 0.0
    %5947 = vmatpush.msra.mxu0 0.0
    %5948 = vmatpush.msra.mxu0 0.0
    %5949 = vmatpush.msra.mxu0 0.0
    %5950 = vmatpush.msra.mxu0 0.0
    %5951 = vmatpush.msra.mxu0 0.0
    %5952 = vmatpush.msra.mxu0 %v5913
    %5953 = vmatpush.msra.mxu0 %v5912
    %5954 = vmatpush.msra.mxu0 %v5911
    %5955 = vmatpush.msra.mxu0 %v5910
    %5956 = vmatpush.msra.mxu0 %v5909
    %5957 = vmatpush.msra.mxu0 %v5908
    %5958 = vmatpush.msra.mxu0 %v5907
    %5959 = vmatpush.msra.mxu0 %v5906
    %5960 = vmatmul.f32.gmra.mxu0 %v5915
    %v5961 = vpop.f32.mrf.mxu0
    %v5962 = vadd.f32 0.0, %v5961
    %5963 = vmatmul.f32.gmra.mxu0 %v5918
    %v5964 = vpop.f32.mrf.mxu0
    %v5965 = vadd.f32 0.0, %v5964
    %5966 = vmatmul.f32.gmra.mxu0 %v5921
    %v5967 = vpop.f32.mrf.mxu0
    %v5968 = vadd.f32 0.0, %v5967
    %5969 = vmatmul.f32.gmra.mxu0 %v5924
    %v5970 = vpop.f32.mrf.mxu0
    %v5971 = vadd.f32 0.0, %v5970
    %5972 = vmatmul.f32.gmra.mxu0 %v5927
    %v5973 = vpop.f32.mrf.mxu0
    %v5974 = vadd.f32 0.0, %v5973
    %5975 = vmatmul.f32.gmra.mxu0 %v5930
    %v5976 = vpop.f32.mrf.mxu0
    %v5977 = vadd.f32 0.0, %v5976
    %5978 = vmatmul.f32.gmra.mxu0 %v5933
    %v5979 = vpop.f32.mrf.mxu0
    %v5980 = vadd.f32 0.0, %v5979
    %5981 = vmatmul.f32.gmra.mxu0 %v5936
    %v5982 = vpop.f32.mrf.mxu0
    %v5983 = vadd.f32 0.0, %v5982
    %5984 = vmatmul.f32.gmra.mxu0 %v5939
    %v5985 = vpop.f32.mrf.mxu0
    %v5986 = vadd.f32 0.0, %v5985
    %5987 = vmatmul.f32.gmra.mxu0 %v5942
    %v5988 = vpop.f32.mrf.mxu0
    %5989 = vdwg.mxu0
    %v5991 = vsel %vm5510, %v5559, 0
    %v5994 = vsel %vm5510, %v5562, 0
    %v5997 = vsel %vm5510, %v5565, 0
    %v6000 = vsel %vm5510, %v5568, 0
    %v6003 = vsel %vm5510, %v5571, 0
    %v6006 = vsel %vm5510, %v5574, 0
    %v6009 = vsel %vm5510, %v5577, 0
    %v6012 = vsel %vm5510, %v5580, 0
    %v6015 = vsel %vm5510, %v5583, 0
    %v6018 = vsel %vm5510, %v5586, 0
    %6020 = vmatpush.msra.mxu0 0.0
    %6021 = vmatpush.msra.mxu0 0.0
    %6022 = vmatpush.msra.mxu0 0.0
    %6023 = vmatpush.msra.mxu0 0.0
    %6024 = vmatpush.msra.mxu0 0.0
    %6025 = vmatpush.msra.mxu0 0.0
    %6026 = vmatpush.msra.mxu0 0.0
    %6027 = vmatpush.msra.mxu0 0.0
    %6028 = vmatpush.msra.mxu0 %v5595
    %6029 = vmatpush.msra.mxu0 %v5594
    %6030 = vmatpush.msra.mxu0 %v5593
    %6031 = vmatpush.msra.mxu0 %v5592
    %6032 = vmatpush.msra.mxu0 %v5591
    %6033 = vmatpush.msra.mxu0 %v5590
    %6034 = vmatpush.msra.mxu0 %v5589
    %6035 = vmatpush.msra.mxu0 %v5588
    %6036 = vmatmul.f32.gmra.mxu0 %v5991
    %v6037 = vpop.f32.mrf.mxu0
    %v6038 = vadd.f32 %v5962, %v6037
    %6039 = vmatmul.f32.gmra.mxu0 %v5994
    %v6040 = vpop.f32.mrf.mxu0
    %v6041 = vadd.f32 %v5965, %v6040
    %6042 = vmatmul.f32.gmra.mxu0 %v5997
    %v6043 = vpop.f32.mrf.mxu0
    %v6044 = vadd.f32 %v5968, %v6043
    %6045 = vmatmul.f32.gmra.mxu0 %v6000
    %v6046 = vpop.f32.mrf.mxu0
    %v6047 = vadd.f32 %v5971, %v6046
    %6048 = vmatmul.f32.gmra.mxu0 %v6003
    %v6049 = vpop.f32.mrf.mxu0
    %v6050 = vadd.f32 %v5974, %v6049
    %6051 = vmatmul.f32.gmra.mxu0 %v6006
    %v6052 = vpop.f32.mrf.mxu0
    %v6053 = vadd.f32 %v5977, %v6052
    %6054 = vmatmul.f32.gmra.mxu0 %v6009
    %v6055 = vpop.f32.mrf.mxu0
    %v6056 = vadd.f32 %v5980, %v6055
    %6057 = vmatmul.f32.gmra.mxu0 %v6012
    %v6058 = vpop.f32.mrf.mxu0
    %v6059 = vadd.f32 %v5983, %v6058
    %6060 = vmatmul.f32.gmra.mxu0 %v6015
    %v6061 = vpop.f32.mrf.mxu0
    %v6062 = vadd.f32 %v5986, %v6061
    %6063 = vmatmul.f32.gmra.mxu0 %v6018
    %v6064 = vpop.f32.mrf.mxu0
    %6065 = vdwg.mxu0
    %v6066 = vld [vmem:[%s2 + $0xa0] sm:$0xf]
    %v6067 = vld [vmem:[%s2 + $0xa4] sm:$0xf]
    %v6068 = vld [vmem:[%s2 + $0xa8] sm:$0xf]
    %v6069 = vld [vmem:[%s2 + $0xac] sm:$0xf]
    %v6070 = vld [vmem:[%s2 + $0xb0] sm:$0xf]
    %v6071 = vld [vmem:[%s2 + $0xb4] sm:$0xf]
    %v6072 = vld [vmem:[%s2 + $0xb8] sm:$0xf]
    %v6073 = vld [vmem:[%s2 + $0xbc] sm:$0xf]
    %v6074 = vld [vmem:[%s2 + $0xc0] sm:$0xf]
    %v6075 = vld [vmem:[%s2 + $0xc4] sm:$0xf]
    %v6076 = vunpack.c.l.bf16 %v6066
    %v6077 = vunpack.c.l.bf16 %v6067
    %v6078 = vunpack.c.l.bf16 %v6068
    %v6079 = vunpack.c.l.bf16 %v6069
    %v6080 = vunpack.c.l.bf16 %v6070
    %v6081 = vunpack.c.l.bf16 %v6071
    %v6082 = vunpack.c.l.bf16 %v6072
    %v6083 = vunpack.c.l.bf16 %v6073
    %v6084 = vunpack.c.l.bf16 %v6074
    %v6085 = vunpack.c.l.bf16 %v6075
    %v6087 = vsel %vm5510, %v6076, 0
    %v6090 = vsel %vm5510, %v6077, 0
    %v6093 = vsel %vm5510, %v6078, 0
    %v6096 = vsel %vm5510, %v6079, 0
    %v6099 = vsel %vm5510, %v6080, 0
    %v6102 = vsel %vm5510, %v6081, 0
    %v6105 = vsel %vm5510, %v6082, 0
    %v6108 = vsel %vm5510, %v6083, 0
    %v6111 = vsel %vm5510, %v6084, 0
    %v6114 = vsel %vm5510, %v6085, 0
    %6116 = vmatpush.msra.mxu0 0.0
    %6117 = vmatpush.msra.mxu0 0.0
    %6118 = vmatpush.msra.mxu0 0.0
    %6119 = vmatpush.msra.mxu0 0.0
    %6120 = vmatpush.msra.mxu0 0.0
    %6121 = vmatpush.msra.mxu0 0.0
    %6122 = vmatpush.msra.mxu0 0.0
    %6123 = vmatpush.msra.mxu0 0.0
    %6124 = vmatpush.msra.mxu0 %v5489
    %6125 = vmatpush.msra.mxu0 %v5488
    %6126 = vmatpush.msra.mxu0 %v5487
    %6127 = vmatpush.msra.mxu0 %v5486
    %6128 = vmatpush.msra.mxu0 %v5485
    %6129 = vmatpush.msra.mxu0 %v5484
    %6130 = vmatpush.msra.mxu0 %v5483
    %6131 = vmatpush.msra.mxu0 %v5482
    %6132 = vmatmul.f32.gmra.mxu0 %v6087
    %v6133 = vpop.f32.mrf.mxu0
    %v6134 = vadd.f32 0.0, %v6133
    %6135 = vmatmul.f32.gmra.mxu0 %v6090
    %v6136 = vpop.f32.mrf.mxu0
    %v6137 = vadd.f32 0.0, %v6136
    %6138 = vmatmul.f32.gmra.mxu0 %v6093
    %v6139 = vpop.f32.mrf.mxu0
    %v6140 = vadd.f32 0.0, %v6139
    %6141 = vmatmul.f32.gmra.mxu0 %v6096
    %v6142 = vpop.f32.mrf.mxu0
    %v6143 = vadd.f32 0.0, %v6142
    %6144 = vmatmul.f32.gmra.mxu0 %v6099
    %v6145 = vpop.f32.mrf.mxu0
    %v6146 = vadd.f32 0.0, %v6145
    %6147 = vmatmul.f32.gmra.mxu0 %v6102
    %v6148 = vpop.f32.mrf.mxu0
    %v6149 = vadd.f32 0.0, %v6148
    %6150 = vmatmul.f32.gmra.mxu0 %v6105
    %v6151 = vpop.f32.mrf.mxu0
    %v6152 = vadd.f32 0.0, %v6151
    %6153 = vmatmul.f32.gmra.mxu0 %v6108
    %v6154 = vpop.f32.mrf.mxu0
    %v6155 = vadd.f32 0.0, %v6154
    %6156 = vmatmul.f32.gmra.mxu0 %v6111
    %v6157 = vpop.f32.mrf.mxu0
    %v6158 = vadd.f32 0.0, %v6157
    %6159 = vmatmul.f32.gmra.mxu0 %v6114
    %v6160 = vpop.f32.mrf.mxu0
    %v6161 = vadd.f32 0.0, %v6160
    %6162 = vdwg.mxu0
    %s6163 = scalar_lea.vmem %s7, 256
    %v6164 = vld [vmem:[%s6163] sm:$0xff]
    %v6165 = vld [vmem:[%s6163 + $0x8] sm:$0xff]
    %v6166 = vld [vmem:[%s6163 + $0x10] sm:$0xff]
    %v6167 = vld [vmem:[%s6163 + $0x18] sm:$0xff]
    %v6168 = vld [vmem:[%s6163 + $0x20] sm:$0xff]
    %v6169 = vld [vmem:[%s6163 + $0x28] sm:$0xff]
    %v6170 = vld [vmem:[%s6163 + $0x30] sm:$0xff]
    %v6171 = vld [vmem:[%s6163 + $0x38] sm:$0xff]
    %v6173 = vsel %vm5510, %v6134, 0
    %v6176 = vsel %vm5510, %v6137, 0
    %v6179 = vsel %vm5510, %v6140, 0
    %v6182 = vsel %vm5510, %v6143, 0
    %v6185 = vsel %vm5510, %v6146, 0
    %v6188 = vsel %vm5510, %v6149, 0
    %v6191 = vsel %vm5510, %v6152, 0
    %v6194 = vsel %vm5510, %v6155, 0
    %v6197 = vsel %vm5510, %v6158, 0
    %v6200 = vsel %vm5510, %v6161, 0
    %6202 = vmatpush.msra.mxu0 0.0
    %6203 = vmatpush.msra.mxu0 0.0
    %6204 = vmatpush.msra.mxu0 0.0
    %6205 = vmatpush.msra.mxu0 0.0
    %6206 = vmatpush.msra.mxu0 0.0
    %6207 = vmatpush.msra.mxu0 0.0
    %6208 = vmatpush.msra.mxu0 0.0
    %6209 = vmatpush.msra.mxu0 0.0
    %6210 = vmatpush.msra.mxu0 %v6171
    %6211 = vmatpush.msra.mxu0 %v6170
    %6212 = vmatpush.msra.mxu0 %v6169
    %6213 = vmatpush.msra.mxu0 %v6168
    %6214 = vmatpush.msra.mxu0 %v6167
    %6215 = vmatpush.msra.mxu0 %v6166
    %6216 = vmatpush.msra.mxu0 %v6165
    %6217 = vmatpush.msra.mxu0 %v6164
    %6218 = vmatmul.f32.gmra.mxu0 %v6173
    %v6219 = vpop.f32.mrf.mxu0
    %v6220 = vadd.f32 0.0, %v6219
    %6221 = vmatmul.f32.gmra.mxu0 %v6176
    %v6222 = vpop.f32.mrf.mxu0
    %v6223 = vadd.f32 0.0, %v6222
    %6224 = vmatmul.f32.gmra.mxu0 %v6179
    %v6225 = vpop.f32.mrf.mxu0
    %v6226 = vadd.f32 0.0, %v6225
    %6227 = vmatmul.f32.gmra.mxu0 %v6182
    %v6228 = vpop.f32.mrf.mxu0
    %v6229 = vadd.f32 0.0, %v6228
    %6230 = vmatmul.f32.gmra.mxu0 %v6185
    %v6231 = vpop.f32.mrf.mxu0
    %v6232 = vadd.f32 0.0, %v6231
    %6233 = vmatmul.f32.gmra.mxu0 %v6188
    %v6234 = vpop.f32.mrf.mxu0
    %v6235 = vadd.f32 0.0, %v6234
    %6236 = vmatmul.f32.gmra.mxu0 %v6191
    %v6237 = vpop.f32.mrf.mxu0
    %v6238 = vadd.f32 0.0, %v6237
    %6239 = vmatmul.f32.gmra.mxu0 %v6194
    %v6240 = vpop.f32.mrf.mxu0
    %v6241 = vadd.f32 0.0, %v6240
    %6242 = vmatmul.f32.gmra.mxu0 %v6197
    %v6243 = vpop.f32.mrf.mxu0
    %v6244 = vadd.f32 0.0, %v6243
    %6245 = vmatmul.f32.gmra.mxu0 %v6200
    %v6246 = vpop.f32.mrf.mxu0
    %6247 = vdwg.mxu0
    %v6249 = vsel %vm5510, %v5664, 0
    %v6252 = vsel %vm5510, %v5667, 0
    %v6255 = vsel %vm5510, %v5670, 0
    %v6258 = vsel %vm5510, %v5673, 0
    %v6261 = vsel %vm5510, %v5676, 0
    %v6264 = vsel %vm5510, %v5679, 0
    %v6267 = vsel %vm5510, %v5682, 0
    %v6270 = vsel %vm5510, %v5685, 0
    %v6273 = vsel %vm5510, %v5688, 0
    %v6276 = vsel %vm5510, %v5691, 0
    %6278 = vmatpush.msra.mxu0 0.0
    %6279 = vmatpush.msra.mxu0 0.0
    %6280 = vmatpush.msra.mxu0 0.0
    %6281 = vmatpush.msra.mxu0 0.0
    %6282 = vmatpush.msra.mxu0 0.0
    %6283 = vmatpush.msra.mxu0 0.0
    %6284 = vmatpush.msra.mxu0 0.0
    %6285 = vmatpush.msra.mxu0 0.0
    %6286 = vmatpush.msra.mxu0 %v5701
    %6287 = vmatpush.msra.mxu0 %v5700
    %6288 = vmatpush.msra.mxu0 %v5699
    %6289 = vmatpush.msra.mxu0 %v5698
    %6290 = vmatpush.msra.mxu0 %v5697
    %6291 = vmatpush.msra.mxu0 %v5696
    %6292 = vmatpush.msra.mxu0 %v5695
    %6293 = vmatpush.msra.mxu0 %v5694
    %6294 = vmatmul.f32.gmra.mxu0 %v6249
    %v6295 = vpop.f32.mrf.mxu0
    %v6296 = vadd.f32 %v6220, %v6295
    %6297 = vmatmul.f32.gmra.mxu0 %v6252
    %v6298 = vpop.f32.mrf.mxu0
    %v6299 = vadd.f32 %v6223, %v6298
    %6300 = vmatmul.f32.gmra.mxu0 %v6255
    %v6301 = vpop.f32.mrf.mxu0
    %v6302 = vadd.f32 %v6226, %v6301
    %6303 = vmatmul.f32.gmra.mxu0 %v6258
    %v6304 = vpop.f32.mrf.mxu0
    %v6305 = vadd.f32 %v6229, %v6304
    %6306 = vmatmul.f32.gmra.mxu0 %v6261
    %v6307 = vpop.f32.mrf.mxu0
    %v6308 = vadd.f32 %v6232, %v6307
    %6309 = vmatmul.f32.gmra.mxu0 %v6264
    %v6310 = vpop.f32.mrf.mxu0
    %v6311 = vadd.f32 %v6235, %v6310
    %6312 = vmatmul.f32.gmra.mxu0 %v6267
    %v6313 = vpop.f32.mrf.mxu0
    %v6314 = vadd.f32 %v6238, %v6313
    %6315 = vmatmul.f32.gmra.mxu0 %v6270
    %v6316 = vpop.f32.mrf.mxu0
    %v6317 = vadd.f32 %v6241, %v6316
    %6318 = vmatmul.f32.gmra.mxu0 %v6273
    %v6319 = vpop.f32.mrf.mxu0
    %v6320 = vadd.f32 %v6244, %v6319
    %6321 = vmatmul.f32.gmra.mxu0 %v6276
    %v6322 = vpop.f32.mrf.mxu0
    %6323 = vdwg.mxu0
    %v6324 = vld [vmem:[%s2 + $0xc8] sm:$0xf]
    %v6325 = vld [vmem:[%s2 + $0xcc] sm:$0xf]
    %v6326 = vld [vmem:[%s2 + $0xd0] sm:$0xf]
    %v6327 = vld [vmem:[%s2 + $0xd4] sm:$0xf]
    %v6328 = vld [vmem:[%s2 + $0xd8] sm:$0xf]
    %v6329 = vld [vmem:[%s2 + $0xdc] sm:$0xf]
    %v6330 = vld [vmem:[%s2 + $0xe0] sm:$0xf]
    %v6331 = vld [vmem:[%s2 + $0xe4] sm:$0xf]
    %v6332 = vld [vmem:[%s2 + $0xe8] sm:$0xf]
    %v6333 = vld [vmem:[%s2 + $0xec] sm:$0xf]
    %v6334 = vunpack.c.l.bf16 %v6324
    %v6335 = vunpack.c.l.bf16 %v6325
    %v6336 = vunpack.c.l.bf16 %v6326
    %v6337 = vunpack.c.l.bf16 %v6327
    %v6338 = vunpack.c.l.bf16 %v6328
    %v6339 = vunpack.c.l.bf16 %v6329
    %v6340 = vunpack.c.l.bf16 %v6330
    %v6341 = vunpack.c.l.bf16 %v6331
    %v6342 = vunpack.c.l.bf16 %v6332
    %v6343 = vunpack.c.l.bf16 %v6333
    %v6345 = vsel %vm5510, %v6334, 0
    %v6348 = vsel %vm5510, %v6335, 0
    %v6351 = vsel %vm5510, %v6336, 0
    %v6354 = vsel %vm5510, %v6337, 0
    %v6357 = vsel %vm5510, %v6338, 0
    %v6360 = vsel %vm5510, %v6339, 0
    %v6363 = vsel %vm5510, %v6340, 0
    %v6366 = vsel %vm5510, %v6341, 0
    %v6369 = vsel %vm5510, %v6342, 0
    %v6372 = vsel %vm5510, %v6343, 0
    %6374 = vmatpush.msra.mxu0 0.0
    %6375 = vmatpush.msra.mxu0 0.0
    %6376 = vmatpush.msra.mxu0 0.0
    %6377 = vmatpush.msra.mxu0 0.0
    %6378 = vmatpush.msra.mxu0 0.0
    %6379 = vmatpush.msra.mxu0 0.0
    %6380 = vmatpush.msra.mxu0 0.0
    %6381 = vmatpush.msra.mxu0 0.0
    %6382 = vmatpush.msra.mxu0 %v5489
    %6383 = vmatpush.msra.mxu0 %v5488
    %6384 = vmatpush.msra.mxu0 %v5487
    %6385 = vmatpush.msra.mxu0 %v5486
    %6386 = vmatpush.msra.mxu0 %v5485
    %6387 = vmatpush.msra.mxu0 %v5484
    %6388 = vmatpush.msra.mxu0 %v5483
    %6389 = vmatpush.msra.mxu0 %v5482
    %6390 = vmatmul.f32.gmra.mxu0 %v6345
    %v6391 = vpop.f32.mrf.mxu0
    %v6392 = vadd.f32 0.0, %v6391
    %6393 = vmatmul.f32.gmra.mxu0 %v6348
    %v6394 = vpop.f32.mrf.mxu0
    %v6395 = vadd.f32 0.0, %v6394
    %6396 = vmatmul.f32.gmra.mxu0 %v6351
    %v6397 = vpop.f32.mrf.mxu0
    %v6398 = vadd.f32 0.0, %v6397
    %6399 = vmatmul.f32.gmra.mxu0 %v6354
    %v6400 = vpop.f32.mrf.mxu0
    %v6401 = vadd.f32 0.0, %v6400
    %6402 = vmatmul.f32.gmra.mxu0 %v6357
    %v6403 = vpop.f32.mrf.mxu0
    %v6404 = vadd.f32 0.0, %v6403
    %6405 = vmatmul.f32.gmra.mxu0 %v6360
    %v6406 = vpop.f32.mrf.mxu0
    %v6407 = vadd.f32 0.0, %v6406
    %6408 = vmatmul.f32.gmra.mxu0 %v6363
    %v6409 = vpop.f32.mrf.mxu0
    %v6410 = vadd.f32 0.0, %v6409
    %6411 = vmatmul.f32.gmra.mxu0 %v6366
    %v6412 = vpop.f32.mrf.mxu0
    %v6413 = vadd.f32 0.0, %v6412
    %6414 = vmatmul.f32.gmra.mxu0 %v6369
    %v6415 = vpop.f32.mrf.mxu0
    %v6416 = vadd.f32 0.0, %v6415
    %6417 = vmatmul.f32.gmra.mxu0 %v6372
    %v6418 = vpop.f32.mrf.mxu0
    %v6419 = vadd.f32 0.0, %v6418
    %6420 = vdwg.mxu0
    %s6421 = scalar_lea.vmem %s7, 320
    %v6422 = vld [vmem:[%s6421] sm:$0xff]
    %v6423 = vld [vmem:[%s6421 + $0x8] sm:$0xff]
    %v6424 = vld [vmem:[%s6421 + $0x10] sm:$0xff]
    %v6425 = vld [vmem:[%s6421 + $0x18] sm:$0xff]
    %v6426 = vld [vmem:[%s6421 + $0x20] sm:$0xff]
    %v6427 = vld [vmem:[%s6421 + $0x28] sm:$0xff]
    %v6428 = vld [vmem:[%s6421 + $0x30] sm:$0xff]
    %v6429 = vld [vmem:[%s6421 + $0x38] sm:$0xff]
    %v6431 = vsel %vm5510, %v6392, 0
    %v6434 = vsel %vm5510, %v6395, 0
    %v6437 = vsel %vm5510, %v6398, 0
    %v6440 = vsel %vm5510, %v6401, 0
    %v6443 = vsel %vm5510, %v6404, 0
    %v6446 = vsel %vm5510, %v6407, 0
    %v6449 = vsel %vm5510, %v6410, 0
    %v6452 = vsel %vm5510, %v6413, 0
    %v6455 = vsel %vm5510, %v6416, 0
    %v6458 = vsel %vm5510, %v6419, 0
    %6460 = vmatpush.msra.mxu0 0.0
    %6461 = vmatpush.msra.mxu0 0.0
    %6462 = vmatpush.msra.mxu0 0.0
    %6463 = vmatpush.msra.mxu0 0.0
    %6464 = vmatpush.msra.mxu0 0.0
    %6465 = vmatpush.msra.mxu0 0.0
    %6466 = vmatpush.msra.mxu0 0.0
    %6467 = vmatpush.msra.mxu0 0.0
    %6468 = vmatpush.msra.mxu0 %v6429
    %6469 = vmatpush.msra.mxu0 %v6428
    %6470 = vmatpush.msra.mxu0 %v6427
    %6471 = vmatpush.msra.mxu0 %v6426
    %6472 = vmatpush.msra.mxu0 %v6425
    %6473 = vmatpush.msra.mxu0 %v6424
    %6474 = vmatpush.msra.mxu0 %v6423
    %6475 = vmatpush.msra.mxu0 %v6422
    %6476 = vmatmul.f32.gmra.mxu0 %v6431
    %v6477 = vpop.f32.mrf.mxu0
    %v6478 = vadd.f32 0.0, %v6477
    %6479 = vmatmul.f32.gmra.mxu0 %v6434
    %v6480 = vpop.f32.mrf.mxu0
    %v6481 = vadd.f32 0.0, %v6480
    %6482 = vmatmul.f32.gmra.mxu0 %v6437
    %v6483 = vpop.f32.mrf.mxu0
    %v6484 = vadd.f32 0.0, %v6483
    %6485 = vmatmul.f32.gmra.mxu0 %v6440
    %v6486 = vpop.f32.mrf.mxu0
    %v6487 = vadd.f32 0.0, %v6486
    %6488 = vmatmul.f32.gmra.mxu0 %v6443
    %v6489 = vpop.f32.mrf.mxu0
    %v6490 = vadd.f32 0.0, %v6489
    %6491 = vmatmul.f32.gmra.mxu0 %v6446
    %v6492 = vpop.f32.mrf.mxu0
    %v6493 = vadd.f32 0.0, %v6492
    %6494 = vmatmul.f32.gmra.mxu0 %v6449
    %v6495 = vpop.f32.mrf.mxu0
    %v6496 = vadd.f32 0.0, %v6495
    %6497 = vmatmul.f32.gmra.mxu0 %v6452
    %v6498 = vpop.f32.mrf.mxu0
    %v6499 = vadd.f32 0.0, %v6498
    %6500 = vmatmul.f32.gmra.mxu0 %v6455
    %v6501 = vpop.f32.mrf.mxu0
    %v6502 = vadd.f32 0.0, %v6501
    %6503 = vmatmul.f32.gmra.mxu0 %v6458
    %v6504 = vpop.f32.mrf.mxu0
    %6505 = vdwg.mxu0
    %v6507 = vsel %vm5510, %v5770, 0
    %v6510 = vsel %vm5510, %v5773, 0
    %v6513 = vsel %vm5510, %v5776, 0
    %v6516 = vsel %vm5510, %v5779, 0
    %v6519 = vsel %vm5510, %v5782, 0
    %v6522 = vsel %vm5510, %v5785, 0
    %v6525 = vsel %vm5510, %v5788, 0
    %v6528 = vsel %vm5510, %v5791, 0
    %v6531 = vsel %vm5510, %v5794, 0
    %v6534 = vsel %vm5510, %v5797, 0
    %6536 = vmatpush.msra.mxu0 0.0
    %6537 = vmatpush.msra.mxu0 0.0
    %6538 = vmatpush.msra.mxu0 0.0
    %6539 = vmatpush.msra.mxu0 0.0
    %6540 = vmatpush.msra.mxu0 0.0
    %6541 = vmatpush.msra.mxu0 0.0
    %6542 = vmatpush.msra.mxu0 0.0
    %6543 = vmatpush.msra.mxu0 0.0
    %6544 = vmatpush.msra.mxu0 %v5807
    %6545 = vmatpush.msra.mxu0 %v5806
    %6546 = vmatpush.msra.mxu0 %v5805
    %6547 = vmatpush.msra.mxu0 %v5804
    %6548 = vmatpush.msra.mxu0 %v5803
    %6549 = vmatpush.msra.mxu0 %v5802
    %6550 = vmatpush.msra.mxu0 %v5801
    %6551 = vmatpush.msra.mxu0 %v5800
    %6552 = vmatmul.f32.gmra.mxu0 %v6507
    %v6553 = vpop.f32.mrf.mxu0
    %v6554 = vadd.f32 %v6478, %v6553
    %6555 = vmatmul.f32.gmra.mxu0 %v6510
    %v6556 = vpop.f32.mrf.mxu0
    %v6557 = vadd.f32 %v6481, %v6556
    %6558 = vmatmul.f32.gmra.mxu0 %v6513
    %v6559 = vpop.f32.mrf.mxu0
    %v6560 = vadd.f32 %v6484, %v6559
    %6561 = vmatmul.f32.gmra.mxu0 %v6516
    %v6562 = vpop.f32.mrf.mxu0
    %v6563 = vadd.f32 %v6487, %v6562
    %6564 = vmatmul.f32.gmra.mxu0 %v6519
    %v6565 = vpop.f32.mrf.mxu0
    %v6566 = vadd.f32 %v6490, %v6565
    %6567 = vmatmul.f32.gmra.mxu0 %v6522
    %v6568 = vpop.f32.mrf.mxu0
    %v6569 = vadd.f32 %v6493, %v6568
    %6570 = vmatmul.f32.gmra.mxu0 %v6525
    %v6571 = vpop.f32.mrf.mxu0
    %v6572 = vadd.f32 %v6496, %v6571
    %6573 = vmatmul.f32.gmra.mxu0 %v6528
    %v6574 = vpop.f32.mrf.mxu0
    %v6575 = vadd.f32 %v6499, %v6574
    %6576 = vmatmul.f32.gmra.mxu0 %v6531
    %v6577 = vpop.f32.mrf.mxu0
    %v6578 = vadd.f32 %v6502, %v6577
    %6579 = vmatmul.f32.gmra.mxu0 %v6534
    %v6580 = vpop.f32.mrf.mxu0
    %6581 = vdwg.mxu0
    %v6582 = vld [vmem:[%s2 + $0xf0] sm:$0xf]
    %v6583 = vld [vmem:[%s2 + $0xf4] sm:$0xf]
    %v6584 = vld [vmem:[%s2 + $0xf8] sm:$0xf]
    %v6585 = vld [vmem:[%s2 + $0xfc] sm:$0xf]
    %v6586 = vld [vmem:[%s2 + $0x100] sm:$0xf]
    %v6587 = vld [vmem:[%s2 + $0x104] sm:$0xf]
    %v6588 = vld [vmem:[%s2 + $0x108] sm:$0xf]
    %v6589 = vld [vmem:[%s2 + $0x10c] sm:$0xf]
    %v6590 = vld [vmem:[%s2 + $0x110] sm:$0xf]
    %v6591 = vld [vmem:[%s2 + $0x114] sm:$0xf]
    %v6592 = vunpack.c.l.bf16 %v6582
    %v6593 = vunpack.c.l.bf16 %v6583
    %v6594 = vunpack.c.l.bf16 %v6584
    %v6595 = vunpack.c.l.bf16 %v6585
    %v6596 = vunpack.c.l.bf16 %v6586
    %v6597 = vunpack.c.l.bf16 %v6587
    %v6598 = vunpack.c.l.bf16 %v6588
    %v6599 = vunpack.c.l.bf16 %v6589
    %v6600 = vunpack.c.l.bf16 %v6590
    %v6601 = vunpack.c.l.bf16 %v6591
    %v6603 = vsel %vm5510, %v6592, 0
    %v6606 = vsel %vm5510, %v6593, 0
    %v6609 = vsel %vm5510, %v6594, 0
    %v6612 = vsel %vm5510, %v6595, 0
    %v6615 = vsel %vm5510, %v6596, 0
    %v6618 = vsel %vm5510, %v6597, 0
    %v6621 = vsel %vm5510, %v6598, 0
    %v6624 = vsel %vm5510, %v6599, 0
    %v6627 = vsel %vm5510, %v6600, 0
    %v6630 = vsel %vm5510, %v6601, 0
    %6632 = vmatpush.msra.mxu0 0.0
    %6633 = vmatpush.msra.mxu0 0.0
    %6634 = vmatpush.msra.mxu0 0.0
    %6635 = vmatpush.msra.mxu0 0.0
    %6636 = vmatpush.msra.mxu0 0.0
    %6637 = vmatpush.msra.mxu0 0.0
    %6638 = vmatpush.msra.mxu0 0.0
    %6639 = vmatpush.msra.mxu0 0.0
    %6640 = vmatpush.msra.mxu0 %v5489
    %6641 = vmatpush.msra.mxu0 %v5488
    %6642 = vmatpush.msra.mxu0 %v5487
    %6643 = vmatpush.msra.mxu0 %v5486
    %6644 = vmatpush.msra.mxu0 %v5485
    %6645 = vmatpush.msra.mxu0 %v5484
    %6646 = vmatpush.msra.mxu0 %v5483
    %6647 = vmatpush.msra.mxu0 %v5482
    %6648 = vmatmul.f32.gmra.mxu0 %v6603
    %v6649 = vpop.f32.mrf.mxu0
    %v6650 = vadd.f32 0.0, %v6649
    %6651 = vmatmul.f32.gmra.mxu0 %v6606
    %v6652 = vpop.f32.mrf.mxu0
    %v6653 = vadd.f32 0.0, %v6652
    %6654 = vmatmul.f32.gmra.mxu0 %v6609
    %v6655 = vpop.f32.mrf.mxu0
    %v6656 = vadd.f32 0.0, %v6655
    %6657 = vmatmul.f32.gmra.mxu0 %v6612
    %v6658 = vpop.f32.mrf.mxu0
    %v6659 = vadd.f32 0.0, %v6658
    %6660 = vmatmul.f32.gmra.mxu0 %v6615
    %v6661 = vpop.f32.mrf.mxu0
    %v6662 = vadd.f32 0.0, %v6661
    %6663 = vmatmul.f32.gmra.mxu0 %v6618
    %v6664 = vpop.f32.mrf.mxu0
    %v6665 = vadd.f32 0.0, %v6664
    %6666 = vmatmul.f32.gmra.mxu0 %v6621
    %v6667 = vpop.f32.mrf.mxu0
    %v6668 = vadd.f32 0.0, %v6667
    %6669 = vmatmul.f32.gmra.mxu0 %v6624
    %v6670 = vpop.f32.mrf.mxu0
    %v6671 = vadd.f32 0.0, %v6670
    %6672 = vmatmul.f32.gmra.mxu0 %v6627
    %v6673 = vpop.f32.mrf.mxu0
    %v6674 = vadd.f32 0.0, %v6673
    %6675 = vmatmul.f32.gmra.mxu0 %v6630
    %v6676 = vpop.f32.mrf.mxu0
    %v6677 = vadd.f32 0.0, %v6676
    %6678 = vdwg.mxu0
    %s6679 = scalar_lea.vmem %s7, 384
    %v6680 = vld [vmem:[%s6679] sm:$0xff]
    %v6681 = vld [vmem:[%s6679 + $0x8] sm:$0xff]
    %v6682 = vld [vmem:[%s6679 + $0x10] sm:$0xff]
    %v6683 = vld [vmem:[%s6679 + $0x18] sm:$0xff]
    %v6684 = vld [vmem:[%s6679 + $0x20] sm:$0xff]
    %v6685 = vld [vmem:[%s6679 + $0x28] sm:$0xff]
    %v6686 = vld [vmem:[%s6679 + $0x30] sm:$0xff]
    %v6687 = vld [vmem:[%s6679 + $0x38] sm:$0xff]
    %v6689 = vsel %vm5510, %v6650, 0
    %v6692 = vsel %vm5510, %v6653, 0
    %v6695 = vsel %vm5510, %v6656, 0
    %v6698 = vsel %vm5510, %v6659, 0
    %v6701 = vsel %vm5510, %v6662, 0
    %v6704 = vsel %vm5510, %v6665, 0
    %v6707 = vsel %vm5510, %v6668, 0
    %v6710 = vsel %vm5510, %v6671, 0
    %v6713 = vsel %vm5510, %v6674, 0
    %v6716 = vsel %vm5510, %v6677, 0
    %6718 = vmatpush.msra.mxu0 0.0
    %6719 = vmatpush.msra.mxu0 0.0
    %6720 = vmatpush.msra.mxu0 0.0
    %6721 = vmatpush.msra.mxu0 0.0
    %6722 = vmatpush.msra.mxu0 0.0
    %6723 = vmatpush.msra.mxu0 0.0
    %6724 = vmatpush.msra.mxu0 0.0
    %6725 = vmatpush.msra.mxu0 0.0
    %6726 = vmatpush.msra.mxu0 %v6687
    %6727 = vmatpush.msra.mxu0 %v6686
    %6728 = vmatpush.msra.mxu0 %v6685
    %6729 = vmatpush.msra.mxu0 %v6684
    %6730 = vmatpush.msra.mxu0 %v6683
    %6731 = vmatpush.msra.mxu0 %v6682
    %6732 = vmatpush.msra.mxu0 %v6681
    %6733 = vmatpush.msra.mxu0 %v6680
    %6734 = vmatmul.f32.gmra.mxu0 %v6689
    %v6735 = vpop.f32.mrf.mxu0
    %v6736 = vadd.f32 0.0, %v6735
    %6737 = vmatmul.f32.gmra.mxu0 %v6692
    %v6738 = vpop.f32.mrf.mxu0
    %v6739 = vadd.f32 0.0, %v6738
    %6740 = vmatmul.f32.gmra.mxu0 %v6695
    %v6741 = vpop.f32.mrf.mxu0
    %v6742 = vadd.f32 0.0, %v6741
    %6743 = vmatmul.f32.gmra.mxu0 %v6698
    %v6744 = vpop.f32.mrf.mxu0
    %v6745 = vadd.f32 0.0, %v6744
    %6746 = vmatmul.f32.gmra.mxu0 %v6701
    %v6747 = vpop.f32.mrf.mxu0
    %v6748 = vadd.f32 0.0, %v6747
    %6749 = vmatmul.f32.gmra.mxu0 %v6704
    %v6750 = vpop.f32.mrf.mxu0
    %v6751 = vadd.f32 0.0, %v6750
    %6752 = vmatmul.f32.gmra.mxu0 %v6707
    %v6753 = vpop.f32.mrf.mxu0
    %v6754 = vadd.f32 0.0, %v6753
    %6755 = vmatmul.f32.gmra.mxu0 %v6710
    %v6756 = vpop.f32.mrf.mxu0
    %v6757 = vadd.f32 0.0, %v6756
    %6758 = vmatmul.f32.gmra.mxu0 %v6713
    %v6759 = vpop.f32.mrf.mxu0
    %v6760 = vadd.f32 0.0, %v6759
    %6761 = vmatmul.f32.gmra.mxu0 %v6716
    %v6762 = vpop.f32.mrf.mxu0
    %6763 = vdwg.mxu0
    %v6764 = vadd.f32 %v6038, %v6736
    %v6765 = vadd.f32 %v6041, %v6739
    %v6766 = vadd.f32 %v6044, %v6742
    %v6767 = vadd.f32 %v6047, %v6745
    %v6768 = vadd.f32 %v6050, %v6748
    %v6769 = vadd.f32 %v6053, %v6751
    %v6770 = vadd.f32 %v6056, %v6754
    %v6771 = vadd.f32 %v6059, %v6757
    %v6772 = vadd.f32 %v6062, %v6760
    %v6773 = vld [vmem:[%s2 + $0x118] sm:$0xf]
    %v6774 = vld [vmem:[%s2 + $0x11c] sm:$0xf]
    %v6775 = vld [vmem:[%s2 + $0x120] sm:$0xf]
    %v6776 = vld [vmem:[%s2 + $0x124] sm:$0xf]
    %v6777 = vld [vmem:[%s2 + $0x128] sm:$0xf]
    %v6778 = vld [vmem:[%s2 + $0x12c] sm:$0xf]
    %v6779 = vld [vmem:[%s2 + $0x130] sm:$0xf]
    %v6780 = vld [vmem:[%s2 + $0x134] sm:$0xf]
    %v6781 = vld [vmem:[%s2 + $0x138] sm:$0xf]
    %v6782 = vld [vmem:[%s2 + $0x13c] sm:$0xf]
    %v6783 = vunpack.c.l.bf16 %v6773
    %v6784 = vunpack.c.l.bf16 %v6774
    %v6785 = vunpack.c.l.bf16 %v6775
    %v6786 = vunpack.c.l.bf16 %v6776
    %v6787 = vunpack.c.l.bf16 %v6777
    %v6788 = vunpack.c.l.bf16 %v6778
    %v6789 = vunpack.c.l.bf16 %v6779
    %v6790 = vunpack.c.l.bf16 %v6780
    %v6791 = vunpack.c.l.bf16 %v6781
    %v6792 = vunpack.c.l.bf16 %v6782
    %v6794 = vsel %vm5510, %v6783, 0
    %v6797 = vsel %vm5510, %v6784, 0
    %v6800 = vsel %vm5510, %v6785, 0
    %v6803 = vsel %vm5510, %v6786, 0
    %v6806 = vsel %vm5510, %v6787, 0
    %v6809 = vsel %vm5510, %v6788, 0
    %v6812 = vsel %vm5510, %v6789, 0
    %v6815 = vsel %vm5510, %v6790, 0
    %v6818 = vsel %vm5510, %v6791, 0
    %v6821 = vsel %vm5510, %v6792, 0
    %6823 = vmatpush.msra.mxu0 0.0
    %6824 = vmatpush.msra.mxu0 0.0
    %6825 = vmatpush.msra.mxu0 0.0
    %6826 = vmatpush.msra.mxu0 0.0
    %6827 = vmatpush.msra.mxu0 0.0
    %6828 = vmatpush.msra.mxu0 0.0
    %6829 = vmatpush.msra.mxu0 0.0
    %6830 = vmatpush.msra.mxu0 0.0
    %6831 = vmatpush.msra.mxu0 %v5489
    %6832 = vmatpush.msra.mxu0 %v5488
    %6833 = vmatpush.msra.mxu0 %v5487
    %6834 = vmatpush.msra.mxu0 %v5486
    %6835 = vmatpush.msra.mxu0 %v5485
    %6836 = vmatpush.msra.mxu0 %v5484
    %6837 = vmatpush.msra.mxu0 %v5483
    %6838 = vmatpush.msra.mxu0 %v5482
    %6839 = vmatmul.f32.gmra.mxu0 %v6794
    %v6840 = vpop.f32.mrf.mxu0
    %v6841 = vadd.f32 0.0, %v6840
    %6842 = vmatmul.f32.gmra.mxu0 %v6797
    %v6843 = vpop.f32.mrf.mxu0
    %v6844 = vadd.f32 0.0, %v6843
    %6845 = vmatmul.f32.gmra.mxu0 %v6800
    %v6846 = vpop.f32.mrf.mxu0
    %v6847 = vadd.f32 0.0, %v6846
    %6848 = vmatmul.f32.gmra.mxu0 %v6803
    %v6849 = vpop.f32.mrf.mxu0
    %v6850 = vadd.f32 0.0, %v6849
    %6851 = vmatmul.f32.gmra.mxu0 %v6806
    %v6852 = vpop.f32.mrf.mxu0
    %v6853 = vadd.f32 0.0, %v6852
    %6854 = vmatmul.f32.gmra.mxu0 %v6809
    %v6855 = vpop.f32.mrf.mxu0
    %v6856 = vadd.f32 0.0, %v6855
    %6857 = vmatmul.f32.gmra.mxu0 %v6812
    %v6858 = vpop.f32.mrf.mxu0
    %v6859 = vadd.f32 0.0, %v6858
    %6860 = vmatmul.f32.gmra.mxu0 %v6815
    %v6861 = vpop.f32.mrf.mxu0
    %v6862 = vadd.f32 0.0, %v6861
    %6863 = vmatmul.f32.gmra.mxu0 %v6818
    %v6864 = vpop.f32.mrf.mxu0
    %v6865 = vadd.f32 0.0, %v6864
    %6866 = vmatmul.f32.gmra.mxu0 %v6821
    %v6867 = vpop.f32.mrf.mxu0
    %v6868 = vadd.f32 0.0, %v6867
    %6869 = vdwg.mxu0
    %s6870 = scalar_lea.vmem %s7, 448
    %v6871 = vld [vmem:[%s6870] sm:$0xff]
    %v6872 = vld [vmem:[%s6870 + $0x8] sm:$0xff]
    %v6873 = vld [vmem:[%s6870 + $0x10] sm:$0xff]
    %v6874 = vld [vmem:[%s6870 + $0x18] sm:$0xff]
    %v6875 = vld [vmem:[%s6870 + $0x20] sm:$0xff]
    %v6876 = vld [vmem:[%s6870 + $0x28] sm:$0xff]
    %v6877 = vld [vmem:[%s6870 + $0x30] sm:$0xff]
    %v6878 = vld [vmem:[%s6870 + $0x38] sm:$0xff]
    %v6880 = vsel %vm5510, %v6841, 0
    %v6883 = vsel %vm5510, %v6844, 0
    %v6886 = vsel %vm5510, %v6847, 0
    %v6889 = vsel %vm5510, %v6850, 0
    %v6892 = vsel %vm5510, %v6853, 0
    %v6895 = vsel %vm5510, %v6856, 0
    %v6898 = vsel %vm5510, %v6859, 0
    %v6901 = vsel %vm5510, %v6862, 0
    %v6904 = vsel %vm5510, %v6865, 0
    %v6907 = vsel %vm5510, %v6868, 0
    %6909 = vmatpush.msra.mxu0 0.0
    %6910 = vmatpush.msra.mxu0 0.0
    %6911 = vmatpush.msra.mxu0 0.0
    %6912 = vmatpush.msra.mxu0 0.0
    %6913 = vmatpush.msra.mxu0 0.0
    %6914 = vmatpush.msra.mxu0 0.0
    %6915 = vmatpush.msra.mxu0 0.0
    %6916 = vmatpush.msra.mxu0 0.0
    %6917 = vmatpush.msra.mxu0 %v6878
    %6918 = vmatpush.msra.mxu0 %v6877
    %6919 = vmatpush.msra.mxu0 %v6876
    %6920 = vmatpush.msra.mxu0 %v6875
    %6921 = vmatpush.msra.mxu0 %v6874
    %6922 = vmatpush.msra.mxu0 %v6873
    %6923 = vmatpush.msra.mxu0 %v6872
    %6924 = vmatpush.msra.mxu0 %v6871
    %6925 = vmatmul.f32.gmra.mxu0 %v6880
    %v6926 = vpop.f32.mrf.mxu0
    %v6927 = vadd.f32 0.0, %v6926
    %6928 = vmatmul.f32.gmra.mxu0 %v6883
    %v6929 = vpop.f32.mrf.mxu0
    %v6930 = vadd.f32 0.0, %v6929
    %6931 = vmatmul.f32.gmra.mxu0 %v6886
    %v6932 = vpop.f32.mrf.mxu0
    %v6933 = vadd.f32 0.0, %v6932
    %6934 = vmatmul.f32.gmra.mxu0 %v6889
    %v6935 = vpop.f32.mrf.mxu0
    %v6936 = vadd.f32 0.0, %v6935
    %6937 = vmatmul.f32.gmra.mxu0 %v6892
    %v6938 = vpop.f32.mrf.mxu0
    %v6939 = vadd.f32 0.0, %v6938
    %6940 = vmatmul.f32.gmra.mxu0 %v6895
    %v6941 = vpop.f32.mrf.mxu0
    %v6942 = vadd.f32 0.0, %v6941
    %6943 = vmatmul.f32.gmra.mxu0 %v6898
    %v6944 = vpop.f32.mrf.mxu0
    %v6945 = vadd.f32 0.0, %v6944
    %6946 = vmatmul.f32.gmra.mxu0 %v6901
    %v6947 = vpop.f32.mrf.mxu0
    %v6948 = vadd.f32 0.0, %v6947
    %6949 = vmatmul.f32.gmra.mxu0 %v6904
    %v6950 = vpop.f32.mrf.mxu0
    %v6951 = vadd.f32 0.0, %v6950
    %6952 = vmatmul.f32.gmra.mxu0 %v6907
    %v6953 = vpop.f32.mrf.mxu0
    %6954 = vdwg.mxu0
    %v6955 = vadd.f32 %v6296, %v6927
    %v6956 = vadd.f32 %v6299, %v6930
    %v6957 = vadd.f32 %v6302, %v6933
    %v6958 = vadd.f32 %v6305, %v6936
    %v6959 = vadd.f32 %v6308, %v6939
    %v6960 = vadd.f32 %v6311, %v6942
    %v6961 = vadd.f32 %v6314, %v6945
    %v6962 = vadd.f32 %v6317, %v6948
    %v6963 = vadd.f32 %v6320, %v6951
    %v6964 = vld [vmem:[%s2 + $0x140] sm:$0xf]
    %v6965 = vld [vmem:[%s2 + $0x144] sm:$0xf]
    %v6966 = vld [vmem:[%s2 + $0x148] sm:$0xf]
    %v6967 = vld [vmem:[%s2 + $0x14c] sm:$0xf]
    %v6968 = vld [vmem:[%s2 + $0x150] sm:$0xf]
    %v6969 = vld [vmem:[%s2 + $0x154] sm:$0xf]
    %v6970 = vld [vmem:[%s2 + $0x158] sm:$0xf]
    %v6971 = vld [vmem:[%s2 + $0x15c] sm:$0xf]
    %v6972 = vld [vmem:[%s2 + $0x160] sm:$0xf]
    %v6973 = vld [vmem:[%s2 + $0x164] sm:$0xf]
    %v6974 = vunpack.c.l.bf16 %v6964
    %v6975 = vunpack.c.l.bf16 %v6965
    %v6976 = vunpack.c.l.bf16 %v6966
    %v6977 = vunpack.c.l.bf16 %v6967
    %v6978 = vunpack.c.l.bf16 %v6968
    %v6979 = vunpack.c.l.bf16 %v6969
    %v6980 = vunpack.c.l.bf16 %v6970
    %v6981 = vunpack.c.l.bf16 %v6971
    %v6982 = vunpack.c.l.bf16 %v6972
    %v6983 = vunpack.c.l.bf16 %v6973
    %v6985 = vsel %vm5510, %v6974, 0
    %v6988 = vsel %vm5510, %v6975, 0
    %v6991 = vsel %vm5510, %v6976, 0
    %v6994 = vsel %vm5510, %v6977, 0
    %v6997 = vsel %vm5510, %v6978, 0
    %v7000 = vsel %vm5510, %v6979, 0
    %v7003 = vsel %vm5510, %v6980, 0
    %v7006 = vsel %vm5510, %v6981, 0
    %v7009 = vsel %vm5510, %v6982, 0
    %v7012 = vsel %vm5510, %v6983, 0
    %7014 = vmatpush.msra.mxu0 0.0
    %7015 = vmatpush.msra.mxu0 0.0
    %7016 = vmatpush.msra.mxu0 0.0
    %7017 = vmatpush.msra.mxu0 0.0
    %7018 = vmatpush.msra.mxu0 0.0
    %7019 = vmatpush.msra.mxu0 0.0
    %7020 = vmatpush.msra.mxu0 0.0
    %7021 = vmatpush.msra.mxu0 0.0
    %7022 = vmatpush.msra.mxu0 %v5489
    %7023 = vmatpush.msra.mxu0 %v5488
    %7024 = vmatpush.msra.mxu0 %v5487
    %7025 = vmatpush.msra.mxu0 %v5486
    %7026 = vmatpush.msra.mxu0 %v5485
    %7027 = vmatpush.msra.mxu0 %v5484
    %7028 = vmatpush.msra.mxu0 %v5483
    %7029 = vmatpush.msra.mxu0 %v5482
    %7030 = vmatmul.f32.gmra.mxu0 %v6985
    %v7031 = vpop.f32.mrf.mxu0
    %v7032 = vadd.f32 0.0, %v7031
    %7033 = vmatmul.f32.gmra.mxu0 %v6988
    %v7034 = vpop.f32.mrf.mxu0
    %v7035 = vadd.f32 0.0, %v7034
    %7036 = vmatmul.f32.gmra.mxu0 %v6991
    %v7037 = vpop.f32.mrf.mxu0
    %v7038 = vadd.f32 0.0, %v7037
    %7039 = vmatmul.f32.gmra.mxu0 %v6994
    %v7040 = vpop.f32.mrf.mxu0
    %v7041 = vadd.f32 0.0, %v7040
    %7042 = vmatmul.f32.gmra.mxu0 %v6997
    %v7043 = vpop.f32.mrf.mxu0
    %v7044 = vadd.f32 0.0, %v7043
    %7045 = vmatmul.f32.gmra.mxu0 %v7000
    %v7046 = vpop.f32.mrf.mxu0
    %v7047 = vadd.f32 0.0, %v7046
    %7048 = vmatmul.f32.gmra.mxu0 %v7003
    %v7049 = vpop.f32.mrf.mxu0
    %v7050 = vadd.f32 0.0, %v7049
    %7051 = vmatmul.f32.gmra.mxu0 %v7006
    %v7052 = vpop.f32.mrf.mxu0
    %v7053 = vadd.f32 0.0, %v7052
    %7054 = vmatmul.f32.gmra.mxu0 %v7009
    %v7055 = vpop.f32.mrf.mxu0
    %v7056 = vadd.f32 0.0, %v7055
    %7057 = vmatmul.f32.gmra.mxu0 %v7012
    %v7058 = vpop.f32.mrf.mxu0
    %v7059 = vadd.f32 0.0, %v7058
    %7060 = vdwg.mxu0
    %s7061 = scalar_lea.vmem %s7, 512
    %v7062 = vld [vmem:[%s7061] sm:$0xff]
    %v7063 = vld [vmem:[%s7061 + $0x8] sm:$0xff]
    %v7064 = vld [vmem:[%s7061 + $0x10] sm:$0xff]
    %v7065 = vld [vmem:[%s7061 + $0x18] sm:$0xff]
    %v7066 = vld [vmem:[%s7061 + $0x20] sm:$0xff]
    %v7067 = vld [vmem:[%s7061 + $0x28] sm:$0xff]
    %v7068 = vld [vmem:[%s7061 + $0x30] sm:$0xff]
    %v7069 = vld [vmem:[%s7061 + $0x38] sm:$0xff]
    %v7071 = vsel %vm5510, %v7032, 0
    %v7074 = vsel %vm5510, %v7035, 0
    %v7077 = vsel %vm5510, %v7038, 0
    %v7080 = vsel %vm5510, %v7041, 0
    %v7083 = vsel %vm5510, %v7044, 0
    %v7086 = vsel %vm5510, %v7047, 0
    %v7089 = vsel %vm5510, %v7050, 0
    %v7092 = vsel %vm5510, %v7053, 0
    %v7095 = vsel %vm5510, %v7056, 0
    %v7098 = vsel %vm5510, %v7059, 0
    %7100 = vmatpush.msra.mxu0 0.0
    %7101 = vmatpush.msra.mxu0 0.0
    %7102 = vmatpush.msra.mxu0 0.0
    %7103 = vmatpush.msra.mxu0 0.0
    %7104 = vmatpush.msra.mxu0 0.0
    %7105 = vmatpush.msra.mxu0 0.0
    %7106 = vmatpush.msra.mxu0 0.0
    %7107 = vmatpush.msra.mxu0 0.0
    %7108 = vmatpush.msra.mxu0 %v7069
    %7109 = vmatpush.msra.mxu0 %v7068
    %7110 = vmatpush.msra.mxu0 %v7067
    %7111 = vmatpush.msra.mxu0 %v7066
    %7112 = vmatpush.msra.mxu0 %v7065
    %7113 = vmatpush.msra.mxu0 %v7064
    %7114 = vmatpush.msra.mxu0 %v7063
    %7115 = vmatpush.msra.mxu0 %v7062
    %7116 = vmatmul.f32.gmra.mxu0 %v7071
    %v7117 = vpop.f32.mrf.mxu0
    %v7118 = vadd.f32 0.0, %v7117
    %7119 = vmatmul.f32.gmra.mxu0 %v7074
    %v7120 = vpop.f32.mrf.mxu0
    %v7121 = vadd.f32 0.0, %v7120
    %7122 = vmatmul.f32.gmra.mxu0 %v7077
    %v7123 = vpop.f32.mrf.mxu0
    %v7124 = vadd.f32 0.0, %v7123
    %7125 = vmatmul.f32.gmra.mxu0 %v7080
    %v7126 = vpop.f32.mrf.mxu0
    %v7127 = vadd.f32 0.0, %v7126
    %7128 = vmatmul.f32.gmra.mxu0 %v7083
    %v7129 = vpop.f32.mrf.mxu0
    %v7130 = vadd.f32 0.0, %v7129
    %7131 = vmatmul.f32.gmra.mxu0 %v7086
    %v7132 = vpop.f32.mrf.mxu0
    %v7133 = vadd.f32 0.0, %v7132
    %7134 = vmatmul.f32.gmra.mxu0 %v7089
    %v7135 = vpop.f32.mrf.mxu0
    %v7136 = vadd.f32 0.0, %v7135
    %7137 = vmatmul.f32.gmra.mxu0 %v7092
    %v7138 = vpop.f32.mrf.mxu0
    %v7139 = vadd.f32 0.0, %v7138
    %7140 = vmatmul.f32.gmra.mxu0 %v7095
    %v7141 = vpop.f32.mrf.mxu0
    %v7142 = vadd.f32 0.0, %v7141
    %7143 = vmatmul.f32.gmra.mxu0 %v7098
    %v7144 = vpop.f32.mrf.mxu0
    %7145 = vdwg.mxu0
    %v7146 = vadd.f32 %v6554, %v7118
    %v7147 = vadd.f32 %v6557, %v7121
    %v7148 = vadd.f32 %v6560, %v7124
    %v7149 = vadd.f32 %v6563, %v7127
    %v7150 = vadd.f32 %v6566, %v7130
    %v7151 = vadd.f32 %v6569, %v7133
    %v7152 = vadd.f32 %v6572, %v7136
    %v7153 = vadd.f32 %v6575, %v7139
    %v7154 = vadd.f32 %v6578, %v7142
    %v7155 = vadd.f32 %v6764, %v6955
    %v7156 = vadd.f32 %v6765, %v6956
    %v7157 = vadd.f32 %v6766, %v6957
    %v7158 = vadd.f32 %v6767, %v6958
    %v7159 = vadd.f32 %v6768, %v6959
    %v7160 = vadd.f32 %v6769, %v6960
    %v7161 = vadd.f32 %v6770, %v6961
    %v7162 = vadd.f32 %v6771, %v6962
    %v7163 = vadd.f32 %v6772, %v6963
    %v7164 = vadd.f32 %v7155, %v7146
    %v7165 = vadd.f32 %v7156, %v7147
    %v7166 = vadd.f32 %v7157, %v7148
    %v7167 = vadd.f32 %v7158, %v7149
    %v7168 = vadd.f32 %v7159, %v7150
    %v7169 = vadd.f32 %v7160, %v7151
    %v7170 = vadd.f32 %v7161, %v7152
    %v7171 = vadd.f32 %v7162, %v7153
    %v7172 = vadd.f32 %v7163, %v7154
    %v7173 = vld [vmem:[%s8] sm:$0x1]
    %v7175 = vperm.slane %v7173, 0
    %v7177 = vadd.f32 %v7164, %v7175
    %v7178 = vadd.f32 %v7165, %v7175
    %v7179 = vadd.f32 %v7166, %v7175
    %v7180 = vadd.f32 %v7167, %v7175
    %v7181 = vadd.f32 %v7168, %v7175
    %v7182 = vadd.f32 %v7169, %v7175
    %v7183 = vadd.f32 %v7170, %v7175
    %v7184 = vadd.f32 %v7171, %v7175
    %v7185 = vadd.f32 %v7172, %v7175
    %v7186 = vmax.f32 %v7177, 0.0
    %v7187 = vmax.f32 %v7178, 0.0
    %v7188 = vmax.f32 %v7179, 0.0
    %v7189 = vmax.f32 %v7180, 0.0
    %v7190 = vmax.f32 %v7181, 0.0
    %v7191 = vmax.f32 %v7182, 0.0
    %v7192 = vmax.f32 %v7183, 0.0
    %v7193 = vmax.f32 %v7184, 0.0
    %v7194 = vmax.f32 %v7185, 0.0
    %v7195 = vld [vmem:[%s9] sm:$0xff]
    %v7196 = vld [vmem:[%s9 + $0x8] sm:$0xff]
    %v7197 = vld [vmem:[%s9 + $0x10] sm:$0xff]
    %v7198 = vld [vmem:[%s9 + $0x18] sm:$0xff]
    %v7199 = vld [vmem:[%s9 + $0x20] sm:$0xff]
    %v7200 = vld [vmem:[%s9 + $0x28] sm:$0xff]
    %v7201 = vld [vmem:[%s9 + $0x30] sm:$0xff]
    %v7202 = vld [vmem:[%s9 + $0x38] sm:$0xff]
    %v7203 = vld [vmem:[%s9 + $0x40] sm:$0xff]
    %v7204 = vld [vmem:[%s9 + $0x48] sm:$0xff]
    %v7205 = vld [vmem:[%s9 + $0x50] sm:$0xff]
    %v7206 = vld [vmem:[%s9 + $0x58] sm:$0xff]
    %v7207 = vld [vmem:[%s9 + $0x60] sm:$0xff]
    %v7208 = vld [vmem:[%s9 + $0x68] sm:$0xff]
    %v7209 = vld [vmem:[%s9 + $0x70] sm:$0xff]
    %v7210 = vld [vmem:[%s9 + $0x78] sm:$0xff]
    %s7211 = scalar_lea.vmem %s9, 128
    %v7212 = vld [vmem:[%s7211] sm:$0xff]
    %v7213 = vld [vmem:[%s7211 + $0x8] sm:$0xff]
    %v7214 = vld [vmem:[%s7211 + $0x10] sm:$0xff]
    %v7215 = vld [vmem:[%s7211 + $0x18] sm:$0xff]
    %v7216 = vld [vmem:[%s7211 + $0x20] sm:$0xff]
    %v7217 = vld [vmem:[%s7211 + $0x28] sm:$0xff]
    %v7218 = vld [vmem:[%s7211 + $0x30] sm:$0xff]
    %v7219 = vld [vmem:[%s7211 + $0x38] sm:$0xff]
    %v7220 = vld [vmem:[%s7211 + $0x40] sm:$0xff]
    %v7221 = vld [vmem:[%s7211 + $0x48] sm:$0xff]
    %v7222 = vld [vmem:[%s7211 + $0x50] sm:$0xff]
    %v7223 = vld [vmem:[%s7211 + $0x58] sm:$0xff]
    %v7224 = vld [vmem:[%s7211 + $0x60] sm:$0xff]
    %v7225 = vld [vmem:[%s7211 + $0x68] sm:$0xff]
    %v7226 = vld [vmem:[%s7211 + $0x70] sm:$0xff]
    %v7227 = vld [vmem:[%s7211 + $0x78] sm:$0xff]
    %s7228 = scalar_lea.vmem %s9, 256
    %v7229 = vld [vmem:[%s7228] sm:$0xff]
    %v7230 = vld [vmem:[%s7228 + $0x8] sm:$0xff]
    %v7231 = vld [vmem:[%s7228 + $0x10] sm:$0xff]
    %v7232 = vld [vmem:[%s7228 + $0x18] sm:$0xff]
    %v7233 = vld [vmem:[%s7228 + $0x20] sm:$0xff]
    %v7234 = vld [vmem:[%s7228 + $0x28] sm:$0xff]
    %v7235 = vld [vmem:[%s7228 + $0x30] sm:$0xff]
    %v7236 = vld [vmem:[%s7228 + $0x38] sm:$0xff]
    %v7237 = vld [vmem:[%s7228 + $0x40] sm:$0xff]
    %v7238 = vld [vmem:[%s7228 + $0x48] sm:$0xff]
    %v7239 = vld [vmem:[%s7228 + $0x50] sm:$0xff]
    %v7240 = vld [vmem:[%s7228 + $0x58] sm:$0xff]
    %v7241 = vld [vmem:[%s7228 + $0x60] sm:$0xff]
    %v7242 = vld [vmem:[%s7228 + $0x68] sm:$0xff]
    %v7243 = vld [vmem:[%s7228 + $0x70] sm:$0xff]
    %v7244 = vld [vmem:[%s7228 + $0x78] sm:$0xff]
    %v7246 = vsel %vm5510, %v7188, 0
    %7248 = vmatpush.msra.mxu0 0.0
    %7249 = vmatpush.msra.mxu0 0.0
    %7250 = vmatpush.msra.mxu0 0.0
    %7251 = vmatpush.msra.mxu0 0.0
    %7252 = vmatpush.msra.mxu0 0.0
    %7253 = vmatpush.msra.mxu0 0.0
    %7254 = vmatpush.msra.mxu0 0.0
    %7255 = vmatpush.msra.mxu0 0.0
    %7256 = vmatpush.msra.mxu0 %v7243
    %7257 = vmatpush.msra.mxu0 %v7241
    %7258 = vmatpush.msra.mxu0 %v7239
    %7259 = vmatpush.msra.mxu0 %v7237
    %7260 = vmatpush.msra.mxu0 %v7235
    %7261 = vmatpush.msra.mxu0 %v7233
    %7262 = vmatpush.msra.mxu0 %v7231
    %7263 = vmatpush.msra.mxu0 %v7229
    %7264 = vmatmul.f32.gmra.mxu0 %v7246
    %v7265 = vpop.f32.mrf.mxu0
    %v7266 = vadd.f32 0.0, %v7265
    %7267 = vdwg.mxu0
    %7268 = vmatpush.msra.mxu0 0.0
    %7269 = vmatpush.msra.mxu0 0.0
    %7270 = vmatpush.msra.mxu0 0.0
    %7271 = vmatpush.msra.mxu0 0.0
    %7272 = vmatpush.msra.mxu0 0.0
    %7273 = vmatpush.msra.mxu0 0.0
    %7274 = vmatpush.msra.mxu0 0.0
    %7275 = vmatpush.msra.mxu0 0.0
    %7276 = vmatpush.msra.mxu0 %v7244
    %7277 = vmatpush.msra.mxu0 %v7242
    %7278 = vmatpush.msra.mxu0 %v7240
    %7279 = vmatpush.msra.mxu0 %v7238
    %7280 = vmatpush.msra.mxu0 %v7236
    %7281 = vmatpush.msra.mxu0 %v7234
    %7282 = vmatpush.msra.mxu0 %v7232
    %7283 = vmatpush.msra.mxu0 %v7230
    %7284 = vmatmul.f32.gmra.mxu0 %v7246
    %v7285 = vpop.f32.mrf.mxu0
    %v7286 = vadd.f32 0.0, %v7285
    %7287 = vdwg.mxu0
    %v7289 = vsel %vm5510, %v7186, 0
    %7291 = vmatpush.msra.mxu0 0.0
    %7292 = vmatpush.msra.mxu0 0.0
    %7293 = vmatpush.msra.mxu0 0.0
    %7294 = vmatpush.msra.mxu0 0.0
    %7295 = vmatpush.msra.mxu0 0.0
    %7296 = vmatpush.msra.mxu0 0.0
    %7297 = vmatpush.msra.mxu0 0.0
    %7298 = vmatpush.msra.mxu0 0.0
    %7299 = vmatpush.msra.mxu0 %v7209
    %7300 = vmatpush.msra.mxu0 %v7207
    %7301 = vmatpush.msra.mxu0 %v7205
    %7302 = vmatpush.msra.mxu0 %v7203
    %7303 = vmatpush.msra.mxu0 %v7201
    %7304 = vmatpush.msra.mxu0 %v7199
    %7305 = vmatpush.msra.mxu0 %v7197
    %7306 = vmatpush.msra.mxu0 %v7195
    %7307 = vmatmul.f32.gmra.mxu0 %v7289
    %v7308 = vpop.f32.mrf.mxu0
    %v7309 = vadd.f32 %v7266, %v7308
    %7310 = vdwg.mxu0
    %7311 = vmatpush.msra.mxu0 0.0
    %7312 = vmatpush.msra.mxu0 0.0
    %7313 = vmatpush.msra.mxu0 0.0
    %7314 = vmatpush.msra.mxu0 0.0
    %7315 = vmatpush.msra.mxu0 0.0
    %7316 = vmatpush.msra.mxu0 0.0
    %7317 = vmatpush.msra.mxu0 0.0
    %7318 = vmatpush.msra.mxu0 0.0
    %7319 = vmatpush.msra.mxu0 %v7210
    %7320 = vmatpush.msra.mxu0 %v7208
    %7321 = vmatpush.msra.mxu0 %v7206
    %7322 = vmatpush.msra.mxu0 %v7204
    %7323 = vmatpush.msra.mxu0 %v7202
    %7324 = vmatpush.msra.mxu0 %v7200
    %7325 = vmatpush.msra.mxu0 %v7198
    %7326 = vmatpush.msra.mxu0 %v7196
    %7327 = vmatmul.f32.gmra.mxu0 %v7289
    %v7328 = vpop.f32.mrf.mxu0
    %v7329 = vadd.f32 %v7286, %v7328
    %7330 = vdwg.mxu0
    %s7331 = scalar_lea.vmem %s9, 384
    %v7332 = vld [vmem:[%s7331] sm:$0xff]
    %v7333 = vld [vmem:[%s7331 + $0x8] sm:$0xff]
    %v7334 = vld [vmem:[%s7331 + $0x10] sm:$0xff]
    %v7335 = vld [vmem:[%s7331 + $0x18] sm:$0xff]
    %v7336 = vld [vmem:[%s7331 + $0x20] sm:$0xff]
    %v7337 = vld [vmem:[%s7331 + $0x28] sm:$0xff]
    %v7338 = vld [vmem:[%s7331 + $0x30] sm:$0xff]
    %v7339 = vld [vmem:[%s7331 + $0x38] sm:$0xff]
    %v7340 = vld [vmem:[%s7331 + $0x40] sm:$0xff]
    %v7341 = vld [vmem:[%s7331 + $0x48] sm:$0xff]
    %v7342 = vld [vmem:[%s7331 + $0x50] sm:$0xff]
    %v7343 = vld [vmem:[%s7331 + $0x58] sm:$0xff]
    %v7344 = vld [vmem:[%s7331 + $0x60] sm:$0xff]
    %v7345 = vld [vmem:[%s7331 + $0x68] sm:$0xff]
    %v7346 = vld [vmem:[%s7331 + $0x70] sm:$0xff]
    %v7347 = vld [vmem:[%s7331 + $0x78] sm:$0xff]
    %v7349 = vsel %vm5510, %v7189, 0
    %7351 = vmatpush.msra.mxu0 0.0
    %7352 = vmatpush.msra.mxu0 0.0
    %7353 = vmatpush.msra.mxu0 0.0
    %7354 = vmatpush.msra.mxu0 0.0
    %7355 = vmatpush.msra.mxu0 0.0
    %7356 = vmatpush.msra.mxu0 0.0
    %7357 = vmatpush.msra.mxu0 0.0
    %7358 = vmatpush.msra.mxu0 0.0
    %7359 = vmatpush.msra.mxu0 %v7346
    %7360 = vmatpush.msra.mxu0 %v7344
    %7361 = vmatpush.msra.mxu0 %v7342
    %7362 = vmatpush.msra.mxu0 %v7340
    %7363 = vmatpush.msra.mxu0 %v7338
    %7364 = vmatpush.msra.mxu0 %v7336
    %7365 = vmatpush.msra.mxu0 %v7334
    %7366 = vmatpush.msra.mxu0 %v7332
    %7367 = vmatmul.f32.gmra.mxu0 %v7349
    %v7368 = vpop.f32.mrf.mxu0
    %v7369 = vadd.f32 0.0, %v7368
    %7370 = vdwg.mxu0
    %7371 = vmatpush.msra.mxu0 0.0
    %7372 = vmatpush.msra.mxu0 0.0
    %7373 = vmatpush.msra.mxu0 0.0
    %7374 = vmatpush.msra.mxu0 0.0
    %7375 = vmatpush.msra.mxu0 0.0
    %7376 = vmatpush.msra.mxu0 0.0
    %7377 = vmatpush.msra.mxu0 0.0
    %7378 = vmatpush.msra.mxu0 0.0
    %7379 = vmatpush.msra.mxu0 %v7347
    %7380 = vmatpush.msra.mxu0 %v7345
    %7381 = vmatpush.msra.mxu0 %v7343
    %7382 = vmatpush.msra.mxu0 %v7341
    %7383 = vmatpush.msra.mxu0 %v7339
    %7384 = vmatpush.msra.mxu0 %v7337
    %7385 = vmatpush.msra.mxu0 %v7335
    %7386 = vmatpush.msra.mxu0 %v7333
    %7387 = vmatmul.f32.gmra.mxu0 %v7349
    %v7388 = vpop.f32.mrf.mxu0
    %v7389 = vadd.f32 0.0, %v7388
    %7390 = vdwg.mxu0
    %v7392 = vsel %vm5510, %v7187, 0
    %7394 = vmatpush.msra.mxu0 0.0
    %7395 = vmatpush.msra.mxu0 0.0
    %7396 = vmatpush.msra.mxu0 0.0
    %7397 = vmatpush.msra.mxu0 0.0
    %7398 = vmatpush.msra.mxu0 0.0
    %7399 = vmatpush.msra.mxu0 0.0
    %7400 = vmatpush.msra.mxu0 0.0
    %7401 = vmatpush.msra.mxu0 0.0
    %7402 = vmatpush.msra.mxu0 %v7226
    %7403 = vmatpush.msra.mxu0 %v7224
    %7404 = vmatpush.msra.mxu0 %v7222
    %7405 = vmatpush.msra.mxu0 %v7220
    %7406 = vmatpush.msra.mxu0 %v7218
    %7407 = vmatpush.msra.mxu0 %v7216
    %7408 = vmatpush.msra.mxu0 %v7214
    %7409 = vmatpush.msra.mxu0 %v7212
    %7410 = vmatmul.f32.gmra.mxu0 %v7392
    %v7411 = vpop.f32.mrf.mxu0
    %v7412 = vadd.f32 %v7369, %v7411
    %7413 = vdwg.mxu0
    %7414 = vmatpush.msra.mxu0 0.0
    %7415 = vmatpush.msra.mxu0 0.0
    %7416 = vmatpush.msra.mxu0 0.0
    %7417 = vmatpush.msra.mxu0 0.0
    %7418 = vmatpush.msra.mxu0 0.0
    %7419 = vmatpush.msra.mxu0 0.0
    %7420 = vmatpush.msra.mxu0 0.0
    %7421 = vmatpush.msra.mxu0 0.0
    %7422 = vmatpush.msra.mxu0 %v7227
    %7423 = vmatpush.msra.mxu0 %v7225
    %7424 = vmatpush.msra.mxu0 %v7223
    %7425 = vmatpush.msra.mxu0 %v7221
    %7426 = vmatpush.msra.mxu0 %v7219
    %7427 = vmatpush.msra.mxu0 %v7217
    %7428 = vmatpush.msra.mxu0 %v7215
    %7429 = vmatpush.msra.mxu0 %v7213
    %7430 = vmatmul.f32.gmra.mxu0 %v7392
    %v7431 = vpop.f32.mrf.mxu0
    %v7432 = vadd.f32 %v7389, %v7431
    %7433 = vdwg.mxu0
    %s7434 = scalar_lea.vmem %s9, 512
    %v7435 = vld [vmem:[%s7434] sm:$0xff]
    %v7436 = vld [vmem:[%s7434 + $0x8] sm:$0xff]
    %v7437 = vld [vmem:[%s7434 + $0x10] sm:$0xff]
    %v7438 = vld [vmem:[%s7434 + $0x18] sm:$0xff]
    %v7439 = vld [vmem:[%s7434 + $0x20] sm:$0xff]
    %v7440 = vld [vmem:[%s7434 + $0x28] sm:$0xff]
    %v7441 = vld [vmem:[%s7434 + $0x30] sm:$0xff]
    %v7442 = vld [vmem:[%s7434 + $0x38] sm:$0xff]
    %v7443 = vld [vmem:[%s7434 + $0x40] sm:$0xff]
    %v7444 = vld [vmem:[%s7434 + $0x48] sm:$0xff]
    %v7445 = vld [vmem:[%s7434 + $0x50] sm:$0xff]
    %v7446 = vld [vmem:[%s7434 + $0x58] sm:$0xff]
    %v7447 = vld [vmem:[%s7434 + $0x60] sm:$0xff]
    %v7448 = vld [vmem:[%s7434 + $0x68] sm:$0xff]
    %v7449 = vld [vmem:[%s7434 + $0x70] sm:$0xff]
    %v7450 = vld [vmem:[%s7434 + $0x78] sm:$0xff]
    %v7452 = vsel %vm5510, %v7190, 0
    %7454 = vmatpush.msra.mxu0 0.0
    %7455 = vmatpush.msra.mxu0 0.0
    %7456 = vmatpush.msra.mxu0 0.0
    %7457 = vmatpush.msra.mxu0 0.0
    %7458 = vmatpush.msra.mxu0 0.0
    %7459 = vmatpush.msra.mxu0 0.0
    %7460 = vmatpush.msra.mxu0 0.0
    %7461 = vmatpush.msra.mxu0 0.0
    %7462 = vmatpush.msra.mxu0 %v7449
    %7463 = vmatpush.msra.mxu0 %v7447
    %7464 = vmatpush.msra.mxu0 %v7445
    %7465 = vmatpush.msra.mxu0 %v7443
    %7466 = vmatpush.msra.mxu0 %v7441
    %7467 = vmatpush.msra.mxu0 %v7439
    %7468 = vmatpush.msra.mxu0 %v7437
    %7469 = vmatpush.msra.mxu0 %v7435
    %7470 = vmatmul.f32.gmra.mxu0 %v7452
    %v7471 = vpop.f32.mrf.mxu0
    %v7472 = vadd.f32 0.0, %v7471
    %7473 = vdwg.mxu0
    %7474 = vmatpush.msra.mxu0 0.0
    %7475 = vmatpush.msra.mxu0 0.0
    %7476 = vmatpush.msra.mxu0 0.0
    %7477 = vmatpush.msra.mxu0 0.0
    %7478 = vmatpush.msra.mxu0 0.0
    %7479 = vmatpush.msra.mxu0 0.0
    %7480 = vmatpush.msra.mxu0 0.0
    %7481 = vmatpush.msra.mxu0 0.0
    %7482 = vmatpush.msra.mxu0 %v7450
    %7483 = vmatpush.msra.mxu0 %v7448
    %7484 = vmatpush.msra.mxu0 %v7446
    %7485 = vmatpush.msra.mxu0 %v7444
    %7486 = vmatpush.msra.mxu0 %v7442
    %7487 = vmatpush.msra.mxu0 %v7440
    %7488 = vmatpush.msra.mxu0 %v7438
    %7489 = vmatpush.msra.mxu0 %v7436
    %7490 = vmatmul.f32.gmra.mxu0 %v7452
    %v7491 = vpop.f32.mrf.mxu0
    %v7492 = vadd.f32 0.0, %v7491
    %7493 = vdwg.mxu0
    %v7494 = vadd.f32 %v7309, %v7472
    %v7495 = vadd.f32 %v7329, %v7492
    %s7496 = scalar_lea.vmem %s9, 640
    %v7497 = vld [vmem:[%s7496] sm:$0xff]
    %v7498 = vld [vmem:[%s7496 + $0x8] sm:$0xff]
    %v7499 = vld [vmem:[%s7496 + $0x10] sm:$0xff]
    %v7500 = vld [vmem:[%s7496 + $0x18] sm:$0xff]
    %v7501 = vld [vmem:[%s7496 + $0x20] sm:$0xff]
    %v7502 = vld [vmem:[%s7496 + $0x28] sm:$0xff]
    %v7503 = vld [vmem:[%s7496 + $0x30] sm:$0xff]
    %v7504 = vld [vmem:[%s7496 + $0x38] sm:$0xff]
    %v7505 = vld [vmem:[%s7496 + $0x40] sm:$0xff]
    %v7506 = vld [vmem:[%s7496 + $0x48] sm:$0xff]
    %v7507 = vld [vmem:[%s7496 + $0x50] sm:$0xff]
    %v7508 = vld [vmem:[%s7496 + $0x58] sm:$0xff]
    %v7509 = vld [vmem:[%s7496 + $0x60] sm:$0xff]
    %v7510 = vld [vmem:[%s7496 + $0x68] sm:$0xff]
    %v7511 = vld [vmem:[%s7496 + $0x70] sm:$0xff]
    %v7512 = vld [vmem:[%s7496 + $0x78] sm:$0xff]
    %v7514 = vsel %vm5510, %v7191, 0
    %7516 = vmatpush.msra.mxu0 0.0
    %7517 = vmatpush.msra.mxu0 0.0
    %7518 = vmatpush.msra.mxu0 0.0
    %7519 = vmatpush.msra.mxu0 0.0
    %7520 = vmatpush.msra.mxu0 0.0
    %7521 = vmatpush.msra.mxu0 0.0
    %7522 = vmatpush.msra.mxu0 0.0
    %7523 = vmatpush.msra.mxu0 0.0
    %7524 = vmatpush.msra.mxu0 %v7511
    %7525 = vmatpush.msra.mxu0 %v7509
    %7526 = vmatpush.msra.mxu0 %v7507
    %7527 = vmatpush.msra.mxu0 %v7505
    %7528 = vmatpush.msra.mxu0 %v7503
    %7529 = vmatpush.msra.mxu0 %v7501
    %7530 = vmatpush.msra.mxu0 %v7499
    %7531 = vmatpush.msra.mxu0 %v7497
    %7532 = vmatmul.f32.gmra.mxu0 %v7514
    %v7533 = vpop.f32.mrf.mxu0
    %v7534 = vadd.f32 0.0, %v7533
    %7535 = vdwg.mxu0
    %7536 = vmatpush.msra.mxu0 0.0
    %7537 = vmatpush.msra.mxu0 0.0
    %7538 = vmatpush.msra.mxu0 0.0
    %7539 = vmatpush.msra.mxu0 0.0
    %7540 = vmatpush.msra.mxu0 0.0
    %7541 = vmatpush.msra.mxu0 0.0
    %7542 = vmatpush.msra.mxu0 0.0
    %7543 = vmatpush.msra.mxu0 0.0
    %7544 = vmatpush.msra.mxu0 %v7512
    %7545 = vmatpush.msra.mxu0 %v7510
    %7546 = vmatpush.msra.mxu0 %v7508
    %7547 = vmatpush.msra.mxu0 %v7506
    %7548 = vmatpush.msra.mxu0 %v7504
    %7549 = vmatpush.msra.mxu0 %v7502
    %7550 = vmatpush.msra.mxu0 %v7500
    %7551 = vmatpush.msra.mxu0 %v7498
    %7552 = vmatmul.f32.gmra.mxu0 %v7514
    %v7553 = vpop.f32.mrf.mxu0
    %v7554 = vadd.f32 0.0, %v7553
    %7555 = vdwg.mxu0
    %v7556 = vadd.f32 %v7412, %v7534
    %v7557 = vadd.f32 %v7432, %v7554
    %s7558 = scalar_lea.vmem %s9, 768
    %v7559 = vld [vmem:[%s7558] sm:$0xff]
    %v7560 = vld [vmem:[%s7558 + $0x8] sm:$0xff]
    %v7561 = vld [vmem:[%s7558 + $0x10] sm:$0xff]
    %v7562 = vld [vmem:[%s7558 + $0x18] sm:$0xff]
    %v7563 = vld [vmem:[%s7558 + $0x20] sm:$0xff]
    %v7564 = vld [vmem:[%s7558 + $0x28] sm:$0xff]
    %v7565 = vld [vmem:[%s7558 + $0x30] sm:$0xff]
    %v7566 = vld [vmem:[%s7558 + $0x38] sm:$0xff]
    %v7567 = vld [vmem:[%s7558 + $0x40] sm:$0xff]
    %v7568 = vld [vmem:[%s7558 + $0x48] sm:$0xff]
    %v7569 = vld [vmem:[%s7558 + $0x50] sm:$0xff]
    %v7570 = vld [vmem:[%s7558 + $0x58] sm:$0xff]
    %v7571 = vld [vmem:[%s7558 + $0x60] sm:$0xff]
    %v7572 = vld [vmem:[%s7558 + $0x68] sm:$0xff]
    %v7573 = vld [vmem:[%s7558 + $0x70] sm:$0xff]
    %v7574 = vld [vmem:[%s7558 + $0x78] sm:$0xff]
    %v7576 = vsel %vm5510, %v7192, 0
    %7578 = vmatpush.msra.mxu0 0.0
    %7579 = vmatpush.msra.mxu0 0.0
    %7580 = vmatpush.msra.mxu0 0.0
    %7581 = vmatpush.msra.mxu0 0.0
    %7582 = vmatpush.msra.mxu0 0.0
    %7583 = vmatpush.msra.mxu0 0.0
    %7584 = vmatpush.msra.mxu0 0.0
    %7585 = vmatpush.msra.mxu0 0.0
    %7586 = vmatpush.msra.mxu0 %v7573
    %7587 = vmatpush.msra.mxu0 %v7571
    %7588 = vmatpush.msra.mxu0 %v7569
    %7589 = vmatpush.msra.mxu0 %v7567
    %7590 = vmatpush.msra.mxu0 %v7565
    %7591 = vmatpush.msra.mxu0 %v7563
    %7592 = vmatpush.msra.mxu0 %v7561
    %7593 = vmatpush.msra.mxu0 %v7559
    %7594 = vmatmul.f32.gmra.mxu0 %v7576
    %v7595 = vpop.f32.mrf.mxu0
    %v7596 = vadd.f32 0.0, %v7595
    %7597 = vdwg.mxu0
    %7598 = vmatpush.msra.mxu0 0.0
    %7599 = vmatpush.msra.mxu0 0.0
    %7600 = vmatpush.msra.mxu0 0.0
    %7601 = vmatpush.msra.mxu0 0.0
    %7602 = vmatpush.msra.mxu0 0.0
    %7603 = vmatpush.msra.mxu0 0.0
    %7604 = vmatpush.msra.mxu0 0.0
    %7605 = vmatpush.msra.mxu0 0.0
    %7606 = vmatpush.msra.mxu0 %v7574
    %7607 = vmatpush.msra.mxu0 %v7572
    %7608 = vmatpush.msra.mxu0 %v7570
    %7609 = vmatpush.msra.mxu0 %v7568
    %7610 = vmatpush.msra.mxu0 %v7566
    %7611 = vmatpush.msra.mxu0 %v7564
    %7612 = vmatpush.msra.mxu0 %v7562
    %7613 = vmatpush.msra.mxu0 %v7560
    %7614 = vmatmul.f32.gmra.mxu0 %v7576
    %v7615 = vpop.f32.mrf.mxu0
    %v7616 = vadd.f32 0.0, %v7615
    %7617 = vdwg.mxu0
    %v7618 = vadd.f32 %v7494, %v7596
    %v7619 = vadd.f32 %v7495, %v7616
    %s7620 = scalar_lea.vmem %s9, 896
    %v7621 = vld [vmem:[%s7620] sm:$0xff]
    %v7622 = vld [vmem:[%s7620 + $0x8] sm:$0xff]
    %v7623 = vld [vmem:[%s7620 + $0x10] sm:$0xff]
    %v7624 = vld [vmem:[%s7620 + $0x18] sm:$0xff]
    %v7625 = vld [vmem:[%s7620 + $0x20] sm:$0xff]
    %v7626 = vld [vmem:[%s7620 + $0x28] sm:$0xff]
    %v7627 = vld [vmem:[%s7620 + $0x30] sm:$0xff]
    %v7628 = vld [vmem:[%s7620 + $0x38] sm:$0xff]
    %v7629 = vld [vmem:[%s7620 + $0x40] sm:$0xff]
    %v7630 = vld [vmem:[%s7620 + $0x48] sm:$0xff]
    %v7631 = vld [vmem:[%s7620 + $0x50] sm:$0xff]
    %v7632 = vld [vmem:[%s7620 + $0x58] sm:$0xff]
    %v7633 = vld [vmem:[%s7620 + $0x60] sm:$0xff]
    %v7634 = vld [vmem:[%s7620 + $0x68] sm:$0xff]
    %v7635 = vld [vmem:[%s7620 + $0x70] sm:$0xff]
    %v7636 = vld [vmem:[%s7620 + $0x78] sm:$0xff]
    %v7638 = vsel %vm5510, %v7193, 0
    %7640 = vmatpush.msra.mxu0 0.0
    %7641 = vmatpush.msra.mxu0 0.0
    %7642 = vmatpush.msra.mxu0 0.0
    %7643 = vmatpush.msra.mxu0 0.0
    %7644 = vmatpush.msra.mxu0 0.0
    %7645 = vmatpush.msra.mxu0 0.0
    %7646 = vmatpush.msra.mxu0 0.0
    %7647 = vmatpush.msra.mxu0 0.0
    %7648 = vmatpush.msra.mxu0 %v7635
    %7649 = vmatpush.msra.mxu0 %v7633
    %7650 = vmatpush.msra.mxu0 %v7631
    %7651 = vmatpush.msra.mxu0 %v7629
    %7652 = vmatpush.msra.mxu0 %v7627
    %7653 = vmatpush.msra.mxu0 %v7625
    %7654 = vmatpush.msra.mxu0 %v7623
    %7655 = vmatpush.msra.mxu0 %v7621
    %7656 = vmatmul.f32.gmra.mxu0 %v7638
    %v7657 = vpop.f32.mrf.mxu0
    %v7658 = vadd.f32 0.0, %v7657
    %7659 = vdwg.mxu0
    %7660 = vmatpush.msra.mxu0 0.0
    %7661 = vmatpush.msra.mxu0 0.0
    %7662 = vmatpush.msra.mxu0 0.0
    %7663 = vmatpush.msra.mxu0 0.0
    %7664 = vmatpush.msra.mxu0 0.0
    %7665 = vmatpush.msra.mxu0 0.0
    %7666 = vmatpush.msra.mxu0 0.0
    %7667 = vmatpush.msra.mxu0 0.0
    %7668 = vmatpush.msra.mxu0 %v7636
    %7669 = vmatpush.msra.mxu0 %v7634
    %7670 = vmatpush.msra.mxu0 %v7632
    %7671 = vmatpush.msra.mxu0 %v7630
    %7672 = vmatpush.msra.mxu0 %v7628
    %7673 = vmatpush.msra.mxu0 %v7626
    %7674 = vmatpush.msra.mxu0 %v7624
    %7675 = vmatpush.msra.mxu0 %v7622
    %7676 = vmatmul.f32.gmra.mxu0 %v7638
    %v7677 = vpop.f32.mrf.mxu0
    %v7678 = vadd.f32 0.0, %v7677
    %7679 = vdwg.mxu0
    %v7680 = vadd.f32 %v7556, %v7658
    %v7681 = vadd.f32 %v7557, %v7678
    %s7682 = scalar_lea.vmem %s9, 1024
    %v7683 = vld [vmem:[%s7682] sm:$0xff]
    %v7684 = vld [vmem:[%s7682 + $0x8] sm:$0xff]
    %v7685 = vld [vmem:[%s7682 + $0x10] sm:$0xff]
    %v7686 = vld [vmem:[%s7682 + $0x18] sm:$0xff]
    %v7687 = vld [vmem:[%s7682 + $0x20] sm:$0xff]
    %v7688 = vld [vmem:[%s7682 + $0x28] sm:$0xff]
    %v7689 = vld [vmem:[%s7682 + $0x30] sm:$0xff]
    %v7690 = vld [vmem:[%s7682 + $0x38] sm:$0xff]
    %v7691 = vld [vmem:[%s7682 + $0x40] sm:$0xff]
    %v7692 = vld [vmem:[%s7682 + $0x48] sm:$0xff]
    %v7693 = vld [vmem:[%s7682 + $0x50] sm:$0xff]
    %v7694 = vld [vmem:[%s7682 + $0x58] sm:$0xff]
    %v7695 = vld [vmem:[%s7682 + $0x60] sm:$0xff]
    %v7696 = vld [vmem:[%s7682 + $0x68] sm:$0xff]
    %v7697 = vld [vmem:[%s7682 + $0x70] sm:$0xff]
    %v7698 = vld [vmem:[%s7682 + $0x78] sm:$0xff]
    %v7700 = vsel %vm5510, %v7194, 0
    %7702 = vmatpush.msra.mxu0 0.0
    %7703 = vmatpush.msra.mxu0 0.0
    %7704 = vmatpush.msra.mxu0 0.0
    %7705 = vmatpush.msra.mxu0 0.0
    %7706 = vmatpush.msra.mxu0 0.0
    %7707 = vmatpush.msra.mxu0 0.0
    %7708 = vmatpush.msra.mxu0 0.0
    %7709 = vmatpush.msra.mxu0 0.0
    %7710 = vmatpush.msra.mxu0 %v7697
    %7711 = vmatpush.msra.mxu0 %v7695
    %7712 = vmatpush.msra.mxu0 %v7693
    %7713 = vmatpush.msra.mxu0 %v7691
    %7714 = vmatpush.msra.mxu0 %v7689
    %7715 = vmatpush.msra.mxu0 %v7687
    %7716 = vmatpush.msra.mxu0 %v7685
    %7717 = vmatpush.msra.mxu0 %v7683
    %7718 = vmatmul.f32.gmra.mxu0 %v7700
    %v7719 = vpop.f32.mrf.mxu0
    %v7720 = vadd.f32 0.0, %v7719
    %7721 = vdwg.mxu0
    %7722 = vmatpush.msra.mxu0 0.0
    %7723 = vmatpush.msra.mxu0 0.0
    %7724 = vmatpush.msra.mxu0 0.0
    %7725 = vmatpush.msra.mxu0 0.0
    %7726 = vmatpush.msra.mxu0 0.0
    %7727 = vmatpush.msra.mxu0 0.0
    %7728 = vmatpush.msra.mxu0 0.0
    %7729 = vmatpush.msra.mxu0 0.0
    %7730 = vmatpush.msra.mxu0 %v7698
    %7731 = vmatpush.msra.mxu0 %v7696
    %7732 = vmatpush.msra.mxu0 %v7694
    %7733 = vmatpush.msra.mxu0 %v7692
    %7734 = vmatpush.msra.mxu0 %v7690
    %7735 = vmatpush.msra.mxu0 %v7688
    %7736 = vmatpush.msra.mxu0 %v7686
    %7737 = vmatpush.msra.mxu0 %v7684
    %7738 = vmatmul.f32.gmra.mxu0 %v7700
    %v7739 = vpop.f32.mrf.mxu0
    %v7740 = vadd.f32 0.0, %v7739
    %7741 = vdwg.mxu0
    %v7742 = vadd.f32 %v7618, %v7720
    %v7743 = vadd.f32 %v7619, %v7740
    %v7744 = vadd.f32 %v7742, %v7680
    %v7745 = vadd.f32 %v7743, %v7681
    %v7746 = vld [vmem:[%s11] sm:$0x3]
    %v7748 = vperm.slane %v7746, 0
    %v7749 = vperm.slane %v7746, 1
    %v7752 = vadd.f32 %v7744, %v7748
    %v7753 = vadd.f32 %v7745, %v7749
    %v7754 = vld [vmem:[%s10] sm:$0xff]
    %v7755 = vld [vmem:[%s10 + $0x8] sm:$0xff]
    %v7756 = vld [vmem:[%s10 + $0x10] sm:$0xff]
    %v7757 = vld [vmem:[%s10 + $0x18] sm:$0xff]
    %v7758 = vld [vmem:[%s10 + $0x20] sm:$0xff]
    %v7759 = vld [vmem:[%s10 + $0x28] sm:$0xff]
    %v7760 = vld [vmem:[%s10 + $0x30] sm:$0xff]
    %v7761 = vld [vmem:[%s10 + $0x38] sm:$0xff]
    %v7762 = vld [vmem:[%s10 + $0x40] sm:$0xff]
    %v7763 = vld [vmem:[%s10 + $0x48] sm:$0xff]
    %v7764 = vld [vmem:[%s10 + $0x50] sm:$0xff]
    %v7765 = vld [vmem:[%s10 + $0x58] sm:$0xff]
    %v7766 = vld [vmem:[%s10 + $0x60] sm:$0xff]
    %v7767 = vld [vmem:[%s10 + $0x68] sm:$0xff]
    %v7768 = vld [vmem:[%s10 + $0x70] sm:$0xff]
    %v7769 = vld [vmem:[%s10 + $0x78] sm:$0xff]
    %s7770 = scalar_lea.vmem %s10, 128
    %v7771 = vld [vmem:[%s7770] sm:$0xff]
    %v7772 = vld [vmem:[%s7770 + $0x8] sm:$0xff]
    %v7773 = vld [vmem:[%s7770 + $0x10] sm:$0xff]
    %v7774 = vld [vmem:[%s7770 + $0x18] sm:$0xff]
    %v7775 = vld [vmem:[%s7770 + $0x20] sm:$0xff]
    %v7776 = vld [vmem:[%s7770 + $0x28] sm:$0xff]
    %v7777 = vld [vmem:[%s7770 + $0x30] sm:$0xff]
    %v7778 = vld [vmem:[%s7770 + $0x38] sm:$0xff]
    %v7779 = vld [vmem:[%s7770 + $0x40] sm:$0xff]
    %v7780 = vld [vmem:[%s7770 + $0x48] sm:$0xff]
    %v7781 = vld [vmem:[%s7770 + $0x50] sm:$0xff]
    %v7782 = vld [vmem:[%s7770 + $0x58] sm:$0xff]
    %v7783 = vld [vmem:[%s7770 + $0x60] sm:$0xff]
    %v7784 = vld [vmem:[%s7770 + $0x68] sm:$0xff]
    %v7785 = vld [vmem:[%s7770 + $0x70] sm:$0xff]
    %v7786 = vld [vmem:[%s7770 + $0x78] sm:$0xff]
    %s7787 = scalar_lea.vmem %s10, 256
    %v7788 = vld [vmem:[%s7787] sm:$0xff]
    %v7789 = vld [vmem:[%s7787 + $0x8] sm:$0xff]
    %v7790 = vld [vmem:[%s7787 + $0x10] sm:$0xff]
    %v7791 = vld [vmem:[%s7787 + $0x18] sm:$0xff]
    %v7792 = vld [vmem:[%s7787 + $0x20] sm:$0xff]
    %v7793 = vld [vmem:[%s7787 + $0x28] sm:$0xff]
    %v7794 = vld [vmem:[%s7787 + $0x30] sm:$0xff]
    %v7795 = vld [vmem:[%s7787 + $0x38] sm:$0xff]
    %v7796 = vld [vmem:[%s7787 + $0x40] sm:$0xff]
    %v7797 = vld [vmem:[%s7787 + $0x48] sm:$0xff]
    %v7798 = vld [vmem:[%s7787 + $0x50] sm:$0xff]
    %v7799 = vld [vmem:[%s7787 + $0x58] sm:$0xff]
    %v7800 = vld [vmem:[%s7787 + $0x60] sm:$0xff]
    %v7801 = vld [vmem:[%s7787 + $0x68] sm:$0xff]
    %v7802 = vld [vmem:[%s7787 + $0x70] sm:$0xff]
    %v7803 = vld [vmem:[%s7787 + $0x78] sm:$0xff]
    %7804 = vrot.lane.b32.xlu0 %v7188, 64
    %v7805 = vpop.permute.xlu0 %7804
    %v7806 = vsel %vm5510, %v7805, 0
    %7808 = vmatpush.msra.mxu0 0.0
    %7809 = vmatpush.msra.mxu0 0.0
    %7810 = vmatpush.msra.mxu0 0.0
    %7811 = vmatpush.msra.mxu0 0.0
    %7812 = vmatpush.msra.mxu0 0.0
    %7813 = vmatpush.msra.mxu0 0.0
    %7814 = vmatpush.msra.mxu0 0.0
    %7815 = vmatpush.msra.mxu0 0.0
    %7816 = vmatpush.msra.mxu0 %v7802
    %7817 = vmatpush.msra.mxu0 %v7800
    %7818 = vmatpush.msra.mxu0 %v7798
    %7819 = vmatpush.msra.mxu0 %v7796
    %7820 = vmatpush.msra.mxu0 %v7794
    %7821 = vmatpush.msra.mxu0 %v7792
    %7822 = vmatpush.msra.mxu0 %v7790
    %7823 = vmatpush.msra.mxu0 %v7788
    %7824 = vmatmul.f32.gmra.mxu0 %v7806
    %v7825 = vpop.f32.mrf.mxu0
    %v7826 = vadd.f32 0.0, %v7825
    %7827 = vdwg.mxu0
    %7828 = vmatpush.msra.mxu0 0.0
    %7829 = vmatpush.msra.mxu0 0.0
    %7830 = vmatpush.msra.mxu0 0.0
    %7831 = vmatpush.msra.mxu0 0.0
    %7832 = vmatpush.msra.mxu0 0.0
    %7833 = vmatpush.msra.mxu0 0.0
    %7834 = vmatpush.msra.mxu0 0.0
    %7835 = vmatpush.msra.mxu0 0.0
    %7836 = vmatpush.msra.mxu0 %v7803
    %7837 = vmatpush.msra.mxu0 %v7801
    %7838 = vmatpush.msra.mxu0 %v7799
    %7839 = vmatpush.msra.mxu0 %v7797
    %7840 = vmatpush.msra.mxu0 %v7795
    %7841 = vmatpush.msra.mxu0 %v7793
    %7842 = vmatpush.msra.mxu0 %v7791
    %7843 = vmatpush.msra.mxu0 %v7789
    %7844 = vmatmul.f32.gmra.mxu0 %v7806
    %v7845 = vpop.f32.mrf.mxu0
    %v7846 = vadd.f32 0.0, %v7845
    %7847 = vdwg.mxu0
    %7848 = vrot.lane.b32.xlu0 %v7186, 64
    %v7849 = vpop.permute.xlu0 %7848
    %v7850 = vsel %vm5510, %v7849, 0
    %7852 = vmatpush.msra.mxu0 0.0
    %7853 = vmatpush.msra.mxu0 0.0
    %7854 = vmatpush.msra.mxu0 0.0
    %7855 = vmatpush.msra.mxu0 0.0
    %7856 = vmatpush.msra.mxu0 0.0
    %7857 = vmatpush.msra.mxu0 0.0
    %7858 = vmatpush.msra.mxu0 0.0
    %7859 = vmatpush.msra.mxu0 0.0
    %7860 = vmatpush.msra.mxu0 %v7768
    %7861 = vmatpush.msra.mxu0 %v7766
    %7862 = vmatpush.msra.mxu0 %v7764
    %7863 = vmatpush.msra.mxu0 %v7762
    %7864 = vmatpush.msra.mxu0 %v7760
    %7865 = vmatpush.msra.mxu0 %v7758
    %7866 = vmatpush.msra.mxu0 %v7756
    %7867 = vmatpush.msra.mxu0 %v7754
    %7868 = vmatmul.f32.gmra.mxu0 %v7850
    %v7869 = vpop.f32.mrf.mxu0
    %v7870 = vadd.f32 %v7826, %v7869
    %7871 = vdwg.mxu0
    %7872 = vmatpush.msra.mxu0 0.0
    %7873 = vmatpush.msra.mxu0 0.0
    %7874 = vmatpush.msra.mxu0 0.0
    %7875 = vmatpush.msra.mxu0 0.0
    %7876 = vmatpush.msra.mxu0 0.0
    %7877 = vmatpush.msra.mxu0 0.0
    %7878 = vmatpush.msra.mxu0 0.0
    %7879 = vmatpush.msra.mxu0 0.0
    %7880 = vmatpush.msra.mxu0 %v7769
    %7881 = vmatpush.msra.mxu0 %v7767
    %7882 = vmatpush.msra.mxu0 %v7765
    %7883 = vmatpush.msra.mxu0 %v7763
    %7884 = vmatpush.msra.mxu0 %v7761
    %7885 = vmatpush.msra.mxu0 %v7759
    %7886 = vmatpush.msra.mxu0 %v7757
    %7887 = vmatpush.msra.mxu0 %v7755
    %7888 = vmatmul.f32.gmra.mxu0 %v7850
    %v7889 = vpop.f32.mrf.mxu0
    %v7890 = vadd.f32 %v7846, %v7889
    %7891 = vdwg.mxu0
    %s7892 = scalar_lea.vmem %s10, 384
    %v7893 = vld [vmem:[%s7892] sm:$0xff]
    %v7894 = vld [vmem:[%s7892 + $0x8] sm:$0xff]
    %v7895 = vld [vmem:[%s7892 + $0x10] sm:$0xff]
    %v7896 = vld [vmem:[%s7892 + $0x18] sm:$0xff]
    %v7897 = vld [vmem:[%s7892 + $0x20] sm:$0xff]
    %v7898 = vld [vmem:[%s7892 + $0x28] sm:$0xff]
    %v7899 = vld [vmem:[%s7892 + $0x30] sm:$0xff]
    %v7900 = vld [vmem:[%s7892 + $0x38] sm:$0xff]
    %v7901 = vld [vmem:[%s7892 + $0x40] sm:$0xff]
    %v7902 = vld [vmem:[%s7892 + $0x48] sm:$0xff]
    %v7903 = vld [vmem:[%s7892 + $0x50] sm:$0xff]
    %v7904 = vld [vmem:[%s7892 + $0x58] sm:$0xff]
    %v7905 = vld [vmem:[%s7892 + $0x60] sm:$0xff]
    %v7906 = vld [vmem:[%s7892 + $0x68] sm:$0xff]
    %v7907 = vld [vmem:[%s7892 + $0x70] sm:$0xff]
    %v7908 = vld [vmem:[%s7892 + $0x78] sm:$0xff]
    %7909 = vrot.lane.b32.xlu0 %v7189, 64
    %v7910 = vpop.permute.xlu0 %7909
    %v7911 = vsel %vm5510, %v7910, 0
    %7913 = vmatpush.msra.mxu0 0.0
    %7914 = vmatpush.msra.mxu0 0.0
    %7915 = vmatpush.msra.mxu0 0.0
    %7916 = vmatpush.msra.mxu0 0.0
    %7917 = vmatpush.msra.mxu0 0.0
    %7918 = vmatpush.msra.mxu0 0.0
    %7919 = vmatpush.msra.mxu0 0.0
    %7920 = vmatpush.msra.mxu0 0.0
    %7921 = vmatpush.msra.mxu0 %v7907
    %7922 = vmatpush.msra.mxu0 %v7905
    %7923 = vmatpush.msra.mxu0 %v7903
    %7924 = vmatpush.msra.mxu0 %v7901
    %7925 = vmatpush.msra.mxu0 %v7899
    %7926 = vmatpush.msra.mxu0 %v7897
    %7927 = vmatpush.msra.mxu0 %v7895
    %7928 = vmatpush.msra.mxu0 %v7893
    %7929 = vmatmul.f32.gmra.mxu0 %v7911
    %v7930 = vpop.f32.mrf.mxu0
    %v7931 = vadd.f32 0.0, %v7930
    %7932 = vdwg.mxu0
    %7933 = vmatpush.msra.mxu0 0.0
    %7934 = vmatpush.msra.mxu0 0.0
    %7935 = vmatpush.msra.mxu0 0.0
    %7936 = vmatpush.msra.mxu0 0.0
    %7937 = vmatpush.msra.mxu0 0.0
    %7938 = vmatpush.msra.mxu0 0.0
    %7939 = vmatpush.msra.mxu0 0.0
    %7940 = vmatpush.msra.mxu0 0.0
    %7941 = vmatpush.msra.mxu0 %v7908
    %7942 = vmatpush.msra.mxu0 %v7906
    %7943 = vmatpush.msra.mxu0 %v7904
    %7944 = vmatpush.msra.mxu0 %v7902
    %7945 = vmatpush.msra.mxu0 %v7900
    %7946 = vmatpush.msra.mxu0 %v7898
    %7947 = vmatpush.msra.mxu0 %v7896
    %7948 = vmatpush.msra.mxu0 %v7894
    %7949 = vmatmul.f32.gmra.mxu0 %v7911
    %v7950 = vpop.f32.mrf.mxu0
    %v7951 = vadd.f32 0.0, %v7950
    %7952 = vdwg.mxu0
    %7953 = vrot.lane.b32.xlu0 %v7187, 64
    %v7954 = vpop.permute.xlu0 %7953
    %v7955 = vsel %vm5510, %v7954, 0
    %7957 = vmatpush.msra.mxu0 0.0
    %7958 = vmatpush.msra.mxu0 0.0
    %7959 = vmatpush.msra.mxu0 0.0
    %7960 = vmatpush.msra.mxu0 0.0
    %7961 = vmatpush.msra.mxu0 0.0
    %7962 = vmatpush.msra.mxu0 0.0
    %7963 = vmatpush.msra.mxu0 0.0
    %7964 = vmatpush.msra.mxu0 0.0
    %7965 = vmatpush.msra.mxu0 %v7785
    %7966 = vmatpush.msra.mxu0 %v7783
    %7967 = vmatpush.msra.mxu0 %v7781
    %7968 = vmatpush.msra.mxu0 %v7779
    %7969 = vmatpush.msra.mxu0 %v7777
    %7970 = vmatpush.msra.mxu0 %v7775
    %7971 = vmatpush.msra.mxu0 %v7773
    %7972 = vmatpush.msra.mxu0 %v7771
    %7973 = vmatmul.f32.gmra.mxu0 %v7955
    %v7974 = vpop.f32.mrf.mxu0
    %v7975 = vadd.f32 %v7931, %v7974
    %7976 = vdwg.mxu0
    %7977 = vmatpush.msra.mxu0 0.0
    %7978 = vmatpush.msra.mxu0 0.0
    %7979 = vmatpush.msra.mxu0 0.0
    %7980 = vmatpush.msra.mxu0 0.0
    %7981 = vmatpush.msra.mxu0 0.0
    %7982 = vmatpush.msra.mxu0 0.0
    %7983 = vmatpush.msra.mxu0 0.0
    %7984 = vmatpush.msra.mxu0 0.0
    %7985 = vmatpush.msra.mxu0 %v7786
    %7986 = vmatpush.msra.mxu0 %v7784
    %7987 = vmatpush.msra.mxu0 %v7782
    %7988 = vmatpush.msra.mxu0 %v7780
    %7989 = vmatpush.msra.mxu0 %v7778
    %7990 = vmatpush.msra.mxu0 %v7776
    %7991 = vmatpush.msra.mxu0 %v7774
    %7992 = vmatpush.msra.mxu0 %v7772
    %7993 = vmatmul.f32.gmra.mxu0 %v7955
    %v7994 = vpop.f32.mrf.mxu0
    %v7995 = vadd.f32 %v7951, %v7994
    %7996 = vdwg.mxu0
    %s7997 = scalar_lea.vmem %s10, 512
    %v7998 = vld [vmem:[%s7997] sm:$0xff]
    %v7999 = vld [vmem:[%s7997 + $0x8] sm:$0xff]
    %v8000 = vld [vmem:[%s7997 + $0x10] sm:$0xff]
    %v8001 = vld [vmem:[%s7997 + $0x18] sm:$0xff]
    %v8002 = vld [vmem:[%s7997 + $0x20] sm:$0xff]
    %v8003 = vld [vmem:[%s7997 + $0x28] sm:$0xff]
    %v8004 = vld [vmem:[%s7997 + $0x30] sm:$0xff]
    %v8005 = vld [vmem:[%s7997 + $0x38] sm:$0xff]
    %v8006 = vld [vmem:[%s7997 + $0x40] sm:$0xff]
    %v8007 = vld [vmem:[%s7997 + $0x48] sm:$0xff]
    %v8008 = vld [vmem:[%s7997 + $0x50] sm:$0xff]
    %v8009 = vld [vmem:[%s7997 + $0x58] sm:$0xff]
    %v8010 = vld [vmem:[%s7997 + $0x60] sm:$0xff]
    %v8011 = vld [vmem:[%s7997 + $0x68] sm:$0xff]
    %v8012 = vld [vmem:[%s7997 + $0x70] sm:$0xff]
    %v8013 = vld [vmem:[%s7997 + $0x78] sm:$0xff]
    %8014 = vrot.lane.b32.xlu0 %v7190, 64
    %v8015 = vpop.permute.xlu0 %8014
    %v8016 = vsel %vm5510, %v8015, 0
    %8018 = vmatpush.msra.mxu0 0.0
    %8019 = vmatpush.msra.mxu0 0.0
    %8020 = vmatpush.msra.mxu0 0.0
    %8021 = vmatpush.msra.mxu0 0.0
    %8022 = vmatpush.msra.mxu0 0.0
    %8023 = vmatpush.msra.mxu0 0.0
    %8024 = vmatpush.msra.mxu0 0.0
    %8025 = vmatpush.msra.mxu0 0.0
    %8026 = vmatpush.msra.mxu0 %v8012
    %8027 = vmatpush.msra.mxu0 %v8010
    %8028 = vmatpush.msra.mxu0 %v8008
    %8029 = vmatpush.msra.mxu0 %v8006
    %8030 = vmatpush.msra.mxu0 %v8004
    %8031 = vmatpush.msra.mxu0 %v8002
    %8032 = vmatpush.msra.mxu0 %v8000
    %8033 = vmatpush.msra.mxu0 %v7998
    %8034 = vmatmul.f32.gmra.mxu0 %v8016
    %v8035 = vpop.f32.mrf.mxu0
    %v8036 = vadd.f32 0.0, %v8035
    %8037 = vdwg.mxu0
    %8038 = vmatpush.msra.mxu0 0.0
    %8039 = vmatpush.msra.mxu0 0.0
    %8040 = vmatpush.msra.mxu0 0.0
    %8041 = vmatpush.msra.mxu0 0.0
    %8042 = vmatpush.msra.mxu0 0.0
    %8043 = vmatpush.msra.mxu0 0.0
    %8044 = vmatpush.msra.mxu0 0.0
    %8045 = vmatpush.msra.mxu0 0.0
    %8046 = vmatpush.msra.mxu0 %v8013
    %8047 = vmatpush.msra.mxu0 %v8011
    %8048 = vmatpush.msra.mxu0 %v8009
    %8049 = vmatpush.msra.mxu0 %v8007
    %8050 = vmatpush.msra.mxu0 %v8005
    %8051 = vmatpush.msra.mxu0 %v8003
    %8052 = vmatpush.msra.mxu0 %v8001
    %8053 = vmatpush.msra.mxu0 %v7999
    %8054 = vmatmul.f32.gmra.mxu0 %v8016
    %v8055 = vpop.f32.mrf.mxu0
    %v8056 = vadd.f32 0.0, %v8055
    %8057 = vdwg.mxu0
    %v8058 = vadd.f32 %v7870, %v8036
    %v8059 = vadd.f32 %v7890, %v8056
    %s8060 = scalar_lea.vmem %s10, 640
    %v8061 = vld [vmem:[%s8060] sm:$0xff]
    %v8062 = vld [vmem:[%s8060 + $0x8] sm:$0xff]
    %v8063 = vld [vmem:[%s8060 + $0x10] sm:$0xff]
    %v8064 = vld [vmem:[%s8060 + $0x18] sm:$0xff]
    %v8065 = vld [vmem:[%s8060 + $0x20] sm:$0xff]
    %v8066 = vld [vmem:[%s8060 + $0x28] sm:$0xff]
    %v8067 = vld [vmem:[%s8060 + $0x30] sm:$0xff]
    %v8068 = vld [vmem:[%s8060 + $0x38] sm:$0xff]
    %v8069 = vld [vmem:[%s8060 + $0x40] sm:$0xff]
    %v8070 = vld [vmem:[%s8060 + $0x48] sm:$0xff]
    %v8071 = vld [vmem:[%s8060 + $0x50] sm:$0xff]
    %v8072 = vld [vmem:[%s8060 + $0x58] sm:$0xff]
    %v8073 = vld [vmem:[%s8060 + $0x60] sm:$0xff]
    %v8074 = vld [vmem:[%s8060 + $0x68] sm:$0xff]
    %v8075 = vld [vmem:[%s8060 + $0x70] sm:$0xff]
    %v8076 = vld [vmem:[%s8060 + $0x78] sm:$0xff]
    %8077 = vrot.lane.b32.xlu0 %v7191, 64
    %v8078 = vpop.permute.xlu0 %8077
    %v8079 = vsel %vm5510, %v8078, 0
    %8081 = vmatpush.msra.mxu0 0.0
    %8082 = vmatpush.msra.mxu0 0.0
    %8083 = vmatpush.msra.mxu0 0.0
    %8084 = vmatpush.msra.mxu0 0.0
    %8085 = vmatpush.msra.mxu0 0.0
    %8086 = vmatpush.msra.mxu0 0.0
    %8087 = vmatpush.msra.mxu0 0.0
    %8088 = vmatpush.msra.mxu0 0.0
    %8089 = vmatpush.msra.mxu0 %v8075
    %8090 = vmatpush.msra.mxu0 %v8073
    %8091 = vmatpush.msra.mxu0 %v8071
    %8092 = vmatpush.msra.mxu0 %v8069
    %8093 = vmatpush.msra.mxu0 %v8067
    %8094 = vmatpush.msra.mxu0 %v8065
    %8095 = vmatpush.msra.mxu0 %v8063
    %8096 = vmatpush.msra.mxu0 %v8061
    %8097 = vmatmul.f32.gmra.mxu0 %v8079
    %v8098 = vpop.f32.mrf.mxu0
    %v8099 = vadd.f32 0.0, %v8098
    %8100 = vdwg.mxu0
    %8101 = vmatpush.msra.mxu0 0.0
    %8102 = vmatpush.msra.mxu0 0.0
    %8103 = vmatpush.msra.mxu0 0.0
    %8104 = vmatpush.msra.mxu0 0.0
    %8105 = vmatpush.msra.mxu0 0.0
    %8106 = vmatpush.msra.mxu0 0.0
    %8107 = vmatpush.msra.mxu0 0.0
    %8108 = vmatpush.msra.mxu0 0.0
    %8109 = vmatpush.msra.mxu0 %v8076
    %8110 = vmatpush.msra.mxu0 %v8074
    %8111 = vmatpush.msra.mxu0 %v8072
    %8112 = vmatpush.msra.mxu0 %v8070
    %8113 = vmatpush.msra.mxu0 %v8068
    %8114 = vmatpush.msra.mxu0 %v8066
    %8115 = vmatpush.msra.mxu0 %v8064
    %8116 = vmatpush.msra.mxu0 %v8062
    %8117 = vmatmul.f32.gmra.mxu0 %v8079
    %v8118 = vpop.f32.mrf.mxu0
    %v8119 = vadd.f32 0.0, %v8118
    %8120 = vdwg.mxu0
    %v8121 = vadd.f32 %v7975, %v8099
    %v8122 = vadd.f32 %v7995, %v8119
    %s8123 = scalar_lea.vmem %s10, 768
    %v8124 = vld [vmem:[%s8123] sm:$0xff]
    %v8125 = vld [vmem:[%s8123 + $0x8] sm:$0xff]
    %v8126 = vld [vmem:[%s8123 + $0x10] sm:$0xff]
    %v8127 = vld [vmem:[%s8123 + $0x18] sm:$0xff]
    %v8128 = vld [vmem:[%s8123 + $0x20] sm:$0xff]
    %v8129 = vld [vmem:[%s8123 + $0x28] sm:$0xff]
    %v8130 = vld [vmem:[%s8123 + $0x30] sm:$0xff]
    %v8131 = vld [vmem:[%s8123 + $0x38] sm:$0xff]
    %v8132 = vld [vmem:[%s8123 + $0x40] sm:$0xff]
    %v8133 = vld [vmem:[%s8123 + $0x48] sm:$0xff]
    %v8134 = vld [vmem:[%s8123 + $0x50] sm:$0xff]
    %v8135 = vld [vmem:[%s8123 + $0x58] sm:$0xff]
    %v8136 = vld [vmem:[%s8123 + $0x60] sm:$0xff]
    %v8137 = vld [vmem:[%s8123 + $0x68] sm:$0xff]
    %v8138 = vld [vmem:[%s8123 + $0x70] sm:$0xff]
    %v8139 = vld [vmem:[%s8123 + $0x78] sm:$0xff]
    %8140 = vrot.lane.b32.xlu0 %v7192, 64
    %v8141 = vpop.permute.xlu0 %8140
    %v8142 = vsel %vm5510, %v8141, 0
    %8144 = vmatpush.msra.mxu0 0.0
    %8145 = vmatpush.msra.mxu0 0.0
    %8146 = vmatpush.msra.mxu0 0.0
    %8147 = vmatpush.msra.mxu0 0.0
    %8148 = vmatpush.msra.mxu0 0.0
    %8149 = vmatpush.msra.mxu0 0.0
    %8150 = vmatpush.msra.mxu0 0.0
    %8151 = vmatpush.msra.mxu0 0.0
    %8152 = vmatpush.msra.mxu0 %v8138
    %8153 = vmatpush.msra.mxu0 %v8136
    %8154 = vmatpush.msra.mxu0 %v8134
    %8155 = vmatpush.msra.mxu0 %v8132
    %8156 = vmatpush.msra.mxu0 %v8130
    %8157 = vmatpush.msra.mxu0 %v8128
    %8158 = vmatpush.msra.mxu0 %v8126
    %8159 = vmatpush.msra.mxu0 %v8124
    %8160 = vmatmul.f32.gmra.mxu0 %v8142
    %v8161 = vpop.f32.mrf.mxu0
    %v8162 = vadd.f32 0.0, %v8161
    %8163 = vdwg.mxu0
    %8164 = vmatpush.msra.mxu0 0.0
    %8165 = vmatpush.msra.mxu0 0.0
    %8166 = vmatpush.msra.mxu0 0.0
    %8167 = vmatpush.msra.mxu0 0.0
    %8168 = vmatpush.msra.mxu0 0.0
    %8169 = vmatpush.msra.mxu0 0.0
    %8170 = vmatpush.msra.mxu0 0.0
    %8171 = vmatpush.msra.mxu0 0.0
    %8172 = vmatpush.msra.mxu0 %v8139
    %8173 = vmatpush.msra.mxu0 %v8137
    %8174 = vmatpush.msra.mxu0 %v8135
    %8175 = vmatpush.msra.mxu0 %v8133
    %8176 = vmatpush.msra.mxu0 %v8131
    %8177 = vmatpush.msra.mxu0 %v8129
    %8178 = vmatpush.msra.mxu0 %v8127
    %8179 = vmatpush.msra.mxu0 %v8125
    %8180 = vmatmul.f32.gmra.mxu0 %v8142
    %v8181 = vpop.f32.mrf.mxu0
    %v8182 = vadd.f32 0.0, %v8181
    %8183 = vdwg.mxu0
    %v8184 = vadd.f32 %v8058, %v8162
    %v8185 = vadd.f32 %v8059, %v8182
    %s8186 = scalar_lea.vmem %s10, 896
    %v8187 = vld [vmem:[%s8186] sm:$0xff]
    %v8188 = vld [vmem:[%s8186 + $0x8] sm:$0xff]
    %v8189 = vld [vmem:[%s8186 + $0x10] sm:$0xff]
    %v8190 = vld [vmem:[%s8186 + $0x18] sm:$0xff]
    %v8191 = vld [vmem:[%s8186 + $0x20] sm:$0xff]
    %v8192 = vld [vmem:[%s8186 + $0x28] sm:$0xff]
    %v8193 = vld [vmem:[%s8186 + $0x30] sm:$0xff]
    %v8194 = vld [vmem:[%s8186 + $0x38] sm:$0xff]
    %v8195 = vld [vmem:[%s8186 + $0x40] sm:$0xff]
    %v8196 = vld [vmem:[%s8186 + $0x48] sm:$0xff]
    %v8197 = vld [vmem:[%s8186 + $0x50] sm:$0xff]
    %v8198 = vld [vmem:[%s8186 + $0x58] sm:$0xff]
    %v8199 = vld [vmem:[%s8186 + $0x60] sm:$0xff]
    %v8200 = vld [vmem:[%s8186 + $0x68] sm:$0xff]
    %v8201 = vld [vmem:[%s8186 + $0x70] sm:$0xff]
    %v8202 = vld [vmem:[%s8186 + $0x78] sm:$0xff]
    %8203 = vrot.lane.b32.xlu0 %v7193, 64
    %v8204 = vpop.permute.xlu0 %8203
    %v8205 = vsel %vm5510, %v8204, 0
    %8207 = vmatpush.msra.mxu0 0.0
    %8208 = vmatpush.msra.mxu0 0.0
    %8209 = vmatpush.msra.mxu0 0.0
    %8210 = vmatpush.msra.mxu0 0.0
    %8211 = vmatpush.msra.mxu0 0.0
    %8212 = vmatpush.msra.mxu0 0.0
    %8213 = vmatpush.msra.mxu0 0.0
    %8214 = vmatpush.msra.mxu0 0.0
    %8215 = vmatpush.msra.mxu0 %v8201
    %8216 = vmatpush.msra.mxu0 %v8199
    %8217 = vmatpush.msra.mxu0 %v8197
    %8218 = vmatpush.msra.mxu0 %v8195
    %8219 = vmatpush.msra.mxu0 %v8193
    %8220 = vmatpush.msra.mxu0 %v8191
    %8221 = vmatpush.msra.mxu0 %v8189
    %8222 = vmatpush.msra.mxu0 %v8187
    %8223 = vmatmul.f32.gmra.mxu0 %v8205
    %v8224 = vpop.f32.mrf.mxu0
    %v8225 = vadd.f32 0.0, %v8224
    %8226 = vdwg.mxu0
    %8227 = vmatpush.msra.mxu0 0.0
    %8228 = vmatpush.msra.mxu0 0.0
    %8229 = vmatpush.msra.mxu0 0.0
    %8230 = vmatpush.msra.mxu0 0.0
    %8231 = vmatpush.msra.mxu0 0.0
    %8232 = vmatpush.msra.mxu0 0.0
    %8233 = vmatpush.msra.mxu0 0.0
    %8234 = vmatpush.msra.mxu0 0.0
    %8235 = vmatpush.msra.mxu0 %v8202
    %8236 = vmatpush.msra.mxu0 %v8200
    %8237 = vmatpush.msra.mxu0 %v8198
    %8238 = vmatpush.msra.mxu0 %v8196
    %8239 = vmatpush.msra.mxu0 %v8194
    %8240 = vmatpush.msra.mxu0 %v8192
    %8241 = vmatpush.msra.mxu0 %v8190
    %8242 = vmatpush.msra.mxu0 %v8188
    %8243 = vmatmul.f32.gmra.mxu0 %v8205
    %v8244 = vpop.f32.mrf.mxu0
    %v8245 = vadd.f32 0.0, %v8244
    %8246 = vdwg.mxu0
    %v8247 = vadd.f32 %v8121, %v8225
    %v8248 = vadd.f32 %v8122, %v8245
    %s8249 = scalar_lea.vmem %s10, 1024
    %v8250 = vld [vmem:[%s8249] sm:$0xff]
    %v8251 = vld [vmem:[%s8249 + $0x8] sm:$0xff]
    %v8252 = vld [vmem:[%s8249 + $0x10] sm:$0xff]
    %v8253 = vld [vmem:[%s8249 + $0x18] sm:$0xff]
    %v8254 = vld [vmem:[%s8249 + $0x20] sm:$0xff]
    %v8255 = vld [vmem:[%s8249 + $0x28] sm:$0xff]
    %v8256 = vld [vmem:[%s8249 + $0x30] sm:$0xff]
    %v8257 = vld [vmem:[%s8249 + $0x38] sm:$0xff]
    %v8258 = vld [vmem:[%s8249 + $0x40] sm:$0xff]
    %v8259 = vld [vmem:[%s8249 + $0x48] sm:$0xff]
    %v8260 = vld [vmem:[%s8249 + $0x50] sm:$0xff]
    %v8261 = vld [vmem:[%s8249 + $0x58] sm:$0xff]
    %v8262 = vld [vmem:[%s8249 + $0x60] sm:$0xff]
    %v8263 = vld [vmem:[%s8249 + $0x68] sm:$0xff]
    %v8264 = vld [vmem:[%s8249 + $0x70] sm:$0xff]
    %v8265 = vld [vmem:[%s8249 + $0x78] sm:$0xff]
    %8266 = vrot.lane.b32.xlu0 %v7194, 64
    %v8267 = vpop.permute.xlu0 %8266
    %v8268 = vsel %vm5510, %v8267, 0
    %8270 = vmatpush.msra.mxu0 0.0
    %8271 = vmatpush.msra.mxu0 0.0
    %8272 = vmatpush.msra.mxu0 0.0
    %8273 = vmatpush.msra.mxu0 0.0
    %8274 = vmatpush.msra.mxu0 0.0
    %8275 = vmatpush.msra.mxu0 0.0
    %8276 = vmatpush.msra.mxu0 0.0
    %8277 = vmatpush.msra.mxu0 0.0
    %8278 = vmatpush.msra.mxu0 %v8264
    %8279 = vmatpush.msra.mxu0 %v8262
    %8280 = vmatpush.msra.mxu0 %v8260
    %8281 = vmatpush.msra.mxu0 %v8258
    %8282 = vmatpush.msra.mxu0 %v8256
    %8283 = vmatpush.msra.mxu0 %v8254
    %8284 = vmatpush.msra.mxu0 %v8252
    %8285 = vmatpush.msra.mxu0 %v8250
    %8286 = vmatmul.f32.gmra.mxu0 %v8268
    %v8287 = vpop.f32.mrf.mxu0
    %v8288 = vadd.f32 0.0, %v8287
    %8289 = vdwg.mxu0
    %8290 = vmatpush.msra.mxu0 0.0
    %8291 = vmatpush.msra.mxu0 0.0
    %8292 = vmatpush.msra.mxu0 0.0
    %8293 = vmatpush.msra.mxu0 0.0
    %8294 = vmatpush.msra.mxu0 0.0
    %8295 = vmatpush.msra.mxu0 0.0
    %8296 = vmatpush.msra.mxu0 0.0
    %8297 = vmatpush.msra.mxu0 0.0
    %8298 = vmatpush.msra.mxu0 %v8265
    %8299 = vmatpush.msra.mxu0 %v8263
    %8300 = vmatpush.msra.mxu0 %v8261
    %8301 = vmatpush.msra.mxu0 %v8259
    %8302 = vmatpush.msra.mxu0 %v8257
    %8303 = vmatpush.msra.mxu0 %v8255
    %8304 = vmatpush.msra.mxu0 %v8253
    %8305 = vmatpush.msra.mxu0 %v8251
    %8306 = vmatmul.f32.gmra.mxu0 %v8268
    %v8307 = vpop.f32.mrf.mxu0
    %v8308 = vadd.f32 0.0, %v8307
    %8309 = vdwg.mxu0
    %v8310 = vadd.f32 %v8184, %v8288
    %v8311 = vadd.f32 %v8185, %v8308
    %v8312 = vadd.f32 %v8310, %v8247
    %v8313 = vadd.f32 %v8311, %v8248
    %v8314 = vld [vmem:[%s12] sm:$0x3]
    %v8316 = vperm.slane %v8314, 0
    %v8317 = vperm.slane %v8314, 1
    %v8320 = vadd.f32 %v8312, %v8316
    %v8321 = vadd.f32 %v8313, %v8317
    %v8322 = vmul.f32 %v7752, %v7752
    %v8323 = vmul.f32 %v7753, %v7753
    %vm8324 = vcmask 1041408
    %v8325 = vsel %vm8324, %v8322, 0.0
    %v8326 = vsel %vm8324, %v8323, 0.0
    %v8327 = vadd.f32 %v8325, %v8326
    %8328 = vadd.xlane.f32.xlu0 %v8327
    %v8329 = vpop.xlane.xlu0 %8328
    %v8330 = vrsqrt.pop %v8329
    %v8331 = vmul.f32 %v8330, %v8329
    %v8332 = vmul.f32 %v8331, %v8330
    %v8333 = vmul.f32 0.5, %v8332
    %v8334 = vsub.f32 1.5, %v8333
    %v8335 = vmul.f32 %v8330, %v8334
    %vm8336 = vweird.f32 %v8329
    %vm8337 = vweird.f32 %v8330
    %vm8338 = vmor %vm8336, %vm8337
    %v8339 = vsel %vm8338, %v8330, %v8335
    %v8340 = vmul.f32 %v7752, %v8339
    %v8341 = vmul.f32 %v7753, %v8339
    %v8342 = vld [vmem:[%s13] sm:$0xff]
    %v8343 = vld [vmem:[%s13 + $0x8] sm:$0xff]
    %v8344 = vld [vmem:[%s13 + $0x10] sm:$0xff]
    %v8345 = vld [vmem:[%s13 + $0x18] sm:$0xff]
    %v8346 = vld [vmem:[%s13 + $0x20] sm:$0xff]
    %v8347 = vld [vmem:[%s13 + $0x28] sm:$0xff]
    %v8348 = vld [vmem:[%s13 + $0x30] sm:$0xff]
    %v8349 = vld [vmem:[%s13 + $0x38] sm:$0xff]
    %v8350 = vld [vmem:[%s13 + $0x40] sm:$0xff]
    %v8351 = vld [vmem:[%s13 + $0x48] sm:$0xff]
    %v8352 = vld [vmem:[%s13 + $0x50] sm:$0xff]
    %v8353 = vld [vmem:[%s13 + $0x58] sm:$0xff]
    %v8354 = vld [vmem:[%s13 + $0x60] sm:$0xff]
    %v8355 = vld [vmem:[%s13 + $0x68] sm:$0xff]
    %v8356 = vld [vmem:[%s13 + $0x70] sm:$0xff]
    %v8357 = vld [vmem:[%s13 + $0x78] sm:$0xff]
    %v8358 = vld [vmem:[%s13 + $0x80] sm:$0xff]
    %v8359 = vld [vmem:[%s13 + $0x88] sm:$0xff]
    %v8360 = vld [vmem:[%s13 + $0x90] sm:$0xff]
    %v8361 = vld [vmem:[%s13 + $0x98] sm:$0xff]
    %v8362 = vld [vmem:[%s13 + $0xa0] sm:$0xff]
    %v8363 = vld [vmem:[%s13 + $0xa8] sm:$0xff]
    %v8364 = vld [vmem:[%s13 + $0xb0] sm:$0xff]
    %v8365 = vld [vmem:[%s13 + $0xb8] sm:$0xff]
    %v8366 = vld [vmem:[%s13 + $0xc0] sm:$0xff]
    %v8367 = vld [vmem:[%s13 + $0xc8] sm:$0xff]
    %v8368 = vld [vmem:[%s13 + $0xd0] sm:$0xff]
    %v8369 = vld [vmem:[%s13 + $0xd8] sm:$0xff]
    %v8370 = vld [vmem:[%s13 + $0xe0] sm:$0xff]
    %v8371 = vld [vmem:[%s13 + $0xe8] sm:$0xff]
    %v8372 = vld [vmem:[%s13 + $0xf0] sm:$0xff]
    %v8373 = vld [vmem:[%s13 + $0xf8] sm:$0xff]
    %v8374 = vld [vmem:[%s14] sm:$0xff]
    %v8375 = vld [vmem:[%s14 + $0x8] sm:$0xff]
    %v8376 = vld [vmem:[%s14 + $0x10] sm:$0xff]
    %v8377 = vld [vmem:[%s14 + $0x18] sm:$0xff]
    %v8378 = vld [vmem:[%s14 + $0x20] sm:$0xff]
    %v8379 = vld [vmem:[%s14 + $0x28] sm:$0xff]
    %v8380 = vld [vmem:[%s14 + $0x30] sm:$0xff]
    %v8381 = vld [vmem:[%s14 + $0x38] sm:$0xff]
    %v8382 = vld [vmem:[%s14 + $0x40] sm:$0xff]
    %v8383 = vld [vmem:[%s14 + $0x48] sm:$0xff]
    %v8384 = vld [vmem:[%s14 + $0x50] sm:$0xff]
    %v8385 = vld [vmem:[%s14 + $0x58] sm:$0xff]
    %v8386 = vld [vmem:[%s14 + $0x60] sm:$0xff]
    %v8387 = vld [vmem:[%s14 + $0x68] sm:$0xff]
    %v8388 = vld [vmem:[%s14 + $0x70] sm:$0xff]
    %v8389 = vld [vmem:[%s14 + $0x78] sm:$0xff]
    %v8390 = vld [vmem:[%s14 + $0x80] sm:$0xff]
    %v8391 = vld [vmem:[%s14 + $0x88] sm:$0xff]
    %v8392 = vld [vmem:[%s14 + $0x90] sm:$0xff]
    %v8393 = vld [vmem:[%s14 + $0x98] sm:$0xff]
    %v8394 = vld [vmem:[%s14 + $0xa0] sm:$0xff]
    %v8395 = vld [vmem:[%s14 + $0xa8] sm:$0xff]
    %v8396 = vld [vmem:[%s14 + $0xb0] sm:$0xff]
    %v8397 = vld [vmem:[%s14 + $0xb8] sm:$0xff]
    %v8398 = vld [vmem:[%s14 + $0xc0] sm:$0xff]
    %v8399 = vld [vmem:[%s14 + $0xc8] sm:$0xff]
    %v8400 = vld [vmem:[%s14 + $0xd0] sm:$0xff]
    %v8401 = vld [vmem:[%s14 + $0xd8] sm:$0xff]
    %v8402 = vld [vmem:[%s14 + $0xe0] sm:$0xff]
    %v8403 = vld [vmem:[%s14 + $0xe8] sm:$0xff]
    %v8404 = vld [vmem:[%s14 + $0xf0] sm:$0xff]
    %v8405 = vld [vmem:[%s14 + $0xf8] sm:$0xff]
    %8406 = vmatpush.msra.mxu0 %v8389
    %8407 = vmatpush.msra.mxu0 %v8388
    %8408 = vmatpush.msra.mxu0 %v8387
    %8409 = vmatpush.msra.mxu0 %v8386
    %8410 = vmatpush.msra.mxu0 %v8385
    %8411 = vmatpush.msra.mxu0 %v8384
    %8412 = vmatpush.msra.mxu0 %v8383
    %8413 = vmatpush.msra.mxu0 %v8382
    %8414 = vmatpush.msra.mxu0 %v8381
    %8415 = vmatpush.msra.mxu0 %v8380
    %8416 = vmatpush.msra.mxu0 %v8379
    %8417 = vmatpush.msra.mxu0 %v8378
    %8418 = vmatpush.msra.mxu0 %v8377
    %8419 = vmatpush.msra.mxu0 %v8376
    %8420 = vmatpush.msra.mxu0 %v8375
    %8421 = vmatpush.msra.mxu0 %v8374
    %8422 = vmatmul.f32.gmra.mxu0 %v8340
    %v8423 = vpop.f32.mrf.mxu0
    %v8424 = vadd.f32 0.0, %v8423
    %8425 = vdwg.mxu0
    %8426 = vmatpush.msra.mxu0 %v8405
    %8427 = vmatpush.msra.mxu0 %v8404
    %8428 = vmatpush.msra.mxu0 %v8403
    %8429 = vmatpush.msra.mxu0 %v8402
    %8430 = vmatpush.msra.mxu0 %v8401
    %8431 = vmatpush.msra.mxu0 %v8400
    %8432 = vmatpush.msra.mxu0 %v8399
    %8433 = vmatpush.msra.mxu0 %v8398
    %8434 = vmatpush.msra.mxu0 %v8397
    %8435 = vmatpush.msra.mxu0 %v8396
    %8436 = vmatpush.msra.mxu0 %v8395
    %8437 = vmatpush.msra.mxu0 %v8394
    %8438 = vmatpush.msra.mxu0 %v8393
    %8439 = vmatpush.msra.mxu0 %v8392
    %8440 = vmatpush.msra.mxu0 %v8391
    %8441 = vmatpush.msra.mxu0 %v8390
    %8442 = vmatmul.f32.gmra.mxu0 %v8341
    %v8443 = vpop.f32.mrf.mxu0
    %v8444 = vadd.f32 %v8424, %v8443
    %8445 = vdwg.mxu0
    %8446 = vmatpush.msra.mxu0 %v8357
    %8447 = vmatpush.msra.mxu0 %v8356
    %8448 = vmatpush.msra.mxu0 %v8355
    %8449 = vmatpush.msra.mxu0 %v8354
    %8450 = vmatpush.msra.mxu0 %v8353
    %8451 = vmatpush.msra.mxu0 %v8352
    %8452 = vmatpush.msra.mxu0 %v8351
    %8453 = vmatpush.msra.mxu0 %v8350
    %8454 = vmatpush.msra.mxu0 %v8349
    %8455 = vmatpush.msra.mxu0 %v8348
    %8456 = vmatpush.msra.mxu0 %v8347
    %8457 = vmatpush.msra.mxu0 %v8346
    %8458 = vmatpush.msra.mxu0 %v8345
    %8459 = vmatpush.msra.mxu0 %v8344
    %8460 = vmatpush.msra.mxu0 %v8343
    %8461 = vmatpush.msra.mxu0 %v8342
    %8462 = vmatmul.f32.gmra.mxu0 %v8320
    %v8463 = vpop.f32.mrf.mxu0
    %v8464 = vadd.f32 %v8444, %v8463
    %8465 = vdwg.mxu0
    %8466 = vmatpush.msra.mxu0 %v8373
    %8467 = vmatpush.msra.mxu0 %v8372
    %8468 = vmatpush.msra.mxu0 %v8371
    %8469 = vmatpush.msra.mxu0 %v8370
    %8470 = vmatpush.msra.mxu0 %v8369
    %8471 = vmatpush.msra.mxu0 %v8368
    %8472 = vmatpush.msra.mxu0 %v8367
    %8473 = vmatpush.msra.mxu0 %v8366
    %8474 = vmatpush.msra.mxu0 %v8365
    %8475 = vmatpush.msra.mxu0 %v8364
    %8476 = vmatpush.msra.mxu0 %v8363
    %8477 = vmatpush.msra.mxu0 %v8362
    %8478 = vmatpush.msra.mxu0 %v8361
    %8479 = vmatpush.msra.mxu0 %v8360
    %8480 = vmatpush.msra.mxu0 %v8359
    %8481 = vmatpush.msra.mxu0 %v8358
    %8482 = vmatmul.f32.gmra.mxu0 %v8321
    %v8483 = vpop.f32.mrf.mxu0
    %v8484 = vadd.f32 %v8464, %v8483
    %8485 = vdwg.mxu0
    %v8486 = vld [vmem:[%s15] sm:$0x1]
    %v8488 = vperm.slane %v8486, 0
    %v8490 = vadd.f32 %v8484, %v8488
    %v8491 = vmax.f32 %v8490, 0.0
    %v8492 = vld [vmem:[%s16] sm:$0xff]
    %v8493 = vld [vmem:[%s16 + $0x8] sm:$0xff]
    %v8494 = vld [vmem:[%s16 + $0x10] sm:$0xff]
    %v8495 = vld [vmem:[%s16 + $0x18] sm:$0xff]
    %v8496 = vld [vmem:[%s16 + $0x20] sm:$0xff]
    %v8497 = vld [vmem:[%s16 + $0x28] sm:$0xff]
    %v8498 = vld [vmem:[%s16 + $0x30] sm:$0xff]
    %v8499 = vld [vmem:[%s16 + $0x38] sm:$0xff]
    %v8500 = vld [vmem:[%s17] sm:$0x1]
    %v8502 = vperm.slane %v8500, 0
    %v8505 = vsel %vm5510, %v8491, 0
    %8507 = vmatpush.msra.mxu0 0.0
    %8508 = vmatpush.msra.mxu0 0.0
    %8509 = vmatpush.msra.mxu0 0.0
    %8510 = vmatpush.msra.mxu0 0.0
    %8511 = vmatpush.msra.mxu0 0.0
    %8512 = vmatpush.msra.mxu0 0.0
    %8513 = vmatpush.msra.mxu0 0.0
    %8514 = vmatpush.msra.mxu0 0.0
    %8515 = vmatpush.msra.mxu0 %v8499
    %8516 = vmatpush.msra.mxu0 %v8498
    %8517 = vmatpush.msra.mxu0 %v8497
    %8518 = vmatpush.msra.mxu0 %v8496
    %8519 = vmatpush.msra.mxu0 %v8495
    %8520 = vmatpush.msra.mxu0 %v8494
    %8521 = vmatpush.msra.mxu0 %v8493
    %8522 = vmatpush.msra.mxu0 %v8492
    %8523 = vmatmul.f32.gmra.mxu0 %v8505
    %v8524 = vpop.f32.mrf.mxu0
    %v8525 = vadd.f32 %v8502, %v8524
    %8526 = vdwg.mxu0
    %v8527 = vmax.f32 %v8525, 0.0
    %v8528 = vld [vmem:[%s18] sm:$0xff]
    %v8529 = vld [vmem:[%s18 + $0x8] sm:$0xff]
    %v8530 = vld [vmem:[%s18 + $0x10] sm:$0xff]
    %v8531 = vld [vmem:[%s18 + $0x18] sm:$0xff]
    %v8532 = vld [vmem:[%s18 + $0x20] sm:$0xff]
    %v8533 = vld [vmem:[%s18 + $0x28] sm:$0xff]
    %v8534 = vld [vmem:[%s18 + $0x30] sm:$0xff]
    %v8535 = vld [vmem:[%s18 + $0x38] sm:$0xff]
    %v8536 = vld [vmem:[%s19] sm:$0x1]
    %v8538 = vperm.slane %v8536, 0
    %v8541 = vsel %vm5510, %v8527, 0
    %8543 = vmatpush.msra.mxu0 0.0
    %8544 = vmatpush.msra.mxu0 0.0
    %8545 = vmatpush.msra.mxu0 0.0
    %8546 = vmatpush.msra.mxu0 0.0
    %8547 = vmatpush.msra.mxu0 0.0
    %8548 = vmatpush.msra.mxu0 0.0
    %8549 = vmatpush.msra.mxu0 0.0
    %8550 = vmatpush.msra.mxu0 0.0
    %8551 = vmatpush.msra.mxu0 %v8535
    %8552 = vmatpush.msra.mxu0 %v8534
    %8553 = vmatpush.msra.mxu0 %v8533
    %8554 = vmatpush.msra.mxu0 %v8532
    %8555 = vmatpush.msra.mxu0 %v8531
    %8556 = vmatpush.msra.mxu0 %v8530
    %8557 = vmatpush.msra.mxu0 %v8529
    %8558 = vmatpush.msra.mxu0 %v8528
    %8559 = vmatmul.f32.gmra.mxu0 %v8541
    %v8560 = vpop.f32.mrf.mxu0
    %v8561 = vadd.f32 %v8538, %v8560
    %8562 = vdwg.mxu0
    %vm8563 = vcmask 41984
    %8564 = vst.msk [vmem:[#allocation2] sm:$0x3] %vm8563, %v8561
    %v8567 = vrot.slane %v8341, 6
    %v8568 = vsel %vm8324, %v8340, %v8567
    %8570 = vst [vmem:[#allocation4] sm:$0xf] %v8568
    // Predicated region
    $region82: #{image_task_embedding_forward.1} parent=1 // pred_check
      _
    $region83: #{image_task_embedding_forward.1} parent=1 // pred_check_branch
      %8572 = sbr.rel (0) target = $region85
    $region84: #{image_task_embedding_forward.1} parent=1 // pred_region
      %8574 = vsyncadd [#allocation3], 0
      %s8576 = sshll.u32 [#allocation2], 4
      %s8577 = int_to_ptr.vmem [resolvable:$true] %s8576
      %s8578 = sshll.u32 %s20, 4
      %s8579 = int_to_ptr.hbm [resolvable:$true] %s8578
      %8581 = dma.vmem_to_hbm [thread:$0]  %s8577, 32, %s8579, [#allocation3]
    $region85: #{image_task_embedding_forward.1} parent=1 // pred_fallthru
      _
    // Predicated region
    $region86: #{image_task_embedding_forward.1} parent=1 // pred_check
      _
    $region87: #{image_task_embedding_forward.1} parent=1 // pred_check_branch
      %8583 = sbr.rel (0) target = $region89
    $region88: #{image_task_embedding_forward.1} parent=1 // pred_region
      %8585 = vsyncadd [#allocation5], 0
      %s8587 = sshll.u32 [#allocation4], 4
      %s8588 = int_to_ptr.vmem [resolvable:$true] %s8587
      %s8589 = sshll.u32 %s21, 4
      %s8590 = int_to_ptr.hbm [resolvable:$true] %s8589
      %8592 = dma.vmem_to_hbm [thread:$0]  %s8588, 64, %s8590, [#allocation5]
    $region89: #{image_task_embedding_forward.1} parent=1 // pred_fallthru
      _
    // Predicated region
    $region90: #{image_task_embedding_forward.1} parent=1 // pred_check
      _
    $region91: #{image_task_embedding_forward.1} parent=1 // pred_check_branch
      %8594 = sbr.rel (0) target = $region93
    $region92: #{image_task_embedding_forward.1} parent=1 // pred_region
      %8596 = dma.done [#allocation3], 32
    $region93: #{image_task_embedding_forward.1} parent=1 // pred_fallthru
      _
    // Predicated region
    $region94: #{image_task_embedding_forward.1} parent=1 // pred_check
      _
    $region95: #{image_task_embedding_forward.1} parent=1 // pred_check_branch
      %8598 = sbr.rel (0) target = $region97
    $region96: #{image_task_embedding_forward.1} parent=1 // pred_region
      %8600 = dma.done [#allocation5], 64
    $region97: #{image_task_embedding_forward.1} parent=1 // pred_fallthru
      _
    %8601 = vsyncpa [#allocation3], 1
    %8602 = vsyncpa [#allocation5], 1

</llo_original>
